<compile_context>
chip_gen: v7x
topology: tpu7x:2x2x1
jax: 0.10.0
libtpu: 0.0.40
codegen_flags: <defaults>
</compile_context>

<pallas_src>
import math
import functools

import jax
import jax.numpy as jnp
from jax.experimental import pallas as pl
from jax.experimental.pallas import tpu as pltpu


# ----------------------------- Pallas kernel --------------------------------

def _mha_kernel(xq_ref, xkv_ref, mask_ref,
                wq_ref, bq_ref, wk_ref, bk_ref, wv_ref, bv_ref,
                wo_ref, bo_ref,
                out_ref,
                *, n_heads: int):
    # xq_ref/xkv_ref: (BB, T, d) bf16 blocks; mask_ref: (T, T) f32 (grid-invariant);
    # weights: (d, d) bf16 pre-transposed to (d_in, d_out); biases: (1, d) f32.
    BB, T, d = xq_ref.shape
    d_head = d // n_heads
    scale = 1.0 / math.sqrt(d_head)
    M = BB * T

    # ---- fused Q/K/V projections on a (BB*T, d) slab: big-M MXU matmuls ----
    xq = xq_ref[...].reshape(M, d)       # bf16, leading-dim reshape (free)
    xkv = xkv_ref[...].reshape(M, d)

    q = jnp.dot(xq, wq_ref[...], preferred_element_type=jnp.float32) + bq_ref[0]
    k = jnp.dot(xkv, wk_ref[...], preferred_element_type=jnp.float32) + bk_ref[0]
    v = jnp.dot(xkv, wv_ref[...], preferred_element_type=jnp.float32) + bv_ref[0]

    # bf16 operands for the attention matmuls; softmax math stays in f32.
    q = q.astype(jnp.bfloat16).reshape(BB, T, d)
    k = k.astype(jnp.bfloat16).reshape(BB, T, d)
    v = v.astype(jnp.bfloat16).reshape(BB, T, d)

    mask = mask_ref[...]                 # (T, T) f32 causal additive mask (0 / -1e4)

    acc = None                           # f32 (M, d): output-projection accumulator
    for h in range(n_heads):             # static unrolled head loop, batched over BB
        lo = h * d_head
        qh = q[:, :, lo:lo + d_head]     # (BB, T, d_head), static lane slice
        kh = k[:, :, lo:lo + d_head]
        vh = v[:, :, lo:lo + d_head]

        # QK^T: contract trailing dim of both operands (no kh.T / XLU transpose).
        s = jnp.einsum('bqd,bkd->bqk', qh, kh,
                       preferred_element_type=jnp.float32) * scale + mask
        s = s - jnp.max(s, axis=-1, keepdims=True)
        p = jnp.exp(s)
        p = p * pl.reciprocal(jnp.sum(p, axis=-1, keepdims=True), approx=True)

        ctx = jnp.einsum('bqk,bkd->bqd', p.astype(jnp.bfloat16), vh,
                         preferred_element_type=jnp.float32)     # (BB, T, d_head) f32

        # Fold the head merge into the output projection: accumulate
        # ctx_h @ Wout^T[h*dh:(h+1)*dh, :] instead of concatenating heads.
        term = jnp.dot(ctx.reshape(M, d_head).astype(jnp.bfloat16),
                       wo_ref[lo:lo + d_head, :],
                       preferred_element_type=jnp.float32)       # (M, d)
        acc = term if acc is None else acc + term

    out = acc + bo_ref[0]
    out_ref[...] = out.reshape(BB, T, d).astype(out_ref.dtype)


# ------------------------------ Wrapper --------------------------------------

def _choose_block_batch(B: int, T: int, target_rows: int = 256) -> int:
    """Pick BB so BB*T approaches `target_rows`, the grid keeps >=2 steps
    (use both v7x TensorCores) and BB divides B exactly."""
    bb = max(1, target_rows // max(T, 1))
    if B >= 2:
        bb = min(bb, B // 2)
    bb = max(1, min(bb, B))
    while B % bb:
        bb -= 1
    return max(bb, 1)


def multihead_attention(x_q, x_kv, params, n_heads: int, *, block_batch=None):
    """params: dict with Wq, bq, Wk, bk, Wv, bv, Wout, bout in PyTorch layout
    (weights (d_out, d_in)); x_q, x_kv: (B, T, d) float32."""
    B, T, d = x_q.shape
    assert d % n_heads == 0

    BB = _choose_block_batch(B, T) if block_batch is None else block_batch
    assert B % BB == 0
    grid = (B // BB,)

    # Pre-transpose weights to (d_in, d_out) and cast to bf16 (halves weight DMA,
    # feeds the MXU's native bf16 path); keep biases / mask / output in f32.
    bf16 = jnp.bfloat16
    wq_t = params["Wq"].T.astype(bf16)
    wk_t = params["Wk"].T.astype(bf16)
    wv_t = params["Wv"].T.astype(bf16)
    wo_t = params["Wout"].T.astype(bf16)
    bq = params["bq"].reshape(1, d).astype(jnp.float32)
    bk = params["bk"].reshape(1, d).astype(jnp.float32)
    bv = params["bv"].reshape(1, d).astype(jnp.float32)
    bo = params["bout"].reshape(1, d).astype(jnp.float32)

    # Hoisted causal mask, identical to get_attention_mask: 0 where j <= i, -1e4 else.
    ids = jnp.arange(T)
    mask = jnp.where(ids[None, :] <= ids[:, None], 0.0, -10000.0).astype(jnp.float32)

    x_spec = pl.BlockSpec((BB, T, d), lambda b: (b, 0, 0))
    m_spec = pl.BlockSpec((T, T), lambda b: (0, 0))     # grid-invariant: DMA'd once
    w_spec = pl.BlockSpec((d, d), lambda b: (0, 0))     # grid-invariant: DMA'd once
    b_spec = pl.BlockSpec((1, d), lambda b: (0, 0))

    kernel = functools.partial(_mha_kernel, n_heads=n_heads)

    return pl.pallas_call(
        kernel,
        out_shape=jax.ShapeDtypeStruct((B, T, d), x_q.dtype),
        grid_spec=pltpu.PrefetchScalarGridSpec(
            num_scalar_prefetch=0,
            grid=grid,
            in_specs=[x_spec, x_spec, m_spec,
                      w_spec, b_spec, w_spec, b_spec, w_spec, b_spec,
                      w_spec, b_spec],
            out_specs=pl.BlockSpec((BB, T, d), lambda b: (b, 0, 0)),
        ),
        compiler_params=pltpu.CompilerParams(
            dimension_semantics=("parallel",),
            vmem_limit_bytes=64 * 1024 * 1024,
        ),
    )(x_q.astype(bf16), x_kv.astype(bf16), mask,
      wq_t, bq, wk_t, bk, wv_t, bv, wo_t, bo)


# -------------------------- Reference (pure JAX, f32) --------------------------

def multihead_attention_ref(x_q, x_kv, params, n_heads: int):
    B, T, d = x_q.shape
    d_head = d // n_heads

    def lin(x, W, b):
        return x @ W.T + b

    q = lin(x_q, params["Wq"], params["bq"])
    k = lin(x_kv, params["Wk"], params["bk"])
    v = lin(x_kv, params["Wv"], params["bv"])

    def split(x):
        return x.reshape(B, T, n_heads, d_head).transpose(0, 2, 1, 3).reshape(
            B * n_heads, T, d_head)

    qh, kh, vh = split(q), split(k), split(v)
    scores = qh @ kh.transpose(0, 2, 1) / math.sqrt(d_head)
    ids = jnp.arange(T)
    mask = (1.0 - (ids[None, None, :] <= ids[None, :, None]).astype(jnp.float32)) * -10000.0
    attn = jax.nn.softmax(scores + mask, axis=-1)
    ctx = attn @ vh
    ctx = ctx.reshape(B, n_heads, T, d_head).transpose(0, 2, 1, 3).reshape(B, T, d)
    return lin(ctx, params["Wout"], params["bout"])


# --------------------------- Param init (deterministic) -----------------------

def _attenuated_kaiming_uniform(key, shape, scale=1.0, a=math.sqrt(5)):
    fan_in = shape[1]                      # Linear weight shape is (out, in)
    gain = math.sqrt(2.0 / (1.0 + a * a))
    std = gain * scale / math.sqrt(fan_in)
    bound = math.sqrt(3.0) * std
    return jax.random.uniform(key, shape, jnp.float32, -bound, bound)


def init_params(key, d: int, init_scale: float = 0.01):
    kq, kk, kv, ko = jax.random.split(key, 4)
    return {
        "Wq": _attenuated_kaiming_uniform(kq, (d, d), scale=init_scale),
        "bq": jnp.zeros((d,), jnp.float32),
        "Wk": _attenuated_kaiming_uniform(kk, (d, d), scale=init_scale),
        "bk": jnp.zeros((d,), jnp.float32),
        "Wv": _attenuated_kaiming_uniform(kv, (d, d), scale=init_scale),
        "bv": jnp.zeros((d,), jnp.float32),
        "Wout": _attenuated_kaiming_uniform(ko, (d, d), scale=1.0),
        "bout": jnp.zeros((d,), jnp.float32),
    }


# ----------------------------------- main -------------------------------------

if __name__ == "__main__":
    # Small but TPU-aligned demo shapes: d multiple of 128 (lane-dense output),
    # BB*T = 128 rows per grid step, 2 grid steps (both TCs on v7x).
    B, T, d, n_heads = 16, 16, 128, 8

    key = jax.random.PRNGKey(0)
    kx, kp = jax.random.split(key)
    x = jax.random.normal(kx, (B, T, d), jnp.float32)   # self-attention: x_q == x_kv
    params = init_params(kp, d)

    out = multihead_attention(x, x, params, n_heads)
    out = jax.block_until_ready(out)

    ref = multihead_attention_ref(x, x, params, n_heads)
    assert out.shape == (B, T, d)
    # bf16 MXU operands + approx reciprocal -> compare with bf16-appropriate tolerance.
    assert jnp.allclose(out, ref, atol=2e-3, rtol=3e-2), "mismatch vs reference"

    print("KERNEL_OK")
</pallas_src>

<mosaic_0001>
module attributes {stable_mosaic.version = 11 : i64} {
  func.func @_mha_kernel(%arg0: i32, %arg1: memref<8x16x128xbf16, #tpu.memory_space<vmem>>, %arg2: memref<8x16x128xbf16, #tpu.memory_space<vmem>>, %arg3: memref<16x16xf32, #tpu.memory_space<vmem>>, %arg4: memref<128x128xbf16, #tpu.memory_space<vmem>>, %arg5: memref<1x128xf32, #tpu.memory_space<vmem>>, %arg6: memref<128x128xbf16, #tpu.memory_space<vmem>>, %arg7: memref<1x128xf32, #tpu.memory_space<vmem>>, %arg8: memref<128x128xbf16, #tpu.memory_space<vmem>>, %arg9: memref<1x128xf32, #tpu.memory_space<vmem>>, %arg10: memref<128x128xbf16, #tpu.memory_space<vmem>>, %arg11: memref<1x128xf32, #tpu.memory_space<vmem>>, %arg12: memref<8x16x128xf32, #tpu.memory_space<vmem>>) attributes {dimension_semantics = [#tpu.dimension_semantics<parallel>], iteration_bounds = array<i64: 2>, scalar_prefetch = 0 : i64, scratch_operands = 0 : i64, tpu.core_type = #tpu.core_type<tc>, window_params = [{transform_indices = @transform_0, window_bounds = array<i64: 8, 16, 128>}, {transform_indices = @transform_1, window_bounds = array<i64: 8, 16, 128>}, {pipeline_mode = #tpu.pipeline_mode<synchronous>, transform_indices = @transform_2, window_bounds = array<i64: 16, 16>}, {pipeline_mode = #tpu.pipeline_mode<synchronous>, transform_indices = @transform_3, window_bounds = array<i64: 128, 128>}, {pipeline_mode = #tpu.pipeline_mode<synchronous>, transform_indices = @transform_4, window_bounds = array<i64: 1, 128>}, {pipeline_mode = #tpu.pipeline_mode<synchronous>, transform_indices = @transform_5, window_bounds = array<i64: 128, 128>}, {pipeline_mode = #tpu.pipeline_mode<synchronous>, transform_indices = @transform_6, window_bounds = array<i64: 1, 128>}, {pipeline_mode = #tpu.pipeline_mode<synchronous>, transform_indices = @transform_7, window_bounds = array<i64: 128, 128>}, {pipeline_mode = #tpu.pipeline_mode<synchronous>, transform_indices = @transform_8, window_bounds = array<i64: 1, 128>}, {pipeline_mode = #tpu.pipeline_mode<synchronous>, transform_indices = @transform_9, window_bounds = array<i64: 128, 128>}, {pipeline_mode = #tpu.pipeline_mode<synchronous>, transform_indices = @transform_10, window_bounds = array<i64: 1, 128>}, {transform_indices = @transform_11, window_bounds = array<i64: 8, 16, 128>}]} {
    %c0 = arith.constant 0 : index
    %c0_0 = arith.constant 0 : index
    %c0_1 = arith.constant 0 : index
    %0 = vector.load %arg1[%c0, %c0_0, %c0_1] : memref<8x16x128xbf16, #tpu.memory_space<vmem>>, vector<8x16x128xbf16>
    %1 = vector.shape_cast %0 : vector<8x16x128xbf16> to vector<128x128xbf16>
    %c0_2 = arith.constant 0 : index
    %c0_3 = arith.constant 0 : index
    %c0_4 = arith.constant 0 : index
    %2 = vector.load %arg2[%c0_2, %c0_3, %c0_4] : memref<8x16x128xbf16, #tpu.memory_space<vmem>>, vector<8x16x128xbf16>
    %3 = vector.shape_cast %2 : vector<8x16x128xbf16> to vector<128x128xbf16>
    %c0_5 = arith.constant 0 : index
    %c0_6 = arith.constant 0 : index
    %4 = vector.load %arg4[%c0_5, %c0_6] : memref<128x128xbf16, #tpu.memory_space<vmem>>, vector<128x128xbf16>
    %cst = arith.constant dense<0.000000e+00> : vector<128x128xf32>
    %5 = tpu.matmul %1, %4, %cst {dimension_numbers = #tpu.dot_dimension_numbers<[1], [0], [0], [1], [0, 0, 1, 1], [], []>} : vector<128x128xbf16>, vector<128x128xbf16>, vector<128x128xf32> -> vector<128x128xf32>
    %c0_7 = arith.constant 0 : index
    %c0_8 = arith.constant 0 : index
    %6 = vector.load %arg5[%c0_7, %c0_8] : memref<1x128xf32, #tpu.memory_space<vmem>>, vector<1x128xf32>
    %7 = vector.shape_cast %6 : vector<1x128xf32> to vector<128xf32>
    %8 = vector.shape_cast %7 : vector<128xf32> to vector<1x128xf32>
    %9 = vector.broadcast %8 : vector<1x128xf32> to vector<128x128xf32>
    %10 = arith.addf %5, %9 : vector<128x128xf32>
    %c0_9 = arith.constant 0 : index
    %c0_10 = arith.constant 0 : index
    %11 = vector.load %arg6[%c0_9, %c0_10] : memref<128x128xbf16, #tpu.memory_space<vmem>>, vector<128x128xbf16>
    %cst_11 = arith.constant dense<0.000000e+00> : vector<128x128xf32>
    %12 = tpu.matmul %3, %11, %cst_11 {dimension_numbers = #tpu.dot_dimension_numbers<[1], [0], [0], [1], [0, 0, 1, 1], [], []>} : vector<128x128xbf16>, vector<128x128xbf16>, vector<128x128xf32> -> vector<128x128xf32>
    %c0_12 = arith.constant 0 : index
    %c0_13 = arith.constant 0 : index
    %13 = vector.load %arg7[%c0_12, %c0_13] : memref<1x128xf32, #tpu.memory_space<vmem>>, vector<1x128xf32>
    %14 = vector.shape_cast %13 : vector<1x128xf32> to vector<128xf32>
    %15 = vector.shape_cast %14 : vector<128xf32> to vector<1x128xf32>
    %16 = vector.broadcast %15 : vector<1x128xf32> to vector<128x128xf32>
    %17 = arith.addf %12, %16 : vector<128x128xf32>
    %c0_14 = arith.constant 0 : index
    %c0_15 = arith.constant 0 : index
    %18 = vector.load %arg8[%c0_14, %c0_15] : memref<128x128xbf16, #tpu.memory_space<vmem>>, vector<128x128xbf16>
    %cst_16 = arith.constant dense<0.000000e+00> : vector<128x128xf32>
    %19 = tpu.matmul %3, %18, %cst_16 {dimension_numbers = #tpu.dot_dimension_numbers<[1], [0], [0], [1], [0, 0, 1, 1], [], []>} : vector<128x128xbf16>, vector<128x128xbf16>, vector<128x128xf32> -> vector<128x128xf32>
    %c0_17 = arith.constant 0 : index
    %c0_18 = arith.constant 0 : index
    %20 = vector.load %arg9[%c0_17, %c0_18] : memref<1x128xf32, #tpu.memory_space<vmem>>, vector<1x128xf32>
    %21 = vector.shape_cast %20 : vector<1x128xf32> to vector<128xf32>
    %22 = vector.shape_cast %21 : vector<128xf32> to vector<1x128xf32>
    %23 = vector.broadcast %22 : vector<1x128xf32> to vector<128x128xf32>
    %24 = arith.addf %19, %23 : vector<128x128xf32>
    %25 = arith.truncf %10 : vector<128x128xf32> to vector<128x128xbf16>
    %26 = vector.shape_cast %25 : vector<128x128xbf16> to vector<8x16x128xbf16>
    %27 = arith.truncf %17 : vector<128x128xf32> to vector<128x128xbf16>
    %28 = vector.shape_cast %27 : vector<128x128xbf16> to vector<8x16x128xbf16>
    %29 = arith.truncf %24 : vector<128x128xf32> to vector<128x128xbf16>
    %30 = vector.shape_cast %29 : vector<128x128xbf16> to vector<8x16x128xbf16>
    %c0_19 = arith.constant 0 : index
    %c0_20 = arith.constant 0 : index
    %31 = vector.load %arg3[%c0_19, %c0_20] : memref<16x16xf32, #tpu.memory_space<vmem>>, vector<16x16xf32>
    %32 = vector.extract_strided_slice %26 {offsets = [0, 0, 0], sizes = [8, 16, 16], strides = [1, 1, 1]} : vector<8x16x128xbf16> to vector<8x16x16xbf16>
    %33 = vector.extract_strided_slice %28 {offsets = [0, 0, 0], sizes = [8, 16, 16], strides = [1, 1, 1]} : vector<8x16x128xbf16> to vector<8x16x16xbf16>
    %34 = vector.extract_strided_slice %30 {offsets = [0, 0, 0], sizes = [8, 16, 16], strides = [1, 1, 1]} : vector<8x16x128xbf16> to vector<8x16x16xbf16>
    "tpu.trace_start"() <{level = 10 : i32, message = "bqd,bkd->bqk"}> : () -> ()
    %cst_21 = arith.constant dense<0.000000e+00> : vector<8x16x16xf32>
    %35 = tpu.matmul %32, %33, %cst_21 {dimension_numbers = #tpu.dot_dimension_numbers<[2], [2], [1], [1], [0, 0, 0, 1, 1, 1], [0], [0]>} : vector<8x16x16xbf16>, vector<8x16x16xbf16>, vector<8x16x16xf32> -> vector<8x16x16xf32>
    "tpu.trace_stop"() : () -> ()
    %cst_22 = arith.constant 2.500000e-01 : f32
    %36 = vector.broadcast %cst_22 : f32 to vector<8x16x16xf32>
    %37 = arith.mulf %35, %36 : vector<8x16x16xf32>
    %38 = vector.shape_cast %31 : vector<16x16xf32> to vector<1x16x16xf32>
    %39 = vector.broadcast %38 : vector<1x16x16xf32> to vector<8x16x16xf32>
    %40 = arith.addf %37, %39 : vector<8x16x16xf32>
    %cst_23 = arith.constant dense<0xFF800000> : vector<8x16xf32>
    %41 = vector.multi_reduction <maximumf>, %40, %cst_23 [2] : vector<8x16x16xf32> to vector<8x16xf32>
    %42 = vector.shape_cast %41 : vector<8x16xf32> to vector<8x16x1xf32>
    %43 = vector.broadcast %42 : vector<8x16x1xf32> to vector<8x16x16xf32>
    %44 = arith.subf %40, %43 : vector<8x16x16xf32>
    %45 = math.exp %44 : vector<8x16x16xf32>
    %cst_24 = arith.constant dense<0.000000e+00> : vector<8x16xf32>
    %46 = vector.multi_reduction <add>, %45, %cst_24 [2] : vector<8x16x16xf32> to vector<8x16xf32>
    %47 = vector.shape_cast %46 : vector<8x16xf32> to vector<8x16x1xf32>
    %48 = tpu.reciprocal %47 {approx = true} : vector<8x16x1xf32> -> vector<8x16x1xf32>
    %49 = vector.broadcast %48 : vector<8x16x1xf32> to vector<8x16x16xf32>
    %50 = arith.mulf %45, %49 : vector<8x16x16xf32>
    %51 = arith.truncf %50 : vector<8x16x16xf32> to vector<8x16x16xbf16>
    "tpu.trace_start"() <{level = 10 : i32, message = "bqk,bkd->bqd"}> : () -> ()
    %cst_25 = arith.constant dense<0.000000e+00> : vector<8x16x16xf32>
    %52 = tpu.matmul %51, %34, %cst_25 {dimension_numbers = #tpu.dot_dimension_numbers<[2], [1], [1], [2], [0, 0, 0, 1, 1, 2], [0], [0]>} : vector<8x16x16xbf16>, vector<8x16x16xbf16>, vector<8x16x16xf32> -> vector<8x16x16xf32>
    "tpu.trace_stop"() : () -> ()
    %53 = vector.shape_cast %52 : vector<8x16x16xf32> to vector<128x16xf32>
    %54 = arith.truncf %53 : vector<128x16xf32> to vector<128x16xbf16>
    %c0_26 = arith.constant 0 : index
    %c0_27 = arith.constant 0 : index
    %55 = vector.load %arg10[%c0_26, %c0_27] : memref<128x128xbf16, #tpu.memory_space<vmem>>, vector<16x128xbf16>
    %cst_28 = arith.constant dense<0.000000e+00> : vector<128x128xf32>
    %56 = tpu.matmul %54, %55, %cst_28 {dimension_numbers = #tpu.dot_dimension_numbers<[1], [0], [0], [1], [0, 0, 1, 1], [], []>} : vector<128x16xbf16>, vector<16x128xbf16>, vector<128x128xf32> -> vector<128x128xf32>
    %57 = vector.extract_strided_slice %26 {offsets = [0, 0, 16], sizes = [8, 16, 16], strides = [1, 1, 1]} : vector<8x16x128xbf16> to vector<8x16x16xbf16>
    %58 = vector.extract_strided_slice %28 {offsets = [0, 0, 16], sizes = [8, 16, 16], strides = [1, 1, 1]} : vector<8x16x128xbf16> to vector<8x16x16xbf16>
    %59 = vector.extract_strided_slice %30 {offsets = [0, 0, 16], sizes = [8, 16, 16], strides = [1, 1, 1]} : vector<8x16x128xbf16> to vector<8x16x16xbf16>
    "tpu.trace_start"() <{level = 10 : i32, message = "bqd,bkd->bqk"}> : () -> ()
    %cst_29 = arith.constant dense<0.000000e+00> : vector<8x16x16xf32>
    %60 = tpu.matmul %57, %58, %cst_29 {dimension_numbers = #tpu.dot_dimension_numbers<[2], [2], [1], [1], [0, 0, 0, 1, 1, 1], [0], [0]>} : vector<8x16x16xbf16>, vector<8x16x16xbf16>, vector<8x16x16xf32> -> vector<8x16x16xf32>
    "tpu.trace_stop"() : () -> ()
    %cst_30 = arith.constant 2.500000e-01 : f32
    %61 = vector.broadcast %cst_30 : f32 to vector<8x16x16xf32>
    %62 = arith.mulf %60, %61 : vector<8x16x16xf32>
    %63 = vector.shape_cast %31 : vector<16x16xf32> to vector<1x16x16xf32>
    %64 = vector.broadcast %63 : vector<1x16x16xf32> to vector<8x16x16xf32>
    %65 = arith.addf %62, %64 : vector<8x16x16xf32>
    %cst_31 = arith.constant dense<0xFF800000> : vector<8x16xf32>
    %66 = vector.multi_reduction <maximumf>, %65, %cst_31 [2] : vector<8x16x16xf32> to vector<8x16xf32>
    %67 = vector.shape_cast %66 : vector<8x16xf32> to vector<8x16x1xf32>
    %68 = vector.broadcast %67 : vector<8x16x1xf32> to vector<8x16x16xf32>
    %69 = arith.subf %65, %68 : vector<8x16x16xf32>
    %70 = math.exp %69 : vector<8x16x16xf32>
    %cst_32 = arith.constant dense<0.000000e+00> : vector<8x16xf32>
    %71 = vector.multi_reduction <add>, %70, %cst_32 [2] : vector<8x16x16xf32> to vector<8x16xf32>
    %72 = vector.shape_cast %71 : vector<8x16xf32> to vector<8x16x1xf32>
    %73 = tpu.reciprocal %72 {approx = true} : vector<8x16x1xf32> -> vector<8x16x1xf32>
    %74 = vector.broadcast %73 : vector<8x16x1xf32> to vector<8x16x16xf32>
    %75 = arith.mulf %70, %74 : vector<8x16x16xf32>
    %76 = arith.truncf %75 : vector<8x16x16xf32> to vector<8x16x16xbf16>
    "tpu.trace_start"() <{level = 10 : i32, message = "bqk,bkd->bqd"}> : () -> ()
    %cst_33 = arith.constant dense<0.000000e+00> : vector<8x16x16xf32>
    %77 = tpu.matmul %76, %59, %cst_33 {dimension_numbers = #tpu.dot_dimension_numbers<[2], [1], [1], [2], [0, 0, 0, 1, 1, 2], [0], [0]>} : vector<8x16x16xbf16>, vector<8x16x16xbf16>, vector<8x16x16xf32> -> vector<8x16x16xf32>
    "tpu.trace_stop"() : () -> ()
    %78 = vector.shape_cast %77 : vector<8x16x16xf32> to vector<128x16xf32>
    %79 = arith.truncf %78 : vector<128x16xf32> to vector<128x16xbf16>
    %c16 = arith.constant 16 : index
    %c0_34 = arith.constant 0 : index
    %80 = vector.load %arg10[%c16, %c0_34] : memref<128x128xbf16, #tpu.memory_space<vmem>>, vector<16x128xbf16>
    %cst_35 = arith.constant dense<0.000000e+00> : vector<128x128xf32>
    %81 = tpu.matmul %79, %80, %cst_35 {dimension_numbers = #tpu.dot_dimension_numbers<[1], [0], [0], [1], [0, 0, 1, 1], [], []>} : vector<128x16xbf16>, vector<16x128xbf16>, vector<128x128xf32> -> vector<128x128xf32>
    %82 = arith.addf %56, %81 : vector<128x128xf32>
    %83 = vector.extract_strided_slice %26 {offsets = [0, 0, 32], sizes = [8, 16, 16], strides = [1, 1, 1]} : vector<8x16x128xbf16> to vector<8x16x16xbf16>
    %84 = vector.extract_strided_slice %28 {offsets = [0, 0, 32], sizes = [8, 16, 16], strides = [1, 1, 1]} : vector<8x16x128xbf16> to vector<8x16x16xbf16>
    %85 = vector.extract_strided_slice %30 {offsets = [0, 0, 32], sizes = [8, 16, 16], strides = [1, 1, 1]} : vector<8x16x128xbf16> to vector<8x16x16xbf16>
    "tpu.trace_start"() <{level = 10 : i32, message = "bqd,bkd->bqk"}> : () -> ()
    %cst_36 = arith.constant dense<0.000000e+00> : vector<8x16x16xf32>
    %86 = tpu.matmul %83, %84, %cst_36 {dimension_numbers = #tpu.dot_dimension_numbers<[2], [2], [1], [1], [0, 0, 0, 1, 1, 1], [0], [0]>} : vector<8x16x16xbf16>, vector<8x16x16xbf16>, vector<8x16x16xf32> -> vector<8x16x16xf32>
    "tpu.trace_stop"() : () -> ()
    %cst_37 = arith.constant 2.500000e-01 : f32
    %87 = vector.broadcast %cst_37 : f32 to vector<8x16x16xf32>
    %88 = arith.mulf %86, %87 : vector<8x16x16xf32>
    %89 = vector.shape_cast %31 : vector<16x16xf32> to vector<1x16x16xf32>
    %90 = vector.broadcast %89 : vector<1x16x16xf32> to vector<8x16x16xf32>
    %91 = arith.addf %88, %90 : vector<8x16x16xf32>
    %cst_38 = arith.constant dense<0xFF800000> : vector<8x16xf32>
    %92 = vector.multi_reduction <maximumf>, %91, %cst_38 [2] : vector<8x16x16xf32> to vector<8x16xf32>
    %93 = vector.shape_cast %92 : vector<8x16xf32> to vector<8x16x1xf32>
    %94 = vector.broadcast %93 : vector<8x16x1xf32> to vector<8x16x16xf32>
    %95 = arith.subf %91, %94 : vector<8x16x16xf32>
    %96 = math.exp %95 : vector<8x16x16xf32>
    %cst_39 = arith.constant dense<0.000000e+00> : vector<8x16xf32>
    %97 = vector.multi_reduction <add>, %96, %cst_39 [2] : vector<8x16x16xf32> to vector<8x16xf32>
    %98 = vector.shape_cast %97 : vector<8x16xf32> to vector<8x16x1xf32>
    %99 = tpu.reciprocal %98 {approx = true} : vector<8x16x1xf32> -> vector<8x16x1xf32>
    %100 = vector.broadcast %99 : vector<8x16x1xf32> to vector<8x16x16xf32>
    %101 = arith.mulf %96, %100 : vector<8x16x16xf32>
    %102 = arith.truncf %101 : vector<8x16x16xf32> to vector<8x16x16xbf16>
    "tpu.trace_start"() <{level = 10 : i32, message = "bqk,bkd->bqd"}> : () -> ()
    %cst_40 = arith.constant dense<0.000000e+00> : vector<8x16x16xf32>
    %103 = tpu.matmul %102, %85, %cst_40 {dimension_numbers = #tpu.dot_dimension_numbers<[2], [1], [1], [2], [0, 0, 0, 1, 1, 2], [0], [0]>} : vector<8x16x16xbf16>, vector<8x16x16xbf16>, vector<8x16x16xf32> -> vector<8x16x16xf32>
    "tpu.trace_stop"() : () -> ()
    %104 = vector.shape_cast %103 : vector<8x16x16xf32> to vector<128x16xf32>
    %105 = arith.truncf %104 : vector<128x16xf32> to vector<128x16xbf16>
    %c32 = arith.constant 32 : index
    %c0_41 = arith.constant 0 : index
    %106 = vector.load %arg10[%c32, %c0_41] : memref<128x128xbf16, #tpu.memory_space<vmem>>, vector<16x128xbf16>
    %cst_42 = arith.constant dense<0.000000e+00> : vector<128x128xf32>
    %107 = tpu.matmul %105, %106, %cst_42 {dimension_numbers = #tpu.dot_dimension_numbers<[1], [0], [0], [1], [0, 0, 1, 1], [], []>} : vector<128x16xbf16>, vector<16x128xbf16>, vector<128x128xf32> -> vector<128x128xf32>
    %108 = arith.addf %82, %107 : vector<128x128xf32>
    %109 = vector.extract_strided_slice %26 {offsets = [0, 0, 48], sizes = [8, 16, 16], strides = [1, 1, 1]} : vector<8x16x128xbf16> to vector<8x16x16xbf16>
    %110 = vector.extract_strided_slice %28 {offsets = [0, 0, 48], sizes = [8, 16, 16], strides = [1, 1, 1]} : vector<8x16x128xbf16> to vector<8x16x16xbf16>
    %111 = vector.extract_strided_slice %30 {offsets = [0, 0, 48], sizes = [8, 16, 16], strides = [1, 1, 1]} : vector<8x16x128xbf16> to vector<8x16x16xbf16>
    "tpu.trace_start"() <{level = 10 : i32, message = "bqd,bkd->bqk"}> : () -> ()
    %cst_43 = arith.constant dense<0.000000e+00> : vector<8x16x16xf32>
    %112 = tpu.matmul %109, %110, %cst_43 {dimension_numbers = #tpu.dot_dimension_numbers<[2], [2], [1], [1], [0, 0, 0, 1, 1, 1], [0], [0]>} : vector<8x16x16xbf16>, vector<8x16x16xbf16>, vector<8x16x16xf32> -> vector<8x16x16xf32>
    "tpu.trace_stop"() : () -> ()
    %cst_44 = arith.constant 2.500000e-01 : f32
    %113 = vector.broadcast %cst_44 : f32 to vector<8x16x16xf32>
    %114 = arith.mulf %112, %113 : vector<8x16x16xf32>
    %115 = vector.shape_cast %31 : vector<16x16xf32> to vector<1x16x16xf32>
    %116 = vector.broadcast %115 : vector<1x16x16xf32> to vector<8x16x16xf32>
    %117 = arith.addf %114, %116 : vector<8x16x16xf32>
    %cst_45 = arith.constant dense<0xFF800000> : vector<8x16xf32>
    %118 = vector.multi_reduction <maximumf>, %117, %cst_45 [2] : vector<8x16x16xf32> to vector<8x16xf32>
    %119 = vector.shape_cast %118 : vector<8x16xf32> to vector<8x16x1xf32>
    %120 = vector.broadcast %119 : vector<8x16x1xf32> to vector<8x16x16xf32>
    %121 = arith.subf %117, %120 : vector<8x16x16xf32>
    %122 = math.exp %121 : vector<8x16x16xf32>
    %cst_46 = arith.constant dense<0.000000e+00> : vector<8x16xf32>
    %123 = vector.multi_reduction <add>, %122, %cst_46 [2] : vector<8x16x16xf32> to vector<8x16xf32>
    %124 = vector.shape_cast %123 : vector<8x16xf32> to vector<8x16x1xf32>
    %125 = tpu.reciprocal %124 {approx = true} : vector<8x16x1xf32> -> vector<8x16x1xf32>
    %126 = vector.broadcast %125 : vector<8x16x1xf32> to vector<8x16x16xf32>
    %127 = arith.mulf %122, %126 : vector<8x16x16xf32>
    %128 = arith.truncf %127 : vector<8x16x16xf32> to vector<8x16x16xbf16>
    "tpu.trace_start"() <{level = 10 : i32, message = "bqk,bkd->bqd"}> : () -> ()
    %cst_47 = arith.constant dense<0.000000e+00> : vector<8x16x16xf32>
    %129 = tpu.matmul %128, %111, %cst_47 {dimension_numbers = #tpu.dot_dimension_numbers<[2], [1], [1], [2], [0, 0, 0, 1, 1, 2], [0], [0]>} : vector<8x16x16xbf16>, vector<8x16x16xbf16>, vector<8x16x16xf32> -> vector<8x16x16xf32>
    "tpu.trace_stop"() : () -> ()
    %130 = vector.shape_cast %129 : vector<8x16x16xf32> to vector<128x16xf32>
    %131 = arith.truncf %130 : vector<128x16xf32> to vector<128x16xbf16>
    %c48 = arith.constant 48 : index
    %c0_48 = arith.constant 0 : index
    %132 = vector.load %arg10[%c48, %c0_48] : memref<128x128xbf16, #tpu.memory_space<vmem>>, vector<16x128xbf16>
    %cst_49 = arith.constant dense<0.000000e+00> : vector<128x128xf32>
    %133 = tpu.matmul %131, %132, %cst_49 {dimension_numbers = #tpu.dot_dimension_numbers<[1], [0], [0], [1], [0, 0, 1, 1], [], []>} : vector<128x16xbf16>, vector<16x128xbf16>, vector<128x128xf32> -> vector<128x128xf32>
    %134 = arith.addf %108, %133 : vector<128x128xf32>
    %135 = vector.extract_strided_slice %26 {offsets = [0, 0, 64], sizes = [8, 16, 16], strides = [1, 1, 1]} : vector<8x16x128xbf16> to vector<8x16x16xbf16>
    %136 = vector.extract_strided_slice %28 {offsets = [0, 0, 64], sizes = [8, 16, 16], strides = [1, 1, 1]} : vector<8x16x128xbf16> to vector<8x16x16xbf16>
    %137 = vector.extract_strided_slice %30 {offsets = [0, 0, 64], sizes = [8, 16, 16], strides = [1, 1, 1]} : vector<8x16x128xbf16> to vector<8x16x16xbf16>
    "tpu.trace_start"() <{level = 10 : i32, message = "bqd,bkd->bqk"}> : () -> ()
    %cst_50 = arith.constant dense<0.000000e+00> : vector<8x16x16xf32>
    %138 = tpu.matmul %135, %136, %cst_50 {dimension_numbers = #tpu.dot_dimension_numbers<[2], [2], [1], [1], [0, 0, 0, 1, 1, 1], [0], [0]>} : vector<8x16x16xbf16>, vector<8x16x16xbf16>, vector<8x16x16xf32> -> vector<8x16x16xf32>
    "tpu.trace_stop"() : () -> ()
    %cst_51 = arith.constant 2.500000e-01 : f32
    %139 = vector.broadcast %cst_51 : f32 to vector<8x16x16xf32>
    %140 = arith.mulf %138, %139 : vector<8x16x16xf32>
    %141 = vector.shape_cast %31 : vector<16x16xf32> to vector<1x16x16xf32>
    %142 = vector.broadcast %141 : vector<1x16x16xf32> to vector<8x16x16xf32>
    %143 = arith.addf %140, %142 : vector<8x16x16xf32>
    %cst_52 = arith.constant dense<0xFF800000> : vector<8x16xf32>
    %144 = vector.multi_reduction <maximumf>, %143, %cst_52 [2] : vector<8x16x16xf32> to vector<8x16xf32>
    %145 = vector.shape_cast %144 : vector<8x16xf32> to vector<8x16x1xf32>
    %146 = vector.broadcast %145 : vector<8x16x1xf32> to vector<8x16x16xf32>
    %147 = arith.subf %143, %146 : vector<8x16x16xf32>
    %148 = math.exp %147 : vector<8x16x16xf32>
    %cst_53 = arith.constant dense<0.000000e+00> : vector<8x16xf32>
    %149 = vector.multi_reduction <add>, %148, %cst_53 [2] : vector<8x16x16xf32> to vector<8x16xf32>
    %150 = vector.shape_cast %149 : vector<8x16xf32> to vector<8x16x1xf32>
    %151 = tpu.reciprocal %150 {approx = true} : vector<8x16x1xf32> -> vector<8x16x1xf32>
    %152 = vector.broadcast %151 : vector<8x16x1xf32> to vector<8x16x16xf32>
    %153 = arith.mulf %148, %152 : vector<8x16x16xf32>
    %154 = arith.truncf %153 : vector<8x16x16xf32> to vector<8x16x16xbf16>
    "tpu.trace_start"() <{level = 10 : i32, message = "bqk,bkd->bqd"}> : () -> ()
    %cst_54 = arith.constant dense<0.000000e+00> : vector<8x16x16xf32>
    %155 = tpu.matmul %154, %137, %cst_54 {dimension_numbers = #tpu.dot_dimension_numbers<[2], [1], [1], [2], [0, 0, 0, 1, 1, 2], [0], [0]>} : vector<8x16x16xbf16>, vector<8x16x16xbf16>, vector<8x16x16xf32> -> vector<8x16x16xf32>
    "tpu.trace_stop"() : () -> ()
    %156 = vector.shape_cast %155 : vector<8x16x16xf32> to vector<128x16xf32>
    %157 = arith.truncf %156 : vector<128x16xf32> to vector<128x16xbf16>
    %c64 = arith.constant 64 : index
    %c0_55 = arith.constant 0 : index
    %158 = vector.load %arg10[%c64, %c0_55] : memref<128x128xbf16, #tpu.memory_space<vmem>>, vector<16x128xbf16>
    %cst_56 = arith.constant dense<0.000000e+00> : vector<128x128xf32>
    %159 = tpu.matmul %157, %158, %cst_56 {dimension_numbers = #tpu.dot_dimension_numbers<[1], [0], [0], [1], [0, 0, 1, 1], [], []>} : vector<128x16xbf16>, vector<16x128xbf16>, vector<128x128xf32> -> vector<128x128xf32>
    %160 = arith.addf %134, %159 : vector<128x128xf32>
    %161 = vector.extract_strided_slice %26 {offsets = [0, 0, 80], sizes = [8, 16, 16], strides = [1, 1, 1]} : vector<8x16x128xbf16> to vector<8x16x16xbf16>
    %162 = vector.extract_strided_slice %28 {offsets = [0, 0, 80], sizes = [8, 16, 16], strides = [1, 1, 1]} : vector<8x16x128xbf16> to vector<8x16x16xbf16>
    %163 = vector.extract_strided_slice %30 {offsets = [0, 0, 80], sizes = [8, 16, 16], strides = [1, 1, 1]} : vector<8x16x128xbf16> to vector<8x16x16xbf16>
    "tpu.trace_start"() <{level = 10 : i32, message = "bqd,bkd->bqk"}> : () -> ()
    %cst_57 = arith.constant dense<0.000000e+00> : vector<8x16x16xf32>
    %164 = tpu.matmul %161, %162, %cst_57 {dimension_numbers = #tpu.dot_dimension_numbers<[2], [2], [1], [1], [0, 0, 0, 1, 1, 1], [0], [0]>} : vector<8x16x16xbf16>, vector<8x16x16xbf16>, vector<8x16x16xf32> -> vector<8x16x16xf32>
    "tpu.trace_stop"() : () -> ()
    %cst_58 = arith.constant 2.500000e-01 : f32
    %165 = vector.broadcast %cst_58 : f32 to vector<8x16x16xf32>
    %166 = arith.mulf %164, %165 : vector<8x16x16xf32>
    %167 = vector.shape_cast %31 : vector<16x16xf32> to vector<1x16x16xf32>
    %168 = vector.broadcast %167 : vector<1x16x16xf32> to vector<8x16x16xf32>
    %169 = arith.addf %166, %168 : vector<8x16x16xf32>
    %cst_59 = arith.constant dense<0xFF800000> : vector<8x16xf32>
    %170 = vector.multi_reduction <maximumf>, %169, %cst_59 [2] : vector<8x16x16xf32> to vector<8x16xf32>
    %171 = vector.shape_cast %170 : vector<8x16xf32> to vector<8x16x1xf32>
    %172 = vector.broadcast %171 : vector<8x16x1xf32> to vector<8x16x16xf32>
    %173 = arith.subf %169, %172 : vector<8x16x16xf32>
    %174 = math.exp %173 : vector<8x16x16xf32>
    %cst_60 = arith.constant dense<0.000000e+00> : vector<8x16xf32>
    %175 = vector.multi_reduction <add>, %174, %cst_60 [2] : vector<8x16x16xf32> to vector<8x16xf32>
    %176 = vector.shape_cast %175 : vector<8x16xf32> to vector<8x16x1xf32>
    %177 = tpu.reciprocal %176 {approx = true} : vector<8x16x1xf32> -> vector<8x16x1xf32>
    %178 = vector.broadcast %177 : vector<8x16x1xf32> to vector<8x16x16xf32>
    %179 = arith.mulf %174, %178 : vector<8x16x16xf32>
    %180 = arith.truncf %179 : vector<8x16x16xf32> to vector<8x16x16xbf16>
    "tpu.trace_start"() <{level = 10 : i32, message = "bqk,bkd->bqd"}> : () -> ()
    %cst_61 = arith.constant dense<0.000000e+00> : vector<8x16x16xf32>
    %181 = tpu.matmul %180, %163, %cst_61 {dimension_numbers = #tpu.dot_dimension_numbers<[2], [1], [1], [2], [0, 0, 0, 1, 1, 2], [0], [0]>} : vector<8x16x16xbf16>, vector<8x16x16xbf16>, vector<8x16x16xf32> -> vector<8x16x16xf32>
    "tpu.trace_stop"() : () -> ()
    %182 = vector.shape_cast %181 : vector<8x16x16xf32> to vector<128x16xf32>
    %183 = arith.truncf %182 : vector<128x16xf32> to vector<128x16xbf16>
    %c80 = arith.constant 80 : index
    %c0_62 = arith.constant 0 : index
    %184 = vector.load %arg10[%c80, %c0_62] : memref<128x128xbf16, #tpu.memory_space<vmem>>, vector<16x128xbf16>
    %cst_63 = arith.constant dense<0.000000e+00> : vector<128x128xf32>
    %185 = tpu.matmul %183, %184, %cst_63 {dimension_numbers = #tpu.dot_dimension_numbers<[1], [0], [0], [1], [0, 0, 1, 1], [], []>} : vector<128x16xbf16>, vector<16x128xbf16>, vector<128x128xf32> -> vector<128x128xf32>
    %186 = arith.addf %160, %185 : vector<128x128xf32>
    %187 = vector.extract_strided_slice %26 {offsets = [0, 0, 96], sizes = [8, 16, 16], strides = [1, 1, 1]} : vector<8x16x128xbf16> to vector<8x16x16xbf16>
    %188 = vector.extract_strided_slice %28 {offsets = [0, 0, 96], sizes = [8, 16, 16], strides = [1, 1, 1]} : vector<8x16x128xbf16> to vector<8x16x16xbf16>
    %189 = vector.extract_strided_slice %30 {offsets = [0, 0, 96], sizes = [8, 16, 16], strides = [1, 1, 1]} : vector<8x16x128xbf16> to vector<8x16x16xbf16>
    "tpu.trace_start"() <{level = 10 : i32, message = "bqd,bkd->bqk"}> : () -> ()
    %cst_64 = arith.constant dense<0.000000e+00> : vector<8x16x16xf32>
    %190 = tpu.matmul %187, %188, %cst_64 {dimension_numbers = #tpu.dot_dimension_numbers<[2], [2], [1], [1], [0, 0, 0, 1, 1, 1], [0], [0]>} : vector<8x16x16xbf16>, vector<8x16x16xbf16>, vector<8x16x16xf32> -> vector<8x16x16xf32>
    "tpu.trace_stop"() : () -> ()
    %cst_65 = arith.constant 2.500000e-01 : f32
    %191 = vector.broadcast %cst_65 : f32 to vector<8x16x16xf32>
    %192 = arith.mulf %190, %191 : vector<8x16x16xf32>
    %193 = vector.shape_cast %31 : vector<16x16xf32> to vector<1x16x16xf32>
    %194 = vector.broadcast %193 : vector<1x16x16xf32> to vector<8x16x16xf32>
    %195 = arith.addf %192, %194 : vector<8x16x16xf32>
    %cst_66 = arith.constant dense<0xFF800000> : vector<8x16xf32>
    %196 = vector.multi_reduction <maximumf>, %195, %cst_66 [2] : vector<8x16x16xf32> to vector<8x16xf32>
    %197 = vector.shape_cast %196 : vector<8x16xf32> to vector<8x16x1xf32>
    %198 = vector.broadcast %197 : vector<8x16x1xf32> to vector<8x16x16xf32>
    %199 = arith.subf %195, %198 : vector<8x16x16xf32>
    %200 = math.exp %199 : vector<8x16x16xf32>
    %cst_67 = arith.constant dense<0.000000e+00> : vector<8x16xf32>
    %201 = vector.multi_reduction <add>, %200, %cst_67 [2] : vector<8x16x16xf32> to vector<8x16xf32>
    %202 = vector.shape_cast %201 : vector<8x16xf32> to vector<8x16x1xf32>
    %203 = tpu.reciprocal %202 {approx = true} : vector<8x16x1xf32> -> vector<8x16x1xf32>
    %204 = vector.broadcast %203 : vector<8x16x1xf32> to vector<8x16x16xf32>
    %205 = arith.mulf %200, %204 : vector<8x16x16xf32>
    %206 = arith.truncf %205 : vector<8x16x16xf32> to vector<8x16x16xbf16>
    "tpu.trace_start"() <{level = 10 : i32, message = "bqk,bkd->bqd"}> : () -> ()
    %cst_68 = arith.constant dense<0.000000e+00> : vector<8x16x16xf32>
    %207 = tpu.matmul %206, %189, %cst_68 {dimension_numbers = #tpu.dot_dimension_numbers<[2], [1], [1], [2], [0, 0, 0, 1, 1, 2], [0], [0]>} : vector<8x16x16xbf16>, vector<8x16x16xbf16>, vector<8x16x16xf32> -> vector<8x16x16xf32>
    "tpu.trace_stop"() : () -> ()
    %208 = vector.shape_cast %207 : vector<8x16x16xf32> to vector<128x16xf32>
    %209 = arith.truncf %208 : vector<128x16xf32> to vector<128x16xbf16>
    %c96 = arith.constant 96 : index
    %c0_69 = arith.constant 0 : index
    %210 = vector.load %arg10[%c96, %c0_69] : memref<128x128xbf16, #tpu.memory_space<vmem>>, vector<16x128xbf16>
    %cst_70 = arith.constant dense<0.000000e+00> : vector<128x128xf32>
    %211 = tpu.matmul %209, %210, %cst_70 {dimension_numbers = #tpu.dot_dimension_numbers<[1], [0], [0], [1], [0, 0, 1, 1], [], []>} : vector<128x16xbf16>, vector<16x128xbf16>, vector<128x128xf32> -> vector<128x128xf32>
    %212 = arith.addf %186, %211 : vector<128x128xf32>
    %213 = vector.extract_strided_slice %26 {offsets = [0, 0, 112], sizes = [8, 16, 16], strides = [1, 1, 1]} : vector<8x16x128xbf16> to vector<8x16x16xbf16>
    %214 = vector.extract_strided_slice %28 {offsets = [0, 0, 112], sizes = [8, 16, 16], strides = [1, 1, 1]} : vector<8x16x128xbf16> to vector<8x16x16xbf16>
    %215 = vector.extract_strided_slice %30 {offsets = [0, 0, 112], sizes = [8, 16, 16], strides = [1, 1, 1]} : vector<8x16x128xbf16> to vector<8x16x16xbf16>
    "tpu.trace_start"() <{level = 10 : i32, message = "bqd,bkd->bqk"}> : () -> ()
    %cst_71 = arith.constant dense<0.000000e+00> : vector<8x16x16xf32>
    %216 = tpu.matmul %213, %214, %cst_71 {dimension_numbers = #tpu.dot_dimension_numbers<[2], [2], [1], [1], [0, 0, 0, 1, 1, 1], [0], [0]>} : vector<8x16x16xbf16>, vector<8x16x16xbf16>, vector<8x16x16xf32> -> vector<8x16x16xf32>
    "tpu.trace_stop"() : () -> ()
    %cst_72 = arith.constant 2.500000e-01 : f32
    %217 = vector.broadcast %cst_72 : f32 to vector<8x16x16xf32>
    %218 = arith.mulf %216, %217 : vector<8x16x16xf32>
    %219 = vector.shape_cast %31 : vector<16x16xf32> to vector<1x16x16xf32>
    %220 = vector.broadcast %219 : vector<1x16x16xf32> to vector<8x16x16xf32>
    %221 = arith.addf %218, %220 : vector<8x16x16xf32>
    %cst_73 = arith.constant dense<0xFF800000> : vector<8x16xf32>
    %222 = vector.multi_reduction <maximumf>, %221, %cst_73 [2] : vector<8x16x16xf32> to vector<8x16xf32>
    %223 = vector.shape_cast %222 : vector<8x16xf32> to vector<8x16x1xf32>
    %224 = vector.broadcast %223 : vector<8x16x1xf32> to vector<8x16x16xf32>
    %225 = arith.subf %221, %224 : vector<8x16x16xf32>
    %226 = math.exp %225 : vector<8x16x16xf32>
    %cst_74 = arith.constant dense<0.000000e+00> : vector<8x16xf32>
    %227 = vector.multi_reduction <add>, %226, %cst_74 [2] : vector<8x16x16xf32> to vector<8x16xf32>
    %228 = vector.shape_cast %227 : vector<8x16xf32> to vector<8x16x1xf32>
    %229 = tpu.reciprocal %228 {approx = true} : vector<8x16x1xf32> -> vector<8x16x1xf32>
    %230 = vector.broadcast %229 : vector<8x16x1xf32> to vector<8x16x16xf32>
    %231 = arith.mulf %226, %230 : vector<8x16x16xf32>
    %232 = arith.truncf %231 : vector<8x16x16xf32> to vector<8x16x16xbf16>
    "tpu.trace_start"() <{level = 10 : i32, message = "bqk,bkd->bqd"}> : () -> ()
    %cst_75 = arith.constant dense<0.000000e+00> : vector<8x16x16xf32>
    %233 = tpu.matmul %232, %215, %cst_75 {dimension_numbers = #tpu.dot_dimension_numbers<[2], [1], [1], [2], [0, 0, 0, 1, 1, 2], [0], [0]>} : vector<8x16x16xbf16>, vector<8x16x16xbf16>, vector<8x16x16xf32> -> vector<8x16x16xf32>
    "tpu.trace_stop"() : () -> ()
    %234 = vector.shape_cast %233 : vector<8x16x16xf32> to vector<128x16xf32>
    %235 = arith.truncf %234 : vector<128x16xf32> to vector<128x16xbf16>
    %c112 = arith.constant 112 : index
    %c0_76 = arith.constant 0 : index
    %236 = vector.load %arg10[%c112, %c0_76] : memref<128x128xbf16, #tpu.memory_space<vmem>>, vector<16x128xbf16>
    %cst_77 = arith.constant dense<0.000000e+00> : vector<128x128xf32>
    %237 = tpu.matmul %235, %236, %cst_77 {dimension_numbers = #tpu.dot_dimension_numbers<[1], [0], [0], [1], [0, 0, 1, 1], [], []>} : vector<128x16xbf16>, vector<16x128xbf16>, vector<128x128xf32> -> vector<128x128xf32>
    %238 = arith.addf %212, %237 : vector<128x128xf32>
    %c0_78 = arith.constant 0 : index
    %c0_79 = arith.constant 0 : index
    %239 = vector.load %arg11[%c0_78, %c0_79] : memref<1x128xf32, #tpu.memory_space<vmem>>, vector<1x128xf32>
    %240 = vector.shape_cast %239 : vector<1x128xf32> to vector<128xf32>
    %241 = vector.shape_cast %240 : vector<128xf32> to vector<1x128xf32>
    %242 = vector.broadcast %241 : vector<1x128xf32> to vector<128x128xf32>
    %243 = arith.addf %238, %242 : vector<128x128xf32>
    %244 = vector.shape_cast %243 : vector<128x128xf32> to vector<8x16x128xf32>
    %c0_80 = arith.constant 0 : index
    %c0_81 = arith.constant 0 : index
    %c0_82 = arith.constant 0 : index
    %245 = vector.load %arg12[%c0_80, %c0_81, %c0_82] : memref<8x16x128xf32, #tpu.memory_space<vmem>>, vector<8x16x128xf32>
    tpu.vector_store %arg12[%c0_80, %c0_81, %c0_82], %244 {strides = array<i32>} : memref<8x16x128xf32, #tpu.memory_space<vmem>>, vector<8x16x128xf32>,
    return
  }
  func.func @transform_0(%arg0: i32) -> (i32, i32, i32) {
    %c0_i32 = arith.constant 0 : i32
    %c0_i32_0 = arith.constant 0 : i32
    %c0_i32_1 = arith.constant 0 : i32
    return %arg0, %c0_i32, %c0_i32_0 : i32, i32, i32
  }
  func.func @transform_1(%arg0: i32) -> (i32, i32, i32) {
    %c0_i32 = arith.constant 0 : i32
    %c0_i32_0 = arith.constant 0 : i32
    %c0_i32_1 = arith.constant 0 : i32
    return %arg0, %c0_i32, %c0_i32_0 : i32, i32, i32
  }
  func.func @transform_2(%arg0: i32) -> (i32, i32) {
    %c0_i32 = arith.constant 0 : i32
    %c0_i32_0 = arith.constant 0 : i32
    %c0_i32_1 = arith.constant 0 : i32
    return %c0_i32, %c0_i32_0 : i32, i32
  }
  func.func @transform_3(%arg0: i32) -> (i32, i32) {
    %c0_i32 = arith.constant 0 : i32
    %c0_i32_0 = arith.constant 0 : i32
    %c0_i32_1 = arith.constant 0 : i32
    return %c0_i32, %c0_i32_0 : i32, i32
  }
  func.func @transform_4(%arg0: i32) -> (i32, i32) {
    %c0_i32 = arith.constant 0 : i32
    %c0_i32_0 = arith.constant 0 : i32
    %c0_i32_1 = arith.constant 0 : i32
    return %c0_i32, %c0_i32_0 : i32, i32
  }
  func.func @transform_5(%arg0: i32) -> (i32, i32) {
    %c0_i32 = arith.constant 0 : i32
    %c0_i32_0 = arith.constant 0 : i32
    %c0_i32_1 = arith.constant 0 : i32
    return %c0_i32, %c0_i32_0 : i32, i32
  }
  func.func @transform_6(%arg0: i32) -> (i32, i32) {
    %c0_i32 = arith.constant 0 : i32
    %c0_i32_0 = arith.constant 0 : i32
    %c0_i32_1 = arith.constant 0 : i32
    return %c0_i32, %c0_i32_0 : i32, i32
  }
  func.func @transform_7(%arg0: i32) -> (i32, i32) {
    %c0_i32 = arith.constant 0 : i32
    %c0_i32_0 = arith.constant 0 : i32
    %c0_i32_1 = arith.constant 0 : i32
    return %c0_i32, %c0_i32_0 : i32, i32
  }
  func.func @transform_8(%arg0: i32) -> (i32, i32) {
    %c0_i32 = arith.constant 0 : i32
    %c0_i32_0 = arith.constant 0 : i32
    %c0_i32_1 = arith.constant 0 : i32
    return %c0_i32, %c0_i32_0 : i32, i32
  }
  func.func @transform_9(%arg0: i32) -> (i32, i32) {
    %c0_i32 = arith.constant 0 : i32
    %c0_i32_0 = arith.constant 0 : i32
    %c0_i32_1 = arith.constant 0 : i32
    return %c0_i32, %c0_i32_0 : i32, i32
  }
  func.func @transform_10(%arg0: i32) -> (i32, i32) {
    %c0_i32 = arith.constant 0 : i32
    %c0_i32_0 = arith.constant 0 : i32
    %c0_i32_1 = arith.constant 0 : i32
    return %c0_i32, %c0_i32_0 : i32, i32
  }
  func.func @transform_11(%arg0: i32) -> (i32, i32, i32) {
    %c0_i32 = arith.constant 0 : i32
    %c0_i32_0 = arith.constant 0 : i32
    %c0_i32_1 = arith.constant 0 : i32
    return %arg0, %c0_i32, %c0_i32_0 : i32, i32, i32
  }
}

</mosaic_0001>

<llo_original>
// kernel: tpu_custom_call.1
$region0: #{tpu_custom_call.1}
  #allocation0 [shape = 'u32[]', space=smem, size = 0x4, offset = 0x4, fixed_abs, tag = 'smem constant byte address 0x4 - core index']
  #allocation1 [shape = 'u32[144,128]{1,0:T(1,128)}', space=vmem, size = 0x12000, scoped, tag = 'internal scratch']
  %s0 = inlined_call_operand.hbm [shape: bf16[16,16,128], index: 0, kind: input, shape index: {}]
  %s1 = inlined_call_operand.hbm [shape: bf16[16,16,128], index: 1, kind: input, shape index: {}]
  %s2 = inlined_call_operand.hbm [shape: f32[16,16], index: 2, kind: input, shape index: {}]
  %s3 = inlined_call_operand.hbm [shape: bf16[128,128], index: 3, kind: input, shape index: {}]
  %s4 = inlined_call_operand.hbm [shape: f32[1,128], index: 4, kind: input, shape index: {}]
  %s5 = inlined_call_operand.hbm [shape: bf16[128,128], index: 5, kind: input, shape index: {}]
  %s6 = inlined_call_operand.hbm [shape: f32[1,128], index: 6, kind: input, shape index: {}]
  %s7 = inlined_call_operand.hbm [shape: bf16[128,128], index: 7, kind: input, shape index: {}]
  %s8 = inlined_call_operand.hbm [shape: f32[1,128], index: 8, kind: input, shape index: {}]
  %s9 = inlined_call_operand.hbm [shape: bf16[128,128], index: 9, kind: input, shape index: {}]
  %s10 = inlined_call_operand.hbm [shape: f32[1,128], index: 10, kind: input, shape index: {}]
  %s11 = inlined_call_operand.hbm [shape: f32[16,16,128], index: 11, kind: output, shape index: {}]
  %s12 = sld [smem:[#allocation0]]
  $region121: #{tpu_custom_call.1} parent=0
    _
  %s14 = ssub.s32 1, %s12
  %s15 = scalar_select 0, %s14, %s12
  $region1: #{tpu_custom_call.1} parent=0
    #allocation2 [shape = 'u8[65536]{0}', space=vmem, size = 0x10000, scoped, tag = 'input window, operand 0']
    #allocation3 [shape = 's32[2]{0}', space=sflag, size = 0x8, scoped, tag = 'scoped memory for tpu_custom_call.1']
    #allocation4 [shape = 's32[2]{0}', space=sflag, size = 0x8, scoped, tag = 'scoped memory for tpu_custom_call.1']
    #allocation5 [shape = 'u8[65536]{0}', space=vmem, size = 0x10000, scoped, tag = 'input window, operand 1']
    #allocation6 [shape = 's32[2]{0}', space=sflag, size = 0x8, scoped, tag = 'scoped memory for tpu_custom_call.1']
    #allocation7 [shape = 'u8[8192]{0}', space=vmem, size = 0x2000, scoped, tag = 'input window, operand 2, single buffered']
    #allocation8 [shape = 'u8[32768]{0}', space=vmem, size = 0x8000, scoped, tag = 'input window, operand 3, single buffered']
    #allocation9 [shape = 's32[1]{0}', space=sflag, size = 0x4, scoped, tag = 'scoped memory for tpu_custom_call.1']
    #allocation10 [shape = 'u8[512]{0}', space=vmem, size = 0x400, scoped, tag = 'input window, operand 4, single buffered']
    #allocation11 [shape = 'u8[32768]{0}', space=vmem, size = 0x8000, scoped, tag = 'input window, operand 5, single buffered']
    #allocation12 [shape = 's32[1]{0}', space=sflag, size = 0x4, scoped, tag = 'scoped memory for tpu_custom_call.1']
    #allocation13 [shape = 'u8[512]{0}', space=vmem, size = 0x400, scoped, tag = 'input window, operand 6, single buffered']
    #allocation14 [shape = 'u8[32768]{0}', space=vmem, size = 0x8000, scoped, tag = 'input window, operand 7, single buffered']
    #allocation15 [shape = 's32[1]{0}', space=sflag, size = 0x4, scoped, tag = 'scoped memory for tpu_custom_call.1']
    #allocation16 [shape = 'u8[512]{0}', space=vmem, size = 0x400, scoped, tag = 'input window, operand 8, single buffered']
    #allocation17 [shape = 'u8[32768]{0}', space=vmem, size = 0x8000, scoped, tag = 'input window, operand 9, single buffered']
    #allocation18 [shape = 's32[1]{0}', space=sflag, size = 0x4, scoped, tag = 'scoped memory for tpu_custom_call.1']
    #allocation19 [shape = 'u8[512]{0}', space=vmem, size = 0x400, scoped, tag = 'input window, operand 10, single buffered']
    #allocation20 [shape = 'u8[131072]{0}', space=vmem, size = 0x20000, scoped, tag = 'output window, operand 0']
    %16 = vsyncpa [#allocation3], 0
    %s17 = scalar_lea.sflag [#allocation3], 1
    %18 = vsyncpa %s17, 0
    %19 = vsyncpa [#allocation6], 0
    %s20 = scalar_lea.sflag [#allocation6], 1
    %21 = vsyncpa %s20, 0
    %22 = vsyncpa [#allocation9], 0
    %23 = vsyncpa [#allocation12], 0
    %24 = vsyncpa [#allocation15], 0
    %25 = vsyncpa [#allocation18], 0
    %26 = vsyncpa [#allocation4], 0
    %s27 = scalar_lea.sflag [#allocation4], 1
    %28 = vsyncpa %s27, 0
    loop: start=0, step=1, limit=4
    $region2: #{tpu_custom_call.1} parent=1 // loop_pre_header
      _
    $region3: #{tpu_custom_call.1} parent=1 // loop_header
      %s30 = sphi 0, %s34
      %p31 = scmp.ge.s32.totalorder %s30, 4
      %s40 = sphi 0, %s42
      %s43 = sphi 0, %s40
      %s44 = sphi 0, %s43
      %s60 = sphi 0, %s44
      %s66 = sphi 0, %s68
      %s69 = sphi 0, %s66
      %s70 = sphi 0, %s69
      %s86 = sphi 0, %s70
      %s90 = sphi 0, %s90
      %s92 = sphi 0, %s90
      %s93 = sphi 0, %s92
      %s107 = sphi 0, %s93
      %s111 = sphi 0, %s111
      %s113 = sphi 0, %s111
      %s114 = sphi 0, %s113
      %s128 = sphi 0, %s114
      %s132 = sphi 0, %s132
      %s134 = sphi 0, %s132
      %s135 = sphi 0, %s134
      %s149 = sphi 0, %s135
      %s153 = sphi 0, %s153
      %s155 = sphi 0, %s153
      %s156 = sphi 0, %s155
      %s170 = sphi 0, %s156
      %s174 = sphi 0, %s174
      %s176 = sphi 0, %s174
      %s177 = sphi 0, %s176
      %s191 = sphi 0, %s177
      %s195 = sphi 0, %s195
      %s197 = sphi 0, %s195
      %s198 = sphi 0, %s197
      %s212 = sphi 0, %s198
      %s216 = sphi 0, %s216
      %s218 = sphi 0, %s216
      %s219 = sphi 0, %s218
      %s233 = sphi 0, %s219
      %s237 = sphi 0, %s237
      %s239 = sphi 0, %s237
      %s240 = sphi 0, %s239
      %s254 = sphi 0, %s240
      %s258 = sphi 0, %s258
      %s260 = sphi 0, %s258
      %s261 = sphi 0, %s260
      %s275 = sphi 0, %s261
      %s281 = sphi 0, %s283
      %s284 = sphi 0, %s281
      %s285 = sphi 0, %s284
      %s301 = sphi 0, %s285
    $region4: #{tpu_custom_call.1} parent=1 // loop_header_branch
      %33 = sbr.rel (%p31) target = $region8
    $region5: #{tpu_custom_call.1} parent=1 // loop_body
      %s35 = ssub.s32 %s30, 1
      %s36 = ssub.s32 %s30, 2
      %s37 = sadd.s32 %s30, 1
      %s38 = ssub.s32 %s30, %s37
      %p39 = scmp.eq.s32.totalorder %s38, 0
      %s41 = sadd.s32 %s40, 1
      %s42 = scalar_select %p39, %s40, %s41
      %p45 = pneg %p39
      %p46 = scmp.eq.s32.totalorder %s30, 1
      %p47 = por %p45, %p46
      %p48 = scmp.ne.s32.totalorder %s40, %s43
      %p49 = scmp.eq.s32.totalorder %s30, 0
      %p50 = por %p48, %p49
      %p51 = scmp.ne.s32.totalorder %s40, %s43
      %p52 = scmp.eq.s32.totalorder %s35, 1
      %p53 = por %p51, %p52
      %p54 = scmp.ne.s32.totalorder %s43, %s44
      %p55 = scmp.eq.s32.totalorder %s35, 0
      %p56 = por %p54, %p55
      %p57 = scmp.ne.s32.totalorder %s43, %s44
      %p58 = scmp.eq.s32.totalorder %s36, 1
      %p59 = por %p57, %p58
      %p61 = scmp.ne.s32.totalorder %s44, %s60
      %p62 = scmp.eq.s32.totalorder %s36, 0
      %p63 = por %p61, %p62
      %s64 = ssub.s32 %s30, %s37
      %p65 = scmp.eq.s32.totalorder %s64, 0
      %s67 = sadd.s32 %s66, 1
      %s68 = scalar_select %p65, %s66, %s67
      %p71 = pneg %p65
      %p72 = scmp.eq.s32.totalorder %s30, 1
      %p73 = por %p71, %p72
      %p74 = scmp.ne.s32.totalorder %s66, %s69
      %p75 = scmp.eq.s32.totalorder %s30, 0
      %p76 = por %p74, %p75
      %p77 = scmp.ne.s32.totalorder %s66, %s69
      %p78 = scmp.eq.s32.totalorder %s35, 1
      %p79 = por %p77, %p78
      %p80 = scmp.ne.s32.totalorder %s69, %s70
      %p81 = scmp.eq.s32.totalorder %s35, 0
      %p82 = por %p80, %p81
      %p83 = scmp.ne.s32.totalorder %s69, %s70
      %p84 = scmp.eq.s32.totalorder %s36, 1
      %p85 = por %p83, %p84
      %p87 = scmp.ne.s32.totalorder %s70, %s86
      %p88 = scmp.eq.s32.totalorder %s36, 0
      %p89 = por %p87, %p88
      %s91 = sadd.s32 %s90, 1
      %p94 = scmp.eq.s32.totalorder %s30, 1
      %p95 = scmp.ne.s32.totalorder %s90, %s92
      %p96 = scmp.eq.s32.totalorder %s30, 0
      %p97 = por %p95, %p96
      %p98 = scmp.ne.s32.totalorder %s90, %s92
      %p99 = scmp.eq.s32.totalorder %s35, 1
      %p100 = por %p98, %p99
      %p101 = scmp.ne.s32.totalorder %s92, %s93
      %p102 = scmp.eq.s32.totalorder %s35, 0
      %p103 = por %p101, %p102
      %p104 = scmp.ne.s32.totalorder %s92, %s93
      %p105 = scmp.eq.s32.totalorder %s36, 1
      %p106 = por %p104, %p105
      %p108 = scmp.ne.s32.totalorder %s93, %s107
      %p109 = scmp.eq.s32.totalorder %s36, 0
      %p110 = por %p108, %p109
      %s112 = sadd.s32 %s111, 1
      %p115 = scmp.eq.s32.totalorder %s30, 1
      %p116 = scmp.ne.s32.totalorder %s111, %s113
      %p117 = scmp.eq.s32.totalorder %s30, 0
      %p118 = por %p116, %p117
      %p119 = scmp.ne.s32.totalorder %s111, %s113
      %p120 = scmp.eq.s32.totalorder %s35, 1
      %p121 = por %p119, %p120
      %p122 = scmp.ne.s32.totalorder %s113, %s114
      %p123 = scmp.eq.s32.totalorder %s35, 0
      %p124 = por %p122, %p123
      %p125 = scmp.ne.s32.totalorder %s113, %s114
      %p126 = scmp.eq.s32.totalorder %s36, 1
      %p127 = por %p125, %p126
      %p129 = scmp.ne.s32.totalorder %s114, %s128
      %p130 = scmp.eq.s32.totalorder %s36, 0
      %p131 = por %p129, %p130
      %s133 = sadd.s32 %s132, 1
      %p136 = scmp.eq.s32.totalorder %s30, 1
      %p137 = scmp.ne.s32.totalorder %s132, %s134
      %p138 = scmp.eq.s32.totalorder %s30, 0
      %p139 = por %p137, %p138
      %p140 = scmp.ne.s32.totalorder %s132, %s134
      %p141 = scmp.eq.s32.totalorder %s35, 1
      %p142 = por %p140, %p141
      %p143 = scmp.ne.s32.totalorder %s134, %s135
      %p144 = scmp.eq.s32.totalorder %s35, 0
      %p145 = por %p143, %p144
      %p146 = scmp.ne.s32.totalorder %s134, %s135
      %p147 = scmp.eq.s32.totalorder %s36, 1
      %p148 = por %p146, %p147
      %p150 = scmp.ne.s32.totalorder %s135, %s149
      %p151 = scmp.eq.s32.totalorder %s36, 0
      %p152 = por %p150, %p151
      %s154 = sadd.s32 %s153, 1
      %p157 = scmp.eq.s32.totalorder %s30, 1
      %p158 = scmp.ne.s32.totalorder %s153, %s155
      %p159 = scmp.eq.s32.totalorder %s30, 0
      %p160 = por %p158, %p159
      %p161 = scmp.ne.s32.totalorder %s153, %s155
      %p162 = scmp.eq.s32.totalorder %s35, 1
      %p163 = por %p161, %p162
      %p164 = scmp.ne.s32.totalorder %s155, %s156
      %p165 = scmp.eq.s32.totalorder %s35, 0
      %p166 = por %p164, %p165
      %p167 = scmp.ne.s32.totalorder %s155, %s156
      %p168 = scmp.eq.s32.totalorder %s36, 1
      %p169 = por %p167, %p168
      %p171 = scmp.ne.s32.totalorder %s156, %s170
      %p172 = scmp.eq.s32.totalorder %s36, 0
      %p173 = por %p171, %p172
      %s175 = sadd.s32 %s174, 1
      %p178 = scmp.eq.s32.totalorder %s30, 1
      %p179 = scmp.ne.s32.totalorder %s174, %s176
      %p180 = scmp.eq.s32.totalorder %s30, 0
      %p181 = por %p179, %p180
      %p182 = scmp.ne.s32.totalorder %s174, %s176
      %p183 = scmp.eq.s32.totalorder %s35, 1
      %p184 = por %p182, %p183
      %p185 = scmp.ne.s32.totalorder %s176, %s177
      %p186 = scmp.eq.s32.totalorder %s35, 0
      %p187 = por %p185, %p186
      %p188 = scmp.ne.s32.totalorder %s176, %s177
      %p189 = scmp.eq.s32.totalorder %s36, 1
      %p190 = por %p188, %p189
      %p192 = scmp.ne.s32.totalorder %s177, %s191
      %p193 = scmp.eq.s32.totalorder %s36, 0
      %p194 = por %p192, %p193
      %s196 = sadd.s32 %s195, 1
      %p199 = scmp.eq.s32.totalorder %s30, 1
      %p200 = scmp.ne.s32.totalorder %s195, %s197
      %p201 = scmp.eq.s32.totalorder %s30, 0
      %p202 = por %p200, %p201
      %p203 = scmp.ne.s32.totalorder %s195, %s197
      %p204 = scmp.eq.s32.totalorder %s35, 1
      %p205 = por %p203, %p204
      %p206 = scmp.ne.s32.totalorder %s197, %s198
      %p207 = scmp.eq.s32.totalorder %s35, 0
      %p208 = por %p206, %p207
      %p209 = scmp.ne.s32.totalorder %s197, %s198
      %p210 = scmp.eq.s32.totalorder %s36, 1
      %p211 = por %p209, %p210
      %p213 = scmp.ne.s32.totalorder %s198, %s212
      %p214 = scmp.eq.s32.totalorder %s36, 0
      %p215 = por %p213, %p214
      %s217 = sadd.s32 %s216, 1
      %p220 = scmp.eq.s32.totalorder %s30, 1
      %p221 = scmp.ne.s32.totalorder %s216, %s218
      %p222 = scmp.eq.s32.totalorder %s30, 0
      %p223 = por %p221, %p222
      %p224 = scmp.ne.s32.totalorder %s216, %s218
      %p225 = scmp.eq.s32.totalorder %s35, 1
      %p226 = por %p224, %p225
      %p227 = scmp.ne.s32.totalorder %s218, %s219
      %p228 = scmp.eq.s32.totalorder %s35, 0
      %p229 = por %p227, %p228
      %p230 = scmp.ne.s32.totalorder %s218, %s219
      %p231 = scmp.eq.s32.totalorder %s36, 1
      %p232 = por %p230, %p231
      %p234 = scmp.ne.s32.totalorder %s219, %s233
      %p235 = scmp.eq.s32.totalorder %s36, 0
      %p236 = por %p234, %p235
      %s238 = sadd.s32 %s237, 1
      %p241 = scmp.eq.s32.totalorder %s30, 1
      %p242 = scmp.ne.s32.totalorder %s237, %s239
      %p243 = scmp.eq.s32.totalorder %s30, 0
      %p244 = por %p242, %p243
      %p245 = scmp.ne.s32.totalorder %s237, %s239
      %p246 = scmp.eq.s32.totalorder %s35, 1
      %p247 = por %p245, %p246
      %p248 = scmp.ne.s32.totalorder %s239, %s240
      %p249 = scmp.eq.s32.totalorder %s35, 0
      %p250 = por %p248, %p249
      %p251 = scmp.ne.s32.totalorder %s239, %s240
      %p252 = scmp.eq.s32.totalorder %s36, 1
      %p253 = por %p251, %p252
      %p255 = scmp.ne.s32.totalorder %s240, %s254
      %p256 = scmp.eq.s32.totalorder %s36, 0
      %p257 = por %p255, %p256
      %s259 = sadd.s32 %s258, 1
      %p262 = scmp.eq.s32.totalorder %s30, 1
      %p263 = scmp.ne.s32.totalorder %s258, %s260
      %p264 = scmp.eq.s32.totalorder %s30, 0
      %p265 = por %p263, %p264
      %p266 = scmp.ne.s32.totalorder %s258, %s260
      %p267 = scmp.eq.s32.totalorder %s35, 1
      %p268 = por %p266, %p267
      %p269 = scmp.ne.s32.totalorder %s260, %s261
      %p270 = scmp.eq.s32.totalorder %s35, 0
      %p271 = por %p269, %p270
      %p272 = scmp.ne.s32.totalorder %s260, %s261
      %p273 = scmp.eq.s32.totalorder %s36, 1
      %p274 = por %p272, %p273
      %p276 = scmp.ne.s32.totalorder %s261, %s275
      %p277 = scmp.eq.s32.totalorder %s36, 0
      %p278 = por %p276, %p277
      %s279 = ssub.s32 %s30, %s37
      %p280 = scmp.eq.s32.totalorder %s279, 0
      %s282 = sadd.s32 %s281, 1
      %s283 = scalar_select %p280, %s281, %s282
      %p286 = pneg %p280
      %p287 = scmp.eq.s32.totalorder %s30, 1
      %p288 = por %p286, %p287
      %p289 = scmp.ne.s32.totalorder %s281, %s284
      %p290 = scmp.eq.s32.totalorder %s30, 0
      %p291 = por %p289, %p290
      %p292 = scmp.ne.s32.totalorder %s281, %s284
      %p293 = scmp.eq.s32.totalorder %s35, 1
      %p294 = por %p292, %p293
      %p295 = scmp.ne.s32.totalorder %s284, %s285
      %p296 = scmp.eq.s32.totalorder %s35, 0
      %p297 = por %p295, %p296
      %p298 = scmp.ne.s32.totalorder %s284, %s285
      %p299 = scmp.eq.s32.totalorder %s36, 1
      %p300 = por %p298, %p299
      %p302 = scmp.ne.s32.totalorder %s285, %s301
      %p303 = scmp.eq.s32.totalorder %s36, 0
      %p304 = por %p302, %p303
      %p305 = scmp.le.s32.totalorder 1, %s30
      %p306 = scmp.lt.s32.totalorder %s30, 3
      %p307 = pnand %p305, %p306
      %p308 = pneg %p307
      // Predicated region
      $region9: #{tpu_custom_call.1} parent=5 // pred_check
        _
      $region10: #{tpu_custom_call.1} parent=5 // pred_check_branch
        %310 = sbr.rel (%p307) target = $region12
      $region11: #{tpu_custom_call.1} parent=5 // pred_region
        %s311 = ssub.s32 %s30, 1
        // Predicated region
        $region13: #{tpu_custom_call.1} parent=11 // pred_check
          %p312 = pneg %p103
        $region14: #{tpu_custom_call.1} parent=11 // pred_check_branch
          %314 = sbr.rel (%p312) target = $region16
        $region15: #{tpu_custom_call.1} parent=11 // pred_region
          %s316 = ssub.s32 256, 256
          %317 = vsyncadd [#allocation6], %s316
          %s318 = sshll.u32 [#allocation7], 4
          %s319 = int_to_ptr.vmem [resolvable:$true] %s318
          %324 = dma.hbm_to_vmem [thread:$0]  %s2, 256, %s319, [#allocation6], 128, 128, 8
        $region16: #{tpu_custom_call.1} parent=11 // pred_fallthru
          _
        // Predicated region
        $region17: #{tpu_custom_call.1} parent=11 // pred_check
          %p325 = pneg %p124
        $region18: #{tpu_custom_call.1} parent=11 // pred_check_branch
          %327 = sbr.rel (%p325) target = $region20
        $region19: #{tpu_custom_call.1} parent=11 // pred_region
          %s329 = ssub.s32 1024, 1024
          %330 = vsyncadd [#allocation9], %s329
          %s331 = sshll.u32 [#allocation8], 4
          %s332 = int_to_ptr.vmem [resolvable:$true] %s331
          %337 = dma.hbm_to_vmem [thread:$0]  %s3, 1024, %s332, [#allocation9], 64, 64, 4
        $region20: #{tpu_custom_call.1} parent=11 // pred_fallthru
          _
        // Predicated region
        $region21: #{tpu_custom_call.1} parent=11 // pred_check
          %p338 = pneg %p145
        $region22: #{tpu_custom_call.1} parent=11 // pred_check_branch
          %340 = sbr.rel (%p338) target = $region24
        $region23: #{tpu_custom_call.1} parent=11 // pred_region
          %s342 = ssub.s32 16, 16
          %343 = vsyncadd [#allocation9], %s342
          %s345 = sshll.u32 [#allocation10], 4
          %s346 = int_to_ptr.vmem [resolvable:$true] %s345
          %348 = dma.hbm_to_vmem [thread:$0]  %s4, 16, %s346, [#allocation9]
        $region24: #{tpu_custom_call.1} parent=11 // pred_fallthru
          _
        // Predicated region
        $region25: #{tpu_custom_call.1} parent=11 // pred_check
          %p349 = pneg %p166
        $region26: #{tpu_custom_call.1} parent=11 // pred_check_branch
          %351 = sbr.rel (%p349) target = $region28
        $region27: #{tpu_custom_call.1} parent=11 // pred_region
          %s353 = ssub.s32 1024, 1024
          %354 = vsyncadd [#allocation12], %s353
          %s355 = sshll.u32 [#allocation11], 4
          %s356 = int_to_ptr.vmem [resolvable:$true] %s355
          %361 = dma.hbm_to_vmem [thread:$0]  %s5, 1024, %s356, [#allocation12], 64, 64, 4
        $region28: #{tpu_custom_call.1} parent=11 // pred_fallthru
          _
        // Predicated region
        $region29: #{tpu_custom_call.1} parent=11 // pred_check
          %p362 = pneg %p187
        $region30: #{tpu_custom_call.1} parent=11 // pred_check_branch
          %364 = sbr.rel (%p362) target = $region32
        $region31: #{tpu_custom_call.1} parent=11 // pred_region
          %s366 = ssub.s32 16, 16
          %367 = vsyncadd [#allocation12], %s366
          %s369 = sshll.u32 [#allocation13], 4
          %s370 = int_to_ptr.vmem [resolvable:$true] %s369
          %372 = dma.hbm_to_vmem [thread:$0]  %s6, 16, %s370, [#allocation12]
        $region32: #{tpu_custom_call.1} parent=11 // pred_fallthru
          _
        // Predicated region
        $region33: #{tpu_custom_call.1} parent=11 // pred_check
          %p373 = pneg %p208
        $region34: #{tpu_custom_call.1} parent=11 // pred_check_branch
          %375 = sbr.rel (%p373) target = $region36
        $region35: #{tpu_custom_call.1} parent=11 // pred_region
          %s377 = ssub.s32 1024, 1024
          %378 = vsyncadd [#allocation15], %s377
          %s379 = sshll.u32 [#allocation14], 4
          %s380 = int_to_ptr.vmem [resolvable:$true] %s379
          %385 = dma.hbm_to_vmem [thread:$0]  %s7, 1024, %s380, [#allocation15], 64, 64, 4
        $region36: #{tpu_custom_call.1} parent=11 // pred_fallthru
          _
        // Predicated region
        $region37: #{tpu_custom_call.1} parent=11 // pred_check
          %p386 = pneg %p229
        $region38: #{tpu_custom_call.1} parent=11 // pred_check_branch
          %388 = sbr.rel (%p386) target = $region40
        $region39: #{tpu_custom_call.1} parent=11 // pred_region
          %s390 = ssub.s32 16, 16
          %391 = vsyncadd [#allocation15], %s390
          %s393 = sshll.u32 [#allocation16], 4
          %s394 = int_to_ptr.vmem [resolvable:$true] %s393
          %396 = dma.hbm_to_vmem [thread:$0]  %s8, 16, %s394, [#allocation15]
        $region40: #{tpu_custom_call.1} parent=11 // pred_fallthru
          _
        // Predicated region
        $region41: #{tpu_custom_call.1} parent=11 // pred_check
          %p397 = pneg %p250
        $region42: #{tpu_custom_call.1} parent=11 // pred_check_branch
          %399 = sbr.rel (%p397) target = $region44
        $region43: #{tpu_custom_call.1} parent=11 // pred_region
          %s401 = ssub.s32 1024, 1024
          %402 = vsyncadd [#allocation18], %s401
          %s403 = sshll.u32 [#allocation17], 4
          %s404 = int_to_ptr.vmem [resolvable:$true] %s403
          %409 = dma.hbm_to_vmem [thread:$0]  %s9, 1024, %s404, [#allocation18], 64, 64, 4
        $region44: #{tpu_custom_call.1} parent=11 // pred_fallthru
          _
        // Predicated region
        $region45: #{tpu_custom_call.1} parent=11 // pred_check
          %p410 = pneg %p271
        $region46: #{tpu_custom_call.1} parent=11 // pred_check_branch
          %412 = sbr.rel (%p410) target = $region48
        $region47: #{tpu_custom_call.1} parent=11 // pred_region
          %s414 = ssub.s32 16, 16
          %415 = vsyncadd [#allocation18], %s414
          %s417 = sshll.u32 [#allocation19], 4
          %s418 = int_to_ptr.vmem [resolvable:$true] %s417
          %420 = dma.hbm_to_vmem [thread:$0]  %s10, 16, %s418, [#allocation18]
        $region48: #{tpu_custom_call.1} parent=11 // pred_fallthru
          _
      $region12: #{tpu_custom_call.1} parent=5 // pred_fallthru
        _
      %p421 = scmp.lt.s32.totalorder %s30, 2
      // Predicated region
      $region49: #{tpu_custom_call.1} parent=5 // pred_check
        %p422 = pneg %p421
      $region50: #{tpu_custom_call.1} parent=5 // pred_check_branch
        %424 = sbr.rel (%p422) target = $region52
      $region51: #{tpu_custom_call.1} parent=5 // pred_region
        // Predicated region
        $region53: #{tpu_custom_call.1} parent=51 // pred_check
          %p425 = pneg %p50
        $region54: #{tpu_custom_call.1} parent=51 // pred_check_branch
          %427 = sbr.rel (%p425) target = $region56
        $region55: #{tpu_custom_call.1} parent=51 // pred_region
          %s428 = sand.u32 %s40, 1
          %s429 = scalar_lea.sflag [#allocation3], %s428
          %s430 = sand.u32 %s40, 1
          %s431 = smul.addr %s430, 64
          %s432 = scalar_lea.vmem [#allocation2], %s431
          %s433 = smul.u32 8, %s30
          %s435 = ssub.s32 1024, 1024
          %436 = vsyncadd %s429, %s435
          %s437 = smul.addr %s433, 2
          %s438 = smul.addr %s437, 64
          %s439 = scalar_lea.hbm %s0, %s438
          %s440 = sshll.u32 %s432, 4
          %s441 = int_to_ptr.vmem [resolvable:$true] %s440
          %446 = dma.hbm_to_vmem [thread:$0]  %s439, 1024, %s441, %s429, 64, 64, 4
        $region56: #{tpu_custom_call.1} parent=51 // pred_fallthru
          _
        // Predicated region
        $region57: #{tpu_custom_call.1} parent=51 // pred_check
          %p447 = pneg %p76
        $region58: #{tpu_custom_call.1} parent=51 // pred_check_branch
          %449 = sbr.rel (%p447) target = $region60
        $region59: #{tpu_custom_call.1} parent=51 // pred_region
          %s450 = sand.u32 %s30, 1
          %s451 = scalar_lea.sflag [#allocation6], %s450
          %s452 = sand.u32 %s66, 1
          %s453 = smul.addr %s452, 64
          %s454 = scalar_lea.vmem [#allocation5], %s453
          %s455 = smul.u32 8, %s30
          %s457 = ssub.s32 1024, 1024
          %458 = vsyncadd %s451, %s457
          %s459 = smul.addr %s455, 2
          %s460 = smul.addr %s459, 64
          %s461 = scalar_lea.hbm %s1, %s460
          %s462 = sshll.u32 %s454, 4
          %s463 = int_to_ptr.vmem [resolvable:$true] %s462
          %468 = dma.hbm_to_vmem [thread:$0]  %s461, 1024, %s463, %s451, 64, 64, 4
        $region60: #{tpu_custom_call.1} parent=51 // pred_fallthru
          _
      $region52: #{tpu_custom_call.1} parent=5 // pred_fallthru
        _
      %p469 = scmp.le.s32.totalorder 1, %s30
      %p470 = scmp.lt.s32.totalorder %s30, 3
      %p471 = pnand %p469, %p470
      %p472 = pneg %p471
      // Predicated region
      $region61: #{tpu_custom_call.1} parent=5 // pred_check
        _
      $region62: #{tpu_custom_call.1} parent=5 // pred_check_branch
        %474 = sbr.rel (%p471) target = $region64
      $region63: #{tpu_custom_call.1} parent=5 // pred_region
        %s475 = ssub.s32 %s30, 1
        %s476 = sand.u32 %s43, 1
        %s477 = scalar_lea.sflag [#allocation3], %s476
        %s478 = sand.u32 %s43, 1
        %s479 = smul.addr %s478, 64
        %s480 = scalar_lea.vmem [#allocation2], %s479
        // Predicated region
        $region65: #{tpu_custom_call.1} parent=63 // pred_check
          %p481 = pneg %p56
        $region66: #{tpu_custom_call.1} parent=63 // pred_check_branch
          %483 = sbr.rel (%p481) target = $region68
        $region67: #{tpu_custom_call.1} parent=63 // pred_region
          %484 = dma.done %s477, 1024
        $region68: #{tpu_custom_call.1} parent=63 // pred_fallthru
          _
        %s485 = sand.u32 %s35, 1
        %s486 = scalar_lea.sflag [#allocation6], %s485
        %s487 = sand.u32 %s69, 1
        %s488 = smul.addr %s487, 64
        %s489 = scalar_lea.vmem [#allocation5], %s488
        // Predicated region
        $region69: #{tpu_custom_call.1} parent=63 // pred_check
          %p490 = pneg %p82
        $region70: #{tpu_custom_call.1} parent=63 // pred_check_branch
          %492 = sbr.rel (%p490) target = $region72
        $region71: #{tpu_custom_call.1} parent=63 // pred_region
          %493 = dma.done %s486, 1024
        $region72: #{tpu_custom_call.1} parent=63 // pred_fallthru
          _
        // Predicated region
        $region73: #{tpu_custom_call.1} parent=63 // pred_check
          %p494 = pneg %p103
        $region74: #{tpu_custom_call.1} parent=63 // pred_check_branch
          %496 = sbr.rel (%p494) target = $region76
        $region75: #{tpu_custom_call.1} parent=63 // pred_region
          %497 = dma.done [#allocation6], 256
        $region76: #{tpu_custom_call.1} parent=63 // pred_fallthru
          _
        // Predicated region
        $region77: #{tpu_custom_call.1} parent=63 // pred_check
          %p498 = pneg %p124
        $region78: #{tpu_custom_call.1} parent=63 // pred_check_branch
          %500 = sbr.rel (%p498) target = $region80
        $region79: #{tpu_custom_call.1} parent=63 // pred_region
          %501 = dma.done [#allocation9], 1024
        $region80: #{tpu_custom_call.1} parent=63 // pred_fallthru
          _
        // Predicated region
        $region81: #{tpu_custom_call.1} parent=63 // pred_check
          %p502 = pneg %p145
        $region82: #{tpu_custom_call.1} parent=63 // pred_check_branch
          %504 = sbr.rel (%p502) target = $region84
        $region83: #{tpu_custom_call.1} parent=63 // pred_region
          %505 = dma.done [#allocation9], 16
        $region84: #{tpu_custom_call.1} parent=63 // pred_fallthru
          _
        // Predicated region
        $region85: #{tpu_custom_call.1} parent=63 // pred_check
          %p506 = pneg %p166
        $region86: #{tpu_custom_call.1} parent=63 // pred_check_branch
          %508 = sbr.rel (%p506) target = $region88
        $region87: #{tpu_custom_call.1} parent=63 // pred_region
          %509 = dma.done [#allocation12], 1024
        $region88: #{tpu_custom_call.1} parent=63 // pred_fallthru
          _
        // Predicated region
        $region89: #{tpu_custom_call.1} parent=63 // pred_check
          %p510 = pneg %p187
        $region90: #{tpu_custom_call.1} parent=63 // pred_check_branch
          %512 = sbr.rel (%p510) target = $region92
        $region91: #{tpu_custom_call.1} parent=63 // pred_region
          %513 = dma.done [#allocation12], 16
        $region92: #{tpu_custom_call.1} parent=63 // pred_fallthru
          _
        // Predicated region
        $region93: #{tpu_custom_call.1} parent=63 // pred_check
          %p514 = pneg %p208
        $region94: #{tpu_custom_call.1} parent=63 // pred_check_branch
          %516 = sbr.rel (%p514) target = $region96
        $region95: #{tpu_custom_call.1} parent=63 // pred_region
          %517 = dma.done [#allocation15], 1024
        $region96: #{tpu_custom_call.1} parent=63 // pred_fallthru
          _
        // Predicated region
        $region97: #{tpu_custom_call.1} parent=63 // pred_check
          %p518 = pneg %p229
        $region98: #{tpu_custom_call.1} parent=63 // pred_check_branch
          %520 = sbr.rel (%p518) target = $region100
        $region99: #{tpu_custom_call.1} parent=63 // pred_region
          %521 = dma.done [#allocation15], 16
        $region100: #{tpu_custom_call.1} parent=63 // pred_fallthru
          _
        // Predicated region
        $region101: #{tpu_custom_call.1} parent=63 // pred_check
          %p522 = pneg %p250
        $region102: #{tpu_custom_call.1} parent=63 // pred_check_branch
          %524 = sbr.rel (%p522) target = $region104
        $region103: #{tpu_custom_call.1} parent=63 // pred_region
          %525 = dma.done [#allocation18], 1024
        $region104: #{tpu_custom_call.1} parent=63 // pred_fallthru
          _
        // Predicated region
        $region105: #{tpu_custom_call.1} parent=63 // pred_check
          %p526 = pneg %p271
        $region106: #{tpu_custom_call.1} parent=63 // pred_check_branch
          %528 = sbr.rel (%p526) target = $region108
        $region107: #{tpu_custom_call.1} parent=63 // pred_region
          %529 = dma.done [#allocation18], 16
        $region108: #{tpu_custom_call.1} parent=63 // pred_fallthru
          _
        %s530 = sand.u32 %s43, 1
        %s531 = scalar_lea.sflag [#allocation3], %s530
        %s532 = sand.u32 %s43, 1
        %s533 = smul.addr %s532, 64
        %s534 = scalar_lea.vmem [#allocation2], %s533
        %p535 = pneg %p56
        %p536 = pneg %p53
        %s537 = sand.u32 %s35, 1
        %s538 = scalar_lea.sflag [#allocation6], %s537
        %s539 = sand.u32 %s69, 1
        %s540 = smul.addr %s539, 64
        %s541 = scalar_lea.vmem [#allocation5], %s540
        %p542 = pneg %p82
        %p543 = pneg %p79
        %p544 = pneg %p103
        %p545 = pneg %p100
        %p546 = pneg %p124
        %p547 = pneg %p121
        %p548 = pneg %p145
        %p549 = pneg %p142
        %p550 = pneg %p166
        %p551 = pneg %p163
        %p552 = pneg %p187
        %p553 = pneg %p184
        %p554 = pneg %p208
        %p555 = pneg %p205
        %p556 = pneg %p229
        %p557 = pneg %p226
        %p558 = pneg %p250
        %p559 = pneg %p247
        %p560 = pneg %p271
        %p561 = pneg %p268
        %p562 = pneg %p297
        %p563 = pneg %p294
        %s564 = sand.u32 %s284, 1
        %s565 = scalar_lea.sflag [#allocation4], %s564
        %s566 = sand.u32 %s284, 1
        %s567 = smul.addr %s566, 128
        %s568 = scalar_lea.vmem [#allocation20], %s567
        %s569 = smul.u32 8, %s35
        %s570 = smul.u32 8, %s35
        %s571 = smul.u32 8, %s35
        %v573 = vld [vmem:[%s480] sm:$0xf]
        %v574 = vld [vmem:[%s480 + $0x4] sm:$0xf]
        %v575 = vld [vmem:[%s480 + $0x8] sm:$0xf]
        %v576 = vld [vmem:[%s480 + $0xc] sm:$0xf]
        %v577 = vld [vmem:[%s480 + $0x10] sm:$0xf]
        %v578 = vld [vmem:[%s480 + $0x14] sm:$0xf]
        %v579 = vld [vmem:[%s480 + $0x18] sm:$0xf]
        %v580 = vld [vmem:[%s480 + $0x1c] sm:$0xf]
        %v581 = vld [vmem:[%s480 + $0x20] sm:$0xf]
        %v582 = vld [vmem:[%s480 + $0x24] sm:$0xf]
        %v583 = vld [vmem:[%s480 + $0x28] sm:$0xf]
        %v584 = vld [vmem:[%s480 + $0x2c] sm:$0xf]
        %v585 = vld [vmem:[%s480 + $0x30] sm:$0xf]
        %v586 = vld [vmem:[%s480 + $0x34] sm:$0xf]
        %v587 = vld [vmem:[%s480 + $0x38] sm:$0xf]
        %v588 = vld [vmem:[%s480 + $0x3c] sm:$0xf]
        %v589 = vld [vmem:[%s489] sm:$0xf]
        %v590 = vld [vmem:[%s489 + $0x4] sm:$0xf]
        %v591 = vld [vmem:[%s489 + $0x8] sm:$0xf]
        %v592 = vld [vmem:[%s489 + $0xc] sm:$0xf]
        %v593 = vld [vmem:[%s489 + $0x10] sm:$0xf]
        %v594 = vld [vmem:[%s489 + $0x14] sm:$0xf]
        %v595 = vld [vmem:[%s489 + $0x18] sm:$0xf]
        %v596 = vld [vmem:[%s489 + $0x1c] sm:$0xf]
        %v597 = vld [vmem:[%s489 + $0x20] sm:$0xf]
        %v598 = vld [vmem:[%s489 + $0x24] sm:$0xf]
        %v599 = vld [vmem:[%s489 + $0x28] sm:$0xf]
        %v600 = vld [vmem:[%s489 + $0x2c] sm:$0xf]
        %v601 = vld [vmem:[%s489 + $0x30] sm:$0xf]
        %v602 = vld [vmem:[%s489 + $0x34] sm:$0xf]
        %v603 = vld [vmem:[%s489 + $0x38] sm:$0xf]
        %v604 = vld [vmem:[%s489 + $0x3c] sm:$0xf]
        %v605 = vld [vmem:[#allocation8] sm:$0xf]
        %v606 = vld [vmem:[#allocation8 + $0x4] sm:$0xf]
        %v607 = vld [vmem:[#allocation8 + $0x8] sm:$0xf]
        %v608 = vld [vmem:[#allocation8 + $0xc] sm:$0xf]
        %v609 = vld [vmem:[#allocation8 + $0x10] sm:$0xf]
        %v610 = vld [vmem:[#allocation8 + $0x14] sm:$0xf]
        %v611 = vld [vmem:[#allocation8 + $0x18] sm:$0xf]
        %v612 = vld [vmem:[#allocation8 + $0x1c] sm:$0xf]
        %v613 = vld [vmem:[#allocation8 + $0x20] sm:$0xf]
        %v614 = vld [vmem:[#allocation8 + $0x24] sm:$0xf]
        %v615 = vld [vmem:[#allocation8 + $0x28] sm:$0xf]
        %v616 = vld [vmem:[#allocation8 + $0x2c] sm:$0xf]
        %v617 = vld [vmem:[#allocation8 + $0x30] sm:$0xf]
        %v618 = vld [vmem:[#allocation8 + $0x34] sm:$0xf]
        %v619 = vld [vmem:[#allocation8 + $0x38] sm:$0xf]
        %v620 = vld [vmem:[#allocation8 + $0x3c] sm:$0xf]
        %v621 = vld [vmem:[#allocation10] sm:$0x1]
        %v623 = vlaneseq
        %v624 = vshrl.u32 %v623, 7
        %v625 = vsub.s32 0, %v624
        %v626 = vrot.slane %v621, %v625
        %v644 = vunpack.c.l.b16 %v573
        %v645 = vunpack.c.l.b16 %v574
        %v646 = vunpack.c.l.b16 %v575
        %v647 = vunpack.c.l.b16 %v576
        %v648 = vunpack.c.l.b16 %v577
        %v649 = vunpack.c.l.b16 %v578
        %v650 = vunpack.c.l.b16 %v579
        %v651 = vunpack.c.l.b16 %v580
        %v652 = vunpack.c.l.b16 %v581
        %v653 = vunpack.c.l.b16 %v582
        %v654 = vunpack.c.l.b16 %v583
        %v655 = vunpack.c.l.b16 %v584
        %v656 = vunpack.c.l.b16 %v585
        %v657 = vunpack.c.l.b16 %v586
        %v658 = vunpack.c.l.b16 %v587
        %v659 = vunpack.c.l.b16 %v588
        %v660 = vpack.c.b16 %v645, %v644
        %v661 = vpack.c.b16 %v647, %v646
        %v662 = vpack.c.b16 %v649, %v648
        %v663 = vpack.c.b16 %v651, %v650
        %v664 = vpack.c.b16 %v653, %v652
        %v665 = vpack.c.b16 %v655, %v654
        %v666 = vpack.c.b16 %v657, %v656
        %v667 = vpack.c.b16 %v659, %v658
        %v692 = vunpack.c.l.b16 %v605
        %v693 = vunpack.c.l.b16 %v606
        %v694 = vunpack.c.l.b16 %v607
        %v695 = vunpack.c.l.b16 %v608
        %v696 = vunpack.c.l.b16 %v609
        %v697 = vunpack.c.l.b16 %v610
        %v698 = vunpack.c.l.b16 %v611
        %v699 = vunpack.c.l.b16 %v612
        %v700 = vunpack.c.l.b16 %v613
        %v701 = vunpack.c.l.b16 %v614
        %v702 = vunpack.c.l.b16 %v615
        %v703 = vunpack.c.l.b16 %v616
        %v704 = vunpack.c.l.b16 %v617
        %v705 = vunpack.c.l.b16 %v618
        %v706 = vunpack.c.l.b16 %v619
        %v707 = vunpack.c.l.b16 %v620
        %v708 = vpack.c.b16 %v693, %v692
        %v709 = vpack.c.b16 %v695, %v694
        %v710 = vpack.c.b16 %v697, %v696
        %v711 = vpack.c.b16 %v699, %v698
        %v712 = vpack.c.b16 %v701, %v700
        %v713 = vpack.c.b16 %v703, %v702
        %v714 = vpack.c.b16 %v705, %v704
        %v715 = vpack.c.b16 %v707, %v706
        %724 = vmatprep.subr.bf16.mxu0 0
        %725 = vmatpush1.bf16.msra.mxu0 %v708
        %726 = vmatprep.subr.bf16.mxu0 0
        %727 = vmatpush1.bf16.msra.mxu0 %v709
        %728 = vmatprep.subr.bf16.mxu0 0
        %729 = vmatpush1.bf16.msra.mxu0 %v710
        %730 = vmatprep.subr.bf16.mxu0 0
        %731 = vmatpush1.bf16.msra.mxu0 %v711
        %732 = vmatprep.subr.bf16.mxu0 0
        %733 = vmatpush1.bf16.msra.mxu0 %v712
        %734 = vmatprep.subr.bf16.mxu0 0
        %735 = vmatpush1.bf16.msra.mxu0 %v713
        %736 = vmatprep.subr.bf16.mxu0 0
        %737 = vmatpush1.bf16.msra.mxu0 %v714
        %738 = vmatprep.subr.bf16.mxu0 0
        %739 = vmatpush1.bf16.msra.mxu0 %v715
        %740 = vmatprep.subr.bf16.mxu0 0
        %741 = vmatpush1.bf16.msra.mxu0 0
        %742 = vmatprep.subr.bf16.mxu0 0
        %743 = vmatpush1.bf16.msra.mxu0 0
        %744 = vmatprep.subr.bf16.mxu0 0
        %745 = vmatpush1.bf16.msra.mxu0 0
        %746 = vmatprep.subr.bf16.mxu0 0
        %747 = vmatpush1.bf16.msra.mxu0 0
        %748 = vmatprep.subr.bf16.mxu0 0
        %749 = vmatpush1.bf16.msra.mxu0 0
        %750 = vmatprep.subr.bf16.mxu0 0
        %751 = vmatpush1.bf16.msra.mxu0 0
        %752 = vmatprep.subr.bf16.mxu0 0
        %753 = vmatpush1.bf16.msra.mxu0 0
        %754 = vmatprep.subr.bf16.mxu0 0
        %755 = vmatpush1.bf16.msra.mxu0 0
        %756 = vmatprep.mubr.bf16.mxu0 0
        %757 = vmatmul.mubr.bf16.gmra.mrb[0].mxu0 %v660
        %v758 = vpop.f32.mrb[0].mxu0
        %v759 = vadd.f32 %v626, %v758
        %v760 = vpop.f32.mrb[0].mxu0
        %v761 = vpop.f32.mrb[0].mxu0
        %v762 = vadd.f32 %v626, %v761
        %v763 = vpop.f32.mrb[0].mxu0
        %764 = vmatprep.mubr.bf16.mxu0 0
        %765 = vmatmul.mubr.bf16.gmra.mrb[0].mxu0 %v661
        %v766 = vpop.f32.mrb[0].mxu0
        %v767 = vadd.f32 %v626, %v766
        %v768 = vpop.f32.mrb[0].mxu0
        %v769 = vpop.f32.mrb[0].mxu0
        %v770 = vadd.f32 %v626, %v769
        %v771 = vpop.f32.mrb[0].mxu0
        %772 = vmatprep.mubr.bf16.mxu0 0
        %773 = vmatmul.mubr.bf16.gmra.mrb[0].mxu0 %v662
        %v774 = vpop.f32.mrb[0].mxu0
        %v775 = vadd.f32 %v626, %v774
        %v776 = vpop.f32.mrb[0].mxu0
        %v777 = vpop.f32.mrb[0].mxu0
        %v778 = vadd.f32 %v626, %v777
        %v779 = vpop.f32.mrb[0].mxu0
        %780 = vmatprep.mubr.bf16.mxu0 0
        %781 = vmatmul.mubr.bf16.gmra.mrb[0].mxu0 %v663
        %v782 = vpop.f32.mrb[0].mxu0
        %v783 = vadd.f32 %v626, %v782
        %v784 = vpop.f32.mrb[0].mxu0
        %v785 = vpop.f32.mrb[0].mxu0
        %v786 = vadd.f32 %v626, %v785
        %v787 = vpop.f32.mrb[0].mxu0
        %788 = vmatprep.mubr.bf16.mxu0 0
        %789 = vmatmul.mubr.bf16.gmra.mrb[0].mxu0 %v664
        %v790 = vpop.f32.mrb[0].mxu0
        %v791 = vadd.f32 %v626, %v790
        %v792 = vpop.f32.mrb[0].mxu0
        %v793 = vpop.f32.mrb[0].mxu0
        %v794 = vadd.f32 %v626, %v793
        %v795 = vpop.f32.mrb[0].mxu0
        %796 = vmatprep.mubr.bf16.mxu0 0
        %797 = vmatmul.mubr.bf16.gmra.mrb[0].mxu0 %v665
        %v798 = vpop.f32.mrb[0].mxu0
        %v799 = vadd.f32 %v626, %v798
        %v800 = vpop.f32.mrb[0].mxu0
        %v801 = vpop.f32.mrb[0].mxu0
        %v802 = vadd.f32 %v626, %v801
        %v803 = vpop.f32.mrb[0].mxu0
        %804 = vmatprep.mubr.bf16.mxu0 0
        %805 = vmatmul.mubr.bf16.gmra.mrb[0].mxu0 %v666
        %v806 = vpop.f32.mrb[0].mxu0
        %v807 = vadd.f32 %v626, %v806
        %v808 = vpop.f32.mrb[0].mxu0
        %v809 = vpop.f32.mrb[0].mxu0
        %v810 = vadd.f32 %v626, %v809
        %v811 = vpop.f32.mrb[0].mxu0
        %812 = vmatprep.mubr.bf16.mxu0 0
        %813 = vmatmul.mubr.bf16.gmra.mrb[0].mxu0 %v667
        %v814 = vpop.f32.mrb[0].mxu0
        %v815 = vadd.f32 %v626, %v814
        %v816 = vpop.f32.mrb[0].mxu0
        %v817 = vpop.f32.mrb[0].mxu0
        %v818 = vadd.f32 %v626, %v817
        %v819 = vpop.f32.mrb[0].mxu0
        %820 = vdwg.mxu0
        %v821 = vld [vmem:[#allocation11] sm:$0xf]
        %v822 = vld [vmem:[#allocation11 + $0x4] sm:$0xf]
        %v823 = vld [vmem:[#allocation11 + $0x8] sm:$0xf]
        %v824 = vld [vmem:[#allocation11 + $0xc] sm:$0xf]
        %v825 = vld [vmem:[#allocation11 + $0x10] sm:$0xf]
        %v826 = vld [vmem:[#allocation11 + $0x14] sm:$0xf]
        %v827 = vld [vmem:[#allocation11 + $0x18] sm:$0xf]
        %v828 = vld [vmem:[#allocation11 + $0x1c] sm:$0xf]
        %v829 = vld [vmem:[#allocation11 + $0x20] sm:$0xf]
        %v830 = vld [vmem:[#allocation11 + $0x24] sm:$0xf]
        %v831 = vld [vmem:[#allocation11 + $0x28] sm:$0xf]
        %v832 = vld [vmem:[#allocation11 + $0x2c] sm:$0xf]
        %v833 = vld [vmem:[#allocation11 + $0x30] sm:$0xf]
        %v834 = vld [vmem:[#allocation11 + $0x34] sm:$0xf]
        %v835 = vld [vmem:[#allocation11 + $0x38] sm:$0xf]
        %v836 = vld [vmem:[#allocation11 + $0x3c] sm:$0xf]
        %v837 = vld [vmem:[#allocation13] sm:$0x1]
        %v839 = vlaneseq
        %v840 = vshrl.u32 %v839, 7
        %v841 = vsub.s32 0, %v840
        %v842 = vrot.slane %v837, %v841
        %v860 = vunpack.c.l.b16 %v589
        %v861 = vunpack.c.l.b16 %v590
        %v862 = vunpack.c.l.b16 %v591
        %v863 = vunpack.c.l.b16 %v592
        %v864 = vunpack.c.l.b16 %v593
        %v865 = vunpack.c.l.b16 %v594
        %v866 = vunpack.c.l.b16 %v595
        %v867 = vunpack.c.l.b16 %v596
        %v868 = vunpack.c.l.b16 %v597
        %v869 = vunpack.c.l.b16 %v598
        %v870 = vunpack.c.l.b16 %v599
        %v871 = vunpack.c.l.b16 %v600
        %v872 = vunpack.c.l.b16 %v601
        %v873 = vunpack.c.l.b16 %v602
        %v874 = vunpack.c.l.b16 %v603
        %v875 = vunpack.c.l.b16 %v604
        %v876 = vpack.c.b16 %v861, %v860
        %v877 = vpack.c.b16 %v863, %v862
        %v878 = vpack.c.b16 %v865, %v864
        %v879 = vpack.c.b16 %v867, %v866
        %v880 = vpack.c.b16 %v869, %v868
        %v881 = vpack.c.b16 %v871, %v870
        %v882 = vpack.c.b16 %v873, %v872
        %v883 = vpack.c.b16 %v875, %v874
        %v908 = vunpack.c.l.b16 %v821
        %v909 = vunpack.c.l.b16 %v822
        %v910 = vunpack.c.l.b16 %v823
        %v911 = vunpack.c.l.b16 %v824
        %v912 = vunpack.c.l.b16 %v825
        %v913 = vunpack.c.l.b16 %v826
        %v914 = vunpack.c.l.b16 %v827
        %v915 = vunpack.c.l.b16 %v828
        %v916 = vunpack.c.l.b16 %v829
        %v917 = vunpack.c.l.b16 %v830
        %v918 = vunpack.c.l.b16 %v831
        %v919 = vunpack.c.l.b16 %v832
        %v920 = vunpack.c.l.b16 %v833
        %v921 = vunpack.c.l.b16 %v834
        %v922 = vunpack.c.l.b16 %v835
        %v923 = vunpack.c.l.b16 %v836
        %v924 = vpack.c.b16 %v909, %v908
        %v925 = vpack.c.b16 %v911, %v910
        %v926 = vpack.c.b16 %v913, %v912
        %v927 = vpack.c.b16 %v915, %v914
        %v928 = vpack.c.b16 %v917, %v916
        %v929 = vpack.c.b16 %v919, %v918
        %v930 = vpack.c.b16 %v921, %v920
        %v931 = vpack.c.b16 %v923, %v922
        %940 = vmatprep.subr.bf16.mxu0 0
        %941 = vmatpush1.bf16.msra.mxu0 %v924
        %942 = vmatprep.subr.bf16.mxu0 0
        %943 = vmatpush1.bf16.msra.mxu0 %v925
        %944 = vmatprep.subr.bf16.mxu0 0
        %945 = vmatpush1.bf16.msra.mxu0 %v926
        %946 = vmatprep.subr.bf16.mxu0 0
        %947 = vmatpush1.bf16.msra.mxu0 %v927
        %948 = vmatprep.subr.bf16.mxu0 0
        %949 = vmatpush1.bf16.msra.mxu0 %v928
        %950 = vmatprep.subr.bf16.mxu0 0
        %951 = vmatpush1.bf16.msra.mxu0 %v929
        %952 = vmatprep.subr.bf16.mxu0 0
        %953 = vmatpush1.bf16.msra.mxu0 %v930
        %954 = vmatprep.subr.bf16.mxu0 0
        %955 = vmatpush1.bf16.msra.mxu0 %v931
        %956 = vmatprep.subr.bf16.mxu0 0
        %957 = vmatpush1.bf16.msra.mxu0 0
        %958 = vmatprep.subr.bf16.mxu0 0
        %959 = vmatpush1.bf16.msra.mxu0 0
        %960 = vmatprep.subr.bf16.mxu0 0
        %961 = vmatpush1.bf16.msra.mxu0 0
        %962 = vmatprep.subr.bf16.mxu0 0
        %963 = vmatpush1.bf16.msra.mxu0 0
        %964 = vmatprep.subr.bf16.mxu0 0
        %965 = vmatpush1.bf16.msra.mxu0 0
        %966 = vmatprep.subr.bf16.mxu0 0
        %967 = vmatpush1.bf16.msra.mxu0 0
        %968 = vmatprep.subr.bf16.mxu0 0
        %969 = vmatpush1.bf16.msra.mxu0 0
        %970 = vmatprep.subr.bf16.mxu0 0
        %971 = vmatpush1.bf16.msra.mxu0 0
        %972 = vmatprep.mubr.bf16.mxu0 0
        %973 = vmatmul.mubr.bf16.gmra.mrb[0].mxu0 %v876
        %v974 = vpop.f32.mrb[0].mxu0
        %v975 = vadd.f32 %v842, %v974
        %v976 = vpop.f32.mrb[0].mxu0
        %v977 = vpop.f32.mrb[0].mxu0
        %v978 = vadd.f32 %v842, %v977
        %v979 = vpop.f32.mrb[0].mxu0
        %980 = vmatprep.mubr.bf16.mxu0 0
        %981 = vmatmul.mubr.bf16.gmra.mrb[0].mxu0 %v877
        %v982 = vpop.f32.mrb[0].mxu0
        %v983 = vadd.f32 %v842, %v982
        %v984 = vpop.f32.mrb[0].mxu0
        %v985 = vpop.f32.mrb[0].mxu0
        %v986 = vadd.f32 %v842, %v985
        %v987 = vpop.f32.mrb[0].mxu0
        %988 = vmatprep.mubr.bf16.mxu0 0
        %989 = vmatmul.mubr.bf16.gmra.mrb[0].mxu0 %v878
        %v990 = vpop.f32.mrb[0].mxu0
        %v991 = vadd.f32 %v842, %v990
        %v992 = vpop.f32.mrb[0].mxu0
        %v993 = vpop.f32.mrb[0].mxu0
        %v994 = vadd.f32 %v842, %v993
        %v995 = vpop.f32.mrb[0].mxu0
        %996 = vmatprep.mubr.bf16.mxu0 0
        %997 = vmatmul.mubr.bf16.gmra.mrb[0].mxu0 %v879
        %v998 = vpop.f32.mrb[0].mxu0
        %v999 = vadd.f32 %v842, %v998
        %v1000 = vpop.f32.mrb[0].mxu0
        %v1001 = vpop.f32.mrb[0].mxu0
        %v1002 = vadd.f32 %v842, %v1001
        %v1003 = vpop.f32.mrb[0].mxu0
        %1004 = vmatprep.mubr.bf16.mxu0 0
        %1005 = vmatmul.mubr.bf16.gmra.mrb[0].mxu0 %v880
        %v1006 = vpop.f32.mrb[0].mxu0
        %v1007 = vadd.f32 %v842, %v1006
        %v1008 = vpop.f32.mrb[0].mxu0
        %v1009 = vpop.f32.mrb[0].mxu0
        %v1010 = vadd.f32 %v842, %v1009
        %v1011 = vpop.f32.mrb[0].mxu0
        %1012 = vmatprep.mubr.bf16.mxu0 0
        %1013 = vmatmul.mubr.bf16.gmra.mrb[0].mxu0 %v881
        %v1014 = vpop.f32.mrb[0].mxu0
        %v1015 = vadd.f32 %v842, %v1014
        %v1016 = vpop.f32.mrb[0].mxu0
        %v1017 = vpop.f32.mrb[0].mxu0
        %v1018 = vadd.f32 %v842, %v1017
        %v1019 = vpop.f32.mrb[0].mxu0
        %1020 = vmatprep.mubr.bf16.mxu0 0
        %1021 = vmatmul.mubr.bf16.gmra.mrb[0].mxu0 %v882
        %v1022 = vpop.f32.mrb[0].mxu0
        %v1023 = vadd.f32 %v842, %v1022
        %v1024 = vpop.f32.mrb[0].mxu0
        %v1025 = vpop.f32.mrb[0].mxu0
        %v1026 = vadd.f32 %v842, %v1025
        %v1027 = vpop.f32.mrb[0].mxu0
        %1028 = vmatprep.mubr.bf16.mxu0 0
        %1029 = vmatmul.mubr.bf16.gmra.mrb[0].mxu0 %v883
        %v1030 = vpop.f32.mrb[0].mxu0
        %v1031 = vadd.f32 %v842, %v1030
        %v1032 = vpop.f32.mrb[0].mxu0
        %v1033 = vpop.f32.mrb[0].mxu0
        %v1034 = vadd.f32 %v842, %v1033
        %v1035 = vpop.f32.mrb[0].mxu0
        %1036 = vdwg.mxu0
        %v1037 = vld [vmem:[#allocation14] sm:$0xf]
        %v1038 = vld [vmem:[#allocation14 + $0x4] sm:$0xf]
        %v1039 = vld [vmem:[#allocation14 + $0x8] sm:$0xf]
        %v1040 = vld [vmem:[#allocation14 + $0xc] sm:$0xf]
        %v1041 = vld [vmem:[#allocation14 + $0x10] sm:$0xf]
        %v1042 = vld [vmem:[#allocation14 + $0x14] sm:$0xf]
        %v1043 = vld [vmem:[#allocation14 + $0x18] sm:$0xf]
        %v1044 = vld [vmem:[#allocation14 + $0x1c] sm:$0xf]
        %v1045 = vld [vmem:[#allocation14 + $0x20] sm:$0xf]
        %v1046 = vld [vmem:[#allocation14 + $0x24] sm:$0xf]
        %v1047 = vld [vmem:[#allocation14 + $0x28] sm:$0xf]
        %v1048 = vld [vmem:[#allocation14 + $0x2c] sm:$0xf]
        %v1049 = vld [vmem:[#allocation14 + $0x30] sm:$0xf]
        %v1050 = vld [vmem:[#allocation14 + $0x34] sm:$0xf]
        %v1051 = vld [vmem:[#allocation14 + $0x38] sm:$0xf]
        %v1052 = vld [vmem:[#allocation14 + $0x3c] sm:$0xf]
        %v1053 = vld [vmem:[#allocation16] sm:$0x1]
        %v1055 = vlaneseq
        %v1056 = vshrl.u32 %v1055, 7
        %v1057 = vsub.s32 0, %v1056
        %v1058 = vrot.slane %v1053, %v1057
        %v1076 = vunpack.c.l.b16 %v1037
        %v1077 = vunpack.c.l.b16 %v1038
        %v1078 = vunpack.c.l.b16 %v1039
        %v1079 = vunpack.c.l.b16 %v1040
        %v1080 = vunpack.c.l.b16 %v1041
        %v1081 = vunpack.c.l.b16 %v1042
        %v1082 = vunpack.c.l.b16 %v1043
        %v1083 = vunpack.c.l.b16 %v1044
        %v1084 = vunpack.c.l.b16 %v1045
        %v1085 = vunpack.c.l.b16 %v1046
        %v1086 = vunpack.c.l.b16 %v1047
        %v1087 = vunpack.c.l.b16 %v1048
        %v1088 = vunpack.c.l.b16 %v1049
        %v1089 = vunpack.c.l.b16 %v1050
        %v1090 = vunpack.c.l.b16 %v1051
        %v1091 = vunpack.c.l.b16 %v1052
        %v1092 = vpack.c.b16 %v1077, %v1076
        %v1093 = vpack.c.b16 %v1079, %v1078
        %v1094 = vpack.c.b16 %v1081, %v1080
        %v1095 = vpack.c.b16 %v1083, %v1082
        %v1096 = vpack.c.b16 %v1085, %v1084
        %v1097 = vpack.c.b16 %v1087, %v1086
        %v1098 = vpack.c.b16 %v1089, %v1088
        %v1099 = vpack.c.b16 %v1091, %v1090
        %1108 = vmatprep.subr.bf16.mxu0 0
        %1109 = vmatpush1.bf16.msra.mxu0 %v1092
        %1110 = vmatprep.subr.bf16.mxu0 0
        %1111 = vmatpush1.bf16.msra.mxu0 %v1093
        %1112 = vmatprep.subr.bf16.mxu0 0
        %1113 = vmatpush1.bf16.msra.mxu0 %v1094
        %1114 = vmatprep.subr.bf16.mxu0 0
        %1115 = vmatpush1.bf16.msra.mxu0 %v1095
        %1116 = vmatprep.subr.bf16.mxu0 0
        %1117 = vmatpush1.bf16.msra.mxu0 %v1096
        %1118 = vmatprep.subr.bf16.mxu0 0
        %1119 = vmatpush1.bf16.msra.mxu0 %v1097
        %1120 = vmatprep.subr.bf16.mxu0 0
        %1121 = vmatpush1.bf16.msra.mxu0 %v1098
        %1122 = vmatprep.subr.bf16.mxu0 0
        %1123 = vmatpush1.bf16.msra.mxu0 %v1099
        %1124 = vmatprep.subr.bf16.mxu0 0
        %1125 = vmatpush1.bf16.msra.mxu0 0
        %1126 = vmatprep.subr.bf16.mxu0 0
        %1127 = vmatpush1.bf16.msra.mxu0 0
        %1128 = vmatprep.subr.bf16.mxu0 0
        %1129 = vmatpush1.bf16.msra.mxu0 0
        %1130 = vmatprep.subr.bf16.mxu0 0
        %1131 = vmatpush1.bf16.msra.mxu0 0
        %1132 = vmatprep.subr.bf16.mxu0 0
        %1133 = vmatpush1.bf16.msra.mxu0 0
        %1134 = vmatprep.subr.bf16.mxu0 0
        %1135 = vmatpush1.bf16.msra.mxu0 0
        %1136 = vmatprep.subr.bf16.mxu0 0
        %1137 = vmatpush1.bf16.msra.mxu0 0
        %1138 = vmatprep.subr.bf16.mxu0 0
        %1139 = vmatpush1.bf16.msra.mxu0 0
        %1140 = vmatprep.mubr.bf16.mxu0 0
        %1141 = vmatmul.mubr.bf16.gmra.mrb[0].mxu0 %v876
        %v1142 = vpop.f32.mrb[0].mxu0
        %v1143 = vadd.f32 %v1058, %v1142
        %v1144 = vpop.f32.mrb[0].mxu0
        %v1145 = vpop.f32.mrb[0].mxu0
        %v1146 = vadd.f32 %v1058, %v1145
        %v1147 = vpop.f32.mrb[0].mxu0
        %1148 = vmatprep.mubr.bf16.mxu0 0
        %1149 = vmatmul.mubr.bf16.gmra.mrb[0].mxu0 %v877
        %v1150 = vpop.f32.mrb[0].mxu0
        %v1151 = vadd.f32 %v1058, %v1150
        %v1152 = vpop.f32.mrb[0].mxu0
        %v1153 = vpop.f32.mrb[0].mxu0
        %v1154 = vadd.f32 %v1058, %v1153
        %v1155 = vpop.f32.mrb[0].mxu0
        %1156 = vmatprep.mubr.bf16.mxu0 0
        %1157 = vmatmul.mubr.bf16.gmra.mrb[0].mxu0 %v878
        %v1158 = vpop.f32.mrb[0].mxu0
        %v1159 = vadd.f32 %v1058, %v1158
        %v1160 = vpop.f32.mrb[0].mxu0
        %v1161 = vpop.f32.mrb[0].mxu0
        %v1162 = vadd.f32 %v1058, %v1161
        %v1163 = vpop.f32.mrb[0].mxu0
        %1164 = vmatprep.mubr.bf16.mxu0 0
        %1165 = vmatmul.mubr.bf16.gmra.mrb[0].mxu0 %v879
        %v1166 = vpop.f32.mrb[0].mxu0
        %v1167 = vadd.f32 %v1058, %v1166
        %v1168 = vpop.f32.mrb[0].mxu0
        %v1169 = vpop.f32.mrb[0].mxu0
        %v1170 = vadd.f32 %v1058, %v1169
        %v1171 = vpop.f32.mrb[0].mxu0
        %1172 = vmatprep.mubr.bf16.mxu0 0
        %1173 = vmatmul.mubr.bf16.gmra.mrb[0].mxu0 %v880
        %v1174 = vpop.f32.mrb[0].mxu0
        %v1175 = vadd.f32 %v1058, %v1174
        %v1176 = vpop.f32.mrb[0].mxu0
        %v1177 = vpop.f32.mrb[0].mxu0
        %v1178 = vadd.f32 %v1058, %v1177
        %v1179 = vpop.f32.mrb[0].mxu0
        %1180 = vmatprep.mubr.bf16.mxu0 0
        %1181 = vmatmul.mubr.bf16.gmra.mrb[0].mxu0 %v881
        %v1182 = vpop.f32.mrb[0].mxu0
        %v1183 = vadd.f32 %v1058, %v1182
        %v1184 = vpop.f32.mrb[0].mxu0
        %v1185 = vpop.f32.mrb[0].mxu0
        %v1186 = vadd.f32 %v1058, %v1185
        %v1187 = vpop.f32.mrb[0].mxu0
        %1188 = vmatprep.mubr.bf16.mxu0 0
        %1189 = vmatmul.mubr.bf16.gmra.mrb[0].mxu0 %v882
        %v1190 = vpop.f32.mrb[0].mxu0
        %v1191 = vadd.f32 %v1058, %v1190
        %v1192 = vpop.f32.mrb[0].mxu0
        %v1193 = vpop.f32.mrb[0].mxu0
        %v1194 = vadd.f32 %v1058, %v1193
        %v1195 = vpop.f32.mrb[0].mxu0
        %1196 = vmatprep.mubr.bf16.mxu0 0
        %1197 = vmatmul.mubr.bf16.gmra.mrb[0].mxu0 %v883
        %v1198 = vpop.f32.mrb[0].mxu0
        %v1199 = vadd.f32 %v1058, %v1198
        %v1200 = vpop.f32.mrb[0].mxu0
        %v1201 = vpop.f32.mrb[0].mxu0
        %v1202 = vadd.f32 %v1058, %v1201
        %v1203 = vpop.f32.mrb[0].mxu0
        %1204 = vdwg.mxu0
        %v1205 = vpack.c.bf16 %v762, %v759
        %v1206 = vpack.c.bf16 %v770, %v767
        %v1207 = vpack.c.bf16 %v778, %v775
        %v1208 = vpack.c.bf16 %v786, %v783
        %v1209 = vpack.c.bf16 %v794, %v791
        %v1210 = vpack.c.bf16 %v802, %v799
        %v1211 = vpack.c.bf16 %v810, %v807
        %v1212 = vpack.c.bf16 %v818, %v815
        %v1213 = vpack.c.bf16 %v978, %v975
        %v1214 = vpack.c.bf16 %v986, %v983
        %v1215 = vpack.c.bf16 %v994, %v991
        %v1216 = vpack.c.bf16 %v1002, %v999
        %v1217 = vpack.c.bf16 %v1010, %v1007
        %v1218 = vpack.c.bf16 %v1018, %v1015
        %v1219 = vpack.c.bf16 %v1026, %v1023
        %v1220 = vpack.c.bf16 %v1034, %v1031
        %v1221 = vpack.c.bf16 %v1146, %v1143
        %v1222 = vpack.c.bf16 %v1154, %v1151
        %v1223 = vpack.c.bf16 %v1162, %v1159
        %v1224 = vpack.c.bf16 %v1170, %v1167
        %v1225 = vpack.c.bf16 %v1178, %v1175
        %v1226 = vpack.c.bf16 %v1186, %v1183
        %v1227 = vpack.c.bf16 %v1194, %v1191
        %v1228 = vpack.c.bf16 %v1202, %v1199
        %v1229 = vld [vmem:[#allocation7] sm:$0xff]
        %v1230 = vld [vmem:[#allocation7 + $0x8] sm:$0xff]
        %vm1231 = vcmask 130048
        %v1233 = vsel %vm1231, %v1205, 0
        %v1236 = vsel %vm1231, %v1213, 0
        %1238 = vmatprep.subr.bf16.mxu0 0
        %1239 = vmatpush1.bf16.xpose.msra.mxu0 %v1236
        %1240 = vmatprep.subr.bf16.mxu0 0
        %1241 = vmatpush1.bf16.xpose.msra.mxu0 0
        %1242 = vmatprep.subr.bf16.mxu0 0
        %1243 = vmatpush1.bf16.xpose.msra.mxu0 0
        %1244 = vmatprep.subr.bf16.mxu0 0
        %1245 = vmatpush1.bf16.xpose.msra.mxu0 0
        %1246 = vmatprep.subr.bf16.mxu0 0
        %1247 = vmatpush1.bf16.xpose.msra.mxu0 0
        %1248 = vmatprep.subr.bf16.mxu0 0
        %1249 = vmatpush1.bf16.xpose.msra.mxu0 0
        %1250 = vmatprep.subr.bf16.mxu0 0
        %1251 = vmatpush1.bf16.xpose.msra.mxu0 0
        %1252 = vmatprep.subr.bf16.mxu0 0
        %1253 = vmatpush1.bf16.xpose.msra.mxu0 0
        %1254 = vmatprep.subr.bf16.mxu0 0
        %1255 = vmatpush1.bf16.xpose.msra.mxu0 0
        %1256 = vmatprep.subr.bf16.mxu0 0
        %1257 = vmatpush1.bf16.xpose.msra.mxu0 0
        %1258 = vmatprep.subr.bf16.mxu0 0
        %1259 = vmatpush1.bf16.xpose.msra.mxu0 0
        %1260 = vmatprep.subr.bf16.mxu0 0
        %1261 = vmatpush1.bf16.xpose.msra.mxu0 0
        %1262 = vmatprep.subr.bf16.mxu0 0
        %1263 = vmatpush1.bf16.xpose.msra.mxu0 0
        %1264 = vmatprep.subr.bf16.mxu0 0
        %1265 = vmatpush1.bf16.xpose.msra.mxu0 0
        %1266 = vmatprep.subr.bf16.mxu0 0
        %1267 = vmatpush1.bf16.xpose.msra.mxu0 0
        %1268 = vmatprep.subr.bf16.mxu0 0
        %1269 = vmatpush1.bf16.xpose.msra.mxu0 0
        %1270 = vmatprep.mubr.bf16.mxu0 0
        %1271 = vmatmul.mubr.bf16.gmra.mrb[0].mxu0 %v1233
        %v1272 = vpop.f32.mrb[0].mxu0
        %v1273 = vadd.f32 0.0, %v1272
        %v1274 = vpop.f32.mrb[0].mxu0
        %v1275 = vpop.f32.mrb[0].mxu0
        %v1276 = vadd.f32 0.0, %v1275
        %v1277 = vpop.f32.mrb[0].mxu0
        %1278 = vdwg.mxu0
        %v1280 = vsel %vm1231, %v1206, 0
        %v1283 = vsel %vm1231, %v1214, 0
        %1285 = vmatprep.subr.bf16.mxu0 0
        %1286 = vmatpush1.bf16.xpose.msra.mxu0 %v1283
        %1287 = vmatprep.subr.bf16.mxu0 0
        %1288 = vmatpush1.bf16.xpose.msra.mxu0 0
        %1289 = vmatprep.subr.bf16.mxu0 0
        %1290 = vmatpush1.bf16.xpose.msra.mxu0 0
        %1291 = vmatprep.subr.bf16.mxu0 0
        %1292 = vmatpush1.bf16.xpose.msra.mxu0 0
        %1293 = vmatprep.subr.bf16.mxu0 0
        %1294 = vmatpush1.bf16.xpose.msra.mxu0 0
        %1295 = vmatprep.subr.bf16.mxu0 0
        %1296 = vmatpush1.bf16.xpose.msra.mxu0 0
        %1297 = vmatprep.subr.bf16.mxu0 0
        %1298 = vmatpush1.bf16.xpose.msra.mxu0 0
        %1299 = vmatprep.subr.bf16.mxu0 0
        %1300 = vmatpush1.bf16.xpose.msra.mxu0 0
        %1301 = vmatprep.subr.bf16.mxu0 0
        %1302 = vmatpush1.bf16.xpose.msra.mxu0 0
        %1303 = vmatprep.subr.bf16.mxu0 0
        %1304 = vmatpush1.bf16.xpose.msra.mxu0 0
        %1305 = vmatprep.subr.bf16.mxu0 0
        %1306 = vmatpush1.bf16.xpose.msra.mxu0 0
        %1307 = vmatprep.subr.bf16.mxu0 0
        %1308 = vmatpush1.bf16.xpose.msra.mxu0 0
        %1309 = vmatprep.subr.bf16.mxu0 0
        %1310 = vmatpush1.bf16.xpose.msra.mxu0 0
        %1311 = vmatprep.subr.bf16.mxu0 0
        %1312 = vmatpush1.bf16.xpose.msra.mxu0 0
        %1313 = vmatprep.subr.bf16.mxu0 0
        %1314 = vmatpush1.bf16.xpose.msra.mxu0 0
        %1315 = vmatprep.subr.bf16.mxu0 0
        %1316 = vmatpush1.bf16.xpose.msra.mxu0 0
        %1317 = vmatprep.mubr.bf16.mxu0 0
        %1318 = vmatmul.mubr.bf16.gmra.mrb[0].mxu0 %v1280
        %v1319 = vpop.f32.mrb[0].mxu0
        %v1320 = vadd.f32 0.0, %v1319
        %v1321 = vpop.f32.mrb[0].mxu0
        %v1322 = vpop.f32.mrb[0].mxu0
        %v1323 = vadd.f32 0.0, %v1322
        %v1324 = vpop.f32.mrb[0].mxu0
        %1325 = vdwg.mxu0
        %v1327 = vsel %vm1231, %v1207, 0
        %v1330 = vsel %vm1231, %v1215, 0
        %1332 = vmatprep.subr.bf16.mxu0 0
        %1333 = vmatpush1.bf16.xpose.msra.mxu0 %v1330
        %1334 = vmatprep.subr.bf16.mxu0 0
        %1335 = vmatpush1.bf16.xpose.msra.mxu0 0
        %1336 = vmatprep.subr.bf16.mxu0 0
        %1337 = vmatpush1.bf16.xpose.msra.mxu0 0
        %1338 = vmatprep.subr.bf16.mxu0 0
        %1339 = vmatpush1.bf16.xpose.msra.mxu0 0
        %1340 = vmatprep.subr.bf16.mxu0 0
        %1341 = vmatpush1.bf16.xpose.msra.mxu0 0
        %1342 = vmatprep.subr.bf16.mxu0 0
        %1343 = vmatpush1.bf16.xpose.msra.mxu0 0
        %1344 = vmatprep.subr.bf16.mxu0 0
        %1345 = vmatpush1.bf16.xpose.msra.mxu0 0
        %1346 = vmatprep.subr.bf16.mxu0 0
        %1347 = vmatpush1.bf16.xpose.msra.mxu0 0
        %1348 = vmatprep.subr.bf16.mxu0 0
        %1349 = vmatpush1.bf16.xpose.msra.mxu0 0
        %1350 = vmatprep.subr.bf16.mxu0 0
        %1351 = vmatpush1.bf16.xpose.msra.mxu0 0
        %1352 = vmatprep.subr.bf16.mxu0 0
        %1353 = vmatpush1.bf16.xpose.msra.mxu0 0
        %1354 = vmatprep.subr.bf16.mxu0 0
        %1355 = vmatpush1.bf16.xpose.msra.mxu0 0
        %1356 = vmatprep.subr.bf16.mxu0 0
        %1357 = vmatpush1.bf16.xpose.msra.mxu0 0
        %1358 = vmatprep.subr.bf16.mxu0 0
        %1359 = vmatpush1.bf16.xpose.msra.mxu0 0
        %1360 = vmatprep.subr.bf16.mxu0 0
        %1361 = vmatpush1.bf16.xpose.msra.mxu0 0
        %1362 = vmatprep.subr.bf16.mxu0 0
        %1363 = vmatpush1.bf16.xpose.msra.mxu0 0
        %1364 = vmatprep.mubr.bf16.mxu0 0
        %1365 = vmatmul.mubr.bf16.gmra.mrb[0].mxu0 %v1327
        %v1366 = vpop.f32.mrb[0].mxu0
        %v1367 = vadd.f32 0.0, %v1366
        %v1368 = vpop.f32.mrb[0].mxu0
        %v1369 = vpop.f32.mrb[0].mxu0
        %v1370 = vadd.f32 0.0, %v1369
        %v1371 = vpop.f32.mrb[0].mxu0
        %1372 = vdwg.mxu0
        %v1374 = vsel %vm1231, %v1208, 0
        %v1377 = vsel %vm1231, %v1216, 0
        %1379 = vmatprep.subr.bf16.mxu0 0
        %1380 = vmatpush1.bf16.xpose.msra.mxu0 %v1377
        %1381 = vmatprep.subr.bf16.mxu0 0
        %1382 = vmatpush1.bf16.xpose.msra.mxu0 0
        %1383 = vmatprep.subr.bf16.mxu0 0
        %1384 = vmatpush1.bf16.xpose.msra.mxu0 0
        %1385 = vmatprep.subr.bf16.mxu0 0
        %1386 = vmatpush1.bf16.xpose.msra.mxu0 0
        %1387 = vmatprep.subr.bf16.mxu0 0
        %1388 = vmatpush1.bf16.xpose.msra.mxu0 0
        %1389 = vmatprep.subr.bf16.mxu0 0
        %1390 = vmatpush1.bf16.xpose.msra.mxu0 0
        %1391 = vmatprep.subr.bf16.mxu0 0
        %1392 = vmatpush1.bf16.xpose.msra.mxu0 0
        %1393 = vmatprep.subr.bf16.mxu0 0
        %1394 = vmatpush1.bf16.xpose.msra.mxu0 0
        %1395 = vmatprep.subr.bf16.mxu0 0
        %1396 = vmatpush1.bf16.xpose.msra.mxu0 0
        %1397 = vmatprep.subr.bf16.mxu0 0
        %1398 = vmatpush1.bf16.xpose.msra.mxu0 0
        %1399 = vmatprep.subr.bf16.mxu0 0
        %1400 = vmatpush1.bf16.xpose.msra.mxu0 0
        %1401 = vmatprep.subr.bf16.mxu0 0
        %1402 = vmatpush1.bf16.xpose.msra.mxu0 0
        %1403 = vmatprep.subr.bf16.mxu0 0
        %1404 = vmatpush1.bf16.xpose.msra.mxu0 0
        %1405 = vmatprep.subr.bf16.mxu0 0
        %1406 = vmatpush1.bf16.xpose.msra.mxu0 0
        %1407 = vmatprep.subr.bf16.mxu0 0
        %1408 = vmatpush1.bf16.xpose.msra.mxu0 0
        %1409 = vmatprep.subr.bf16.mxu0 0
        %1410 = vmatpush1.bf16.xpose.msra.mxu0 0
        %1411 = vmatprep.mubr.bf16.mxu0 0
        %1412 = vmatmul.mubr.bf16.gmra.mrb[0].mxu0 %v1374
        %v1413 = vpop.f32.mrb[0].mxu0
        %v1414 = vadd.f32 0.0, %v1413
        %v1415 = vpop.f32.mrb[0].mxu0
        %v1416 = vpop.f32.mrb[0].mxu0
        %v1417 = vadd.f32 0.0, %v1416
        %v1418 = vpop.f32.mrb[0].mxu0
        %1419 = vdwg.mxu0
        %v1421 = vsel %vm1231, %v1209, 0
        %v1424 = vsel %vm1231, %v1217, 0
        %1426 = vmatprep.subr.bf16.mxu0 0
        %1427 = vmatpush1.bf16.xpose.msra.mxu0 %v1424
        %1428 = vmatprep.subr.bf16.mxu0 0
        %1429 = vmatpush1.bf16.xpose.msra.mxu0 0
        %1430 = vmatprep.subr.bf16.mxu0 0
        %1431 = vmatpush1.bf16.xpose.msra.mxu0 0
        %1432 = vmatprep.subr.bf16.mxu0 0
        %1433 = vmatpush1.bf16.xpose.msra.mxu0 0
        %1434 = vmatprep.subr.bf16.mxu0 0
        %1435 = vmatpush1.bf16.xpose.msra.mxu0 0
        %1436 = vmatprep.subr.bf16.mxu0 0
        %1437 = vmatpush1.bf16.xpose.msra.mxu0 0
        %1438 = vmatprep.subr.bf16.mxu0 0
        %1439 = vmatpush1.bf16.xpose.msra.mxu0 0
        %1440 = vmatprep.subr.bf16.mxu0 0
        %1441 = vmatpush1.bf16.xpose.msra.mxu0 0
        %1442 = vmatprep.subr.bf16.mxu0 0
        %1443 = vmatpush1.bf16.xpose.msra.mxu0 0
        %1444 = vmatprep.subr.bf16.mxu0 0
        %1445 = vmatpush1.bf16.xpose.msra.mxu0 0
        %1446 = vmatprep.subr.bf16.mxu0 0
        %1447 = vmatpush1.bf16.xpose.msra.mxu0 0
        %1448 = vmatprep.subr.bf16.mxu0 0
        %1449 = vmatpush1.bf16.xpose.msra.mxu0 0
        %1450 = vmatprep.subr.bf16.mxu0 0
        %1451 = vmatpush1.bf16.xpose.msra.mxu0 0
        %1452 = vmatprep.subr.bf16.mxu0 0
        %1453 = vmatpush1.bf16.xpose.msra.mxu0 0
        %1454 = vmatprep.subr.bf16.mxu0 0
        %1455 = vmatpush1.bf16.xpose.msra.mxu0 0
        %1456 = vmatprep.subr.bf16.mxu0 0
        %1457 = vmatpush1.bf16.xpose.msra.mxu0 0
        %1458 = vmatprep.mubr.bf16.mxu0 0
        %1459 = vmatmul.mubr.bf16.gmra.mrb[0].mxu0 %v1421
        %v1460 = vpop.f32.mrb[0].mxu0
        %v1461 = vadd.f32 0.0, %v1460
        %v1462 = vpop.f32.mrb[0].mxu0
        %v1463 = vpop.f32.mrb[0].mxu0
        %v1464 = vadd.f32 0.0, %v1463
        %v1465 = vpop.f32.mrb[0].mxu0
        %1466 = vdwg.mxu0
        %v1468 = vsel %vm1231, %v1210, 0
        %v1471 = vsel %vm1231, %v1218, 0
        %1473 = vmatprep.subr.bf16.mxu0 0
        %1474 = vmatpush1.bf16.xpose.msra.mxu0 %v1471
        %1475 = vmatprep.subr.bf16.mxu0 0
        %1476 = vmatpush1.bf16.xpose.msra.mxu0 0
        %1477 = vmatprep.subr.bf16.mxu0 0
        %1478 = vmatpush1.bf16.xpose.msra.mxu0 0
        %1479 = vmatprep.subr.bf16.mxu0 0
        %1480 = vmatpush1.bf16.xpose.msra.mxu0 0
        %1481 = vmatprep.subr.bf16.mxu0 0
        %1482 = vmatpush1.bf16.xpose.msra.mxu0 0
        %1483 = vmatprep.subr.bf16.mxu0 0
        %1484 = vmatpush1.bf16.xpose.msra.mxu0 0
        %1485 = vmatprep.subr.bf16.mxu0 0
        %1486 = vmatpush1.bf16.xpose.msra.mxu0 0
        %1487 = vmatprep.subr.bf16.mxu0 0
        %1488 = vmatpush1.bf16.xpose.msra.mxu0 0
        %1489 = vmatprep.subr.bf16.mxu0 0
        %1490 = vmatpush1.bf16.xpose.msra.mxu0 0
        %1491 = vmatprep.subr.bf16.mxu0 0
        %1492 = vmatpush1.bf16.xpose.msra.mxu0 0
        %1493 = vmatprep.subr.bf16.mxu0 0
        %1494 = vmatpush1.bf16.xpose.msra.mxu0 0
        %1495 = vmatprep.subr.bf16.mxu0 0
        %1496 = vmatpush1.bf16.xpose.msra.mxu0 0
        %1497 = vmatprep.subr.bf16.mxu0 0
        %1498 = vmatpush1.bf16.xpose.msra.mxu0 0
        %1499 = vmatprep.subr.bf16.mxu0 0
        %1500 = vmatpush1.bf16.xpose.msra.mxu0 0
        %1501 = vmatprep.subr.bf16.mxu0 0
        %1502 = vmatpush1.bf16.xpose.msra.mxu0 0
        %1503 = vmatprep.subr.bf16.mxu0 0
        %1504 = vmatpush1.bf16.xpose.msra.mxu0 0
        %1505 = vmatprep.mubr.bf16.mxu0 0
        %1506 = vmatmul.mubr.bf16.gmra.mrb[0].mxu0 %v1468
        %v1507 = vpop.f32.mrb[0].mxu0
        %v1508 = vadd.f32 0.0, %v1507
        %v1509 = vpop.f32.mrb[0].mxu0
        %v1510 = vpop.f32.mrb[0].mxu0
        %v1511 = vadd.f32 0.0, %v1510
        %v1512 = vpop.f32.mrb[0].mxu0
        %1513 = vdwg.mxu0
        %v1515 = vsel %vm1231, %v1211, 0
        %v1518 = vsel %vm1231, %v1219, 0
        %1520 = vmatprep.subr.bf16.mxu0 0
        %1521 = vmatpush1.bf16.xpose.msra.mxu0 %v1518
        %1522 = vmatprep.subr.bf16.mxu0 0
        %1523 = vmatpush1.bf16.xpose.msra.mxu0 0
        %1524 = vmatprep.subr.bf16.mxu0 0
        %1525 = vmatpush1.bf16.xpose.msra.mxu0 0
        %1526 = vmatprep.subr.bf16.mxu0 0
        %1527 = vmatpush1.bf16.xpose.msra.mxu0 0
        %1528 = vmatprep.subr.bf16.mxu0 0
        %1529 = vmatpush1.bf16.xpose.msra.mxu0 0
        %1530 = vmatprep.subr.bf16.mxu0 0
        %1531 = vmatpush1.bf16.xpose.msra.mxu0 0
        %1532 = vmatprep.subr.bf16.mxu0 0
        %1533 = vmatpush1.bf16.xpose.msra.mxu0 0
        %1534 = vmatprep.subr.bf16.mxu0 0
        %1535 = vmatpush1.bf16.xpose.msra.mxu0 0
        %1536 = vmatprep.subr.bf16.mxu0 0
        %1537 = vmatpush1.bf16.xpose.msra.mxu0 0
        %1538 = vmatprep.subr.bf16.mxu0 0
        %1539 = vmatpush1.bf16.xpose.msra.mxu0 0
        %1540 = vmatprep.subr.bf16.mxu0 0
        %1541 = vmatpush1.bf16.xpose.msra.mxu0 0
        %1542 = vmatprep.subr.bf16.mxu0 0
        %1543 = vmatpush1.bf16.xpose.msra.mxu0 0
        %1544 = vmatprep.subr.bf16.mxu0 0
        %1545 = vmatpush1.bf16.xpose.msra.mxu0 0
        %1546 = vmatprep.subr.bf16.mxu0 0
        %1547 = vmatpush1.bf16.xpose.msra.mxu0 0
        %1548 = vmatprep.subr.bf16.mxu0 0
        %1549 = vmatpush1.bf16.xpose.msra.mxu0 0
        %1550 = vmatprep.subr.bf16.mxu0 0
        %1551 = vmatpush1.bf16.xpose.msra.mxu0 0
        %1552 = vmatprep.mubr.bf16.mxu0 0
        %1553 = vmatmul.mubr.bf16.gmra.mrb[0].mxu0 %v1515
        %v1554 = vpop.f32.mrb[0].mxu0
        %v1555 = vadd.f32 0.0, %v1554
        %v1556 = vpop.f32.mrb[0].mxu0
        %v1557 = vpop.f32.mrb[0].mxu0
        %v1558 = vadd.f32 0.0, %v1557
        %v1559 = vpop.f32.mrb[0].mxu0
        %1560 = vdwg.mxu0
        %v1562 = vsel %vm1231, %v1212, 0
        %v1565 = vsel %vm1231, %v1220, 0
        %1567 = vmatprep.subr.bf16.mxu0 0
        %1568 = vmatpush1.bf16.xpose.msra.mxu0 %v1565
        %1569 = vmatprep.subr.bf16.mxu0 0
        %1570 = vmatpush1.bf16.xpose.msra.mxu0 0
        %1571 = vmatprep.subr.bf16.mxu0 0
        %1572 = vmatpush1.bf16.xpose.msra.mxu0 0
        %1573 = vmatprep.subr.bf16.mxu0 0
        %1574 = vmatpush1.bf16.xpose.msra.mxu0 0
        %1575 = vmatprep.subr.bf16.mxu0 0
        %1576 = vmatpush1.bf16.xpose.msra.mxu0 0
        %1577 = vmatprep.subr.bf16.mxu0 0
        %1578 = vmatpush1.bf16.xpose.msra.mxu0 0
        %1579 = vmatprep.subr.bf16.mxu0 0
        %1580 = vmatpush1.bf16.xpose.msra.mxu0 0
        %1581 = vmatprep.subr.bf16.mxu0 0
        %1582 = vmatpush1.bf16.xpose.msra.mxu0 0
        %1583 = vmatprep.subr.bf16.mxu0 0
        %1584 = vmatpush1.bf16.xpose.msra.mxu0 0
        %1585 = vmatprep.subr.bf16.mxu0 0
        %1586 = vmatpush1.bf16.xpose.msra.mxu0 0
        %1587 = vmatprep.subr.bf16.mxu0 0
        %1588 = vmatpush1.bf16.xpose.msra.mxu0 0
        %1589 = vmatprep.subr.bf16.mxu0 0
        %1590 = vmatpush1.bf16.xpose.msra.mxu0 0
        %1591 = vmatprep.subr.bf16.mxu0 0
        %1592 = vmatpush1.bf16.xpose.msra.mxu0 0
        %1593 = vmatprep.subr.bf16.mxu0 0
        %1594 = vmatpush1.bf16.xpose.msra.mxu0 0
        %1595 = vmatprep.subr.bf16.mxu0 0
        %1596 = vmatpush1.bf16.xpose.msra.mxu0 0
        %1597 = vmatprep.subr.bf16.mxu0 0
        %1598 = vmatpush1.bf16.xpose.msra.mxu0 0
        %1599 = vmatprep.mubr.bf16.mxu0 0
        %1600 = vmatmul.mubr.bf16.gmra.mrb[0].mxu0 %v1562
        %v1601 = vpop.f32.mrb[0].mxu0
        %v1602 = vadd.f32 0.0, %v1601
        %v1603 = vpop.f32.mrb[0].mxu0
        %v1604 = vpop.f32.mrb[0].mxu0
        %v1605 = vadd.f32 0.0, %v1604
        %v1606 = vpop.f32.mrb[0].mxu0
        %1607 = vdwg.mxu0
        %v1608 = vmul.f32 %v1273, 0.25
        %v1609 = vmul.f32 %v1276, 0.25
        %v1610 = vmul.f32 %v1320, 0.25
        %v1611 = vmul.f32 %v1323, 0.25
        %v1612 = vmul.f32 %v1367, 0.25
        %v1613 = vmul.f32 %v1370, 0.25
        %v1614 = vmul.f32 %v1414, 0.25
        %v1615 = vmul.f32 %v1417, 0.25
        %v1616 = vmul.f32 %v1461, 0.25
        %v1617 = vmul.f32 %v1464, 0.25
        %v1618 = vmul.f32 %v1508, 0.25
        %v1619 = vmul.f32 %v1511, 0.25
        %v1620 = vmul.f32 %v1555, 0.25
        %v1621 = vmul.f32 %v1558, 0.25
        %v1622 = vmul.f32 %v1602, 0.25
        %v1623 = vmul.f32 %v1605, 0.25
        %v1624 = vadd.f32 %v1608, %v1229
        %v1625 = vadd.f32 %v1609, %v1230
        %v1626 = vadd.f32 %v1610, %v1229
        %v1627 = vadd.f32 %v1611, %v1230
        %v1628 = vadd.f32 %v1612, %v1229
        %v1629 = vadd.f32 %v1613, %v1230
        %v1630 = vadd.f32 %v1614, %v1229
        %v1631 = vadd.f32 %v1615, %v1230
        %v1632 = vadd.f32 %v1616, %v1229
        %v1633 = vadd.f32 %v1617, %v1230
        %v1634 = vadd.f32 %v1618, %v1229
        %v1635 = vadd.f32 %v1619, %v1230
        %v1636 = vadd.f32 %v1620, %v1229
        %v1637 = vadd.f32 %v1621, %v1230
        %v1638 = vadd.f32 %v1622, %v1229
        %v1639 = vadd.f32 %v1623, %v1230
        %v1640 = vsel %vm1231, %v1624, -inf
        %1641 = vmax.xlane.f32.xlu0 %v1640
        %v1642 = vpop.xlane.xlu0 %1641
        %v1643 = vsel %vm1231, %v1625, -inf
        %1644 = vmax.xlane.f32.xlu0 %v1643
        %v1645 = vpop.xlane.xlu0 %1644
        %v1646 = vsel %vm1231, %v1626, -inf
        %1647 = vmax.xlane.f32.xlu0 %v1646
        %v1648 = vpop.xlane.xlu0 %1647
        %v1649 = vsel %vm1231, %v1627, -inf
        %1650 = vmax.xlane.f32.xlu0 %v1649
        %v1651 = vpop.xlane.xlu0 %1650
        %v1652 = vsel %vm1231, %v1628, -inf
        %1653 = vmax.xlane.f32.xlu0 %v1652
        %v1654 = vpop.xlane.xlu0 %1653
        %v1655 = vsel %vm1231, %v1629, -inf
        %1656 = vmax.xlane.f32.xlu0 %v1655
        %v1657 = vpop.xlane.xlu0 %1656
        %v1658 = vsel %vm1231, %v1630, -inf
        %1659 = vmax.xlane.f32.xlu0 %v1658
        %v1660 = vpop.xlane.xlu0 %1659
        %v1661 = vsel %vm1231, %v1631, -inf
        %1662 = vmax.xlane.f32.xlu0 %v1661
        %v1663 = vpop.xlane.xlu0 %1662
        %v1664 = vsel %vm1231, %v1632, -inf
        %1665 = vmax.xlane.f32.xlu0 %v1664
        %v1666 = vpop.xlane.xlu0 %1665
        %v1667 = vsel %vm1231, %v1633, -inf
        %1668 = vmax.xlane.f32.xlu0 %v1667
        %v1669 = vpop.xlane.xlu0 %1668
        %v1670 = vsel %vm1231, %v1634, -inf
        %1671 = vmax.xlane.f32.xlu0 %v1670
        %v1672 = vpop.xlane.xlu0 %1671
        %v1673 = vsel %vm1231, %v1635, -inf
        %1674 = vmax.xlane.f32.xlu0 %v1673
        %v1675 = vpop.xlane.xlu0 %1674
        %v1676 = vsel %vm1231, %v1636, -inf
        %1677 = vmax.xlane.f32.xlu0 %v1676
        %v1678 = vpop.xlane.xlu0 %1677
        %v1679 = vsel %vm1231, %v1637, -inf
        %1680 = vmax.xlane.f32.xlu0 %v1679
        %v1681 = vpop.xlane.xlu0 %1680
        %v1682 = vsel %vm1231, %v1638, -inf
        %1683 = vmax.xlane.f32.xlu0 %v1682
        %v1684 = vpop.xlane.xlu0 %1683
        %v1685 = vsel %vm1231, %v1639, -inf
        %1686 = vmax.xlane.f32.xlu0 %v1685
        %v1687 = vpop.xlane.xlu0 %1686
        %v1688 = vsub.f32 %v1624, %v1642
        %v1689 = vsub.f32 %v1625, %v1645
        %v1690 = vsub.f32 %v1626, %v1648
        %v1691 = vsub.f32 %v1627, %v1651
        %v1692 = vsub.f32 %v1628, %v1654
        %v1693 = vsub.f32 %v1629, %v1657
        %v1694 = vsub.f32 %v1630, %v1660
        %v1695 = vsub.f32 %v1631, %v1663
        %v1696 = vsub.f32 %v1632, %v1666
        %v1697 = vsub.f32 %v1633, %v1669
        %v1698 = vsub.f32 %v1634, %v1672
        %v1699 = vsub.f32 %v1635, %v1675
        %v1700 = vsub.f32 %v1636, %v1678
        %v1701 = vsub.f32 %v1637, %v1681
        %v1702 = vsub.f32 %v1638, %v1684
        %v1703 = vsub.f32 %v1639, %v1687
        %v1704 = vmul.f32 %v1688, 1.442695
        %v1705 = vpow.pop %v1704
        %v1706 = vmul.f32 %v1689, 1.442695
        %v1707 = vpow.pop %v1706
        %v1708 = vmul.f32 %v1690, 1.442695
        %v1709 = vpow.pop %v1708
        %v1710 = vmul.f32 %v1691, 1.442695
        %v1711 = vpow.pop %v1710
        %v1712 = vmul.f32 %v1692, 1.442695
        %v1713 = vpow.pop %v1712
        %v1714 = vmul.f32 %v1693, 1.442695
        %v1715 = vpow.pop %v1714
        %v1716 = vmul.f32 %v1694, 1.442695
        %v1717 = vpow.pop %v1716
        %v1718 = vmul.f32 %v1695, 1.442695
        %v1719 = vpow.pop %v1718
        %v1720 = vmul.f32 %v1696, 1.442695
        %v1721 = vpow.pop %v1720
        %v1722 = vmul.f32 %v1697, 1.442695
        %v1723 = vpow.pop %v1722
        %v1724 = vmul.f32 %v1698, 1.442695
        %v1725 = vpow.pop %v1724
        %v1726 = vmul.f32 %v1699, 1.442695
        %v1727 = vpow.pop %v1726
        %v1728 = vmul.f32 %v1700, 1.442695
        %v1729 = vpow.pop %v1728
        %v1730 = vmul.f32 %v1701, 1.442695
        %v1731 = vpow.pop %v1730
        %v1732 = vmul.f32 %v1702, 1.442695
        %v1733 = vpow.pop %v1732
        %v1734 = vmul.f32 %v1703, 1.442695
        %v1735 = vpow.pop %v1734
        %v1736 = vsel %vm1231, %v1705, 0.0
        %1737 = vadd.xlane.f32.xlu0 %v1736
        %v1738 = vpop.xlane.xlu0 %1737
        %v1739 = vsel %vm1231, %v1707, 0.0
        %1740 = vadd.xlane.f32.xlu0 %v1739
        %v1741 = vpop.xlane.xlu0 %1740
        %v1742 = vsel %vm1231, %v1709, 0.0
        %1743 = vadd.xlane.f32.xlu0 %v1742
        %v1744 = vpop.xlane.xlu0 %1743
        %v1745 = vsel %vm1231, %v1711, 0.0
        %1746 = vadd.xlane.f32.xlu0 %v1745
        %v1747 = vpop.xlane.xlu0 %1746
        %v1748 = vsel %vm1231, %v1713, 0.0
        %1749 = vadd.xlane.f32.xlu0 %v1748
        %v1750 = vpop.xlane.xlu0 %1749
        %v1751 = vsel %vm1231, %v1715, 0.0
        %1752 = vadd.xlane.f32.xlu0 %v1751
        %v1753 = vpop.xlane.xlu0 %1752
        %v1754 = vsel %vm1231, %v1717, 0.0
        %1755 = vadd.xlane.f32.xlu0 %v1754
        %v1756 = vpop.xlane.xlu0 %1755
        %v1757 = vsel %vm1231, %v1719, 0.0
        %1758 = vadd.xlane.f32.xlu0 %v1757
        %v1759 = vpop.xlane.xlu0 %1758
        %v1760 = vsel %vm1231, %v1721, 0.0
        %1761 = vadd.xlane.f32.xlu0 %v1760
        %v1762 = vpop.xlane.xlu0 %1761
        %v1763 = vsel %vm1231, %v1723, 0.0
        %1764 = vadd.xlane.f32.xlu0 %v1763
        %v1765 = vpop.xlane.xlu0 %1764
        %v1766 = vsel %vm1231, %v1725, 0.0
        %1767 = vadd.xlane.f32.xlu0 %v1766
        %v1768 = vpop.xlane.xlu0 %1767
        %v1769 = vsel %vm1231, %v1727, 0.0
        %1770 = vadd.xlane.f32.xlu0 %v1769
        %v1771 = vpop.xlane.xlu0 %1770
        %v1772 = vsel %vm1231, %v1729, 0.0
        %1773 = vadd.xlane.f32.xlu0 %v1772
        %v1774 = vpop.xlane.xlu0 %1773
        %v1775 = vsel %vm1231, %v1731, 0.0
        %1776 = vadd.xlane.f32.xlu0 %v1775
        %v1777 = vpop.xlane.xlu0 %1776
        %v1778 = vsel %vm1231, %v1733, 0.0
        %1779 = vadd.xlane.f32.xlu0 %v1778
        %v1780 = vpop.xlane.xlu0 %1779
        %v1781 = vsel %vm1231, %v1735, 0.0
        %1782 = vadd.xlane.f32.xlu0 %v1781
        %v1783 = vpop.xlane.xlu0 %1782
        %v1784 = vrcp.pop %v1738
        %v1785 = vrcp.pop %v1741
        %v1786 = vrcp.pop %v1744
        %v1787 = vrcp.pop %v1747
        %v1788 = vrcp.pop %v1750
        %v1789 = vrcp.pop %v1753
        %v1790 = vrcp.pop %v1756
        %v1791 = vrcp.pop %v1759
        %v1792 = vrcp.pop %v1762
        %v1793 = vrcp.pop %v1765
        %v1794 = vrcp.pop %v1768
        %v1795 = vrcp.pop %v1771
        %v1796 = vrcp.pop %v1774
        %v1797 = vrcp.pop %v1777
        %v1798 = vrcp.pop %v1780
        %v1799 = vrcp.pop %v1783
        %v1800 = vmul.f32 %v1705, %v1784
        %v1801 = vmul.f32 %v1707, %v1785
        %v1802 = vmul.f32 %v1709, %v1786
        %v1803 = vmul.f32 %v1711, %v1787
        %v1804 = vmul.f32 %v1713, %v1788
        %v1805 = vmul.f32 %v1715, %v1789
        %v1806 = vmul.f32 %v1717, %v1790
        %v1807 = vmul.f32 %v1719, %v1791
        %v1808 = vmul.f32 %v1721, %v1792
        %v1809 = vmul.f32 %v1723, %v1793
        %v1810 = vmul.f32 %v1725, %v1794
        %v1811 = vmul.f32 %v1727, %v1795
        %v1812 = vmul.f32 %v1729, %v1796
        %v1813 = vmul.f32 %v1731, %v1797
        %v1814 = vmul.f32 %v1733, %v1798
        %v1815 = vmul.f32 %v1735, %v1799
        %v1816 = vpack.c.bf16 %v1801, %v1800
        %v1817 = vpack.c.bf16 %v1803, %v1802
        %v1818 = vpack.c.bf16 %v1805, %v1804
        %v1819 = vpack.c.bf16 %v1807, %v1806
        %v1820 = vpack.c.bf16 %v1809, %v1808
        %v1821 = vpack.c.bf16 %v1811, %v1810
        %v1822 = vpack.c.bf16 %v1813, %v1812
        %v1823 = vpack.c.bf16 %v1815, %v1814
        %v1825 = vsel %vm1231, %v1816, 0
        %1827 = vmatprep.subr.bf16.mxu0 0
        %1828 = vmatpush1.bf16.msra.mxu0 %v1221
        %1829 = vmatprep.subr.bf16.mxu0 0
        %1830 = vmatpush1.bf16.msra.mxu0 0
        %1831 = vmatprep.subr.bf16.mxu0 0
        %1832 = vmatpush1.bf16.msra.mxu0 0
        %1833 = vmatprep.subr.bf16.mxu0 0
        %1834 = vmatpush1.bf16.msra.mxu0 0
        %1835 = vmatprep.subr.bf16.mxu0 0
        %1836 = vmatpush1.bf16.msra.mxu0 0
        %1837 = vmatprep.subr.bf16.mxu0 0
        %1838 = vmatpush1.bf16.msra.mxu0 0
        %1839 = vmatprep.subr.bf16.mxu0 0
        %1840 = vmatpush1.bf16.msra.mxu0 0
        %1841 = vmatprep.subr.bf16.mxu0 0
        %1842 = vmatpush1.bf16.msra.mxu0 0
        %1843 = vmatprep.subr.bf16.mxu0 0
        %1844 = vmatpush1.bf16.msra.mxu0 0
        %1845 = vmatprep.subr.bf16.mxu0 0
        %1846 = vmatpush1.bf16.msra.mxu0 0
        %1847 = vmatprep.subr.bf16.mxu0 0
        %1848 = vmatpush1.bf16.msra.mxu0 0
        %1849 = vmatprep.subr.bf16.mxu0 0
        %1850 = vmatpush1.bf16.msra.mxu0 0
        %1851 = vmatprep.subr.bf16.mxu0 0
        %1852 = vmatpush1.bf16.msra.mxu0 0
        %1853 = vmatprep.subr.bf16.mxu0 0
        %1854 = vmatpush1.bf16.msra.mxu0 0
        %1855 = vmatprep.subr.bf16.mxu0 0
        %1856 = vmatpush1.bf16.msra.mxu0 0
        %1857 = vmatprep.subr.bf16.mxu0 0
        %1858 = vmatpush1.bf16.msra.mxu0 0
        %1859 = vmatprep.mubr.bf16.mxu0 0
        %1860 = vmatmul.mubr.bf16.gmra.mrb[0].mxu0 %v1825
        %v1861 = vpop.f32.mrb[0].mxu0
        %v1862 = vadd.f32 0.0, %v1861
        %v1863 = vpop.f32.mrb[0].mxu0
        %v1864 = vpop.f32.mrb[0].mxu0
        %v1865 = vadd.f32 0.0, %v1864
        %v1866 = vpop.f32.mrb[0].mxu0
        %1867 = vdwg.mxu0
        %v1869 = vsel %vm1231, %v1817, 0
        %1871 = vmatprep.subr.bf16.mxu0 0
        %1872 = vmatpush1.bf16.msra.mxu0 %v1222
        %1873 = vmatprep.subr.bf16.mxu0 0
        %1874 = vmatpush1.bf16.msra.mxu0 0
        %1875 = vmatprep.subr.bf16.mxu0 0
        %1876 = vmatpush1.bf16.msra.mxu0 0
        %1877 = vmatprep.subr.bf16.mxu0 0
        %1878 = vmatpush1.bf16.msra.mxu0 0
        %1879 = vmatprep.subr.bf16.mxu0 0
        %1880 = vmatpush1.bf16.msra.mxu0 0
        %1881 = vmatprep.subr.bf16.mxu0 0
        %1882 = vmatpush1.bf16.msra.mxu0 0
        %1883 = vmatprep.subr.bf16.mxu0 0
        %1884 = vmatpush1.bf16.msra.mxu0 0
        %1885 = vmatprep.subr.bf16.mxu0 0
        %1886 = vmatpush1.bf16.msra.mxu0 0
        %1887 = vmatprep.subr.bf16.mxu0 0
        %1888 = vmatpush1.bf16.msra.mxu0 0
        %1889 = vmatprep.subr.bf16.mxu0 0
        %1890 = vmatpush1.bf16.msra.mxu0 0
        %1891 = vmatprep.subr.bf16.mxu0 0
        %1892 = vmatpush1.bf16.msra.mxu0 0
        %1893 = vmatprep.subr.bf16.mxu0 0
        %1894 = vmatpush1.bf16.msra.mxu0 0
        %1895 = vmatprep.subr.bf16.mxu0 0
        %1896 = vmatpush1.bf16.msra.mxu0 0
        %1897 = vmatprep.subr.bf16.mxu0 0
        %1898 = vmatpush1.bf16.msra.mxu0 0
        %1899 = vmatprep.subr.bf16.mxu0 0
        %1900 = vmatpush1.bf16.msra.mxu0 0
        %1901 = vmatprep.subr.bf16.mxu0 0
        %1902 = vmatpush1.bf16.msra.mxu0 0
        %1903 = vmatprep.mubr.bf16.mxu0 0
        %1904 = vmatmul.mubr.bf16.gmra.mrb[0].mxu0 %v1869
        %v1905 = vpop.f32.mrb[0].mxu0
        %v1906 = vadd.f32 0.0, %v1905
        %v1907 = vpop.f32.mrb[0].mxu0
        %v1908 = vpop.f32.mrb[0].mxu0
        %v1909 = vadd.f32 0.0, %v1908
        %v1910 = vpop.f32.mrb[0].mxu0
        %1911 = vdwg.mxu0
        %v1913 = vsel %vm1231, %v1818, 0
        %1915 = vmatprep.subr.bf16.mxu0 0
        %1916 = vmatpush1.bf16.msra.mxu0 %v1223
        %1917 = vmatprep.subr.bf16.mxu0 0
        %1918 = vmatpush1.bf16.msra.mxu0 0
        %1919 = vmatprep.subr.bf16.mxu0 0
        %1920 = vmatpush1.bf16.msra.mxu0 0
        %1921 = vmatprep.subr.bf16.mxu0 0
        %1922 = vmatpush1.bf16.msra.mxu0 0
        %1923 = vmatprep.subr.bf16.mxu0 0
        %1924 = vmatpush1.bf16.msra.mxu0 0
        %1925 = vmatprep.subr.bf16.mxu0 0
        %1926 = vmatpush1.bf16.msra.mxu0 0
        %1927 = vmatprep.subr.bf16.mxu0 0
        %1928 = vmatpush1.bf16.msra.mxu0 0
        %1929 = vmatprep.subr.bf16.mxu0 0
        %1930 = vmatpush1.bf16.msra.mxu0 0
        %1931 = vmatprep.subr.bf16.mxu0 0
        %1932 = vmatpush1.bf16.msra.mxu0 0
        %1933 = vmatprep.subr.bf16.mxu0 0
        %1934 = vmatpush1.bf16.msra.mxu0 0
        %1935 = vmatprep.subr.bf16.mxu0 0
        %1936 = vmatpush1.bf16.msra.mxu0 0
        %1937 = vmatprep.subr.bf16.mxu0 0
        %1938 = vmatpush1.bf16.msra.mxu0 0
        %1939 = vmatprep.subr.bf16.mxu0 0
        %1940 = vmatpush1.bf16.msra.mxu0 0
        %1941 = vmatprep.subr.bf16.mxu0 0
        %1942 = vmatpush1.bf16.msra.mxu0 0
        %1943 = vmatprep.subr.bf16.mxu0 0
        %1944 = vmatpush1.bf16.msra.mxu0 0
        %1945 = vmatprep.subr.bf16.mxu0 0
        %1946 = vmatpush1.bf16.msra.mxu0 0
        %1947 = vmatprep.mubr.bf16.mxu0 0
        %1948 = vmatmul.mubr.bf16.gmra.mrb[0].mxu0 %v1913
        %v1949 = vpop.f32.mrb[0].mxu0
        %v1950 = vadd.f32 0.0, %v1949
        %v1951 = vpop.f32.mrb[0].mxu0
        %v1952 = vpop.f32.mrb[0].mxu0
        %v1953 = vadd.f32 0.0, %v1952
        %v1954 = vpop.f32.mrb[0].mxu0
        %1955 = vdwg.mxu0
        %v1957 = vsel %vm1231, %v1819, 0
        %1959 = vmatprep.subr.bf16.mxu0 0
        %1960 = vmatpush1.bf16.msra.mxu0 %v1224
        %1961 = vmatprep.subr.bf16.mxu0 0
        %1962 = vmatpush1.bf16.msra.mxu0 0
        %1963 = vmatprep.subr.bf16.mxu0 0
        %1964 = vmatpush1.bf16.msra.mxu0 0
        %1965 = vmatprep.subr.bf16.mxu0 0
        %1966 = vmatpush1.bf16.msra.mxu0 0
        %1967 = vmatprep.subr.bf16.mxu0 0
        %1968 = vmatpush1.bf16.msra.mxu0 0
        %1969 = vmatprep.subr.bf16.mxu0 0
        %1970 = vmatpush1.bf16.msra.mxu0 0
        %1971 = vmatprep.subr.bf16.mxu0 0
        %1972 = vmatpush1.bf16.msra.mxu0 0
        %1973 = vmatprep.subr.bf16.mxu0 0
        %1974 = vmatpush1.bf16.msra.mxu0 0
        %1975 = vmatprep.subr.bf16.mxu0 0
        %1976 = vmatpush1.bf16.msra.mxu0 0
        %1977 = vmatprep.subr.bf16.mxu0 0
        %1978 = vmatpush1.bf16.msra.mxu0 0
        %1979 = vmatprep.subr.bf16.mxu0 0
        %1980 = vmatpush1.bf16.msra.mxu0 0
        %1981 = vmatprep.subr.bf16.mxu0 0
        %1982 = vmatpush1.bf16.msra.mxu0 0
        %1983 = vmatprep.subr.bf16.mxu0 0
        %1984 = vmatpush1.bf16.msra.mxu0 0
        %1985 = vmatprep.subr.bf16.mxu0 0
        %1986 = vmatpush1.bf16.msra.mxu0 0
        %1987 = vmatprep.subr.bf16.mxu0 0
        %1988 = vmatpush1.bf16.msra.mxu0 0
        %1989 = vmatprep.subr.bf16.mxu0 0
        %1990 = vmatpush1.bf16.msra.mxu0 0
        %1991 = vmatprep.mubr.bf16.mxu0 0
        %1992 = vmatmul.mubr.bf16.gmra.mrb[0].mxu0 %v1957
        %v1993 = vpop.f32.mrb[0].mxu0
        %v1994 = vadd.f32 0.0, %v1993
        %v1995 = vpop.f32.mrb[0].mxu0
        %v1996 = vpop.f32.mrb[0].mxu0
        %v1997 = vadd.f32 0.0, %v1996
        %v1998 = vpop.f32.mrb[0].mxu0
        %1999 = vdwg.mxu0
        %v2001 = vsel %vm1231, %v1820, 0
        %2003 = vmatprep.subr.bf16.mxu0 0
        %2004 = vmatpush1.bf16.msra.mxu0 %v1225
        %2005 = vmatprep.subr.bf16.mxu0 0
        %2006 = vmatpush1.bf16.msra.mxu0 0
        %2007 = vmatprep.subr.bf16.mxu0 0
        %2008 = vmatpush1.bf16.msra.mxu0 0
        %2009 = vmatprep.subr.bf16.mxu0 0
        %2010 = vmatpush1.bf16.msra.mxu0 0
        %2011 = vmatprep.subr.bf16.mxu0 0
        %2012 = vmatpush1.bf16.msra.mxu0 0
        %2013 = vmatprep.subr.bf16.mxu0 0
        %2014 = vmatpush1.bf16.msra.mxu0 0
        %2015 = vmatprep.subr.bf16.mxu0 0
        %2016 = vmatpush1.bf16.msra.mxu0 0
        %2017 = vmatprep.subr.bf16.mxu0 0
        %2018 = vmatpush1.bf16.msra.mxu0 0
        %2019 = vmatprep.subr.bf16.mxu0 0
        %2020 = vmatpush1.bf16.msra.mxu0 0
        %2021 = vmatprep.subr.bf16.mxu0 0
        %2022 = vmatpush1.bf16.msra.mxu0 0
        %2023 = vmatprep.subr.bf16.mxu0 0
        %2024 = vmatpush1.bf16.msra.mxu0 0
        %2025 = vmatprep.subr.bf16.mxu0 0
        %2026 = vmatpush1.bf16.msra.mxu0 0
        %2027 = vmatprep.subr.bf16.mxu0 0
        %2028 = vmatpush1.bf16.msra.mxu0 0
        %2029 = vmatprep.subr.bf16.mxu0 0
        %2030 = vmatpush1.bf16.msra.mxu0 0
        %2031 = vmatprep.subr.bf16.mxu0 0
        %2032 = vmatpush1.bf16.msra.mxu0 0
        %2033 = vmatprep.subr.bf16.mxu0 0
        %2034 = vmatpush1.bf16.msra.mxu0 0
        %2035 = vmatprep.mubr.bf16.mxu0 0
        %2036 = vmatmul.mubr.bf16.gmra.mrb[0].mxu0 %v2001
        %v2037 = vpop.f32.mrb[0].mxu0
        %v2038 = vadd.f32 0.0, %v2037
        %v2039 = vpop.f32.mrb[0].mxu0
        %v2040 = vpop.f32.mrb[0].mxu0
        %v2041 = vadd.f32 0.0, %v2040
        %v2042 = vpop.f32.mrb[0].mxu0
        %2043 = vdwg.mxu0
        %v2045 = vsel %vm1231, %v1821, 0
        %2047 = vmatprep.subr.bf16.mxu0 0
        %2048 = vmatpush1.bf16.msra.mxu0 %v1226
        %2049 = vmatprep.subr.bf16.mxu0 0
        %2050 = vmatpush1.bf16.msra.mxu0 0
        %2051 = vmatprep.subr.bf16.mxu0 0
        %2052 = vmatpush1.bf16.msra.mxu0 0
        %2053 = vmatprep.subr.bf16.mxu0 0
        %2054 = vmatpush1.bf16.msra.mxu0 0
        %2055 = vmatprep.subr.bf16.mxu0 0
        %2056 = vmatpush1.bf16.msra.mxu0 0
        %2057 = vmatprep.subr.bf16.mxu0 0
        %2058 = vmatpush1.bf16.msra.mxu0 0
        %2059 = vmatprep.subr.bf16.mxu0 0
        %2060 = vmatpush1.bf16.msra.mxu0 0
        %2061 = vmatprep.subr.bf16.mxu0 0
        %2062 = vmatpush1.bf16.msra.mxu0 0
        %2063 = vmatprep.subr.bf16.mxu0 0
        %2064 = vmatpush1.bf16.msra.mxu0 0
        %2065 = vmatprep.subr.bf16.mxu0 0
        %2066 = vmatpush1.bf16.msra.mxu0 0
        %2067 = vmatprep.subr.bf16.mxu0 0
        %2068 = vmatpush1.bf16.msra.mxu0 0
        %2069 = vmatprep.subr.bf16.mxu0 0
        %2070 = vmatpush1.bf16.msra.mxu0 0
        %2071 = vmatprep.subr.bf16.mxu0 0
        %2072 = vmatpush1.bf16.msra.mxu0 0
        %2073 = vmatprep.subr.bf16.mxu0 0
        %2074 = vmatpush1.bf16.msra.mxu0 0
        %2075 = vmatprep.subr.bf16.mxu0 0
        %2076 = vmatpush1.bf16.msra.mxu0 0
        %2077 = vmatprep.subr.bf16.mxu0 0
        %2078 = vmatpush1.bf16.msra.mxu0 0
        %2079 = vmatprep.mubr.bf16.mxu0 0
        %2080 = vmatmul.mubr.bf16.gmra.mrb[0].mxu0 %v2045
        %v2081 = vpop.f32.mrb[0].mxu0
        %v2082 = vadd.f32 0.0, %v2081
        %v2083 = vpop.f32.mrb[0].mxu0
        %v2084 = vpop.f32.mrb[0].mxu0
        %v2085 = vadd.f32 0.0, %v2084
        %v2086 = vpop.f32.mrb[0].mxu0
        %2087 = vdwg.mxu0
        %v2089 = vsel %vm1231, %v1822, 0
        %2091 = vmatprep.subr.bf16.mxu0 0
        %2092 = vmatpush1.bf16.msra.mxu0 %v1227
        %2093 = vmatprep.subr.bf16.mxu0 0
        %2094 = vmatpush1.bf16.msra.mxu0 0
        %2095 = vmatprep.subr.bf16.mxu0 0
        %2096 = vmatpush1.bf16.msra.mxu0 0
        %2097 = vmatprep.subr.bf16.mxu0 0
        %2098 = vmatpush1.bf16.msra.mxu0 0
        %2099 = vmatprep.subr.bf16.mxu0 0
        %2100 = vmatpush1.bf16.msra.mxu0 0
        %2101 = vmatprep.subr.bf16.mxu0 0
        %2102 = vmatpush1.bf16.msra.mxu0 0
        %2103 = vmatprep.subr.bf16.mxu0 0
        %2104 = vmatpush1.bf16.msra.mxu0 0
        %2105 = vmatprep.subr.bf16.mxu0 0
        %2106 = vmatpush1.bf16.msra.mxu0 0
        %2107 = vmatprep.subr.bf16.mxu0 0
        %2108 = vmatpush1.bf16.msra.mxu0 0
        %2109 = vmatprep.subr.bf16.mxu0 0
        %2110 = vmatpush1.bf16.msra.mxu0 0
        %2111 = vmatprep.subr.bf16.mxu0 0
        %2112 = vmatpush1.bf16.msra.mxu0 0
        %2113 = vmatprep.subr.bf16.mxu0 0
        %2114 = vmatpush1.bf16.msra.mxu0 0
        %2115 = vmatprep.subr.bf16.mxu0 0
        %2116 = vmatpush1.bf16.msra.mxu0 0
        %2117 = vmatprep.subr.bf16.mxu0 0
        %2118 = vmatpush1.bf16.msra.mxu0 0
        %2119 = vmatprep.subr.bf16.mxu0 0
        %2120 = vmatpush1.bf16.msra.mxu0 0
        %2121 = vmatprep.subr.bf16.mxu0 0
        %2122 = vmatpush1.bf16.msra.mxu0 0
        %2123 = vmatprep.mubr.bf16.mxu0 0
        %2124 = vmatmul.mubr.bf16.gmra.mrb[0].mxu0 %v2089
        %v2125 = vpop.f32.mrb[0].mxu0
        %v2126 = vadd.f32 0.0, %v2125
        %v2127 = vpop.f32.mrb[0].mxu0
        %v2128 = vpop.f32.mrb[0].mxu0
        %v2129 = vadd.f32 0.0, %v2128
        %v2130 = vpop.f32.mrb[0].mxu0
        %2131 = vdwg.mxu0
        %v2133 = vsel %vm1231, %v1823, 0
        %2135 = vmatprep.subr.bf16.mxu0 0
        %2136 = vmatpush1.bf16.msra.mxu0 %v1228
        %2137 = vmatprep.subr.bf16.mxu0 0
        %2138 = vmatpush1.bf16.msra.mxu0 0
        %2139 = vmatprep.subr.bf16.mxu0 0
        %2140 = vmatpush1.bf16.msra.mxu0 0
        %2141 = vmatprep.subr.bf16.mxu0 0
        %2142 = vmatpush1.bf16.msra.mxu0 0
        %2143 = vmatprep.subr.bf16.mxu0 0
        %2144 = vmatpush1.bf16.msra.mxu0 0
        %2145 = vmatprep.subr.bf16.mxu0 0
        %2146 = vmatpush1.bf16.msra.mxu0 0
        %2147 = vmatprep.subr.bf16.mxu0 0
        %2148 = vmatpush1.bf16.msra.mxu0 0
        %2149 = vmatprep.subr.bf16.mxu0 0
        %2150 = vmatpush1.bf16.msra.mxu0 0
        %2151 = vmatprep.subr.bf16.mxu0 0
        %2152 = vmatpush1.bf16.msra.mxu0 0
        %2153 = vmatprep.subr.bf16.mxu0 0
        %2154 = vmatpush1.bf16.msra.mxu0 0
        %2155 = vmatprep.subr.bf16.mxu0 0
        %2156 = vmatpush1.bf16.msra.mxu0 0
        %2157 = vmatprep.subr.bf16.mxu0 0
        %2158 = vmatpush1.bf16.msra.mxu0 0
        %2159 = vmatprep.subr.bf16.mxu0 0
        %2160 = vmatpush1.bf16.msra.mxu0 0
        %2161 = vmatprep.subr.bf16.mxu0 0
        %2162 = vmatpush1.bf16.msra.mxu0 0
        %2163 = vmatprep.subr.bf16.mxu0 0
        %2164 = vmatpush1.bf16.msra.mxu0 0
        %2165 = vmatprep.subr.bf16.mxu0 0
        %2166 = vmatpush1.bf16.msra.mxu0 0
        %2167 = vmatprep.mubr.bf16.mxu0 0
        %2168 = vmatmul.mubr.bf16.gmra.mrb[0].mxu0 %v2133
        %v2169 = vpop.f32.mrb[0].mxu0
        %v2170 = vadd.f32 0.0, %v2169
        %v2171 = vpop.f32.mrb[0].mxu0
        %v2172 = vpop.f32.mrb[0].mxu0
        %v2173 = vadd.f32 0.0, %v2172
        %v2174 = vpop.f32.mrb[0].mxu0
        %2175 = vdwg.mxu0
        %v2176 = vpack.c.bf16 %v1865, %v1862
        %v2177 = vpack.c.bf16 %v1909, %v1906
        %v2178 = vpack.c.bf16 %v1953, %v1950
        %v2179 = vpack.c.bf16 %v1997, %v1994
        %v2180 = vpack.c.bf16 %v2041, %v2038
        %v2181 = vpack.c.bf16 %v2085, %v2082
        %v2182 = vpack.c.bf16 %v2129, %v2126
        %v2183 = vpack.c.bf16 %v2173, %v2170
        %v2184 = vld [vmem:[#allocation17] sm:$0xf]
        %v2185 = vld [vmem:[#allocation17 + $0x4] sm:$0xf]
        %2187 = vrot.lane.b32.xlu0 %v1205, 112
        %v2188 = vpop.permute.xlu0 %2187
        %2190 = vrot.lane.b32.xlu0 %v1213, 112
        %v2191 = vpop.permute.xlu0 %2190
        %v2193 = vsel %vm1231, %v2188, 0
        %v2196 = vsel %vm1231, %v2191, 0
        %2198 = vmatprep.subr.bf16.mxu0 0
        %2199 = vmatpush1.bf16.xpose.msra.mxu0 %v2196
        %2200 = vmatprep.subr.bf16.mxu0 0
        %2201 = vmatpush1.bf16.xpose.msra.mxu0 0
        %2202 = vmatprep.subr.bf16.mxu0 0
        %2203 = vmatpush1.bf16.xpose.msra.mxu0 0
        %2204 = vmatprep.subr.bf16.mxu0 0
        %2205 = vmatpush1.bf16.xpose.msra.mxu0 0
        %2206 = vmatprep.subr.bf16.mxu0 0
        %2207 = vmatpush1.bf16.xpose.msra.mxu0 0
        %2208 = vmatprep.subr.bf16.mxu0 0
        %2209 = vmatpush1.bf16.xpose.msra.mxu0 0
        %2210 = vmatprep.subr.bf16.mxu0 0
        %2211 = vmatpush1.bf16.xpose.msra.mxu0 0
        %2212 = vmatprep.subr.bf16.mxu0 0
        %2213 = vmatpush1.bf16.xpose.msra.mxu0 0
        %2214 = vmatprep.subr.bf16.mxu0 0
        %2215 = vmatpush1.bf16.xpose.msra.mxu0 0
        %2216 = vmatprep.subr.bf16.mxu0 0
        %2217 = vmatpush1.bf16.xpose.msra.mxu0 0
        %2218 = vmatprep.subr.bf16.mxu0 0
        %2219 = vmatpush1.bf16.xpose.msra.mxu0 0
        %2220 = vmatprep.subr.bf16.mxu0 0
        %2221 = vmatpush1.bf16.xpose.msra.mxu0 0
        %2222 = vmatprep.subr.bf16.mxu0 0
        %2223 = vmatpush1.bf16.xpose.msra.mxu0 0
        %2224 = vmatprep.subr.bf16.mxu0 0
        %2225 = vmatpush1.bf16.xpose.msra.mxu0 0
        %2226 = vmatprep.subr.bf16.mxu0 0
        %2227 = vmatpush1.bf16.xpose.msra.mxu0 0
        %2228 = vmatprep.subr.bf16.mxu0 0
        %2229 = vmatpush1.bf16.xpose.msra.mxu0 0
        %2230 = vmatprep.mubr.bf16.mxu0 0
        %2231 = vmatmul.mubr.bf16.gmra.mrb[0].mxu0 %v2193
        %v2232 = vpop.f32.mrb[0].mxu0
        %v2233 = vadd.f32 0.0, %v2232
        %v2234 = vpop.f32.mrb[0].mxu0
        %v2235 = vpop.f32.mrb[0].mxu0
        %v2236 = vadd.f32 0.0, %v2235
        %v2237 = vpop.f32.mrb[0].mxu0
        %2238 = vdwg.mxu0
        %2240 = vrot.lane.b32.xlu0 %v1206, 112
        %v2241 = vpop.permute.xlu0 %2240
        %2243 = vrot.lane.b32.xlu0 %v1214, 112
        %v2244 = vpop.permute.xlu0 %2243
        %v2246 = vsel %vm1231, %v2241, 0
        %v2249 = vsel %vm1231, %v2244, 0
        %2251 = vmatprep.subr.bf16.mxu0 0
        %2252 = vmatpush1.bf16.xpose.msra.mxu0 %v2249
        %2253 = vmatprep.subr.bf16.mxu0 0
        %2254 = vmatpush1.bf16.xpose.msra.mxu0 0
        %2255 = vmatprep.subr.bf16.mxu0 0
        %2256 = vmatpush1.bf16.xpose.msra.mxu0 0
        %2257 = vmatprep.subr.bf16.mxu0 0
        %2258 = vmatpush1.bf16.xpose.msra.mxu0 0
        %2259 = vmatprep.subr.bf16.mxu0 0
        %2260 = vmatpush1.bf16.xpose.msra.mxu0 0
        %2261 = vmatprep.subr.bf16.mxu0 0
        %2262 = vmatpush1.bf16.xpose.msra.mxu0 0
        %2263 = vmatprep.subr.bf16.mxu0 0
        %2264 = vmatpush1.bf16.xpose.msra.mxu0 0
        %2265 = vmatprep.subr.bf16.mxu0 0
        %2266 = vmatpush1.bf16.xpose.msra.mxu0 0
        %2267 = vmatprep.subr.bf16.mxu0 0
        %2268 = vmatpush1.bf16.xpose.msra.mxu0 0
        %2269 = vmatprep.subr.bf16.mxu0 0
        %2270 = vmatpush1.bf16.xpose.msra.mxu0 0
        %2271 = vmatprep.subr.bf16.mxu0 0
        %2272 = vmatpush1.bf16.xpose.msra.mxu0 0
        %2273 = vmatprep.subr.bf16.mxu0 0
        %2274 = vmatpush1.bf16.xpose.msra.mxu0 0
        %2275 = vmatprep.subr.bf16.mxu0 0
        %2276 = vmatpush1.bf16.xpose.msra.mxu0 0
        %2277 = vmatprep.subr.bf16.mxu0 0
        %2278 = vmatpush1.bf16.xpose.msra.mxu0 0
        %2279 = vmatprep.subr.bf16.mxu0 0
        %2280 = vmatpush1.bf16.xpose.msra.mxu0 0
        %2281 = vmatprep.subr.bf16.mxu0 0
        %2282 = vmatpush1.bf16.xpose.msra.mxu0 0
        %2283 = vmatprep.mubr.bf16.mxu0 0
        %2284 = vmatmul.mubr.bf16.gmra.mrb[0].mxu0 %v2246
        %v2285 = vpop.f32.mrb[0].mxu0
        %v2286 = vadd.f32 0.0, %v2285
        %v2287 = vpop.f32.mrb[0].mxu0
        %v2288 = vpop.f32.mrb[0].mxu0
        %v2289 = vadd.f32 0.0, %v2288
        %v2290 = vpop.f32.mrb[0].mxu0
        %2291 = vdwg.mxu0
        %2293 = vrot.lane.b32.xlu0 %v1207, 112
        %v2294 = vpop.permute.xlu0 %2293
        %2296 = vrot.lane.b32.xlu0 %v1215, 112
        %v2297 = vpop.permute.xlu0 %2296
        %v2299 = vsel %vm1231, %v2294, 0
        %v2302 = vsel %vm1231, %v2297, 0
        %2304 = vmatprep.subr.bf16.mxu0 0
        %2305 = vmatpush1.bf16.xpose.msra.mxu0 %v2302
        %2306 = vmatprep.subr.bf16.mxu0 0
        %2307 = vmatpush1.bf16.xpose.msra.mxu0 0
        %2308 = vmatprep.subr.bf16.mxu0 0
        %2309 = vmatpush1.bf16.xpose.msra.mxu0 0
        %2310 = vmatprep.subr.bf16.mxu0 0
        %2311 = vmatpush1.bf16.xpose.msra.mxu0 0
        %2312 = vmatprep.subr.bf16.mxu0 0
        %2313 = vmatpush1.bf16.xpose.msra.mxu0 0
        %2314 = vmatprep.subr.bf16.mxu0 0
        %2315 = vmatpush1.bf16.xpose.msra.mxu0 0
        %2316 = vmatprep.subr.bf16.mxu0 0
        %2317 = vmatpush1.bf16.xpose.msra.mxu0 0
        %2318 = vmatprep.subr.bf16.mxu0 0
        %2319 = vmatpush1.bf16.xpose.msra.mxu0 0
        %2320 = vmatprep.subr.bf16.mxu0 0
        %2321 = vmatpush1.bf16.xpose.msra.mxu0 0
        %2322 = vmatprep.subr.bf16.mxu0 0
        %2323 = vmatpush1.bf16.xpose.msra.mxu0 0
        %2324 = vmatprep.subr.bf16.mxu0 0
        %2325 = vmatpush1.bf16.xpose.msra.mxu0 0
        %2326 = vmatprep.subr.bf16.mxu0 0
        %2327 = vmatpush1.bf16.xpose.msra.mxu0 0
        %2328 = vmatprep.subr.bf16.mxu0 0
        %2329 = vmatpush1.bf16.xpose.msra.mxu0 0
        %2330 = vmatprep.subr.bf16.mxu0 0
        %2331 = vmatpush1.bf16.xpose.msra.mxu0 0
        %2332 = vmatprep.subr.bf16.mxu0 0
        %2333 = vmatpush1.bf16.xpose.msra.mxu0 0
        %2334 = vmatprep.subr.bf16.mxu0 0
        %2335 = vmatpush1.bf16.xpose.msra.mxu0 0
        %2336 = vmatprep.mubr.bf16.mxu0 0
        %2337 = vmatmul.mubr.bf16.gmra.mrb[0].mxu0 %v2299
        %v2338 = vpop.f32.mrb[0].mxu0
        %v2339 = vadd.f32 0.0, %v2338
        %v2340 = vpop.f32.mrb[0].mxu0
        %v2341 = vpop.f32.mrb[0].mxu0
        %v2342 = vadd.f32 0.0, %v2341
        %v2343 = vpop.f32.mrb[0].mxu0
        %2344 = vdwg.mxu0
        %2346 = vrot.lane.b32.xlu0 %v1208, 112
        %v2347 = vpop.permute.xlu0 %2346
        %2349 = vrot.lane.b32.xlu0 %v1216, 112
        %v2350 = vpop.permute.xlu0 %2349
        %v2352 = vsel %vm1231, %v2347, 0
        %v2355 = vsel %vm1231, %v2350, 0
        %2357 = vmatprep.subr.bf16.mxu0 0
        %2358 = vmatpush1.bf16.xpose.msra.mxu0 %v2355
        %2359 = vmatprep.subr.bf16.mxu0 0
        %2360 = vmatpush1.bf16.xpose.msra.mxu0 0
        %2361 = vmatprep.subr.bf16.mxu0 0
        %2362 = vmatpush1.bf16.xpose.msra.mxu0 0
        %2363 = vmatprep.subr.bf16.mxu0 0
        %2364 = vmatpush1.bf16.xpose.msra.mxu0 0
        %2365 = vmatprep.subr.bf16.mxu0 0
        %2366 = vmatpush1.bf16.xpose.msra.mxu0 0
        %2367 = vmatprep.subr.bf16.mxu0 0
        %2368 = vmatpush1.bf16.xpose.msra.mxu0 0
        %2369 = vmatprep.subr.bf16.mxu0 0
        %2370 = vmatpush1.bf16.xpose.msra.mxu0 0
        %2371 = vmatprep.subr.bf16.mxu0 0
        %2372 = vmatpush1.bf16.xpose.msra.mxu0 0
        %2373 = vmatprep.subr.bf16.mxu0 0
        %2374 = vmatpush1.bf16.xpose.msra.mxu0 0
        %2375 = vmatprep.subr.bf16.mxu0 0
        %2376 = vmatpush1.bf16.xpose.msra.mxu0 0
        %2377 = vmatprep.subr.bf16.mxu0 0
        %2378 = vmatpush1.bf16.xpose.msra.mxu0 0
        %2379 = vmatprep.subr.bf16.mxu0 0
        %2380 = vmatpush1.bf16.xpose.msra.mxu0 0
        %2381 = vmatprep.subr.bf16.mxu0 0
        %2382 = vmatpush1.bf16.xpose.msra.mxu0 0
        %2383 = vmatprep.subr.bf16.mxu0 0
        %2384 = vmatpush1.bf16.xpose.msra.mxu0 0
        %2385 = vmatprep.subr.bf16.mxu0 0
        %2386 = vmatpush1.bf16.xpose.msra.mxu0 0
        %2387 = vmatprep.subr.bf16.mxu0 0
        %2388 = vmatpush1.bf16.xpose.msra.mxu0 0
        %2389 = vmatprep.mubr.bf16.mxu0 0
        %2390 = vmatmul.mubr.bf16.gmra.mrb[0].mxu0 %v2352
        %v2391 = vpop.f32.mrb[0].mxu0
        %v2392 = vadd.f32 0.0, %v2391
        %v2393 = vpop.f32.mrb[0].mxu0
        %v2394 = vpop.f32.mrb[0].mxu0
        %v2395 = vadd.f32 0.0, %v2394
        %v2396 = vpop.f32.mrb[0].mxu0
        %2397 = vdwg.mxu0
        %2399 = vrot.lane.b32.xlu0 %v1209, 112
        %v2400 = vpop.permute.xlu0 %2399
        %2402 = vrot.lane.b32.xlu0 %v1217, 112
        %v2403 = vpop.permute.xlu0 %2402
        %v2405 = vsel %vm1231, %v2400, 0
        %v2408 = vsel %vm1231, %v2403, 0
        %2410 = vmatprep.subr.bf16.mxu0 0
        %2411 = vmatpush1.bf16.xpose.msra.mxu0 %v2408
        %2412 = vmatprep.subr.bf16.mxu0 0
        %2413 = vmatpush1.bf16.xpose.msra.mxu0 0
        %2414 = vmatprep.subr.bf16.mxu0 0
        %2415 = vmatpush1.bf16.xpose.msra.mxu0 0
        %2416 = vmatprep.subr.bf16.mxu0 0
        %2417 = vmatpush1.bf16.xpose.msra.mxu0 0
        %2418 = vmatprep.subr.bf16.mxu0 0
        %2419 = vmatpush1.bf16.xpose.msra.mxu0 0
        %2420 = vmatprep.subr.bf16.mxu0 0
        %2421 = vmatpush1.bf16.xpose.msra.mxu0 0
        %2422 = vmatprep.subr.bf16.mxu0 0
        %2423 = vmatpush1.bf16.xpose.msra.mxu0 0
        %2424 = vmatprep.subr.bf16.mxu0 0
        %2425 = vmatpush1.bf16.xpose.msra.mxu0 0
        %2426 = vmatprep.subr.bf16.mxu0 0
        %2427 = vmatpush1.bf16.xpose.msra.mxu0 0
        %2428 = vmatprep.subr.bf16.mxu0 0
        %2429 = vmatpush1.bf16.xpose.msra.mxu0 0
        %2430 = vmatprep.subr.bf16.mxu0 0
        %2431 = vmatpush1.bf16.xpose.msra.mxu0 0
        %2432 = vmatprep.subr.bf16.mxu0 0
        %2433 = vmatpush1.bf16.xpose.msra.mxu0 0
        %2434 = vmatprep.subr.bf16.mxu0 0
        %2435 = vmatpush1.bf16.xpose.msra.mxu0 0
        %2436 = vmatprep.subr.bf16.mxu0 0
        %2437 = vmatpush1.bf16.xpose.msra.mxu0 0
        %2438 = vmatprep.subr.bf16.mxu0 0
        %2439 = vmatpush1.bf16.xpose.msra.mxu0 0
        %2440 = vmatprep.subr.bf16.mxu0 0
        %2441 = vmatpush1.bf16.xpose.msra.mxu0 0
        %2442 = vmatprep.mubr.bf16.mxu0 0
        %2443 = vmatmul.mubr.bf16.gmra.mrb[0].mxu0 %v2405
        %v2444 = vpop.f32.mrb[0].mxu0
        %v2445 = vadd.f32 0.0, %v2444
        %v2446 = vpop.f32.mrb[0].mxu0
        %v2447 = vpop.f32.mrb[0].mxu0
        %v2448 = vadd.f32 0.0, %v2447
        %v2449 = vpop.f32.mrb[0].mxu0
        %2450 = vdwg.mxu0
        %2452 = vrot.lane.b32.xlu0 %v1210, 112
        %v2453 = vpop.permute.xlu0 %2452
        %2455 = vrot.lane.b32.xlu0 %v1218, 112
        %v2456 = vpop.permute.xlu0 %2455
        %v2458 = vsel %vm1231, %v2453, 0
        %v2461 = vsel %vm1231, %v2456, 0
        %2463 = vmatprep.subr.bf16.mxu0 0
        %2464 = vmatpush1.bf16.xpose.msra.mxu0 %v2461
        %2465 = vmatprep.subr.bf16.mxu0 0
        %2466 = vmatpush1.bf16.xpose.msra.mxu0 0
        %2467 = vmatprep.subr.bf16.mxu0 0
        %2468 = vmatpush1.bf16.xpose.msra.mxu0 0
        %2469 = vmatprep.subr.bf16.mxu0 0
        %2470 = vmatpush1.bf16.xpose.msra.mxu0 0
        %2471 = vmatprep.subr.bf16.mxu0 0
        %2472 = vmatpush1.bf16.xpose.msra.mxu0 0
        %2473 = vmatprep.subr.bf16.mxu0 0
        %2474 = vmatpush1.bf16.xpose.msra.mxu0 0
        %2475 = vmatprep.subr.bf16.mxu0 0
        %2476 = vmatpush1.bf16.xpose.msra.mxu0 0
        %2477 = vmatprep.subr.bf16.mxu0 0
        %2478 = vmatpush1.bf16.xpose.msra.mxu0 0
        %2479 = vmatprep.subr.bf16.mxu0 0
        %2480 = vmatpush1.bf16.xpose.msra.mxu0 0
        %2481 = vmatprep.subr.bf16.mxu0 0
        %2482 = vmatpush1.bf16.xpose.msra.mxu0 0
        %2483 = vmatprep.subr.bf16.mxu0 0
        %2484 = vmatpush1.bf16.xpose.msra.mxu0 0
        %2485 = vmatprep.subr.bf16.mxu0 0
        %2486 = vmatpush1.bf16.xpose.msra.mxu0 0
        %2487 = vmatprep.subr.bf16.mxu0 0
        %2488 = vmatpush1.bf16.xpose.msra.mxu0 0
        %2489 = vmatprep.subr.bf16.mxu0 0
        %2490 = vmatpush1.bf16.xpose.msra.mxu0 0
        %2491 = vmatprep.subr.bf16.mxu0 0
        %2492 = vmatpush1.bf16.xpose.msra.mxu0 0
        %2493 = vmatprep.subr.bf16.mxu0 0
        %2494 = vmatpush1.bf16.xpose.msra.mxu0 0
        %2495 = vmatprep.mubr.bf16.mxu0 0
        %2496 = vmatmul.mubr.bf16.gmra.mrb[0].mxu0 %v2458
        %v2497 = vpop.f32.mrb[0].mxu0
        %v2498 = vadd.f32 0.0, %v2497
        %v2499 = vpop.f32.mrb[0].mxu0
        %v2500 = vpop.f32.mrb[0].mxu0
        %v2501 = vadd.f32 0.0, %v2500
        %v2502 = vpop.f32.mrb[0].mxu0
        %2503 = vdwg.mxu0
        %2505 = vrot.lane.b32.xlu0 %v1211, 112
        %v2506 = vpop.permute.xlu0 %2505
        %2508 = vrot.lane.b32.xlu0 %v1219, 112
        %v2509 = vpop.permute.xlu0 %2508
        %v2511 = vsel %vm1231, %v2506, 0
        %v2514 = vsel %vm1231, %v2509, 0
        %2516 = vmatprep.subr.bf16.mxu0 0
        %2517 = vmatpush1.bf16.xpose.msra.mxu0 %v2514
        %2518 = vmatprep.subr.bf16.mxu0 0
        %2519 = vmatpush1.bf16.xpose.msra.mxu0 0
        %2520 = vmatprep.subr.bf16.mxu0 0
        %2521 = vmatpush1.bf16.xpose.msra.mxu0 0
        %2522 = vmatprep.subr.bf16.mxu0 0
        %2523 = vmatpush1.bf16.xpose.msra.mxu0 0
        %2524 = vmatprep.subr.bf16.mxu0 0
        %2525 = vmatpush1.bf16.xpose.msra.mxu0 0
        %2526 = vmatprep.subr.bf16.mxu0 0
        %2527 = vmatpush1.bf16.xpose.msra.mxu0 0
        %2528 = vmatprep.subr.bf16.mxu0 0
        %2529 = vmatpush1.bf16.xpose.msra.mxu0 0
        %2530 = vmatprep.subr.bf16.mxu0 0
        %2531 = vmatpush1.bf16.xpose.msra.mxu0 0
        %2532 = vmatprep.subr.bf16.mxu0 0
        %2533 = vmatpush1.bf16.xpose.msra.mxu0 0
        %2534 = vmatprep.subr.bf16.mxu0 0
        %2535 = vmatpush1.bf16.xpose.msra.mxu0 0
        %2536 = vmatprep.subr.bf16.mxu0 0
        %2537 = vmatpush1.bf16.xpose.msra.mxu0 0
        %2538 = vmatprep.subr.bf16.mxu0 0
        %2539 = vmatpush1.bf16.xpose.msra.mxu0 0
        %2540 = vmatprep.subr.bf16.mxu0 0
        %2541 = vmatpush1.bf16.xpose.msra.mxu0 0
        %2542 = vmatprep.subr.bf16.mxu0 0
        %2543 = vmatpush1.bf16.xpose.msra.mxu0 0
        %2544 = vmatprep.subr.bf16.mxu0 0
        %2545 = vmatpush1.bf16.xpose.msra.mxu0 0
        %2546 = vmatprep.subr.bf16.mxu0 0
        %2547 = vmatpush1.bf16.xpose.msra.mxu0 0
        %2548 = vmatprep.mubr.bf16.mxu0 0
        %2549 = vmatmul.mubr.bf16.gmra.mrb[0].mxu0 %v2511
        %v2550 = vpop.f32.mrb[0].mxu0
        %v2551 = vadd.f32 0.0, %v2550
        %v2552 = vpop.f32.mrb[0].mxu0
        %v2553 = vpop.f32.mrb[0].mxu0
        %v2554 = vadd.f32 0.0, %v2553
        %v2555 = vpop.f32.mrb[0].mxu0
        %2556 = vdwg.mxu0
        %2558 = vrot.lane.b32.xlu0 %v1212, 112
        %v2559 = vpop.permute.xlu0 %2558
        %2561 = vrot.lane.b32.xlu0 %v1220, 112
        %v2562 = vpop.permute.xlu0 %2561
        %v2564 = vsel %vm1231, %v2559, 0
        %v2567 = vsel %vm1231, %v2562, 0
        %2569 = vmatprep.subr.bf16.mxu0 0
        %2570 = vmatpush1.bf16.xpose.msra.mxu0 %v2567
        %2571 = vmatprep.subr.bf16.mxu0 0
        %2572 = vmatpush1.bf16.xpose.msra.mxu0 0
        %2573 = vmatprep.subr.bf16.mxu0 0
        %2574 = vmatpush1.bf16.xpose.msra.mxu0 0
        %2575 = vmatprep.subr.bf16.mxu0 0
        %2576 = vmatpush1.bf16.xpose.msra.mxu0 0
        %2577 = vmatprep.subr.bf16.mxu0 0
        %2578 = vmatpush1.bf16.xpose.msra.mxu0 0
        %2579 = vmatprep.subr.bf16.mxu0 0
        %2580 = vmatpush1.bf16.xpose.msra.mxu0 0
        %2581 = vmatprep.subr.bf16.mxu0 0
        %2582 = vmatpush1.bf16.xpose.msra.mxu0 0
        %2583 = vmatprep.subr.bf16.mxu0 0
        %2584 = vmatpush1.bf16.xpose.msra.mxu0 0
        %2585 = vmatprep.subr.bf16.mxu0 0
        %2586 = vmatpush1.bf16.xpose.msra.mxu0 0
        %2587 = vmatprep.subr.bf16.mxu0 0
        %2588 = vmatpush1.bf16.xpose.msra.mxu0 0
        %2589 = vmatprep.subr.bf16.mxu0 0
        %2590 = vmatpush1.bf16.xpose.msra.mxu0 0
        %2591 = vmatprep.subr.bf16.mxu0 0
        %2592 = vmatpush1.bf16.xpose.msra.mxu0 0
        %2593 = vmatprep.subr.bf16.mxu0 0
        %2594 = vmatpush1.bf16.xpose.msra.mxu0 0
        %2595 = vmatprep.subr.bf16.mxu0 0
        %2596 = vmatpush1.bf16.xpose.msra.mxu0 0
        %2597 = vmatprep.subr.bf16.mxu0 0
        %2598 = vmatpush1.bf16.xpose.msra.mxu0 0
        %2599 = vmatprep.subr.bf16.mxu0 0
        %2600 = vmatpush1.bf16.xpose.msra.mxu0 0
        %2601 = vmatprep.mubr.bf16.mxu0 0
        %2602 = vmatmul.mubr.bf16.gmra.mrb[0].mxu0 %v2564
        %v2603 = vpop.f32.mrb[0].mxu0
        %v2604 = vadd.f32 0.0, %v2603
        %v2605 = vpop.f32.mrb[0].mxu0
        %v2606 = vpop.f32.mrb[0].mxu0
        %v2607 = vadd.f32 0.0, %v2606
        %v2608 = vpop.f32.mrb[0].mxu0
        %2609 = vdwg.mxu0
        %v2610 = vmul.f32 %v2233, 0.25
        %v2611 = vmul.f32 %v2236, 0.25
        %v2612 = vmul.f32 %v2286, 0.25
        %v2613 = vmul.f32 %v2289, 0.25
        %v2614 = vmul.f32 %v2339, 0.25
        %v2615 = vmul.f32 %v2342, 0.25
        %v2616 = vmul.f32 %v2392, 0.25
        %v2617 = vmul.f32 %v2395, 0.25
        %v2618 = vmul.f32 %v2445, 0.25
        %v2619 = vmul.f32 %v2448, 0.25
        %v2620 = vmul.f32 %v2498, 0.25
        %v2621 = vmul.f32 %v2501, 0.25
        %v2622 = vmul.f32 %v2551, 0.25
        %v2623 = vmul.f32 %v2554, 0.25
        %v2624 = vmul.f32 %v2604, 0.25
        %v2625 = vmul.f32 %v2607, 0.25
        %v2626 = vadd.f32 %v2610, %v1229
        %v2627 = vadd.f32 %v2611, %v1230
        %v2628 = vadd.f32 %v2612, %v1229
        %v2629 = vadd.f32 %v2613, %v1230
        %v2630 = vadd.f32 %v2614, %v1229
        %v2631 = vadd.f32 %v2615, %v1230
        %v2632 = vadd.f32 %v2616, %v1229
        %v2633 = vadd.f32 %v2617, %v1230
        %v2634 = vadd.f32 %v2618, %v1229
        %v2635 = vadd.f32 %v2619, %v1230
        %v2636 = vadd.f32 %v2620, %v1229
        %v2637 = vadd.f32 %v2621, %v1230
        %v2638 = vadd.f32 %v2622, %v1229
        %v2639 = vadd.f32 %v2623, %v1230
        %v2640 = vadd.f32 %v2624, %v1229
        %v2641 = vadd.f32 %v2625, %v1230
        %v2642 = vsel %vm1231, %v2626, -inf
        %2643 = vmax.xlane.f32.xlu0 %v2642
        %v2644 = vpop.xlane.xlu0 %2643
        %v2645 = vsel %vm1231, %v2627, -inf
        %2646 = vmax.xlane.f32.xlu0 %v2645
        %v2647 = vpop.xlane.xlu0 %2646
        %v2648 = vsel %vm1231, %v2628, -inf
        %2649 = vmax.xlane.f32.xlu0 %v2648
        %v2650 = vpop.xlane.xlu0 %2649
        %v2651 = vsel %vm1231, %v2629, -inf
        %2652 = vmax.xlane.f32.xlu0 %v2651
        %v2653 = vpop.xlane.xlu0 %2652
        %v2654 = vsel %vm1231, %v2630, -inf
        %2655 = vmax.xlane.f32.xlu0 %v2654
        %v2656 = vpop.xlane.xlu0 %2655
        %v2657 = vsel %vm1231, %v2631, -inf
        %2658 = vmax.xlane.f32.xlu0 %v2657
        %v2659 = vpop.xlane.xlu0 %2658
        %v2660 = vsel %vm1231, %v2632, -inf
        %2661 = vmax.xlane.f32.xlu0 %v2660
        %v2662 = vpop.xlane.xlu0 %2661
        %v2663 = vsel %vm1231, %v2633, -inf
        %2664 = vmax.xlane.f32.xlu0 %v2663
        %v2665 = vpop.xlane.xlu0 %2664
        %v2666 = vsel %vm1231, %v2634, -inf
        %2667 = vmax.xlane.f32.xlu0 %v2666
        %v2668 = vpop.xlane.xlu0 %2667
        %v2669 = vsel %vm1231, %v2635, -inf
        %2670 = vmax.xlane.f32.xlu0 %v2669
        %v2671 = vpop.xlane.xlu0 %2670
        %v2672 = vsel %vm1231, %v2636, -inf
        %2673 = vmax.xlane.f32.xlu0 %v2672
        %v2674 = vpop.xlane.xlu0 %2673
        %v2675 = vsel %vm1231, %v2637, -inf
        %2676 = vmax.xlane.f32.xlu0 %v2675
        %v2677 = vpop.xlane.xlu0 %2676
        %v2678 = vsel %vm1231, %v2638, -inf
        %2679 = vmax.xlane.f32.xlu0 %v2678
        %v2680 = vpop.xlane.xlu0 %2679
        %v2681 = vsel %vm1231, %v2639, -inf
        %2682 = vmax.xlane.f32.xlu0 %v2681
        %v2683 = vpop.xlane.xlu0 %2682
        %v2684 = vsel %vm1231, %v2640, -inf
        %2685 = vmax.xlane.f32.xlu0 %v2684
        %v2686 = vpop.xlane.xlu0 %2685
        %v2687 = vsel %vm1231, %v2641, -inf
        %2688 = vmax.xlane.f32.xlu0 %v2687
        %v2689 = vpop.xlane.xlu0 %2688
        %v2690 = vsub.f32 %v2626, %v2644
        %v2691 = vsub.f32 %v2627, %v2647
        %v2692 = vsub.f32 %v2628, %v2650
        %v2693 = vsub.f32 %v2629, %v2653
        %v2694 = vsub.f32 %v2630, %v2656
        %v2695 = vsub.f32 %v2631, %v2659
        %v2696 = vsub.f32 %v2632, %v2662
        %v2697 = vsub.f32 %v2633, %v2665
        %v2698 = vsub.f32 %v2634, %v2668
        %v2699 = vsub.f32 %v2635, %v2671
        %v2700 = vsub.f32 %v2636, %v2674
        %v2701 = vsub.f32 %v2637, %v2677
        %v2702 = vsub.f32 %v2638, %v2680
        %v2703 = vsub.f32 %v2639, %v2683
        %v2704 = vsub.f32 %v2640, %v2686
        %v2705 = vsub.f32 %v2641, %v2689
        %v2706 = vmul.f32 %v2690, 1.442695
        %v2707 = vpow.pop %v2706
        %v2708 = vmul.f32 %v2691, 1.442695
        %v2709 = vpow.pop %v2708
        %v2710 = vmul.f32 %v2692, 1.442695
        %v2711 = vpow.pop %v2710
        %v2712 = vmul.f32 %v2693, 1.442695
        %v2713 = vpow.pop %v2712
        %v2714 = vmul.f32 %v2694, 1.442695
        %v2715 = vpow.pop %v2714
        %v2716 = vmul.f32 %v2695, 1.442695
        %v2717 = vpow.pop %v2716
        %v2718 = vmul.f32 %v2696, 1.442695
        %v2719 = vpow.pop %v2718
        %v2720 = vmul.f32 %v2697, 1.442695
        %v2721 = vpow.pop %v2720
        %v2722 = vmul.f32 %v2698, 1.442695
        %v2723 = vpow.pop %v2722
        %v2724 = vmul.f32 %v2699, 1.442695
        %v2725 = vpow.pop %v2724
        %v2726 = vmul.f32 %v2700, 1.442695
        %v2727 = vpow.pop %v2726
        %v2728 = vmul.f32 %v2701, 1.442695
        %v2729 = vpow.pop %v2728
        %v2730 = vmul.f32 %v2702, 1.442695
        %v2731 = vpow.pop %v2730
        %v2732 = vmul.f32 %v2703, 1.442695
        %v2733 = vpow.pop %v2732
        %v2734 = vmul.f32 %v2704, 1.442695
        %v2735 = vpow.pop %v2734
        %v2736 = vmul.f32 %v2705, 1.442695
        %v2737 = vpow.pop %v2736
        %v2738 = vsel %vm1231, %v2707, 0.0
        %2739 = vadd.xlane.f32.xlu0 %v2738
        %v2740 = vpop.xlane.xlu0 %2739
        %v2741 = vsel %vm1231, %v2709, 0.0
        %2742 = vadd.xlane.f32.xlu0 %v2741
        %v2743 = vpop.xlane.xlu0 %2742
        %v2744 = vsel %vm1231, %v2711, 0.0
        %2745 = vadd.xlane.f32.xlu0 %v2744
        %v2746 = vpop.xlane.xlu0 %2745
        %v2747 = vsel %vm1231, %v2713, 0.0
        %2748 = vadd.xlane.f32.xlu0 %v2747
        %v2749 = vpop.xlane.xlu0 %2748
        %v2750 = vsel %vm1231, %v2715, 0.0
        %2751 = vadd.xlane.f32.xlu0 %v2750
        %v2752 = vpop.xlane.xlu0 %2751
        %v2753 = vsel %vm1231, %v2717, 0.0
        %2754 = vadd.xlane.f32.xlu0 %v2753
        %v2755 = vpop.xlane.xlu0 %2754
        %v2756 = vsel %vm1231, %v2719, 0.0
        %2757 = vadd.xlane.f32.xlu0 %v2756
        %v2758 = vpop.xlane.xlu0 %2757
        %v2759 = vsel %vm1231, %v2721, 0.0
        %2760 = vadd.xlane.f32.xlu0 %v2759
        %v2761 = vpop.xlane.xlu0 %2760
        %v2762 = vsel %vm1231, %v2723, 0.0
        %2763 = vadd.xlane.f32.xlu0 %v2762
        %v2764 = vpop.xlane.xlu0 %2763
        %v2765 = vsel %vm1231, %v2725, 0.0
        %2766 = vadd.xlane.f32.xlu0 %v2765
        %v2767 = vpop.xlane.xlu0 %2766
        %v2768 = vsel %vm1231, %v2727, 0.0
        %2769 = vadd.xlane.f32.xlu0 %v2768
        %v2770 = vpop.xlane.xlu0 %2769
        %v2771 = vsel %vm1231, %v2729, 0.0
        %2772 = vadd.xlane.f32.xlu0 %v2771
        %v2773 = vpop.xlane.xlu0 %2772
        %v2774 = vsel %vm1231, %v2731, 0.0
        %2775 = vadd.xlane.f32.xlu0 %v2774
        %v2776 = vpop.xlane.xlu0 %2775
        %v2777 = vsel %vm1231, %v2733, 0.0
        %2778 = vadd.xlane.f32.xlu0 %v2777
        %v2779 = vpop.xlane.xlu0 %2778
        %v2780 = vsel %vm1231, %v2735, 0.0
        %2781 = vadd.xlane.f32.xlu0 %v2780
        %v2782 = vpop.xlane.xlu0 %2781
        %v2783 = vsel %vm1231, %v2737, 0.0
        %2784 = vadd.xlane.f32.xlu0 %v2783
        %v2785 = vpop.xlane.xlu0 %2784
        %v2786 = vrcp.pop %v2740
        %v2787 = vrcp.pop %v2743
        %v2788 = vrcp.pop %v2746
        %v2789 = vrcp.pop %v2749
        %v2790 = vrcp.pop %v2752
        %v2791 = vrcp.pop %v2755
        %v2792 = vrcp.pop %v2758
        %v2793 = vrcp.pop %v2761
        %v2794 = vrcp.pop %v2764
        %v2795 = vrcp.pop %v2767
        %v2796 = vrcp.pop %v2770
        %v2797 = vrcp.pop %v2773
        %v2798 = vrcp.pop %v2776
        %v2799 = vrcp.pop %v2779
        %v2800 = vrcp.pop %v2782
        %v2801 = vrcp.pop %v2785
        %v2802 = vmul.f32 %v2707, %v2786
        %v2803 = vmul.f32 %v2709, %v2787
        %v2804 = vmul.f32 %v2711, %v2788
        %v2805 = vmul.f32 %v2713, %v2789
        %v2806 = vmul.f32 %v2715, %v2790
        %v2807 = vmul.f32 %v2717, %v2791
        %v2808 = vmul.f32 %v2719, %v2792
        %v2809 = vmul.f32 %v2721, %v2793
        %v2810 = vmul.f32 %v2723, %v2794
        %v2811 = vmul.f32 %v2725, %v2795
        %v2812 = vmul.f32 %v2727, %v2796
        %v2813 = vmul.f32 %v2729, %v2797
        %v2814 = vmul.f32 %v2731, %v2798
        %v2815 = vmul.f32 %v2733, %v2799
        %v2816 = vmul.f32 %v2735, %v2800
        %v2817 = vmul.f32 %v2737, %v2801
        %v2818 = vpack.c.bf16 %v2803, %v2802
        %v2819 = vpack.c.bf16 %v2805, %v2804
        %v2820 = vpack.c.bf16 %v2807, %v2806
        %v2821 = vpack.c.bf16 %v2809, %v2808
        %v2822 = vpack.c.bf16 %v2811, %v2810
        %v2823 = vpack.c.bf16 %v2813, %v2812
        %v2824 = vpack.c.bf16 %v2815, %v2814
        %v2825 = vpack.c.bf16 %v2817, %v2816
        %2827 = vrot.lane.b32.xlu0 %v1221, 112
        %v2828 = vpop.permute.xlu0 %2827
        %v2831 = vsel %vm1231, %v2818, 0
        %2833 = vmatprep.subr.bf16.mxu0 0
        %2834 = vmatpush1.bf16.msra.mxu0 %v2828
        %2835 = vmatprep.subr.bf16.mxu0 0
        %2836 = vmatpush1.bf16.msra.mxu0 0
        %2837 = vmatprep.subr.bf16.mxu0 0
        %2838 = vmatpush1.bf16.msra.mxu0 0
        %2839 = vmatprep.subr.bf16.mxu0 0
        %2840 = vmatpush1.bf16.msra.mxu0 0
        %2841 = vmatprep.subr.bf16.mxu0 0
        %2842 = vmatpush1.bf16.msra.mxu0 0
        %2843 = vmatprep.subr.bf16.mxu0 0
        %2844 = vmatpush1.bf16.msra.mxu0 0
        %2845 = vmatprep.subr.bf16.mxu0 0
        %2846 = vmatpush1.bf16.msra.mxu0 0
        %2847 = vmatprep.subr.bf16.mxu0 0
        %2848 = vmatpush1.bf16.msra.mxu0 0
        %2849 = vmatprep.subr.bf16.mxu0 0
        %2850 = vmatpush1.bf16.msra.mxu0 0
        %2851 = vmatprep.subr.bf16.mxu0 0
        %2852 = vmatpush1.bf16.msra.mxu0 0
        %2853 = vmatprep.subr.bf16.mxu0 0
        %2854 = vmatpush1.bf16.msra.mxu0 0
        %2855 = vmatprep.subr.bf16.mxu0 0
        %2856 = vmatpush1.bf16.msra.mxu0 0
        %2857 = vmatprep.subr.bf16.mxu0 0
        %2858 = vmatpush1.bf16.msra.mxu0 0
        %2859 = vmatprep.subr.bf16.mxu0 0
        %2860 = vmatpush1.bf16.msra.mxu0 0
        %2861 = vmatprep.subr.bf16.mxu0 0
        %2862 = vmatpush1.bf16.msra.mxu0 0
        %2863 = vmatprep.subr.bf16.mxu0 0
        %2864 = vmatpush1.bf16.msra.mxu0 0
        %2865 = vmatprep.mubr.bf16.mxu0 0
        %2866 = vmatmul.mubr.bf16.gmra.mrb[0].mxu0 %v2831
        %v2867 = vpop.f32.mrb[0].mxu0
        %v2868 = vadd.f32 0.0, %v2867
        %v2869 = vpop.f32.mrb[0].mxu0
        %v2870 = vpop.f32.mrb[0].mxu0
        %v2871 = vadd.f32 0.0, %v2870
        %v2872 = vpop.f32.mrb[0].mxu0
        %2873 = vdwg.mxu0
        %2875 = vrot.lane.b32.xlu0 %v1222, 112
        %v2876 = vpop.permute.xlu0 %2875
        %v2879 = vsel %vm1231, %v2819, 0
        %2881 = vmatprep.subr.bf16.mxu0 0
        %2882 = vmatpush1.bf16.msra.mxu0 %v2876
        %2883 = vmatprep.subr.bf16.mxu0 0
        %2884 = vmatpush1.bf16.msra.mxu0 0
        %2885 = vmatprep.subr.bf16.mxu0 0
        %2886 = vmatpush1.bf16.msra.mxu0 0
        %2887 = vmatprep.subr.bf16.mxu0 0
        %2888 = vmatpush1.bf16.msra.mxu0 0
        %2889 = vmatprep.subr.bf16.mxu0 0
        %2890 = vmatpush1.bf16.msra.mxu0 0
        %2891 = vmatprep.subr.bf16.mxu0 0
        %2892 = vmatpush1.bf16.msra.mxu0 0
        %2893 = vmatprep.subr.bf16.mxu0 0
        %2894 = vmatpush1.bf16.msra.mxu0 0
        %2895 = vmatprep.subr.bf16.mxu0 0
        %2896 = vmatpush1.bf16.msra.mxu0 0
        %2897 = vmatprep.subr.bf16.mxu0 0
        %2898 = vmatpush1.bf16.msra.mxu0 0
        %2899 = vmatprep.subr.bf16.mxu0 0
        %2900 = vmatpush1.bf16.msra.mxu0 0
        %2901 = vmatprep.subr.bf16.mxu0 0
        %2902 = vmatpush1.bf16.msra.mxu0 0
        %2903 = vmatprep.subr.bf16.mxu0 0
        %2904 = vmatpush1.bf16.msra.mxu0 0
        %2905 = vmatprep.subr.bf16.mxu0 0
        %2906 = vmatpush1.bf16.msra.mxu0 0
        %2907 = vmatprep.subr.bf16.mxu0 0
        %2908 = vmatpush1.bf16.msra.mxu0 0
        %2909 = vmatprep.subr.bf16.mxu0 0
        %2910 = vmatpush1.bf16.msra.mxu0 0
        %2911 = vmatprep.subr.bf16.mxu0 0
        %2912 = vmatpush1.bf16.msra.mxu0 0
        %2913 = vmatprep.mubr.bf16.mxu0 0
        %2914 = vmatmul.mubr.bf16.gmra.mrb[0].mxu0 %v2879
        %v2915 = vpop.f32.mrb[0].mxu0
        %v2916 = vadd.f32 0.0, %v2915
        %v2917 = vpop.f32.mrb[0].mxu0
        %v2918 = vpop.f32.mrb[0].mxu0
        %v2919 = vadd.f32 0.0, %v2918
        %v2920 = vpop.f32.mrb[0].mxu0
        %2921 = vdwg.mxu0
        %2923 = vrot.lane.b32.xlu0 %v1223, 112
        %v2924 = vpop.permute.xlu0 %2923
        %v2927 = vsel %vm1231, %v2820, 0
        %2929 = vmatprep.subr.bf16.mxu0 0
        %2930 = vmatpush1.bf16.msra.mxu0 %v2924
        %2931 = vmatprep.subr.bf16.mxu0 0
        %2932 = vmatpush1.bf16.msra.mxu0 0
        %2933 = vmatprep.subr.bf16.mxu0 0
        %2934 = vmatpush1.bf16.msra.mxu0 0
        %2935 = vmatprep.subr.bf16.mxu0 0
        %2936 = vmatpush1.bf16.msra.mxu0 0
        %2937 = vmatprep.subr.bf16.mxu0 0
        %2938 = vmatpush1.bf16.msra.mxu0 0
        %2939 = vmatprep.subr.bf16.mxu0 0
        %2940 = vmatpush1.bf16.msra.mxu0 0
        %2941 = vmatprep.subr.bf16.mxu0 0
        %2942 = vmatpush1.bf16.msra.mxu0 0
        %2943 = vmatprep.subr.bf16.mxu0 0
        %2944 = vmatpush1.bf16.msra.mxu0 0
        %2945 = vmatprep.subr.bf16.mxu0 0
        %2946 = vmatpush1.bf16.msra.mxu0 0
        %2947 = vmatprep.subr.bf16.mxu0 0
        %2948 = vmatpush1.bf16.msra.mxu0 0
        %2949 = vmatprep.subr.bf16.mxu0 0
        %2950 = vmatpush1.bf16.msra.mxu0 0
        %2951 = vmatprep.subr.bf16.mxu0 0
        %2952 = vmatpush1.bf16.msra.mxu0 0
        %2953 = vmatprep.subr.bf16.mxu0 0
        %2954 = vmatpush1.bf16.msra.mxu0 0
        %2955 = vmatprep.subr.bf16.mxu0 0
        %2956 = vmatpush1.bf16.msra.mxu0 0
        %2957 = vmatprep.subr.bf16.mxu0 0
        %2958 = vmatpush1.bf16.msra.mxu0 0
        %2959 = vmatprep.subr.bf16.mxu0 0
        %2960 = vmatpush1.bf16.msra.mxu0 0
        %2961 = vmatprep.mubr.bf16.mxu0 0
        %2962 = vmatmul.mubr.bf16.gmra.mrb[0].mxu0 %v2927
        %v2963 = vpop.f32.mrb[0].mxu0
        %v2964 = vadd.f32 0.0, %v2963
        %v2965 = vpop.f32.mrb[0].mxu0
        %v2966 = vpop.f32.mrb[0].mxu0
        %v2967 = vadd.f32 0.0, %v2966
        %v2968 = vpop.f32.mrb[0].mxu0
        %2969 = vdwg.mxu0
        %2971 = vrot.lane.b32.xlu0 %v1224, 112
        %v2972 = vpop.permute.xlu0 %2971
        %v2975 = vsel %vm1231, %v2821, 0
        %2977 = vmatprep.subr.bf16.mxu0 0
        %2978 = vmatpush1.bf16.msra.mxu0 %v2972
        %2979 = vmatprep.subr.bf16.mxu0 0
        %2980 = vmatpush1.bf16.msra.mxu0 0
        %2981 = vmatprep.subr.bf16.mxu0 0
        %2982 = vmatpush1.bf16.msra.mxu0 0
        %2983 = vmatprep.subr.bf16.mxu0 0
        %2984 = vmatpush1.bf16.msra.mxu0 0
        %2985 = vmatprep.subr.bf16.mxu0 0
        %2986 = vmatpush1.bf16.msra.mxu0 0
        %2987 = vmatprep.subr.bf16.mxu0 0
        %2988 = vmatpush1.bf16.msra.mxu0 0
        %2989 = vmatprep.subr.bf16.mxu0 0
        %2990 = vmatpush1.bf16.msra.mxu0 0
        %2991 = vmatprep.subr.bf16.mxu0 0
        %2992 = vmatpush1.bf16.msra.mxu0 0
        %2993 = vmatprep.subr.bf16.mxu0 0
        %2994 = vmatpush1.bf16.msra.mxu0 0
        %2995 = vmatprep.subr.bf16.mxu0 0
        %2996 = vmatpush1.bf16.msra.mxu0 0
        %2997 = vmatprep.subr.bf16.mxu0 0
        %2998 = vmatpush1.bf16.msra.mxu0 0
        %2999 = vmatprep.subr.bf16.mxu0 0
        %3000 = vmatpush1.bf16.msra.mxu0 0
        %3001 = vmatprep.subr.bf16.mxu0 0
        %3002 = vmatpush1.bf16.msra.mxu0 0
        %3003 = vmatprep.subr.bf16.mxu0 0
        %3004 = vmatpush1.bf16.msra.mxu0 0
        %3005 = vmatprep.subr.bf16.mxu0 0
        %3006 = vmatpush1.bf16.msra.mxu0 0
        %3007 = vmatprep.subr.bf16.mxu0 0
        %3008 = vmatpush1.bf16.msra.mxu0 0
        %3009 = vmatprep.mubr.bf16.mxu0 0
        %3010 = vmatmul.mubr.bf16.gmra.mrb[0].mxu0 %v2975
        %v3011 = vpop.f32.mrb[0].mxu0
        %v3012 = vadd.f32 0.0, %v3011
        %v3013 = vpop.f32.mrb[0].mxu0
        %v3014 = vpop.f32.mrb[0].mxu0
        %v3015 = vadd.f32 0.0, %v3014
        %v3016 = vpop.f32.mrb[0].mxu0
        %3017 = vdwg.mxu0
        %3019 = vrot.lane.b32.xlu0 %v1225, 112
        %v3020 = vpop.permute.xlu0 %3019
        %v3023 = vsel %vm1231, %v2822, 0
        %3025 = vmatprep.subr.bf16.mxu0 0
        %3026 = vmatpush1.bf16.msra.mxu0 %v3020
        %3027 = vmatprep.subr.bf16.mxu0 0
        %3028 = vmatpush1.bf16.msra.mxu0 0
        %3029 = vmatprep.subr.bf16.mxu0 0
        %3030 = vmatpush1.bf16.msra.mxu0 0
        %3031 = vmatprep.subr.bf16.mxu0 0
        %3032 = vmatpush1.bf16.msra.mxu0 0
        %3033 = vmatprep.subr.bf16.mxu0 0
        %3034 = vmatpush1.bf16.msra.mxu0 0
        %3035 = vmatprep.subr.bf16.mxu0 0
        %3036 = vmatpush1.bf16.msra.mxu0 0
        %3037 = vmatprep.subr.bf16.mxu0 0
        %3038 = vmatpush1.bf16.msra.mxu0 0
        %3039 = vmatprep.subr.bf16.mxu0 0
        %3040 = vmatpush1.bf16.msra.mxu0 0
        %3041 = vmatprep.subr.bf16.mxu0 0
        %3042 = vmatpush1.bf16.msra.mxu0 0
        %3043 = vmatprep.subr.bf16.mxu0 0
        %3044 = vmatpush1.bf16.msra.mxu0 0
        %3045 = vmatprep.subr.bf16.mxu0 0
        %3046 = vmatpush1.bf16.msra.mxu0 0
        %3047 = vmatprep.subr.bf16.mxu0 0
        %3048 = vmatpush1.bf16.msra.mxu0 0
        %3049 = vmatprep.subr.bf16.mxu0 0
        %3050 = vmatpush1.bf16.msra.mxu0 0
        %3051 = vmatprep.subr.bf16.mxu0 0
        %3052 = vmatpush1.bf16.msra.mxu0 0
        %3053 = vmatprep.subr.bf16.mxu0 0
        %3054 = vmatpush1.bf16.msra.mxu0 0
        %3055 = vmatprep.subr.bf16.mxu0 0
        %3056 = vmatpush1.bf16.msra.mxu0 0
        %3057 = vmatprep.mubr.bf16.mxu0 0
        %3058 = vmatmul.mubr.bf16.gmra.mrb[0].mxu0 %v3023
        %v3059 = vpop.f32.mrb[0].mxu0
        %v3060 = vadd.f32 0.0, %v3059
        %v3061 = vpop.f32.mrb[0].mxu0
        %v3062 = vpop.f32.mrb[0].mxu0
        %v3063 = vadd.f32 0.0, %v3062
        %v3064 = vpop.f32.mrb[0].mxu0
        %3065 = vdwg.mxu0
        %3067 = vrot.lane.b32.xlu0 %v1226, 112
        %v3068 = vpop.permute.xlu0 %3067
        %v3071 = vsel %vm1231, %v2823, 0
        %3073 = vmatprep.subr.bf16.mxu0 0
        %3074 = vmatpush1.bf16.msra.mxu0 %v3068
        %3075 = vmatprep.subr.bf16.mxu0 0
        %3076 = vmatpush1.bf16.msra.mxu0 0
        %3077 = vmatprep.subr.bf16.mxu0 0
        %3078 = vmatpush1.bf16.msra.mxu0 0
        %3079 = vmatprep.subr.bf16.mxu0 0
        %3080 = vmatpush1.bf16.msra.mxu0 0
        %3081 = vmatprep.subr.bf16.mxu0 0
        %3082 = vmatpush1.bf16.msra.mxu0 0
        %3083 = vmatprep.subr.bf16.mxu0 0
        %3084 = vmatpush1.bf16.msra.mxu0 0
        %3085 = vmatprep.subr.bf16.mxu0 0
        %3086 = vmatpush1.bf16.msra.mxu0 0
        %3087 = vmatprep.subr.bf16.mxu0 0
        %3088 = vmatpush1.bf16.msra.mxu0 0
        %3089 = vmatprep.subr.bf16.mxu0 0
        %3090 = vmatpush1.bf16.msra.mxu0 0
        %3091 = vmatprep.subr.bf16.mxu0 0
        %3092 = vmatpush1.bf16.msra.mxu0 0
        %3093 = vmatprep.subr.bf16.mxu0 0
        %3094 = vmatpush1.bf16.msra.mxu0 0
        %3095 = vmatprep.subr.bf16.mxu0 0
        %3096 = vmatpush1.bf16.msra.mxu0 0
        %3097 = vmatprep.subr.bf16.mxu0 0
        %3098 = vmatpush1.bf16.msra.mxu0 0
        %3099 = vmatprep.subr.bf16.mxu0 0
        %3100 = vmatpush1.bf16.msra.mxu0 0
        %3101 = vmatprep.subr.bf16.mxu0 0
        %3102 = vmatpush1.bf16.msra.mxu0 0
        %3103 = vmatprep.subr.bf16.mxu0 0
        %3104 = vmatpush1.bf16.msra.mxu0 0
        %3105 = vmatprep.mubr.bf16.mxu0 0
        %3106 = vmatmul.mubr.bf16.gmra.mrb[0].mxu0 %v3071
        %v3107 = vpop.f32.mrb[0].mxu0
        %v3108 = vadd.f32 0.0, %v3107
        %v3109 = vpop.f32.mrb[0].mxu0
        %v3110 = vpop.f32.mrb[0].mxu0
        %v3111 = vadd.f32 0.0, %v3110
        %v3112 = vpop.f32.mrb[0].mxu0
        %3113 = vdwg.mxu0
        %3115 = vrot.lane.b32.xlu0 %v1227, 112
        %v3116 = vpop.permute.xlu0 %3115
        %v3119 = vsel %vm1231, %v2824, 0
        %3121 = vmatprep.subr.bf16.mxu0 0
        %3122 = vmatpush1.bf16.msra.mxu0 %v3116
        %3123 = vmatprep.subr.bf16.mxu0 0
        %3124 = vmatpush1.bf16.msra.mxu0 0
        %3125 = vmatprep.subr.bf16.mxu0 0
        %3126 = vmatpush1.bf16.msra.mxu0 0
        %3127 = vmatprep.subr.bf16.mxu0 0
        %3128 = vmatpush1.bf16.msra.mxu0 0
        %3129 = vmatprep.subr.bf16.mxu0 0
        %3130 = vmatpush1.bf16.msra.mxu0 0
        %3131 = vmatprep.subr.bf16.mxu0 0
        %3132 = vmatpush1.bf16.msra.mxu0 0
        %3133 = vmatprep.subr.bf16.mxu0 0
        %3134 = vmatpush1.bf16.msra.mxu0 0
        %3135 = vmatprep.subr.bf16.mxu0 0
        %3136 = vmatpush1.bf16.msra.mxu0 0
        %3137 = vmatprep.subr.bf16.mxu0 0
        %3138 = vmatpush1.bf16.msra.mxu0 0
        %3139 = vmatprep.subr.bf16.mxu0 0
        %3140 = vmatpush1.bf16.msra.mxu0 0
        %3141 = vmatprep.subr.bf16.mxu0 0
        %3142 = vmatpush1.bf16.msra.mxu0 0
        %3143 = vmatprep.subr.bf16.mxu0 0
        %3144 = vmatpush1.bf16.msra.mxu0 0
        %3145 = vmatprep.subr.bf16.mxu0 0
        %3146 = vmatpush1.bf16.msra.mxu0 0
        %3147 = vmatprep.subr.bf16.mxu0 0
        %3148 = vmatpush1.bf16.msra.mxu0 0
        %3149 = vmatprep.subr.bf16.mxu0 0
        %3150 = vmatpush1.bf16.msra.mxu0 0
        %3151 = vmatprep.subr.bf16.mxu0 0
        %3152 = vmatpush1.bf16.msra.mxu0 0
        %3153 = vmatprep.mubr.bf16.mxu0 0
        %3154 = vmatmul.mubr.bf16.gmra.mrb[0].mxu0 %v3119
        %v3155 = vpop.f32.mrb[0].mxu0
        %v3156 = vadd.f32 0.0, %v3155
        %v3157 = vpop.f32.mrb[0].mxu0
        %v3158 = vpop.f32.mrb[0].mxu0
        %v3159 = vadd.f32 0.0, %v3158
        %v3160 = vpop.f32.mrb[0].mxu0
        %3161 = vdwg.mxu0
        %3163 = vrot.lane.b32.xlu0 %v1228, 112
        %v3164 = vpop.permute.xlu0 %3163
        %v3167 = vsel %vm1231, %v2825, 0
        %3169 = vmatprep.subr.bf16.mxu0 0
        %3170 = vmatpush1.bf16.msra.mxu0 %v3164
        %3171 = vmatprep.subr.bf16.mxu0 0
        %3172 = vmatpush1.bf16.msra.mxu0 0
        %3173 = vmatprep.subr.bf16.mxu0 0
        %3174 = vmatpush1.bf16.msra.mxu0 0
        %3175 = vmatprep.subr.bf16.mxu0 0
        %3176 = vmatpush1.bf16.msra.mxu0 0
        %3177 = vmatprep.subr.bf16.mxu0 0
        %3178 = vmatpush1.bf16.msra.mxu0 0
        %3179 = vmatprep.subr.bf16.mxu0 0
        %3180 = vmatpush1.bf16.msra.mxu0 0
        %3181 = vmatprep.subr.bf16.mxu0 0
        %3182 = vmatpush1.bf16.msra.mxu0 0
        %3183 = vmatprep.subr.bf16.mxu0 0
        %3184 = vmatpush1.bf16.msra.mxu0 0
        %3185 = vmatprep.subr.bf16.mxu0 0
        %3186 = vmatpush1.bf16.msra.mxu0 0
        %3187 = vmatprep.subr.bf16.mxu0 0
        %3188 = vmatpush1.bf16.msra.mxu0 0
        %3189 = vmatprep.subr.bf16.mxu0 0
        %3190 = vmatpush1.bf16.msra.mxu0 0
        %3191 = vmatprep.subr.bf16.mxu0 0
        %3192 = vmatpush1.bf16.msra.mxu0 0
        %3193 = vmatprep.subr.bf16.mxu0 0
        %3194 = vmatpush1.bf16.msra.mxu0 0
        %3195 = vmatprep.subr.bf16.mxu0 0
        %3196 = vmatpush1.bf16.msra.mxu0 0
        %3197 = vmatprep.subr.bf16.mxu0 0
        %3198 = vmatpush1.bf16.msra.mxu0 0
        %3199 = vmatprep.subr.bf16.mxu0 0
        %3200 = vmatpush1.bf16.msra.mxu0 0
        %3201 = vmatprep.mubr.bf16.mxu0 0
        %3202 = vmatmul.mubr.bf16.gmra.mrb[0].mxu0 %v3167
        %v3203 = vpop.f32.mrb[0].mxu0
        %v3204 = vadd.f32 0.0, %v3203
        %v3205 = vpop.f32.mrb[0].mxu0
        %v3206 = vpop.f32.mrb[0].mxu0
        %v3207 = vadd.f32 0.0, %v3206
        %v3208 = vpop.f32.mrb[0].mxu0
        %3209 = vdwg.mxu0
        %v3210 = vpack.c.bf16 %v2871, %v2868
        %v3211 = vpack.c.bf16 %v2919, %v2916
        %v3212 = vpack.c.bf16 %v2967, %v2964
        %v3213 = vpack.c.bf16 %v3015, %v3012
        %v3214 = vpack.c.bf16 %v3063, %v3060
        %v3215 = vpack.c.bf16 %v3111, %v3108
        %v3216 = vpack.c.bf16 %v3159, %v3156
        %v3217 = vpack.c.bf16 %v3207, %v3204
        %v3218 = vld [vmem:[#allocation17 + $0x8] sm:$0xf]
        %v3219 = vld [vmem:[#allocation17 + $0xc] sm:$0xf]
        %v3222 = vunpack.c.l.b16 %v3218
        %v3223 = vunpack.c.l.b16 %v3219
        %v3224 = vpack.c.b16 %v3223, %v3222
        %v3227 = vsel %vm1231, %v3210, 0
        %v3230 = vsel %vm1231, %v3211, 0
        %v3233 = vsel %vm1231, %v3212, 0
        %v3236 = vsel %vm1231, %v3213, 0
        %v3239 = vsel %vm1231, %v3214, 0
        %v3242 = vsel %vm1231, %v3215, 0
        %v3245 = vsel %vm1231, %v3216, 0
        %v3248 = vsel %vm1231, %v3217, 0
        %3250 = vmatprep.subr.bf16.mxu0 0
        %3251 = vmatpush1.bf16.msra.mxu0 %v3224
        %3252 = vmatprep.subr.bf16.mxu0 0
        %3253 = vmatpush1.bf16.msra.mxu0 0
        %3254 = vmatprep.subr.bf16.mxu0 0
        %3255 = vmatpush1.bf16.msra.mxu0 0
        %3256 = vmatprep.subr.bf16.mxu0 0
        %3257 = vmatpush1.bf16.msra.mxu0 0
        %3258 = vmatprep.subr.bf16.mxu0 0
        %3259 = vmatpush1.bf16.msra.mxu0 0
        %3260 = vmatprep.subr.bf16.mxu0 0
        %3261 = vmatpush1.bf16.msra.mxu0 0
        %3262 = vmatprep.subr.bf16.mxu0 0
        %3263 = vmatpush1.bf16.msra.mxu0 0
        %3264 = vmatprep.subr.bf16.mxu0 0
        %3265 = vmatpush1.bf16.msra.mxu0 0
        %3266 = vmatprep.subr.bf16.mxu0 0
        %3267 = vmatpush1.bf16.msra.mxu0 0
        %3268 = vmatprep.subr.bf16.mxu0 0
        %3269 = vmatpush1.bf16.msra.mxu0 0
        %3270 = vmatprep.subr.bf16.mxu0 0
        %3271 = vmatpush1.bf16.msra.mxu0 0
        %3272 = vmatprep.subr.bf16.mxu0 0
        %3273 = vmatpush1.bf16.msra.mxu0 0
        %3274 = vmatprep.subr.bf16.mxu0 0
        %3275 = vmatpush1.bf16.msra.mxu0 0
        %3276 = vmatprep.subr.bf16.mxu0 0
        %3277 = vmatpush1.bf16.msra.mxu0 0
        %3278 = vmatprep.subr.bf16.mxu0 0
        %3279 = vmatpush1.bf16.msra.mxu0 0
        %3280 = vmatprep.subr.bf16.mxu0 0
        %3281 = vmatpush1.bf16.msra.mxu0 0
        %3282 = vmatprep.mubr.bf16.mxu0 0
        %3283 = vmatmul.mubr.bf16.gmra.mrb[0].mxu0 %v3227
        %v3284 = vpop.f32.mrb[0].mxu0
        %v3285 = vadd.f32 0.0, %v3284
        %v3286 = vpop.f32.mrb[0].mxu0
        %v3287 = vpop.f32.mrb[0].mxu0
        %v3288 = vadd.f32 0.0, %v3287
        %v3289 = vpop.f32.mrb[0].mxu0
        %3290 = vmatprep.mubr.bf16.mxu0 0
        %3291 = vmatmul.mubr.bf16.gmra.mrb[0].mxu0 %v3230
        %v3292 = vpop.f32.mrb[0].mxu0
        %v3293 = vadd.f32 0.0, %v3292
        %v3294 = vpop.f32.mrb[0].mxu0
        %v3295 = vpop.f32.mrb[0].mxu0
        %v3296 = vadd.f32 0.0, %v3295
        %v3297 = vpop.f32.mrb[0].mxu0
        %3298 = vmatprep.mubr.bf16.mxu0 0
        %3299 = vmatmul.mubr.bf16.gmra.mrb[0].mxu0 %v3233
        %v3300 = vpop.f32.mrb[0].mxu0
        %v3301 = vadd.f32 0.0, %v3300
        %v3302 = vpop.f32.mrb[0].mxu0
        %v3303 = vpop.f32.mrb[0].mxu0
        %v3304 = vadd.f32 0.0, %v3303
        %v3305 = vpop.f32.mrb[0].mxu0
        %3306 = vmatprep.mubr.bf16.mxu0 0
        %3307 = vmatmul.mubr.bf16.gmra.mrb[0].mxu0 %v3236
        %v3308 = vpop.f32.mrb[0].mxu0
        %v3309 = vadd.f32 0.0, %v3308
        %v3310 = vpop.f32.mrb[0].mxu0
        %v3311 = vpop.f32.mrb[0].mxu0
        %v3312 = vadd.f32 0.0, %v3311
        %v3313 = vpop.f32.mrb[0].mxu0
        %3314 = vmatprep.mubr.bf16.mxu0 0
        %3315 = vmatmul.mubr.bf16.gmra.mrb[0].mxu0 %v3239
        %v3316 = vpop.f32.mrb[0].mxu0
        %v3317 = vadd.f32 0.0, %v3316
        %v3318 = vpop.f32.mrb[0].mxu0
        %v3319 = vpop.f32.mrb[0].mxu0
        %v3320 = vadd.f32 0.0, %v3319
        %v3321 = vpop.f32.mrb[0].mxu0
        %3322 = vmatprep.mubr.bf16.mxu0 0
        %3323 = vmatmul.mubr.bf16.gmra.mrb[0].mxu0 %v3242
        %v3324 = vpop.f32.mrb[0].mxu0
        %v3325 = vadd.f32 0.0, %v3324
        %v3326 = vpop.f32.mrb[0].mxu0
        %v3327 = vpop.f32.mrb[0].mxu0
        %v3328 = vadd.f32 0.0, %v3327
        %v3329 = vpop.f32.mrb[0].mxu0
        %3330 = vmatprep.mubr.bf16.mxu0 0
        %3331 = vmatmul.mubr.bf16.gmra.mrb[0].mxu0 %v3245
        %v3332 = vpop.f32.mrb[0].mxu0
        %v3333 = vadd.f32 0.0, %v3332
        %v3334 = vpop.f32.mrb[0].mxu0
        %v3335 = vpop.f32.mrb[0].mxu0
        %v3336 = vadd.f32 0.0, %v3335
        %v3337 = vpop.f32.mrb[0].mxu0
        %3338 = vmatprep.mubr.bf16.mxu0 0
        %3339 = vmatmul.mubr.bf16.gmra.mrb[0].mxu0 %v3248
        %v3340 = vpop.f32.mrb[0].mxu0
        %v3341 = vadd.f32 0.0, %v3340
        %v3342 = vpop.f32.mrb[0].mxu0
        %v3343 = vpop.f32.mrb[0].mxu0
        %v3344 = vadd.f32 0.0, %v3343
        %v3345 = vpop.f32.mrb[0].mxu0
        %3346 = vdwg.mxu0
        %v3349 = vunpack.c.l.b16 %v2184
        %v3350 = vunpack.c.l.b16 %v2185
        %v3351 = vpack.c.b16 %v3350, %v3349
        %v3354 = vsel %vm1231, %v2176, 0
        %v3357 = vsel %vm1231, %v2177, 0
        %v3360 = vsel %vm1231, %v2178, 0
        %v3363 = vsel %vm1231, %v2179, 0
        %v3366 = vsel %vm1231, %v2180, 0
        %v3369 = vsel %vm1231, %v2181, 0
        %v3372 = vsel %vm1231, %v2182, 0
        %v3375 = vsel %vm1231, %v2183, 0
        %3377 = vmatprep.subr.bf16.mxu0 0
        %3378 = vmatpush1.bf16.msra.mxu0 %v3351
        %3379 = vmatprep.subr.bf16.mxu0 0
        %3380 = vmatpush1.bf16.msra.mxu0 0
        %3381 = vmatprep.subr.bf16.mxu0 0
        %3382 = vmatpush1.bf16.msra.mxu0 0
        %3383 = vmatprep.subr.bf16.mxu0 0
        %3384 = vmatpush1.bf16.msra.mxu0 0
        %3385 = vmatprep.subr.bf16.mxu0 0
        %3386 = vmatpush1.bf16.msra.mxu0 0
        %3387 = vmatprep.subr.bf16.mxu0 0
        %3388 = vmatpush1.bf16.msra.mxu0 0
        %3389 = vmatprep.subr.bf16.mxu0 0
        %3390 = vmatpush1.bf16.msra.mxu0 0
        %3391 = vmatprep.subr.bf16.mxu0 0
        %3392 = vmatpush1.bf16.msra.mxu0 0
        %3393 = vmatprep.subr.bf16.mxu0 0
        %3394 = vmatpush1.bf16.msra.mxu0 0
        %3395 = vmatprep.subr.bf16.mxu0 0
        %3396 = vmatpush1.bf16.msra.mxu0 0
        %3397 = vmatprep.subr.bf16.mxu0 0
        %3398 = vmatpush1.bf16.msra.mxu0 0
        %3399 = vmatprep.subr.bf16.mxu0 0
        %3400 = vmatpush1.bf16.msra.mxu0 0
        %3401 = vmatprep.subr.bf16.mxu0 0
        %3402 = vmatpush1.bf16.msra.mxu0 0
        %3403 = vmatprep.subr.bf16.mxu0 0
        %3404 = vmatpush1.bf16.msra.mxu0 0
        %3405 = vmatprep.subr.bf16.mxu0 0
        %3406 = vmatpush1.bf16.msra.mxu0 0
        %3407 = vmatprep.subr.bf16.mxu0 0
        %3408 = vmatpush1.bf16.msra.mxu0 0
        %3409 = vmatprep.mubr.bf16.mxu0 0
        %3410 = vmatmul.mubr.bf16.gmra.mrb[0].mxu0 %v3354
        %v3411 = vpop.f32.mrb[0].mxu0
        %v3412 = vadd.f32 %v3285, %v3411
        %v3413 = vpop.f32.mrb[0].mxu0
        %v3414 = vpop.f32.mrb[0].mxu0
        %v3415 = vadd.f32 %v3288, %v3414
        %v3416 = vpop.f32.mrb[0].mxu0
        %3417 = vmatprep.mubr.bf16.mxu0 0
        %3418 = vmatmul.mubr.bf16.gmra.mrb[0].mxu0 %v3357
        %v3419 = vpop.f32.mrb[0].mxu0
        %v3420 = vadd.f32 %v3293, %v3419
        %v3421 = vpop.f32.mrb[0].mxu0
        %v3422 = vpop.f32.mrb[0].mxu0
        %v3423 = vadd.f32 %v3296, %v3422
        %v3424 = vpop.f32.mrb[0].mxu0
        %3425 = vmatprep.mubr.bf16.mxu0 0
        %3426 = vmatmul.mubr.bf16.gmra.mrb[0].mxu0 %v3360
        %v3427 = vpop.f32.mrb[0].mxu0
        %v3428 = vadd.f32 %v3301, %v3427
        %v3429 = vpop.f32.mrb[0].mxu0
        %v3430 = vpop.f32.mrb[0].mxu0
        %v3431 = vadd.f32 %v3304, %v3430
        %v3432 = vpop.f32.mrb[0].mxu0
        %3433 = vmatprep.mubr.bf16.mxu0 0
        %3434 = vmatmul.mubr.bf16.gmra.mrb[0].mxu0 %v3363
        %v3435 = vpop.f32.mrb[0].mxu0
        %v3436 = vadd.f32 %v3309, %v3435
        %v3437 = vpop.f32.mrb[0].mxu0
        %v3438 = vpop.f32.mrb[0].mxu0
        %v3439 = vadd.f32 %v3312, %v3438
        %v3440 = vpop.f32.mrb[0].mxu0
        %3441 = vmatprep.mubr.bf16.mxu0 0
        %3442 = vmatmul.mubr.bf16.gmra.mrb[0].mxu0 %v3366
        %v3443 = vpop.f32.mrb[0].mxu0
        %v3444 = vadd.f32 %v3317, %v3443
        %v3445 = vpop.f32.mrb[0].mxu0
        %v3446 = vpop.f32.mrb[0].mxu0
        %v3447 = vadd.f32 %v3320, %v3446
        %v3448 = vpop.f32.mrb[0].mxu0
        %3449 = vmatprep.mubr.bf16.mxu0 0
        %3450 = vmatmul.mubr.bf16.gmra.mrb[0].mxu0 %v3369
        %v3451 = vpop.f32.mrb[0].mxu0
        %v3452 = vadd.f32 %v3325, %v3451
        %v3453 = vpop.f32.mrb[0].mxu0
        %v3454 = vpop.f32.mrb[0].mxu0
        %v3455 = vadd.f32 %v3328, %v3454
        %v3456 = vpop.f32.mrb[0].mxu0
        %3457 = vmatprep.mubr.bf16.mxu0 0
        %3458 = vmatmul.mubr.bf16.gmra.mrb[0].mxu0 %v3372
        %v3459 = vpop.f32.mrb[0].mxu0
        %v3460 = vadd.f32 %v3333, %v3459
        %v3461 = vpop.f32.mrb[0].mxu0
        %v3462 = vpop.f32.mrb[0].mxu0
        %v3463 = vadd.f32 %v3336, %v3462
        %v3464 = vpop.f32.mrb[0].mxu0
        %3465 = vmatprep.mubr.bf16.mxu0 0
        %3466 = vmatmul.mubr.bf16.gmra.mrb[0].mxu0 %v3375
        %v3467 = vpop.f32.mrb[0].mxu0
        %v3468 = vadd.f32 %v3341, %v3467
        %v3469 = vpop.f32.mrb[0].mxu0
        %v3470 = vpop.f32.mrb[0].mxu0
        %v3471 = vadd.f32 %v3344, %v3470
        %v3472 = vpop.f32.mrb[0].mxu0
        %3473 = vdwg.mxu0
        %3474 = vrot.lane.b32.xlu0 %v1205, 96
        %v3475 = vpop.permute.xlu0 %3474
        %3476 = vrot.lane.b32.xlu0 %v1213, 96
        %v3477 = vpop.permute.xlu0 %3476
        %v3479 = vsel %vm1231, %v3475, 0
        %v3482 = vsel %vm1231, %v3477, 0
        %3484 = vmatprep.subr.bf16.mxu0 0
        %3485 = vmatpush1.bf16.xpose.msra.mxu0 %v3482
        %3486 = vmatprep.subr.bf16.mxu0 0
        %3487 = vmatpush1.bf16.xpose.msra.mxu0 0
        %3488 = vmatprep.subr.bf16.mxu0 0
        %3489 = vmatpush1.bf16.xpose.msra.mxu0 0
        %3490 = vmatprep.subr.bf16.mxu0 0
        %3491 = vmatpush1.bf16.xpose.msra.mxu0 0
        %3492 = vmatprep.subr.bf16.mxu0 0
        %3493 = vmatpush1.bf16.xpose.msra.mxu0 0
        %3494 = vmatprep.subr.bf16.mxu0 0
        %3495 = vmatpush1.bf16.xpose.msra.mxu0 0
        %3496 = vmatprep.subr.bf16.mxu0 0
        %3497 = vmatpush1.bf16.xpose.msra.mxu0 0
        %3498 = vmatprep.subr.bf16.mxu0 0
        %3499 = vmatpush1.bf16.xpose.msra.mxu0 0
        %3500 = vmatprep.subr.bf16.mxu0 0
        %3501 = vmatpush1.bf16.xpose.msra.mxu0 0
        %3502 = vmatprep.subr.bf16.mxu0 0
        %3503 = vmatpush1.bf16.xpose.msra.mxu0 0
        %3504 = vmatprep.subr.bf16.mxu0 0
        %3505 = vmatpush1.bf16.xpose.msra.mxu0 0
        %3506 = vmatprep.subr.bf16.mxu0 0
        %3507 = vmatpush1.bf16.xpose.msra.mxu0 0
        %3508 = vmatprep.subr.bf16.mxu0 0
        %3509 = vmatpush1.bf16.xpose.msra.mxu0 0
        %3510 = vmatprep.subr.bf16.mxu0 0
        %3511 = vmatpush1.bf16.xpose.msra.mxu0 0
        %3512 = vmatprep.subr.bf16.mxu0 0
        %3513 = vmatpush1.bf16.xpose.msra.mxu0 0
        %3514 = vmatprep.subr.bf16.mxu0 0
        %3515 = vmatpush1.bf16.xpose.msra.mxu0 0
        %3516 = vmatprep.mubr.bf16.mxu0 0
        %3517 = vmatmul.mubr.bf16.gmra.mrb[0].mxu0 %v3479
        %v3518 = vpop.f32.mrb[0].mxu0
        %v3519 = vadd.f32 0.0, %v3518
        %v3520 = vpop.f32.mrb[0].mxu0
        %v3521 = vpop.f32.mrb[0].mxu0
        %v3522 = vadd.f32 0.0, %v3521
        %v3523 = vpop.f32.mrb[0].mxu0
        %3524 = vdwg.mxu0
        %3525 = vrot.lane.b32.xlu0 %v1206, 96
        %v3526 = vpop.permute.xlu0 %3525
        %3527 = vrot.lane.b32.xlu0 %v1214, 96
        %v3528 = vpop.permute.xlu0 %3527
        %v3530 = vsel %vm1231, %v3526, 0
        %v3533 = vsel %vm1231, %v3528, 0
        %3535 = vmatprep.subr.bf16.mxu0 0
        %3536 = vmatpush1.bf16.xpose.msra.mxu0 %v3533
        %3537 = vmatprep.subr.bf16.mxu0 0
        %3538 = vmatpush1.bf16.xpose.msra.mxu0 0
        %3539 = vmatprep.subr.bf16.mxu0 0
        %3540 = vmatpush1.bf16.xpose.msra.mxu0 0
        %3541 = vmatprep.subr.bf16.mxu0 0
        %3542 = vmatpush1.bf16.xpose.msra.mxu0 0
        %3543 = vmatprep.subr.bf16.mxu0 0
        %3544 = vmatpush1.bf16.xpose.msra.mxu0 0
        %3545 = vmatprep.subr.bf16.mxu0 0
        %3546 = vmatpush1.bf16.xpose.msra.mxu0 0
        %3547 = vmatprep.subr.bf16.mxu0 0
        %3548 = vmatpush1.bf16.xpose.msra.mxu0 0
        %3549 = vmatprep.subr.bf16.mxu0 0
        %3550 = vmatpush1.bf16.xpose.msra.mxu0 0
        %3551 = vmatprep.subr.bf16.mxu0 0
        %3552 = vmatpush1.bf16.xpose.msra.mxu0 0
        %3553 = vmatprep.subr.bf16.mxu0 0
        %3554 = vmatpush1.bf16.xpose.msra.mxu0 0
        %3555 = vmatprep.subr.bf16.mxu0 0
        %3556 = vmatpush1.bf16.xpose.msra.mxu0 0
        %3557 = vmatprep.subr.bf16.mxu0 0
        %3558 = vmatpush1.bf16.xpose.msra.mxu0 0
        %3559 = vmatprep.subr.bf16.mxu0 0
        %3560 = vmatpush1.bf16.xpose.msra.mxu0 0
        %3561 = vmatprep.subr.bf16.mxu0 0
        %3562 = vmatpush1.bf16.xpose.msra.mxu0 0
        %3563 = vmatprep.subr.bf16.mxu0 0
        %3564 = vmatpush1.bf16.xpose.msra.mxu0 0
        %3565 = vmatprep.subr.bf16.mxu0 0
        %3566 = vmatpush1.bf16.xpose.msra.mxu0 0
        %3567 = vmatprep.mubr.bf16.mxu0 0
        %3568 = vmatmul.mubr.bf16.gmra.mrb[0].mxu0 %v3530
        %v3569 = vpop.f32.mrb[0].mxu0
        %v3570 = vadd.f32 0.0, %v3569
        %v3571 = vpop.f32.mrb[0].mxu0
        %v3572 = vpop.f32.mrb[0].mxu0
        %v3573 = vadd.f32 0.0, %v3572
        %v3574 = vpop.f32.mrb[0].mxu0
        %3575 = vdwg.mxu0
        %3576 = vrot.lane.b32.xlu0 %v1207, 96
        %v3577 = vpop.permute.xlu0 %3576
        %3578 = vrot.lane.b32.xlu0 %v1215, 96
        %v3579 = vpop.permute.xlu0 %3578
        %v3581 = vsel %vm1231, %v3577, 0
        %v3584 = vsel %vm1231, %v3579, 0
        %3586 = vmatprep.subr.bf16.mxu0 0
        %3587 = vmatpush1.bf16.xpose.msra.mxu0 %v3584
        %3588 = vmatprep.subr.bf16.mxu0 0
        %3589 = vmatpush1.bf16.xpose.msra.mxu0 0
        %3590 = vmatprep.subr.bf16.mxu0 0
        %3591 = vmatpush1.bf16.xpose.msra.mxu0 0
        %3592 = vmatprep.subr.bf16.mxu0 0
        %3593 = vmatpush1.bf16.xpose.msra.mxu0 0
        %3594 = vmatprep.subr.bf16.mxu0 0
        %3595 = vmatpush1.bf16.xpose.msra.mxu0 0
        %3596 = vmatprep.subr.bf16.mxu0 0
        %3597 = vmatpush1.bf16.xpose.msra.mxu0 0
        %3598 = vmatprep.subr.bf16.mxu0 0
        %3599 = vmatpush1.bf16.xpose.msra.mxu0 0
        %3600 = vmatprep.subr.bf16.mxu0 0
        %3601 = vmatpush1.bf16.xpose.msra.mxu0 0
        %3602 = vmatprep.subr.bf16.mxu0 0
        %3603 = vmatpush1.bf16.xpose.msra.mxu0 0
        %3604 = vmatprep.subr.bf16.mxu0 0
        %3605 = vmatpush1.bf16.xpose.msra.mxu0 0
        %3606 = vmatprep.subr.bf16.mxu0 0
        %3607 = vmatpush1.bf16.xpose.msra.mxu0 0
        %3608 = vmatprep.subr.bf16.mxu0 0
        %3609 = vmatpush1.bf16.xpose.msra.mxu0 0
        %3610 = vmatprep.subr.bf16.mxu0 0
        %3611 = vmatpush1.bf16.xpose.msra.mxu0 0
        %3612 = vmatprep.subr.bf16.mxu0 0
        %3613 = vmatpush1.bf16.xpose.msra.mxu0 0
        %3614 = vmatprep.subr.bf16.mxu0 0
        %3615 = vmatpush1.bf16.xpose.msra.mxu0 0
        %3616 = vmatprep.subr.bf16.mxu0 0
        %3617 = vmatpush1.bf16.xpose.msra.mxu0 0
        %3618 = vmatprep.mubr.bf16.mxu0 0
        %3619 = vmatmul.mubr.bf16.gmra.mrb[0].mxu0 %v3581
        %v3620 = vpop.f32.mrb[0].mxu0
        %v3621 = vadd.f32 0.0, %v3620
        %v3622 = vpop.f32.mrb[0].mxu0
        %v3623 = vpop.f32.mrb[0].mxu0
        %v3624 = vadd.f32 0.0, %v3623
        %v3625 = vpop.f32.mrb[0].mxu0
        %3626 = vdwg.mxu0
        %3627 = vrot.lane.b32.xlu0 %v1208, 96
        %v3628 = vpop.permute.xlu0 %3627
        %3629 = vrot.lane.b32.xlu0 %v1216, 96
        %v3630 = vpop.permute.xlu0 %3629
        %v3632 = vsel %vm1231, %v3628, 0
        %v3635 = vsel %vm1231, %v3630, 0
        %3637 = vmatprep.subr.bf16.mxu0 0
        %3638 = vmatpush1.bf16.xpose.msra.mxu0 %v3635
        %3639 = vmatprep.subr.bf16.mxu0 0
        %3640 = vmatpush1.bf16.xpose.msra.mxu0 0
        %3641 = vmatprep.subr.bf16.mxu0 0
        %3642 = vmatpush1.bf16.xpose.msra.mxu0 0
        %3643 = vmatprep.subr.bf16.mxu0 0
        %3644 = vmatpush1.bf16.xpose.msra.mxu0 0
        %3645 = vmatprep.subr.bf16.mxu0 0
        %3646 = vmatpush1.bf16.xpose.msra.mxu0 0
        %3647 = vmatprep.subr.bf16.mxu0 0
        %3648 = vmatpush1.bf16.xpose.msra.mxu0 0
        %3649 = vmatprep.subr.bf16.mxu0 0
        %3650 = vmatpush1.bf16.xpose.msra.mxu0 0
        %3651 = vmatprep.subr.bf16.mxu0 0
        %3652 = vmatpush1.bf16.xpose.msra.mxu0 0
        %3653 = vmatprep.subr.bf16.mxu0 0
        %3654 = vmatpush1.bf16.xpose.msra.mxu0 0
        %3655 = vmatprep.subr.bf16.mxu0 0
        %3656 = vmatpush1.bf16.xpose.msra.mxu0 0
        %3657 = vmatprep.subr.bf16.mxu0 0
        %3658 = vmatpush1.bf16.xpose.msra.mxu0 0
        %3659 = vmatprep.subr.bf16.mxu0 0
        %3660 = vmatpush1.bf16.xpose.msra.mxu0 0
        %3661 = vmatprep.subr.bf16.mxu0 0
        %3662 = vmatpush1.bf16.xpose.msra.mxu0 0
        %3663 = vmatprep.subr.bf16.mxu0 0
        %3664 = vmatpush1.bf16.xpose.msra.mxu0 0
        %3665 = vmatprep.subr.bf16.mxu0 0
        %3666 = vmatpush1.bf16.xpose.msra.mxu0 0
        %3667 = vmatprep.subr.bf16.mxu0 0
        %3668 = vmatpush1.bf16.xpose.msra.mxu0 0
        %3669 = vmatprep.mubr.bf16.mxu0 0
        %3670 = vmatmul.mubr.bf16.gmra.mrb[0].mxu0 %v3632
        %v3671 = vpop.f32.mrb[0].mxu0
        %v3672 = vadd.f32 0.0, %v3671
        %v3673 = vpop.f32.mrb[0].mxu0
        %v3674 = vpop.f32.mrb[0].mxu0
        %v3675 = vadd.f32 0.0, %v3674
        %v3676 = vpop.f32.mrb[0].mxu0
        %3677 = vdwg.mxu0
        %3678 = vrot.lane.b32.xlu0 %v1209, 96
        %v3679 = vpop.permute.xlu0 %3678
        %3680 = vrot.lane.b32.xlu0 %v1217, 96
        %v3681 = vpop.permute.xlu0 %3680
        %v3683 = vsel %vm1231, %v3679, 0
        %v3686 = vsel %vm1231, %v3681, 0
        %3688 = vmatprep.subr.bf16.mxu0 0
        %3689 = vmatpush1.bf16.xpose.msra.mxu0 %v3686
        %3690 = vmatprep.subr.bf16.mxu0 0
        %3691 = vmatpush1.bf16.xpose.msra.mxu0 0
        %3692 = vmatprep.subr.bf16.mxu0 0
        %3693 = vmatpush1.bf16.xpose.msra.mxu0 0
        %3694 = vmatprep.subr.bf16.mxu0 0
        %3695 = vmatpush1.bf16.xpose.msra.mxu0 0
        %3696 = vmatprep.subr.bf16.mxu0 0
        %3697 = vmatpush1.bf16.xpose.msra.mxu0 0
        %3698 = vmatprep.subr.bf16.mxu0 0
        %3699 = vmatpush1.bf16.xpose.msra.mxu0 0
        %3700 = vmatprep.subr.bf16.mxu0 0
        %3701 = vmatpush1.bf16.xpose.msra.mxu0 0
        %3702 = vmatprep.subr.bf16.mxu0 0
        %3703 = vmatpush1.bf16.xpose.msra.mxu0 0
        %3704 = vmatprep.subr.bf16.mxu0 0
        %3705 = vmatpush1.bf16.xpose.msra.mxu0 0
        %3706 = vmatprep.subr.bf16.mxu0 0
        %3707 = vmatpush1.bf16.xpose.msra.mxu0 0
        %3708 = vmatprep.subr.bf16.mxu0 0
        %3709 = vmatpush1.bf16.xpose.msra.mxu0 0
        %3710 = vmatprep.subr.bf16.mxu0 0
        %3711 = vmatpush1.bf16.xpose.msra.mxu0 0
        %3712 = vmatprep.subr.bf16.mxu0 0
        %3713 = vmatpush1.bf16.xpose.msra.mxu0 0
        %3714 = vmatprep.subr.bf16.mxu0 0
        %3715 = vmatpush1.bf16.xpose.msra.mxu0 0
        %3716 = vmatprep.subr.bf16.mxu0 0
        %3717 = vmatpush1.bf16.xpose.msra.mxu0 0
        %3718 = vmatprep.subr.bf16.mxu0 0
        %3719 = vmatpush1.bf16.xpose.msra.mxu0 0
        %3720 = vmatprep.mubr.bf16.mxu0 0
        %3721 = vmatmul.mubr.bf16.gmra.mrb[0].mxu0 %v3683
        %v3722 = vpop.f32.mrb[0].mxu0
        %v3723 = vadd.f32 0.0, %v3722
        %v3724 = vpop.f32.mrb[0].mxu0
        %v3725 = vpop.f32.mrb[0].mxu0
        %v3726 = vadd.f32 0.0, %v3725
        %v3727 = vpop.f32.mrb[0].mxu0
        %3728 = vdwg.mxu0
        %3729 = vrot.lane.b32.xlu0 %v1210, 96
        %v3730 = vpop.permute.xlu0 %3729
        %3731 = vrot.lane.b32.xlu0 %v1218, 96
        %v3732 = vpop.permute.xlu0 %3731
        %v3734 = vsel %vm1231, %v3730, 0
        %v3737 = vsel %vm1231, %v3732, 0
        %3739 = vmatprep.subr.bf16.mxu0 0
        %3740 = vmatpush1.bf16.xpose.msra.mxu0 %v3737
        %3741 = vmatprep.subr.bf16.mxu0 0
        %3742 = vmatpush1.bf16.xpose.msra.mxu0 0
        %3743 = vmatprep.subr.bf16.mxu0 0
        %3744 = vmatpush1.bf16.xpose.msra.mxu0 0
        %3745 = vmatprep.subr.bf16.mxu0 0
        %3746 = vmatpush1.bf16.xpose.msra.mxu0 0
        %3747 = vmatprep.subr.bf16.mxu0 0
        %3748 = vmatpush1.bf16.xpose.msra.mxu0 0
        %3749 = vmatprep.subr.bf16.mxu0 0
        %3750 = vmatpush1.bf16.xpose.msra.mxu0 0
        %3751 = vmatprep.subr.bf16.mxu0 0
        %3752 = vmatpush1.bf16.xpose.msra.mxu0 0
        %3753 = vmatprep.subr.bf16.mxu0 0
        %3754 = vmatpush1.bf16.xpose.msra.mxu0 0
        %3755 = vmatprep.subr.bf16.mxu0 0
        %3756 = vmatpush1.bf16.xpose.msra.mxu0 0
        %3757 = vmatprep.subr.bf16.mxu0 0
        %3758 = vmatpush1.bf16.xpose.msra.mxu0 0
        %3759 = vmatprep.subr.bf16.mxu0 0
        %3760 = vmatpush1.bf16.xpose.msra.mxu0 0
        %3761 = vmatprep.subr.bf16.mxu0 0
        %3762 = vmatpush1.bf16.xpose.msra.mxu0 0
        %3763 = vmatprep.subr.bf16.mxu0 0
        %3764 = vmatpush1.bf16.xpose.msra.mxu0 0
        %3765 = vmatprep.subr.bf16.mxu0 0
        %3766 = vmatpush1.bf16.xpose.msra.mxu0 0
        %3767 = vmatprep.subr.bf16.mxu0 0
        %3768 = vmatpush1.bf16.xpose.msra.mxu0 0
        %3769 = vmatprep.subr.bf16.mxu0 0
        %3770 = vmatpush1.bf16.xpose.msra.mxu0 0
        %3771 = vmatprep.mubr.bf16.mxu0 0
        %3772 = vmatmul.mubr.bf16.gmra.mrb[0].mxu0 %v3734
        %v3773 = vpop.f32.mrb[0].mxu0
        %v3774 = vadd.f32 0.0, %v3773
        %v3775 = vpop.f32.mrb[0].mxu0
        %v3776 = vpop.f32.mrb[0].mxu0
        %v3777 = vadd.f32 0.0, %v3776
        %v3778 = vpop.f32.mrb[0].mxu0
        %3779 = vdwg.mxu0
        %3780 = vrot.lane.b32.xlu0 %v1211, 96
        %v3781 = vpop.permute.xlu0 %3780
        %3782 = vrot.lane.b32.xlu0 %v1219, 96
        %v3783 = vpop.permute.xlu0 %3782
        %v3785 = vsel %vm1231, %v3781, 0
        %v3788 = vsel %vm1231, %v3783, 0
        %3790 = vmatprep.subr.bf16.mxu0 0
        %3791 = vmatpush1.bf16.xpose.msra.mxu0 %v3788
        %3792 = vmatprep.subr.bf16.mxu0 0
        %3793 = vmatpush1.bf16.xpose.msra.mxu0 0
        %3794 = vmatprep.subr.bf16.mxu0 0
        %3795 = vmatpush1.bf16.xpose.msra.mxu0 0
        %3796 = vmatprep.subr.bf16.mxu0 0
        %3797 = vmatpush1.bf16.xpose.msra.mxu0 0
        %3798 = vmatprep.subr.bf16.mxu0 0
        %3799 = vmatpush1.bf16.xpose.msra.mxu0 0
        %3800 = vmatprep.subr.bf16.mxu0 0
        %3801 = vmatpush1.bf16.xpose.msra.mxu0 0
        %3802 = vmatprep.subr.bf16.mxu0 0
        %3803 = vmatpush1.bf16.xpose.msra.mxu0 0
        %3804 = vmatprep.subr.bf16.mxu0 0
        %3805 = vmatpush1.bf16.xpose.msra.mxu0 0
        %3806 = vmatprep.subr.bf16.mxu0 0
        %3807 = vmatpush1.bf16.xpose.msra.mxu0 0
        %3808 = vmatprep.subr.bf16.mxu0 0
        %3809 = vmatpush1.bf16.xpose.msra.mxu0 0
        %3810 = vmatprep.subr.bf16.mxu0 0
        %3811 = vmatpush1.bf16.xpose.msra.mxu0 0
        %3812 = vmatprep.subr.bf16.mxu0 0
        %3813 = vmatpush1.bf16.xpose.msra.mxu0 0
        %3814 = vmatprep.subr.bf16.mxu0 0
        %3815 = vmatpush1.bf16.xpose.msra.mxu0 0
        %3816 = vmatprep.subr.bf16.mxu0 0
        %3817 = vmatpush1.bf16.xpose.msra.mxu0 0
        %3818 = vmatprep.subr.bf16.mxu0 0
        %3819 = vmatpush1.bf16.xpose.msra.mxu0 0
        %3820 = vmatprep.subr.bf16.mxu0 0
        %3821 = vmatpush1.bf16.xpose.msra.mxu0 0
        %3822 = vmatprep.mubr.bf16.mxu0 0
        %3823 = vmatmul.mubr.bf16.gmra.mrb[0].mxu0 %v3785
        %v3824 = vpop.f32.mrb[0].mxu0
        %v3825 = vadd.f32 0.0, %v3824
        %v3826 = vpop.f32.mrb[0].mxu0
        %v3827 = vpop.f32.mrb[0].mxu0
        %v3828 = vadd.f32 0.0, %v3827
        %v3829 = vpop.f32.mrb[0].mxu0
        %3830 = vdwg.mxu0
        %3831 = vrot.lane.b32.xlu0 %v1212, 96
        %v3832 = vpop.permute.xlu0 %3831
        %3833 = vrot.lane.b32.xlu0 %v1220, 96
        %v3834 = vpop.permute.xlu0 %3833
        %v3836 = vsel %vm1231, %v3832, 0
        %v3839 = vsel %vm1231, %v3834, 0
        %3841 = vmatprep.subr.bf16.mxu0 0
        %3842 = vmatpush1.bf16.xpose.msra.mxu0 %v3839
        %3843 = vmatprep.subr.bf16.mxu0 0
        %3844 = vmatpush1.bf16.xpose.msra.mxu0 0
        %3845 = vmatprep.subr.bf16.mxu0 0
        %3846 = vmatpush1.bf16.xpose.msra.mxu0 0
        %3847 = vmatprep.subr.bf16.mxu0 0
        %3848 = vmatpush1.bf16.xpose.msra.mxu0 0
        %3849 = vmatprep.subr.bf16.mxu0 0
        %3850 = vmatpush1.bf16.xpose.msra.mxu0 0
        %3851 = vmatprep.subr.bf16.mxu0 0
        %3852 = vmatpush1.bf16.xpose.msra.mxu0 0
        %3853 = vmatprep.subr.bf16.mxu0 0
        %3854 = vmatpush1.bf16.xpose.msra.mxu0 0
        %3855 = vmatprep.subr.bf16.mxu0 0
        %3856 = vmatpush1.bf16.xpose.msra.mxu0 0
        %3857 = vmatprep.subr.bf16.mxu0 0
        %3858 = vmatpush1.bf16.xpose.msra.mxu0 0
        %3859 = vmatprep.subr.bf16.mxu0 0
        %3860 = vmatpush1.bf16.xpose.msra.mxu0 0
        %3861 = vmatprep.subr.bf16.mxu0 0
        %3862 = vmatpush1.bf16.xpose.msra.mxu0 0
        %3863 = vmatprep.subr.bf16.mxu0 0
        %3864 = vmatpush1.bf16.xpose.msra.mxu0 0
        %3865 = vmatprep.subr.bf16.mxu0 0
        %3866 = vmatpush1.bf16.xpose.msra.mxu0 0
        %3867 = vmatprep.subr.bf16.mxu0 0
        %3868 = vmatpush1.bf16.xpose.msra.mxu0 0
        %3869 = vmatprep.subr.bf16.mxu0 0
        %3870 = vmatpush1.bf16.xpose.msra.mxu0 0
        %3871 = vmatprep.subr.bf16.mxu0 0
        %3872 = vmatpush1.bf16.xpose.msra.mxu0 0
        %3873 = vmatprep.mubr.bf16.mxu0 0
        %3874 = vmatmul.mubr.bf16.gmra.mrb[0].mxu0 %v3836
        %v3875 = vpop.f32.mrb[0].mxu0
        %v3876 = vadd.f32 0.0, %v3875
        %v3877 = vpop.f32.mrb[0].mxu0
        %v3878 = vpop.f32.mrb[0].mxu0
        %v3879 = vadd.f32 0.0, %v3878
        %v3880 = vpop.f32.mrb[0].mxu0
        %3881 = vdwg.mxu0
        %v3882 = vmul.f32 %v3519, 0.25
        %v3883 = vmul.f32 %v3522, 0.25
        %v3884 = vmul.f32 %v3570, 0.25
        %v3885 = vmul.f32 %v3573, 0.25
        %v3886 = vmul.f32 %v3621, 0.25
        %v3887 = vmul.f32 %v3624, 0.25
        %v3888 = vmul.f32 %v3672, 0.25
        %v3889 = vmul.f32 %v3675, 0.25
        %v3890 = vmul.f32 %v3723, 0.25
        %v3891 = vmul.f32 %v3726, 0.25
        %v3892 = vmul.f32 %v3774, 0.25
        %v3893 = vmul.f32 %v3777, 0.25
        %v3894 = vmul.f32 %v3825, 0.25
        %v3895 = vmul.f32 %v3828, 0.25
        %v3896 = vmul.f32 %v3876, 0.25
        %v3897 = vmul.f32 %v3879, 0.25
        %v3898 = vadd.f32 %v3882, %v1229
        %v3899 = vadd.f32 %v3883, %v1230
        %v3900 = vadd.f32 %v3884, %v1229
        %v3901 = vadd.f32 %v3885, %v1230
        %v3902 = vadd.f32 %v3886, %v1229
        %v3903 = vadd.f32 %v3887, %v1230
        %v3904 = vadd.f32 %v3888, %v1229
        %v3905 = vadd.f32 %v3889, %v1230
        %v3906 = vadd.f32 %v3890, %v1229
        %v3907 = vadd.f32 %v3891, %v1230
        %v3908 = vadd.f32 %v3892, %v1229
        %v3909 = vadd.f32 %v3893, %v1230
        %v3910 = vadd.f32 %v3894, %v1229
        %v3911 = vadd.f32 %v3895, %v1230
        %v3912 = vadd.f32 %v3896, %v1229
        %v3913 = vadd.f32 %v3897, %v1230
        %v3914 = vsel %vm1231, %v3898, -inf
        %3915 = vmax.xlane.f32.xlu0 %v3914
        %v3916 = vpop.xlane.xlu0 %3915
        %v3917 = vsel %vm1231, %v3899, -inf
        %3918 = vmax.xlane.f32.xlu0 %v3917
        %v3919 = vpop.xlane.xlu0 %3918
        %v3920 = vsel %vm1231, %v3900, -inf
        %3921 = vmax.xlane.f32.xlu0 %v3920
        %v3922 = vpop.xlane.xlu0 %3921
        %v3923 = vsel %vm1231, %v3901, -inf
        %3924 = vmax.xlane.f32.xlu0 %v3923
        %v3925 = vpop.xlane.xlu0 %3924
        %v3926 = vsel %vm1231, %v3902, -inf
        %3927 = vmax.xlane.f32.xlu0 %v3926
        %v3928 = vpop.xlane.xlu0 %3927
        %v3929 = vsel %vm1231, %v3903, -inf
        %3930 = vmax.xlane.f32.xlu0 %v3929
        %v3931 = vpop.xlane.xlu0 %3930
        %v3932 = vsel %vm1231, %v3904, -inf
        %3933 = vmax.xlane.f32.xlu0 %v3932
        %v3934 = vpop.xlane.xlu0 %3933
        %v3935 = vsel %vm1231, %v3905, -inf
        %3936 = vmax.xlane.f32.xlu0 %v3935
        %v3937 = vpop.xlane.xlu0 %3936
        %v3938 = vsel %vm1231, %v3906, -inf
        %3939 = vmax.xlane.f32.xlu0 %v3938
        %v3940 = vpop.xlane.xlu0 %3939
        %v3941 = vsel %vm1231, %v3907, -inf
        %3942 = vmax.xlane.f32.xlu0 %v3941
        %v3943 = vpop.xlane.xlu0 %3942
        %v3944 = vsel %vm1231, %v3908, -inf
        %3945 = vmax.xlane.f32.xlu0 %v3944
        %v3946 = vpop.xlane.xlu0 %3945
        %v3947 = vsel %vm1231, %v3909, -inf
        %3948 = vmax.xlane.f32.xlu0 %v3947
        %v3949 = vpop.xlane.xlu0 %3948
        %v3950 = vsel %vm1231, %v3910, -inf
        %3951 = vmax.xlane.f32.xlu0 %v3950
        %v3952 = vpop.xlane.xlu0 %3951
        %v3953 = vsel %vm1231, %v3911, -inf
        %3954 = vmax.xlane.f32.xlu0 %v3953
        %v3955 = vpop.xlane.xlu0 %3954
        %v3956 = vsel %vm1231, %v3912, -inf
        %3957 = vmax.xlane.f32.xlu0 %v3956
        %v3958 = vpop.xlane.xlu0 %3957
        %v3959 = vsel %vm1231, %v3913, -inf
        %3960 = vmax.xlane.f32.xlu0 %v3959
        %v3961 = vpop.xlane.xlu0 %3960
        %v3962 = vsub.f32 %v3898, %v3916
        %v3963 = vsub.f32 %v3899, %v3919
        %v3964 = vsub.f32 %v3900, %v3922
        %v3965 = vsub.f32 %v3901, %v3925
        %v3966 = vsub.f32 %v3902, %v3928
        %v3967 = vsub.f32 %v3903, %v3931
        %v3968 = vsub.f32 %v3904, %v3934
        %v3969 = vsub.f32 %v3905, %v3937
        %v3970 = vsub.f32 %v3906, %v3940
        %v3971 = vsub.f32 %v3907, %v3943
        %v3972 = vsub.f32 %v3908, %v3946
        %v3973 = vsub.f32 %v3909, %v3949
        %v3974 = vsub.f32 %v3910, %v3952
        %v3975 = vsub.f32 %v3911, %v3955
        %v3976 = vsub.f32 %v3912, %v3958
        %v3977 = vsub.f32 %v3913, %v3961
        %v3978 = vmul.f32 %v3962, 1.442695
        %v3979 = vpow.pop %v3978
        %v3980 = vmul.f32 %v3963, 1.442695
        %v3981 = vpow.pop %v3980
        %v3982 = vmul.f32 %v3964, 1.442695
        %v3983 = vpow.pop %v3982
        %v3984 = vmul.f32 %v3965, 1.442695
        %v3985 = vpow.pop %v3984
        %v3986 = vmul.f32 %v3966, 1.442695
        %v3987 = vpow.pop %v3986
        %v3988 = vmul.f32 %v3967, 1.442695
        %v3989 = vpow.pop %v3988
        %v3990 = vmul.f32 %v3968, 1.442695
        %v3991 = vpow.pop %v3990
        %v3992 = vmul.f32 %v3969, 1.442695
        %v3993 = vpow.pop %v3992
        %v3994 = vmul.f32 %v3970, 1.442695
        %v3995 = vpow.pop %v3994
        %v3996 = vmul.f32 %v3971, 1.442695
        %v3997 = vpow.pop %v3996
        %v3998 = vmul.f32 %v3972, 1.442695
        %v3999 = vpow.pop %v3998
        %v4000 = vmul.f32 %v3973, 1.442695
        %v4001 = vpow.pop %v4000
        %v4002 = vmul.f32 %v3974, 1.442695
        %v4003 = vpow.pop %v4002
        %v4004 = vmul.f32 %v3975, 1.442695
        %v4005 = vpow.pop %v4004
        %v4006 = vmul.f32 %v3976, 1.442695
        %v4007 = vpow.pop %v4006
        %v4008 = vmul.f32 %v3977, 1.442695
        %v4009 = vpow.pop %v4008
        %v4010 = vsel %vm1231, %v3979, 0.0
        %4011 = vadd.xlane.f32.xlu0 %v4010
        %v4012 = vpop.xlane.xlu0 %4011
        %v4013 = vsel %vm1231, %v3981, 0.0
        %4014 = vadd.xlane.f32.xlu0 %v4013
        %v4015 = vpop.xlane.xlu0 %4014
        %v4016 = vsel %vm1231, %v3983, 0.0
        %4017 = vadd.xlane.f32.xlu0 %v4016
        %v4018 = vpop.xlane.xlu0 %4017
        %v4019 = vsel %vm1231, %v3985, 0.0
        %4020 = vadd.xlane.f32.xlu0 %v4019
        %v4021 = vpop.xlane.xlu0 %4020
        %v4022 = vsel %vm1231, %v3987, 0.0
        %4023 = vadd.xlane.f32.xlu0 %v4022
        %v4024 = vpop.xlane.xlu0 %4023
        %v4025 = vsel %vm1231, %v3989, 0.0
        %4026 = vadd.xlane.f32.xlu0 %v4025
        %v4027 = vpop.xlane.xlu0 %4026
        %v4028 = vsel %vm1231, %v3991, 0.0
        %4029 = vadd.xlane.f32.xlu0 %v4028
        %v4030 = vpop.xlane.xlu0 %4029
        %v4031 = vsel %vm1231, %v3993, 0.0
        %4032 = vadd.xlane.f32.xlu0 %v4031
        %v4033 = vpop.xlane.xlu0 %4032
        %v4034 = vsel %vm1231, %v3995, 0.0
        %4035 = vadd.xlane.f32.xlu0 %v4034
        %v4036 = vpop.xlane.xlu0 %4035
        %v4037 = vsel %vm1231, %v3997, 0.0
        %4038 = vadd.xlane.f32.xlu0 %v4037
        %v4039 = vpop.xlane.xlu0 %4038
        %v4040 = vsel %vm1231, %v3999, 0.0
        %4041 = vadd.xlane.f32.xlu0 %v4040
        %v4042 = vpop.xlane.xlu0 %4041
        %v4043 = vsel %vm1231, %v4001, 0.0
        %4044 = vadd.xlane.f32.xlu0 %v4043
        %v4045 = vpop.xlane.xlu0 %4044
        %v4046 = vsel %vm1231, %v4003, 0.0
        %4047 = vadd.xlane.f32.xlu0 %v4046
        %v4048 = vpop.xlane.xlu0 %4047
        %v4049 = vsel %vm1231, %v4005, 0.0
        %4050 = vadd.xlane.f32.xlu0 %v4049
        %v4051 = vpop.xlane.xlu0 %4050
        %v4052 = vsel %vm1231, %v4007, 0.0
        %4053 = vadd.xlane.f32.xlu0 %v4052
        %v4054 = vpop.xlane.xlu0 %4053
        %v4055 = vsel %vm1231, %v4009, 0.0
        %4056 = vadd.xlane.f32.xlu0 %v4055
        %v4057 = vpop.xlane.xlu0 %4056
        %v4058 = vrcp.pop %v4012
        %v4059 = vrcp.pop %v4015
        %v4060 = vrcp.pop %v4018
        %v4061 = vrcp.pop %v4021
        %v4062 = vrcp.pop %v4024
        %v4063 = vrcp.pop %v4027
        %v4064 = vrcp.pop %v4030
        %v4065 = vrcp.pop %v4033
        %v4066 = vrcp.pop %v4036
        %v4067 = vrcp.pop %v4039
        %v4068 = vrcp.pop %v4042
        %v4069 = vrcp.pop %v4045
        %v4070 = vrcp.pop %v4048
        %v4071 = vrcp.pop %v4051
        %v4072 = vrcp.pop %v4054
        %v4073 = vrcp.pop %v4057
        %v4074 = vmul.f32 %v3979, %v4058
        %v4075 = vmul.f32 %v3981, %v4059
        %v4076 = vmul.f32 %v3983, %v4060
        %v4077 = vmul.f32 %v3985, %v4061
        %v4078 = vmul.f32 %v3987, %v4062
        %v4079 = vmul.f32 %v3989, %v4063
        %v4080 = vmul.f32 %v3991, %v4064
        %v4081 = vmul.f32 %v3993, %v4065
        %v4082 = vmul.f32 %v3995, %v4066
        %v4083 = vmul.f32 %v3997, %v4067
        %v4084 = vmul.f32 %v3999, %v4068
        %v4085 = vmul.f32 %v4001, %v4069
        %v4086 = vmul.f32 %v4003, %v4070
        %v4087 = vmul.f32 %v4005, %v4071
        %v4088 = vmul.f32 %v4007, %v4072
        %v4089 = vmul.f32 %v4009, %v4073
        %v4090 = vpack.c.bf16 %v4075, %v4074
        %v4091 = vpack.c.bf16 %v4077, %v4076
        %v4092 = vpack.c.bf16 %v4079, %v4078
        %v4093 = vpack.c.bf16 %v4081, %v4080
        %v4094 = vpack.c.bf16 %v4083, %v4082
        %v4095 = vpack.c.bf16 %v4085, %v4084
        %v4096 = vpack.c.bf16 %v4087, %v4086
        %v4097 = vpack.c.bf16 %v4089, %v4088
        %4098 = vrot.lane.b32.xlu0 %v1221, 96
        %v4099 = vpop.permute.xlu0 %4098
        %v4102 = vsel %vm1231, %v4090, 0
        %4104 = vmatprep.subr.bf16.mxu0 0
        %4105 = vmatpush1.bf16.msra.mxu0 %v4099
        %4106 = vmatprep.subr.bf16.mxu0 0
        %4107 = vmatpush1.bf16.msra.mxu0 0
        %4108 = vmatprep.subr.bf16.mxu0 0
        %4109 = vmatpush1.bf16.msra.mxu0 0
        %4110 = vmatprep.subr.bf16.mxu0 0
        %4111 = vmatpush1.bf16.msra.mxu0 0
        %4112 = vmatprep.subr.bf16.mxu0 0
        %4113 = vmatpush1.bf16.msra.mxu0 0
        %4114 = vmatprep.subr.bf16.mxu0 0
        %4115 = vmatpush1.bf16.msra.mxu0 0
        %4116 = vmatprep.subr.bf16.mxu0 0
        %4117 = vmatpush1.bf16.msra.mxu0 0
        %4118 = vmatprep.subr.bf16.mxu0 0
        %4119 = vmatpush1.bf16.msra.mxu0 0
        %4120 = vmatprep.subr.bf16.mxu0 0
        %4121 = vmatpush1.bf16.msra.mxu0 0
        %4122 = vmatprep.subr.bf16.mxu0 0
        %4123 = vmatpush1.bf16.msra.mxu0 0
        %4124 = vmatprep.subr.bf16.mxu0 0
        %4125 = vmatpush1.bf16.msra.mxu0 0
        %4126 = vmatprep.subr.bf16.mxu0 0
        %4127 = vmatpush1.bf16.msra.mxu0 0
        %4128 = vmatprep.subr.bf16.mxu0 0
        %4129 = vmatpush1.bf16.msra.mxu0 0
        %4130 = vmatprep.subr.bf16.mxu0 0
        %4131 = vmatpush1.bf16.msra.mxu0 0
        %4132 = vmatprep.subr.bf16.mxu0 0
        %4133 = vmatpush1.bf16.msra.mxu0 0
        %4134 = vmatprep.subr.bf16.mxu0 0
        %4135 = vmatpush1.bf16.msra.mxu0 0
        %4136 = vmatprep.mubr.bf16.mxu0 0
        %4137 = vmatmul.mubr.bf16.gmra.mrb[0].mxu0 %v4102
        %v4138 = vpop.f32.mrb[0].mxu0
        %v4139 = vadd.f32 0.0, %v4138
        %v4140 = vpop.f32.mrb[0].mxu0
        %v4141 = vpop.f32.mrb[0].mxu0
        %v4142 = vadd.f32 0.0, %v4141
        %v4143 = vpop.f32.mrb[0].mxu0
        %4144 = vdwg.mxu0
        %4145 = vrot.lane.b32.xlu0 %v1222, 96
        %v4146 = vpop.permute.xlu0 %4145
        %v4149 = vsel %vm1231, %v4091, 0
        %4151 = vmatprep.subr.bf16.mxu0 0
        %4152 = vmatpush1.bf16.msra.mxu0 %v4146
        %4153 = vmatprep.subr.bf16.mxu0 0
        %4154 = vmatpush1.bf16.msra.mxu0 0
        %4155 = vmatprep.subr.bf16.mxu0 0
        %4156 = vmatpush1.bf16.msra.mxu0 0
        %4157 = vmatprep.subr.bf16.mxu0 0
        %4158 = vmatpush1.bf16.msra.mxu0 0
        %4159 = vmatprep.subr.bf16.mxu0 0
        %4160 = vmatpush1.bf16.msra.mxu0 0
        %4161 = vmatprep.subr.bf16.mxu0 0
        %4162 = vmatpush1.bf16.msra.mxu0 0
        %4163 = vmatprep.subr.bf16.mxu0 0
        %4164 = vmatpush1.bf16.msra.mxu0 0
        %4165 = vmatprep.subr.bf16.mxu0 0
        %4166 = vmatpush1.bf16.msra.mxu0 0
        %4167 = vmatprep.subr.bf16.mxu0 0
        %4168 = vmatpush1.bf16.msra.mxu0 0
        %4169 = vmatprep.subr.bf16.mxu0 0
        %4170 = vmatpush1.bf16.msra.mxu0 0
        %4171 = vmatprep.subr.bf16.mxu0 0
        %4172 = vmatpush1.bf16.msra.mxu0 0
        %4173 = vmatprep.subr.bf16.mxu0 0
        %4174 = vmatpush1.bf16.msra.mxu0 0
        %4175 = vmatprep.subr.bf16.mxu0 0
        %4176 = vmatpush1.bf16.msra.mxu0 0
        %4177 = vmatprep.subr.bf16.mxu0 0
        %4178 = vmatpush1.bf16.msra.mxu0 0
        %4179 = vmatprep.subr.bf16.mxu0 0
        %4180 = vmatpush1.bf16.msra.mxu0 0
        %4181 = vmatprep.subr.bf16.mxu0 0
        %4182 = vmatpush1.bf16.msra.mxu0 0
        %4183 = vmatprep.mubr.bf16.mxu0 0
        %4184 = vmatmul.mubr.bf16.gmra.mrb[0].mxu0 %v4149
        %v4185 = vpop.f32.mrb[0].mxu0
        %v4186 = vadd.f32 0.0, %v4185
        %v4187 = vpop.f32.mrb[0].mxu0
        %v4188 = vpop.f32.mrb[0].mxu0
        %v4189 = vadd.f32 0.0, %v4188
        %v4190 = vpop.f32.mrb[0].mxu0
        %4191 = vdwg.mxu0
        %4192 = vrot.lane.b32.xlu0 %v1223, 96
        %v4193 = vpop.permute.xlu0 %4192
        %v4196 = vsel %vm1231, %v4092, 0
        %4198 = vmatprep.subr.bf16.mxu0 0
        %4199 = vmatpush1.bf16.msra.mxu0 %v4193
        %4200 = vmatprep.subr.bf16.mxu0 0
        %4201 = vmatpush1.bf16.msra.mxu0 0
        %4202 = vmatprep.subr.bf16.mxu0 0
        %4203 = vmatpush1.bf16.msra.mxu0 0
        %4204 = vmatprep.subr.bf16.mxu0 0
        %4205 = vmatpush1.bf16.msra.mxu0 0
        %4206 = vmatprep.subr.bf16.mxu0 0
        %4207 = vmatpush1.bf16.msra.mxu0 0
        %4208 = vmatprep.subr.bf16.mxu0 0
        %4209 = vmatpush1.bf16.msra.mxu0 0
        %4210 = vmatprep.subr.bf16.mxu0 0
        %4211 = vmatpush1.bf16.msra.mxu0 0
        %4212 = vmatprep.subr.bf16.mxu0 0
        %4213 = vmatpush1.bf16.msra.mxu0 0
        %4214 = vmatprep.subr.bf16.mxu0 0
        %4215 = vmatpush1.bf16.msra.mxu0 0
        %4216 = vmatprep.subr.bf16.mxu0 0
        %4217 = vmatpush1.bf16.msra.mxu0 0
        %4218 = vmatprep.subr.bf16.mxu0 0
        %4219 = vmatpush1.bf16.msra.mxu0 0
        %4220 = vmatprep.subr.bf16.mxu0 0
        %4221 = vmatpush1.bf16.msra.mxu0 0
        %4222 = vmatprep.subr.bf16.mxu0 0
        %4223 = vmatpush1.bf16.msra.mxu0 0
        %4224 = vmatprep.subr.bf16.mxu0 0
        %4225 = vmatpush1.bf16.msra.mxu0 0
        %4226 = vmatprep.subr.bf16.mxu0 0
        %4227 = vmatpush1.bf16.msra.mxu0 0
        %4228 = vmatprep.subr.bf16.mxu0 0
        %4229 = vmatpush1.bf16.msra.mxu0 0
        %4230 = vmatprep.mubr.bf16.mxu0 0
        %4231 = vmatmul.mubr.bf16.gmra.mrb[0].mxu0 %v4196
        %v4232 = vpop.f32.mrb[0].mxu0
        %v4233 = vadd.f32 0.0, %v4232
        %v4234 = vpop.f32.mrb[0].mxu0
        %v4235 = vpop.f32.mrb[0].mxu0
        %v4236 = vadd.f32 0.0, %v4235
        %v4237 = vpop.f32.mrb[0].mxu0
        %4238 = vdwg.mxu0
        %4239 = vrot.lane.b32.xlu0 %v1224, 96
        %v4240 = vpop.permute.xlu0 %4239
        %v4243 = vsel %vm1231, %v4093, 0
        %4245 = vmatprep.subr.bf16.mxu0 0
        %4246 = vmatpush1.bf16.msra.mxu0 %v4240
        %4247 = vmatprep.subr.bf16.mxu0 0
        %4248 = vmatpush1.bf16.msra.mxu0 0
        %4249 = vmatprep.subr.bf16.mxu0 0
        %4250 = vmatpush1.bf16.msra.mxu0 0
        %4251 = vmatprep.subr.bf16.mxu0 0
        %4252 = vmatpush1.bf16.msra.mxu0 0
        %4253 = vmatprep.subr.bf16.mxu0 0
        %4254 = vmatpush1.bf16.msra.mxu0 0
        %4255 = vmatprep.subr.bf16.mxu0 0
        %4256 = vmatpush1.bf16.msra.mxu0 0
        %4257 = vmatprep.subr.bf16.mxu0 0
        %4258 = vmatpush1.bf16.msra.mxu0 0
        %4259 = vmatprep.subr.bf16.mxu0 0
        %4260 = vmatpush1.bf16.msra.mxu0 0
        %4261 = vmatprep.subr.bf16.mxu0 0
        %4262 = vmatpush1.bf16.msra.mxu0 0
        %4263 = vmatprep.subr.bf16.mxu0 0
        %4264 = vmatpush1.bf16.msra.mxu0 0
        %4265 = vmatprep.subr.bf16.mxu0 0
        %4266 = vmatpush1.bf16.msra.mxu0 0
        %4267 = vmatprep.subr.bf16.mxu0 0
        %4268 = vmatpush1.bf16.msra.mxu0 0
        %4269 = vmatprep.subr.bf16.mxu0 0
        %4270 = vmatpush1.bf16.msra.mxu0 0
        %4271 = vmatprep.subr.bf16.mxu0 0
        %4272 = vmatpush1.bf16.msra.mxu0 0
        %4273 = vmatprep.subr.bf16.mxu0 0
        %4274 = vmatpush1.bf16.msra.mxu0 0
        %4275 = vmatprep.subr.bf16.mxu0 0
        %4276 = vmatpush1.bf16.msra.mxu0 0
        %4277 = vmatprep.mubr.bf16.mxu0 0
        %4278 = vmatmul.mubr.bf16.gmra.mrb[0].mxu0 %v4243
        %v4279 = vpop.f32.mrb[0].mxu0
        %v4280 = vadd.f32 0.0, %v4279
        %v4281 = vpop.f32.mrb[0].mxu0
        %v4282 = vpop.f32.mrb[0].mxu0
        %v4283 = vadd.f32 0.0, %v4282
        %v4284 = vpop.f32.mrb[0].mxu0
        %4285 = vdwg.mxu0
        %4286 = vrot.lane.b32.xlu0 %v1225, 96
        %v4287 = vpop.permute.xlu0 %4286
        %v4290 = vsel %vm1231, %v4094, 0
        %4292 = vmatprep.subr.bf16.mxu0 0
        %4293 = vmatpush1.bf16.msra.mxu0 %v4287
        %4294 = vmatprep.subr.bf16.mxu0 0
        %4295 = vmatpush1.bf16.msra.mxu0 0
        %4296 = vmatprep.subr.bf16.mxu0 0
        %4297 = vmatpush1.bf16.msra.mxu0 0
        %4298 = vmatprep.subr.bf16.mxu0 0
        %4299 = vmatpush1.bf16.msra.mxu0 0
        %4300 = vmatprep.subr.bf16.mxu0 0
        %4301 = vmatpush1.bf16.msra.mxu0 0
        %4302 = vmatprep.subr.bf16.mxu0 0
        %4303 = vmatpush1.bf16.msra.mxu0 0
        %4304 = vmatprep.subr.bf16.mxu0 0
        %4305 = vmatpush1.bf16.msra.mxu0 0
        %4306 = vmatprep.subr.bf16.mxu0 0
        %4307 = vmatpush1.bf16.msra.mxu0 0
        %4308 = vmatprep.subr.bf16.mxu0 0
        %4309 = vmatpush1.bf16.msra.mxu0 0
        %4310 = vmatprep.subr.bf16.mxu0 0
        %4311 = vmatpush1.bf16.msra.mxu0 0
        %4312 = vmatprep.subr.bf16.mxu0 0
        %4313 = vmatpush1.bf16.msra.mxu0 0
        %4314 = vmatprep.subr.bf16.mxu0 0
        %4315 = vmatpush1.bf16.msra.mxu0 0
        %4316 = vmatprep.subr.bf16.mxu0 0
        %4317 = vmatpush1.bf16.msra.mxu0 0
        %4318 = vmatprep.subr.bf16.mxu0 0
        %4319 = vmatpush1.bf16.msra.mxu0 0
        %4320 = vmatprep.subr.bf16.mxu0 0
        %4321 = vmatpush1.bf16.msra.mxu0 0
        %4322 = vmatprep.subr.bf16.mxu0 0
        %4323 = vmatpush1.bf16.msra.mxu0 0
        %4324 = vmatprep.mubr.bf16.mxu0 0
        %4325 = vmatmul.mubr.bf16.gmra.mrb[0].mxu0 %v4290
        %v4326 = vpop.f32.mrb[0].mxu0
        %v4327 = vadd.f32 0.0, %v4326
        %v4328 = vpop.f32.mrb[0].mxu0
        %v4329 = vpop.f32.mrb[0].mxu0
        %v4330 = vadd.f32 0.0, %v4329
        %v4331 = vpop.f32.mrb[0].mxu0
        %4332 = vdwg.mxu0
        %4333 = vrot.lane.b32.xlu0 %v1226, 96
        %v4334 = vpop.permute.xlu0 %4333
        %v4337 = vsel %vm1231, %v4095, 0
        %4339 = vmatprep.subr.bf16.mxu0 0
        %4340 = vmatpush1.bf16.msra.mxu0 %v4334
        %4341 = vmatprep.subr.bf16.mxu0 0
        %4342 = vmatpush1.bf16.msra.mxu0 0
        %4343 = vmatprep.subr.bf16.mxu0 0
        %4344 = vmatpush1.bf16.msra.mxu0 0
        %4345 = vmatprep.subr.bf16.mxu0 0
        %4346 = vmatpush1.bf16.msra.mxu0 0
        %4347 = vmatprep.subr.bf16.mxu0 0
        %4348 = vmatpush1.bf16.msra.mxu0 0
        %4349 = vmatprep.subr.bf16.mxu0 0
        %4350 = vmatpush1.bf16.msra.mxu0 0
        %4351 = vmatprep.subr.bf16.mxu0 0
        %4352 = vmatpush1.bf16.msra.mxu0 0
        %4353 = vmatprep.subr.bf16.mxu0 0
        %4354 = vmatpush1.bf16.msra.mxu0 0
        %4355 = vmatprep.subr.bf16.mxu0 0
        %4356 = vmatpush1.bf16.msra.mxu0 0
        %4357 = vmatprep.subr.bf16.mxu0 0
        %4358 = vmatpush1.bf16.msra.mxu0 0
        %4359 = vmatprep.subr.bf16.mxu0 0
        %4360 = vmatpush1.bf16.msra.mxu0 0
        %4361 = vmatprep.subr.bf16.mxu0 0
        %4362 = vmatpush1.bf16.msra.mxu0 0
        %4363 = vmatprep.subr.bf16.mxu0 0
        %4364 = vmatpush1.bf16.msra.mxu0 0
        %4365 = vmatprep.subr.bf16.mxu0 0
        %4366 = vmatpush1.bf16.msra.mxu0 0
        %4367 = vmatprep.subr.bf16.mxu0 0
        %4368 = vmatpush1.bf16.msra.mxu0 0
        %4369 = vmatprep.subr.bf16.mxu0 0
        %4370 = vmatpush1.bf16.msra.mxu0 0
        %4371 = vmatprep.mubr.bf16.mxu0 0
        %4372 = vmatmul.mubr.bf16.gmra.mrb[0].mxu0 %v4337
        %v4373 = vpop.f32.mrb[0].mxu0
        %v4374 = vadd.f32 0.0, %v4373
        %v4375 = vpop.f32.mrb[0].mxu0
        %v4376 = vpop.f32.mrb[0].mxu0
        %v4377 = vadd.f32 0.0, %v4376
        %v4378 = vpop.f32.mrb[0].mxu0
        %4379 = vdwg.mxu0
        %4380 = vrot.lane.b32.xlu0 %v1227, 96
        %v4381 = vpop.permute.xlu0 %4380
        %v4384 = vsel %vm1231, %v4096, 0
        %4386 = vmatprep.subr.bf16.mxu0 0
        %4387 = vmatpush1.bf16.msra.mxu0 %v4381
        %4388 = vmatprep.subr.bf16.mxu0 0
        %4389 = vmatpush1.bf16.msra.mxu0 0
        %4390 = vmatprep.subr.bf16.mxu0 0
        %4391 = vmatpush1.bf16.msra.mxu0 0
        %4392 = vmatprep.subr.bf16.mxu0 0
        %4393 = vmatpush1.bf16.msra.mxu0 0
        %4394 = vmatprep.subr.bf16.mxu0 0
        %4395 = vmatpush1.bf16.msra.mxu0 0
        %4396 = vmatprep.subr.bf16.mxu0 0
        %4397 = vmatpush1.bf16.msra.mxu0 0
        %4398 = vmatprep.subr.bf16.mxu0 0
        %4399 = vmatpush1.bf16.msra.mxu0 0
        %4400 = vmatprep.subr.bf16.mxu0 0
        %4401 = vmatpush1.bf16.msra.mxu0 0
        %4402 = vmatprep.subr.bf16.mxu0 0
        %4403 = vmatpush1.bf16.msra.mxu0 0
        %4404 = vmatprep.subr.bf16.mxu0 0
        %4405 = vmatpush1.bf16.msra.mxu0 0
        %4406 = vmatprep.subr.bf16.mxu0 0
        %4407 = vmatpush1.bf16.msra.mxu0 0
        %4408 = vmatprep.subr.bf16.mxu0 0
        %4409 = vmatpush1.bf16.msra.mxu0 0
        %4410 = vmatprep.subr.bf16.mxu0 0
        %4411 = vmatpush1.bf16.msra.mxu0 0
        %4412 = vmatprep.subr.bf16.mxu0 0
        %4413 = vmatpush1.bf16.msra.mxu0 0
        %4414 = vmatprep.subr.bf16.mxu0 0
        %4415 = vmatpush1.bf16.msra.mxu0 0
        %4416 = vmatprep.subr.bf16.mxu0 0
        %4417 = vmatpush1.bf16.msra.mxu0 0
        %4418 = vmatprep.mubr.bf16.mxu0 0
        %4419 = vmatmul.mubr.bf16.gmra.mrb[0].mxu0 %v4384
        %v4420 = vpop.f32.mrb[0].mxu0
        %v4421 = vadd.f32 0.0, %v4420
        %v4422 = vpop.f32.mrb[0].mxu0
        %v4423 = vpop.f32.mrb[0].mxu0
        %v4424 = vadd.f32 0.0, %v4423
        %v4425 = vpop.f32.mrb[0].mxu0
        %4426 = vdwg.mxu0
        %4427 = vrot.lane.b32.xlu0 %v1228, 96
        %v4428 = vpop.permute.xlu0 %4427
        %v4431 = vsel %vm1231, %v4097, 0
        %4433 = vmatprep.subr.bf16.mxu0 0
        %4434 = vmatpush1.bf16.msra.mxu0 %v4428
        %4435 = vmatprep.subr.bf16.mxu0 0
        %4436 = vmatpush1.bf16.msra.mxu0 0
        %4437 = vmatprep.subr.bf16.mxu0 0
        %4438 = vmatpush1.bf16.msra.mxu0 0
        %4439 = vmatprep.subr.bf16.mxu0 0
        %4440 = vmatpush1.bf16.msra.mxu0 0
        %4441 = vmatprep.subr.bf16.mxu0 0
        %4442 = vmatpush1.bf16.msra.mxu0 0
        %4443 = vmatprep.subr.bf16.mxu0 0
        %4444 = vmatpush1.bf16.msra.mxu0 0
        %4445 = vmatprep.subr.bf16.mxu0 0
        %4446 = vmatpush1.bf16.msra.mxu0 0
        %4447 = vmatprep.subr.bf16.mxu0 0
        %4448 = vmatpush1.bf16.msra.mxu0 0
        %4449 = vmatprep.subr.bf16.mxu0 0
        %4450 = vmatpush1.bf16.msra.mxu0 0
        %4451 = vmatprep.subr.bf16.mxu0 0
        %4452 = vmatpush1.bf16.msra.mxu0 0
        %4453 = vmatprep.subr.bf16.mxu0 0
        %4454 = vmatpush1.bf16.msra.mxu0 0
        %4455 = vmatprep.subr.bf16.mxu0 0
        %4456 = vmatpush1.bf16.msra.mxu0 0
        %4457 = vmatprep.subr.bf16.mxu0 0
        %4458 = vmatpush1.bf16.msra.mxu0 0
        %4459 = vmatprep.subr.bf16.mxu0 0
        %4460 = vmatpush1.bf16.msra.mxu0 0
        %4461 = vmatprep.subr.bf16.mxu0 0
        %4462 = vmatpush1.bf16.msra.mxu0 0
        %4463 = vmatprep.subr.bf16.mxu0 0
        %4464 = vmatpush1.bf16.msra.mxu0 0
        %4465 = vmatprep.mubr.bf16.mxu0 0
        %4466 = vmatmul.mubr.bf16.gmra.mrb[0].mxu0 %v4431
        %v4467 = vpop.f32.mrb[0].mxu0
        %v4468 = vadd.f32 0.0, %v4467
        %v4469 = vpop.f32.mrb[0].mxu0
        %v4470 = vpop.f32.mrb[0].mxu0
        %v4471 = vadd.f32 0.0, %v4470
        %v4472 = vpop.f32.mrb[0].mxu0
        %4473 = vdwg.mxu0
        %v4474 = vpack.c.bf16 %v4142, %v4139
        %v4475 = vpack.c.bf16 %v4189, %v4186
        %v4476 = vpack.c.bf16 %v4236, %v4233
        %v4477 = vpack.c.bf16 %v4283, %v4280
        %v4478 = vpack.c.bf16 %v4330, %v4327
        %v4479 = vpack.c.bf16 %v4377, %v4374
        %v4480 = vpack.c.bf16 %v4424, %v4421
        %v4481 = vpack.c.bf16 %v4471, %v4468
        %v4482 = vld [vmem:[#allocation17 + $0x10] sm:$0xf]
        %v4483 = vld [vmem:[#allocation17 + $0x14] sm:$0xf]
        %v4486 = vunpack.c.l.b16 %v4482
        %v4487 = vunpack.c.l.b16 %v4483
        %v4488 = vpack.c.b16 %v4487, %v4486
        %v4491 = vsel %vm1231, %v4474, 0
        %v4494 = vsel %vm1231, %v4475, 0
        %v4497 = vsel %vm1231, %v4476, 0
        %v4500 = vsel %vm1231, %v4477, 0
        %v4503 = vsel %vm1231, %v4478, 0
        %v4506 = vsel %vm1231, %v4479, 0
        %v4509 = vsel %vm1231, %v4480, 0
        %v4512 = vsel %vm1231, %v4481, 0
        %4514 = vmatprep.subr.bf16.mxu0 0
        %4515 = vmatpush1.bf16.msra.mxu0 %v4488
        %4516 = vmatprep.subr.bf16.mxu0 0
        %4517 = vmatpush1.bf16.msra.mxu0 0
        %4518 = vmatprep.subr.bf16.mxu0 0
        %4519 = vmatpush1.bf16.msra.mxu0 0
        %4520 = vmatprep.subr.bf16.mxu0 0
        %4521 = vmatpush1.bf16.msra.mxu0 0
        %4522 = vmatprep.subr.bf16.mxu0 0
        %4523 = vmatpush1.bf16.msra.mxu0 0
        %4524 = vmatprep.subr.bf16.mxu0 0
        %4525 = vmatpush1.bf16.msra.mxu0 0
        %4526 = vmatprep.subr.bf16.mxu0 0
        %4527 = vmatpush1.bf16.msra.mxu0 0
        %4528 = vmatprep.subr.bf16.mxu0 0
        %4529 = vmatpush1.bf16.msra.mxu0 0
        %4530 = vmatprep.subr.bf16.mxu0 0
        %4531 = vmatpush1.bf16.msra.mxu0 0
        %4532 = vmatprep.subr.bf16.mxu0 0
        %4533 = vmatpush1.bf16.msra.mxu0 0
        %4534 = vmatprep.subr.bf16.mxu0 0
        %4535 = vmatpush1.bf16.msra.mxu0 0
        %4536 = vmatprep.subr.bf16.mxu0 0
        %4537 = vmatpush1.bf16.msra.mxu0 0
        %4538 = vmatprep.subr.bf16.mxu0 0
        %4539 = vmatpush1.bf16.msra.mxu0 0
        %4540 = vmatprep.subr.bf16.mxu0 0
        %4541 = vmatpush1.bf16.msra.mxu0 0
        %4542 = vmatprep.subr.bf16.mxu0 0
        %4543 = vmatpush1.bf16.msra.mxu0 0
        %4544 = vmatprep.subr.bf16.mxu0 0
        %4545 = vmatpush1.bf16.msra.mxu0 0
        %4546 = vmatprep.mubr.bf16.mxu0 0
        %4547 = vmatmul.mubr.bf16.gmra.mrb[0].mxu0 %v4491
        %v4548 = vpop.f32.mrb[0].mxu0
        %v4549 = vadd.f32 0.0, %v4548
        %v4550 = vpop.f32.mrb[0].mxu0
        %v4551 = vpop.f32.mrb[0].mxu0
        %v4552 = vadd.f32 0.0, %v4551
        %v4553 = vpop.f32.mrb[0].mxu0
        %4554 = vmatprep.mubr.bf16.mxu0 0
        %4555 = vmatmul.mubr.bf16.gmra.mrb[0].mxu0 %v4494
        %v4556 = vpop.f32.mrb[0].mxu0
        %v4557 = vadd.f32 0.0, %v4556
        %v4558 = vpop.f32.mrb[0].mxu0
        %v4559 = vpop.f32.mrb[0].mxu0
        %v4560 = vadd.f32 0.0, %v4559
        %v4561 = vpop.f32.mrb[0].mxu0
        %4562 = vmatprep.mubr.bf16.mxu0 0
        %4563 = vmatmul.mubr.bf16.gmra.mrb[0].mxu0 %v4497
        %v4564 = vpop.f32.mrb[0].mxu0
        %v4565 = vadd.f32 0.0, %v4564
        %v4566 = vpop.f32.mrb[0].mxu0
        %v4567 = vpop.f32.mrb[0].mxu0
        %v4568 = vadd.f32 0.0, %v4567
        %v4569 = vpop.f32.mrb[0].mxu0
        %4570 = vmatprep.mubr.bf16.mxu0 0
        %4571 = vmatmul.mubr.bf16.gmra.mrb[0].mxu0 %v4500
        %v4572 = vpop.f32.mrb[0].mxu0
        %v4573 = vadd.f32 0.0, %v4572
        %v4574 = vpop.f32.mrb[0].mxu0
        %v4575 = vpop.f32.mrb[0].mxu0
        %v4576 = vadd.f32 0.0, %v4575
        %v4577 = vpop.f32.mrb[0].mxu0
        %4578 = vmatprep.mubr.bf16.mxu0 0
        %4579 = vmatmul.mubr.bf16.gmra.mrb[0].mxu0 %v4503
        %v4580 = vpop.f32.mrb[0].mxu0
        %v4581 = vadd.f32 0.0, %v4580
        %v4582 = vpop.f32.mrb[0].mxu0
        %v4583 = vpop.f32.mrb[0].mxu0
        %v4584 = vadd.f32 0.0, %v4583
        %v4585 = vpop.f32.mrb[0].mxu0
        %4586 = vmatprep.mubr.bf16.mxu0 0
        %4587 = vmatmul.mubr.bf16.gmra.mrb[0].mxu0 %v4506
        %v4588 = vpop.f32.mrb[0].mxu0
        %v4589 = vadd.f32 0.0, %v4588
        %v4590 = vpop.f32.mrb[0].mxu0
        %v4591 = vpop.f32.mrb[0].mxu0
        %v4592 = vadd.f32 0.0, %v4591
        %v4593 = vpop.f32.mrb[0].mxu0
        %4594 = vmatprep.mubr.bf16.mxu0 0
        %4595 = vmatmul.mubr.bf16.gmra.mrb[0].mxu0 %v4509
        %v4596 = vpop.f32.mrb[0].mxu0
        %v4597 = vadd.f32 0.0, %v4596
        %v4598 = vpop.f32.mrb[0].mxu0
        %v4599 = vpop.f32.mrb[0].mxu0
        %v4600 = vadd.f32 0.0, %v4599
        %v4601 = vpop.f32.mrb[0].mxu0
        %4602 = vmatprep.mubr.bf16.mxu0 0
        %4603 = vmatmul.mubr.bf16.gmra.mrb[0].mxu0 %v4512
        %v4604 = vpop.f32.mrb[0].mxu0
        %v4605 = vadd.f32 0.0, %v4604
        %v4606 = vpop.f32.mrb[0].mxu0
        %v4607 = vpop.f32.mrb[0].mxu0
        %v4608 = vadd.f32 0.0, %v4607
        %v4609 = vpop.f32.mrb[0].mxu0
        %4610 = vdwg.mxu0
        %v4611 = vadd.f32 %v3412, %v4549
        %v4612 = vadd.f32 %v3415, %v4552
        %v4613 = vadd.f32 %v3420, %v4557
        %v4614 = vadd.f32 %v3423, %v4560
        %v4615 = vadd.f32 %v3428, %v4565
        %v4616 = vadd.f32 %v3431, %v4568
        %v4617 = vadd.f32 %v3436, %v4573
        %v4618 = vadd.f32 %v3439, %v4576
        %v4619 = vadd.f32 %v3444, %v4581
        %v4620 = vadd.f32 %v3447, %v4584
        %v4621 = vadd.f32 %v3452, %v4589
        %v4622 = vadd.f32 %v3455, %v4592
        %v4623 = vadd.f32 %v3460, %v4597
        %v4624 = vadd.f32 %v3463, %v4600
        %v4625 = vadd.f32 %v3468, %v4605
        %v4626 = vadd.f32 %v3471, %v4608
        %4627 = vrot.lane.b32.xlu0 %v1205, 80
        %v4628 = vpop.permute.xlu0 %4627
        %4629 = vrot.lane.b32.xlu0 %v1213, 80
        %v4630 = vpop.permute.xlu0 %4629
        %v4632 = vsel %vm1231, %v4628, 0
        %v4635 = vsel %vm1231, %v4630, 0
        %4637 = vmatprep.subr.bf16.mxu0 0
        %4638 = vmatpush1.bf16.xpose.msra.mxu0 %v4635
        %4639 = vmatprep.subr.bf16.mxu0 0
        %4640 = vmatpush1.bf16.xpose.msra.mxu0 0
        %4641 = vmatprep.subr.bf16.mxu0 0
        %4642 = vmatpush1.bf16.xpose.msra.mxu0 0
        %4643 = vmatprep.subr.bf16.mxu0 0
        %4644 = vmatpush1.bf16.xpose.msra.mxu0 0
        %4645 = vmatprep.subr.bf16.mxu0 0
        %4646 = vmatpush1.bf16.xpose.msra.mxu0 0
        %4647 = vmatprep.subr.bf16.mxu0 0
        %4648 = vmatpush1.bf16.xpose.msra.mxu0 0
        %4649 = vmatprep.subr.bf16.mxu0 0
        %4650 = vmatpush1.bf16.xpose.msra.mxu0 0
        %4651 = vmatprep.subr.bf16.mxu0 0
        %4652 = vmatpush1.bf16.xpose.msra.mxu0 0
        %4653 = vmatprep.subr.bf16.mxu0 0
        %4654 = vmatpush1.bf16.xpose.msra.mxu0 0
        %4655 = vmatprep.subr.bf16.mxu0 0
        %4656 = vmatpush1.bf16.xpose.msra.mxu0 0
        %4657 = vmatprep.subr.bf16.mxu0 0
        %4658 = vmatpush1.bf16.xpose.msra.mxu0 0
        %4659 = vmatprep.subr.bf16.mxu0 0
        %4660 = vmatpush1.bf16.xpose.msra.mxu0 0
        %4661 = vmatprep.subr.bf16.mxu0 0
        %4662 = vmatpush1.bf16.xpose.msra.mxu0 0
        %4663 = vmatprep.subr.bf16.mxu0 0
        %4664 = vmatpush1.bf16.xpose.msra.mxu0 0
        %4665 = vmatprep.subr.bf16.mxu0 0
        %4666 = vmatpush1.bf16.xpose.msra.mxu0 0
        %4667 = vmatprep.subr.bf16.mxu0 0
        %4668 = vmatpush1.bf16.xpose.msra.mxu0 0
        %4669 = vmatprep.mubr.bf16.mxu0 0
        %4670 = vmatmul.mubr.bf16.gmra.mrb[0].mxu0 %v4632
        %v4671 = vpop.f32.mrb[0].mxu0
        %v4672 = vadd.f32 0.0, %v4671
        %v4673 = vpop.f32.mrb[0].mxu0
        %v4674 = vpop.f32.mrb[0].mxu0
        %v4675 = vadd.f32 0.0, %v4674
        %v4676 = vpop.f32.mrb[0].mxu0
        %4677 = vdwg.mxu0
        %4678 = vrot.lane.b32.xlu0 %v1206, 80
        %v4679 = vpop.permute.xlu0 %4678
        %4680 = vrot.lane.b32.xlu0 %v1214, 80
        %v4681 = vpop.permute.xlu0 %4680
        %v4683 = vsel %vm1231, %v4679, 0
        %v4686 = vsel %vm1231, %v4681, 0
        %4688 = vmatprep.subr.bf16.mxu0 0
        %4689 = vmatpush1.bf16.xpose.msra.mxu0 %v4686
        %4690 = vmatprep.subr.bf16.mxu0 0
        %4691 = vmatpush1.bf16.xpose.msra.mxu0 0
        %4692 = vmatprep.subr.bf16.mxu0 0
        %4693 = vmatpush1.bf16.xpose.msra.mxu0 0
        %4694 = vmatprep.subr.bf16.mxu0 0
        %4695 = vmatpush1.bf16.xpose.msra.mxu0 0
        %4696 = vmatprep.subr.bf16.mxu0 0
        %4697 = vmatpush1.bf16.xpose.msra.mxu0 0
        %4698 = vmatprep.subr.bf16.mxu0 0
        %4699 = vmatpush1.bf16.xpose.msra.mxu0 0
        %4700 = vmatprep.subr.bf16.mxu0 0
        %4701 = vmatpush1.bf16.xpose.msra.mxu0 0
        %4702 = vmatprep.subr.bf16.mxu0 0
        %4703 = vmatpush1.bf16.xpose.msra.mxu0 0
        %4704 = vmatprep.subr.bf16.mxu0 0
        %4705 = vmatpush1.bf16.xpose.msra.mxu0 0
        %4706 = vmatprep.subr.bf16.mxu0 0
        %4707 = vmatpush1.bf16.xpose.msra.mxu0 0
        %4708 = vmatprep.subr.bf16.mxu0 0
        %4709 = vmatpush1.bf16.xpose.msra.mxu0 0
        %4710 = vmatprep.subr.bf16.mxu0 0
        %4711 = vmatpush1.bf16.xpose.msra.mxu0 0
        %4712 = vmatprep.subr.bf16.mxu0 0
        %4713 = vmatpush1.bf16.xpose.msra.mxu0 0
        %4714 = vmatprep.subr.bf16.mxu0 0
        %4715 = vmatpush1.bf16.xpose.msra.mxu0 0
        %4716 = vmatprep.subr.bf16.mxu0 0
        %4717 = vmatpush1.bf16.xpose.msra.mxu0 0
        %4718 = vmatprep.subr.bf16.mxu0 0
        %4719 = vmatpush1.bf16.xpose.msra.mxu0 0
        %4720 = vmatprep.mubr.bf16.mxu0 0
        %4721 = vmatmul.mubr.bf16.gmra.mrb[0].mxu0 %v4683
        %v4722 = vpop.f32.mrb[0].mxu0
        %v4723 = vadd.f32 0.0, %v4722
        %v4724 = vpop.f32.mrb[0].mxu0
        %v4725 = vpop.f32.mrb[0].mxu0
        %v4726 = vadd.f32 0.0, %v4725
        %v4727 = vpop.f32.mrb[0].mxu0
        %4728 = vdwg.mxu0
        %4729 = vrot.lane.b32.xlu0 %v1207, 80
        %v4730 = vpop.permute.xlu0 %4729
        %4731 = vrot.lane.b32.xlu0 %v1215, 80
        %v4732 = vpop.permute.xlu0 %4731
        %v4734 = vsel %vm1231, %v4730, 0
        %v4737 = vsel %vm1231, %v4732, 0
        %4739 = vmatprep.subr.bf16.mxu0 0
        %4740 = vmatpush1.bf16.xpose.msra.mxu0 %v4737
        %4741 = vmatprep.subr.bf16.mxu0 0
        %4742 = vmatpush1.bf16.xpose.msra.mxu0 0
        %4743 = vmatprep.subr.bf16.mxu0 0
        %4744 = vmatpush1.bf16.xpose.msra.mxu0 0
        %4745 = vmatprep.subr.bf16.mxu0 0
        %4746 = vmatpush1.bf16.xpose.msra.mxu0 0
        %4747 = vmatprep.subr.bf16.mxu0 0
        %4748 = vmatpush1.bf16.xpose.msra.mxu0 0
        %4749 = vmatprep.subr.bf16.mxu0 0
        %4750 = vmatpush1.bf16.xpose.msra.mxu0 0
        %4751 = vmatprep.subr.bf16.mxu0 0
        %4752 = vmatpush1.bf16.xpose.msra.mxu0 0
        %4753 = vmatprep.subr.bf16.mxu0 0
        %4754 = vmatpush1.bf16.xpose.msra.mxu0 0
        %4755 = vmatprep.subr.bf16.mxu0 0
        %4756 = vmatpush1.bf16.xpose.msra.mxu0 0
        %4757 = vmatprep.subr.bf16.mxu0 0
        %4758 = vmatpush1.bf16.xpose.msra.mxu0 0
        %4759 = vmatprep.subr.bf16.mxu0 0
        %4760 = vmatpush1.bf16.xpose.msra.mxu0 0
        %4761 = vmatprep.subr.bf16.mxu0 0
        %4762 = vmatpush1.bf16.xpose.msra.mxu0 0
        %4763 = vmatprep.subr.bf16.mxu0 0
        %4764 = vmatpush1.bf16.xpose.msra.mxu0 0
        %4765 = vmatprep.subr.bf16.mxu0 0
        %4766 = vmatpush1.bf16.xpose.msra.mxu0 0
        %4767 = vmatprep.subr.bf16.mxu0 0
        %4768 = vmatpush1.bf16.xpose.msra.mxu0 0
        %4769 = vmatprep.subr.bf16.mxu0 0
        %4770 = vmatpush1.bf16.xpose.msra.mxu0 0
        %4771 = vmatprep.mubr.bf16.mxu0 0
        %4772 = vmatmul.mubr.bf16.gmra.mrb[0].mxu0 %v4734
        %v4773 = vpop.f32.mrb[0].mxu0
        %v4774 = vadd.f32 0.0, %v4773
        %v4775 = vpop.f32.mrb[0].mxu0
        %v4776 = vpop.f32.mrb[0].mxu0
        %v4777 = vadd.f32 0.0, %v4776
        %v4778 = vpop.f32.mrb[0].mxu0
        %4779 = vdwg.mxu0
        %4780 = vrot.lane.b32.xlu0 %v1208, 80
        %v4781 = vpop.permute.xlu0 %4780
        %4782 = vrot.lane.b32.xlu0 %v1216, 80
        %v4783 = vpop.permute.xlu0 %4782
        %v4785 = vsel %vm1231, %v4781, 0
        %v4788 = vsel %vm1231, %v4783, 0
        %4790 = vmatprep.subr.bf16.mxu0 0
        %4791 = vmatpush1.bf16.xpose.msra.mxu0 %v4788
        %4792 = vmatprep.subr.bf16.mxu0 0
        %4793 = vmatpush1.bf16.xpose.msra.mxu0 0
        %4794 = vmatprep.subr.bf16.mxu0 0
        %4795 = vmatpush1.bf16.xpose.msra.mxu0 0
        %4796 = vmatprep.subr.bf16.mxu0 0
        %4797 = vmatpush1.bf16.xpose.msra.mxu0 0
        %4798 = vmatprep.subr.bf16.mxu0 0
        %4799 = vmatpush1.bf16.xpose.msra.mxu0 0
        %4800 = vmatprep.subr.bf16.mxu0 0
        %4801 = vmatpush1.bf16.xpose.msra.mxu0 0
        %4802 = vmatprep.subr.bf16.mxu0 0
        %4803 = vmatpush1.bf16.xpose.msra.mxu0 0
        %4804 = vmatprep.subr.bf16.mxu0 0
        %4805 = vmatpush1.bf16.xpose.msra.mxu0 0
        %4806 = vmatprep.subr.bf16.mxu0 0
        %4807 = vmatpush1.bf16.xpose.msra.mxu0 0
        %4808 = vmatprep.subr.bf16.mxu0 0
        %4809 = vmatpush1.bf16.xpose.msra.mxu0 0
        %4810 = vmatprep.subr.bf16.mxu0 0
        %4811 = vmatpush1.bf16.xpose.msra.mxu0 0
        %4812 = vmatprep.subr.bf16.mxu0 0
        %4813 = vmatpush1.bf16.xpose.msra.mxu0 0
        %4814 = vmatprep.subr.bf16.mxu0 0
        %4815 = vmatpush1.bf16.xpose.msra.mxu0 0
        %4816 = vmatprep.subr.bf16.mxu0 0
        %4817 = vmatpush1.bf16.xpose.msra.mxu0 0
        %4818 = vmatprep.subr.bf16.mxu0 0
        %4819 = vmatpush1.bf16.xpose.msra.mxu0 0
        %4820 = vmatprep.subr.bf16.mxu0 0
        %4821 = vmatpush1.bf16.xpose.msra.mxu0 0
        %4822 = vmatprep.mubr.bf16.mxu0 0
        %4823 = vmatmul.mubr.bf16.gmra.mrb[0].mxu0 %v4785
        %v4824 = vpop.f32.mrb[0].mxu0
        %v4825 = vadd.f32 0.0, %v4824
        %v4826 = vpop.f32.mrb[0].mxu0
        %v4827 = vpop.f32.mrb[0].mxu0
        %v4828 = vadd.f32 0.0, %v4827
        %v4829 = vpop.f32.mrb[0].mxu0
        %4830 = vdwg.mxu0
        %4831 = vrot.lane.b32.xlu0 %v1209, 80
        %v4832 = vpop.permute.xlu0 %4831
        %4833 = vrot.lane.b32.xlu0 %v1217, 80
        %v4834 = vpop.permute.xlu0 %4833
        %v4836 = vsel %vm1231, %v4832, 0
        %v4839 = vsel %vm1231, %v4834, 0
        %4841 = vmatprep.subr.bf16.mxu0 0
        %4842 = vmatpush1.bf16.xpose.msra.mxu0 %v4839
        %4843 = vmatprep.subr.bf16.mxu0 0
        %4844 = vmatpush1.bf16.xpose.msra.mxu0 0
        %4845 = vmatprep.subr.bf16.mxu0 0
        %4846 = vmatpush1.bf16.xpose.msra.mxu0 0
        %4847 = vmatprep.subr.bf16.mxu0 0
        %4848 = vmatpush1.bf16.xpose.msra.mxu0 0
        %4849 = vmatprep.subr.bf16.mxu0 0
        %4850 = vmatpush1.bf16.xpose.msra.mxu0 0
        %4851 = vmatprep.subr.bf16.mxu0 0
        %4852 = vmatpush1.bf16.xpose.msra.mxu0 0
        %4853 = vmatprep.subr.bf16.mxu0 0
        %4854 = vmatpush1.bf16.xpose.msra.mxu0 0
        %4855 = vmatprep.subr.bf16.mxu0 0
        %4856 = vmatpush1.bf16.xpose.msra.mxu0 0
        %4857 = vmatprep.subr.bf16.mxu0 0
        %4858 = vmatpush1.bf16.xpose.msra.mxu0 0
        %4859 = vmatprep.subr.bf16.mxu0 0
        %4860 = vmatpush1.bf16.xpose.msra.mxu0 0
        %4861 = vmatprep.subr.bf16.mxu0 0
        %4862 = vmatpush1.bf16.xpose.msra.mxu0 0
        %4863 = vmatprep.subr.bf16.mxu0 0
        %4864 = vmatpush1.bf16.xpose.msra.mxu0 0
        %4865 = vmatprep.subr.bf16.mxu0 0
        %4866 = vmatpush1.bf16.xpose.msra.mxu0 0
        %4867 = vmatprep.subr.bf16.mxu0 0
        %4868 = vmatpush1.bf16.xpose.msra.mxu0 0
        %4869 = vmatprep.subr.bf16.mxu0 0
        %4870 = vmatpush1.bf16.xpose.msra.mxu0 0
        %4871 = vmatprep.subr.bf16.mxu0 0
        %4872 = vmatpush1.bf16.xpose.msra.mxu0 0
        %4873 = vmatprep.mubr.bf16.mxu0 0
        %4874 = vmatmul.mubr.bf16.gmra.mrb[0].mxu0 %v4836
        %v4875 = vpop.f32.mrb[0].mxu0
        %v4876 = vadd.f32 0.0, %v4875
        %v4877 = vpop.f32.mrb[0].mxu0
        %v4878 = vpop.f32.mrb[0].mxu0
        %v4879 = vadd.f32 0.0, %v4878
        %v4880 = vpop.f32.mrb[0].mxu0
        %4881 = vdwg.mxu0
        %4882 = vrot.lane.b32.xlu0 %v1210, 80
        %v4883 = vpop.permute.xlu0 %4882
        %4884 = vrot.lane.b32.xlu0 %v1218, 80
        %v4885 = vpop.permute.xlu0 %4884
        %v4887 = vsel %vm1231, %v4883, 0
        %v4890 = vsel %vm1231, %v4885, 0
        %4892 = vmatprep.subr.bf16.mxu0 0
        %4893 = vmatpush1.bf16.xpose.msra.mxu0 %v4890
        %4894 = vmatprep.subr.bf16.mxu0 0
        %4895 = vmatpush1.bf16.xpose.msra.mxu0 0
        %4896 = vmatprep.subr.bf16.mxu0 0
        %4897 = vmatpush1.bf16.xpose.msra.mxu0 0
        %4898 = vmatprep.subr.bf16.mxu0 0
        %4899 = vmatpush1.bf16.xpose.msra.mxu0 0
        %4900 = vmatprep.subr.bf16.mxu0 0
        %4901 = vmatpush1.bf16.xpose.msra.mxu0 0
        %4902 = vmatprep.subr.bf16.mxu0 0
        %4903 = vmatpush1.bf16.xpose.msra.mxu0 0
        %4904 = vmatprep.subr.bf16.mxu0 0
        %4905 = vmatpush1.bf16.xpose.msra.mxu0 0
        %4906 = vmatprep.subr.bf16.mxu0 0
        %4907 = vmatpush1.bf16.xpose.msra.mxu0 0
        %4908 = vmatprep.subr.bf16.mxu0 0
        %4909 = vmatpush1.bf16.xpose.msra.mxu0 0
        %4910 = vmatprep.subr.bf16.mxu0 0
        %4911 = vmatpush1.bf16.xpose.msra.mxu0 0
        %4912 = vmatprep.subr.bf16.mxu0 0
        %4913 = vmatpush1.bf16.xpose.msra.mxu0 0
        %4914 = vmatprep.subr.bf16.mxu0 0
        %4915 = vmatpush1.bf16.xpose.msra.mxu0 0
        %4916 = vmatprep.subr.bf16.mxu0 0
        %4917 = vmatpush1.bf16.xpose.msra.mxu0 0
        %4918 = vmatprep.subr.bf16.mxu0 0
        %4919 = vmatpush1.bf16.xpose.msra.mxu0 0
        %4920 = vmatprep.subr.bf16.mxu0 0
        %4921 = vmatpush1.bf16.xpose.msra.mxu0 0
        %4922 = vmatprep.subr.bf16.mxu0 0
        %4923 = vmatpush1.bf16.xpose.msra.mxu0 0
        %4924 = vmatprep.mubr.bf16.mxu0 0
        %4925 = vmatmul.mubr.bf16.gmra.mrb[0].mxu0 %v4887
        %v4926 = vpop.f32.mrb[0].mxu0
        %v4927 = vadd.f32 0.0, %v4926
        %v4928 = vpop.f32.mrb[0].mxu0
        %v4929 = vpop.f32.mrb[0].mxu0
        %v4930 = vadd.f32 0.0, %v4929
        %v4931 = vpop.f32.mrb[0].mxu0
        %4932 = vdwg.mxu0
        %4933 = vrot.lane.b32.xlu0 %v1211, 80
        %v4934 = vpop.permute.xlu0 %4933
        %4935 = vrot.lane.b32.xlu0 %v1219, 80
        %v4936 = vpop.permute.xlu0 %4935
        %v4938 = vsel %vm1231, %v4934, 0
        %v4941 = vsel %vm1231, %v4936, 0
        %4943 = vmatprep.subr.bf16.mxu0 0
        %4944 = vmatpush1.bf16.xpose.msra.mxu0 %v4941
        %4945 = vmatprep.subr.bf16.mxu0 0
        %4946 = vmatpush1.bf16.xpose.msra.mxu0 0
        %4947 = vmatprep.subr.bf16.mxu0 0
        %4948 = vmatpush1.bf16.xpose.msra.mxu0 0
        %4949 = vmatprep.subr.bf16.mxu0 0
        %4950 = vmatpush1.bf16.xpose.msra.mxu0 0
        %4951 = vmatprep.subr.bf16.mxu0 0
        %4952 = vmatpush1.bf16.xpose.msra.mxu0 0
        %4953 = vmatprep.subr.bf16.mxu0 0
        %4954 = vmatpush1.bf16.xpose.msra.mxu0 0
        %4955 = vmatprep.subr.bf16.mxu0 0
        %4956 = vmatpush1.bf16.xpose.msra.mxu0 0
        %4957 = vmatprep.subr.bf16.mxu0 0
        %4958 = vmatpush1.bf16.xpose.msra.mxu0 0
        %4959 = vmatprep.subr.bf16.mxu0 0
        %4960 = vmatpush1.bf16.xpose.msra.mxu0 0
        %4961 = vmatprep.subr.bf16.mxu0 0
        %4962 = vmatpush1.bf16.xpose.msra.mxu0 0
        %4963 = vmatprep.subr.bf16.mxu0 0
        %4964 = vmatpush1.bf16.xpose.msra.mxu0 0
        %4965 = vmatprep.subr.bf16.mxu0 0
        %4966 = vmatpush1.bf16.xpose.msra.mxu0 0
        %4967 = vmatprep.subr.bf16.mxu0 0
        %4968 = vmatpush1.bf16.xpose.msra.mxu0 0
        %4969 = vmatprep.subr.bf16.mxu0 0
        %4970 = vmatpush1.bf16.xpose.msra.mxu0 0
        %4971 = vmatprep.subr.bf16.mxu0 0
        %4972 = vmatpush1.bf16.xpose.msra.mxu0 0
        %4973 = vmatprep.subr.bf16.mxu0 0
        %4974 = vmatpush1.bf16.xpose.msra.mxu0 0
        %4975 = vmatprep.mubr.bf16.mxu0 0
        %4976 = vmatmul.mubr.bf16.gmra.mrb[0].mxu0 %v4938
        %v4977 = vpop.f32.mrb[0].mxu0
        %v4978 = vadd.f32 0.0, %v4977
        %v4979 = vpop.f32.mrb[0].mxu0
        %v4980 = vpop.f32.mrb[0].mxu0
        %v4981 = vadd.f32 0.0, %v4980
        %v4982 = vpop.f32.mrb[0].mxu0
        %4983 = vdwg.mxu0
        %4984 = vrot.lane.b32.xlu0 %v1212, 80
        %v4985 = vpop.permute.xlu0 %4984
        %4986 = vrot.lane.b32.xlu0 %v1220, 80
        %v4987 = vpop.permute.xlu0 %4986
        %v4989 = vsel %vm1231, %v4985, 0
        %v4992 = vsel %vm1231, %v4987, 0
        %4994 = vmatprep.subr.bf16.mxu0 0
        %4995 = vmatpush1.bf16.xpose.msra.mxu0 %v4992
        %4996 = vmatprep.subr.bf16.mxu0 0
        %4997 = vmatpush1.bf16.xpose.msra.mxu0 0
        %4998 = vmatprep.subr.bf16.mxu0 0
        %4999 = vmatpush1.bf16.xpose.msra.mxu0 0
        %5000 = vmatprep.subr.bf16.mxu0 0
        %5001 = vmatpush1.bf16.xpose.msra.mxu0 0
        %5002 = vmatprep.subr.bf16.mxu0 0
        %5003 = vmatpush1.bf16.xpose.msra.mxu0 0
        %5004 = vmatprep.subr.bf16.mxu0 0
        %5005 = vmatpush1.bf16.xpose.msra.mxu0 0
        %5006 = vmatprep.subr.bf16.mxu0 0
        %5007 = vmatpush1.bf16.xpose.msra.mxu0 0
        %5008 = vmatprep.subr.bf16.mxu0 0
        %5009 = vmatpush1.bf16.xpose.msra.mxu0 0
        %5010 = vmatprep.subr.bf16.mxu0 0
        %5011 = vmatpush1.bf16.xpose.msra.mxu0 0
        %5012 = vmatprep.subr.bf16.mxu0 0
        %5013 = vmatpush1.bf16.xpose.msra.mxu0 0
        %5014 = vmatprep.subr.bf16.mxu0 0
        %5015 = vmatpush1.bf16.xpose.msra.mxu0 0
        %5016 = vmatprep.subr.bf16.mxu0 0
        %5017 = vmatpush1.bf16.xpose.msra.mxu0 0
        %5018 = vmatprep.subr.bf16.mxu0 0
        %5019 = vmatpush1.bf16.xpose.msra.mxu0 0
        %5020 = vmatprep.subr.bf16.mxu0 0
        %5021 = vmatpush1.bf16.xpose.msra.mxu0 0
        %5022 = vmatprep.subr.bf16.mxu0 0
        %5023 = vmatpush1.bf16.xpose.msra.mxu0 0
        %5024 = vmatprep.subr.bf16.mxu0 0
        %5025 = vmatpush1.bf16.xpose.msra.mxu0 0
        %5026 = vmatprep.mubr.bf16.mxu0 0
        %5027 = vmatmul.mubr.bf16.gmra.mrb[0].mxu0 %v4989
        %v5028 = vpop.f32.mrb[0].mxu0
        %v5029 = vadd.f32 0.0, %v5028
        %v5030 = vpop.f32.mrb[0].mxu0
        %v5031 = vpop.f32.mrb[0].mxu0
        %v5032 = vadd.f32 0.0, %v5031
        %v5033 = vpop.f32.mrb[0].mxu0
        %5034 = vdwg.mxu0
        %v5035 = vmul.f32 %v4672, 0.25
        %v5036 = vmul.f32 %v4675, 0.25
        %v5037 = vmul.f32 %v4723, 0.25
        %v5038 = vmul.f32 %v4726, 0.25
        %v5039 = vmul.f32 %v4774, 0.25
        %v5040 = vmul.f32 %v4777, 0.25
        %v5041 = vmul.f32 %v4825, 0.25
        %v5042 = vmul.f32 %v4828, 0.25
        %v5043 = vmul.f32 %v4876, 0.25
        %v5044 = vmul.f32 %v4879, 0.25
        %v5045 = vmul.f32 %v4927, 0.25
        %v5046 = vmul.f32 %v4930, 0.25
        %v5047 = vmul.f32 %v4978, 0.25
        %v5048 = vmul.f32 %v4981, 0.25
        %v5049 = vmul.f32 %v5029, 0.25
        %v5050 = vmul.f32 %v5032, 0.25
        %v5051 = vadd.f32 %v5035, %v1229
        %v5052 = vadd.f32 %v5036, %v1230
        %v5053 = vadd.f32 %v5037, %v1229
        %v5054 = vadd.f32 %v5038, %v1230
        %v5055 = vadd.f32 %v5039, %v1229
        %v5056 = vadd.f32 %v5040, %v1230
        %v5057 = vadd.f32 %v5041, %v1229
        %v5058 = vadd.f32 %v5042, %v1230
        %v5059 = vadd.f32 %v5043, %v1229
        %v5060 = vadd.f32 %v5044, %v1230
        %v5061 = vadd.f32 %v5045, %v1229
        %v5062 = vadd.f32 %v5046, %v1230
        %v5063 = vadd.f32 %v5047, %v1229
        %v5064 = vadd.f32 %v5048, %v1230
        %v5065 = vadd.f32 %v5049, %v1229
        %v5066 = vadd.f32 %v5050, %v1230
        %v5067 = vsel %vm1231, %v5051, -inf
        %5068 = vmax.xlane.f32.xlu0 %v5067
        %v5069 = vpop.xlane.xlu0 %5068
        %v5070 = vsel %vm1231, %v5052, -inf
        %5071 = vmax.xlane.f32.xlu0 %v5070
        %v5072 = vpop.xlane.xlu0 %5071
        %v5073 = vsel %vm1231, %v5053, -inf
        %5074 = vmax.xlane.f32.xlu0 %v5073
        %v5075 = vpop.xlane.xlu0 %5074
        %v5076 = vsel %vm1231, %v5054, -inf
        %5077 = vmax.xlane.f32.xlu0 %v5076
        %v5078 = vpop.xlane.xlu0 %5077
        %v5079 = vsel %vm1231, %v5055, -inf
        %5080 = vmax.xlane.f32.xlu0 %v5079
        %v5081 = vpop.xlane.xlu0 %5080
        %v5082 = vsel %vm1231, %v5056, -inf
        %5083 = vmax.xlane.f32.xlu0 %v5082
        %v5084 = vpop.xlane.xlu0 %5083
        %v5085 = vsel %vm1231, %v5057, -inf
        %5086 = vmax.xlane.f32.xlu0 %v5085
        %v5087 = vpop.xlane.xlu0 %5086
        %v5088 = vsel %vm1231, %v5058, -inf
        %5089 = vmax.xlane.f32.xlu0 %v5088
        %v5090 = vpop.xlane.xlu0 %5089
        %v5091 = vsel %vm1231, %v5059, -inf
        %5092 = vmax.xlane.f32.xlu0 %v5091
        %v5093 = vpop.xlane.xlu0 %5092
        %v5094 = vsel %vm1231, %v5060, -inf
        %5095 = vmax.xlane.f32.xlu0 %v5094
        %v5096 = vpop.xlane.xlu0 %5095
        %v5097 = vsel %vm1231, %v5061, -inf
        %5098 = vmax.xlane.f32.xlu0 %v5097
        %v5099 = vpop.xlane.xlu0 %5098
        %v5100 = vsel %vm1231, %v5062, -inf
        %5101 = vmax.xlane.f32.xlu0 %v5100
        %v5102 = vpop.xlane.xlu0 %5101
        %v5103 = vsel %vm1231, %v5063, -inf
        %5104 = vmax.xlane.f32.xlu0 %v5103
        %v5105 = vpop.xlane.xlu0 %5104
        %v5106 = vsel %vm1231, %v5064, -inf
        %5107 = vmax.xlane.f32.xlu0 %v5106
        %v5108 = vpop.xlane.xlu0 %5107
        %v5109 = vsel %vm1231, %v5065, -inf
        %5110 = vmax.xlane.f32.xlu0 %v5109
        %v5111 = vpop.xlane.xlu0 %5110
        %v5112 = vsel %vm1231, %v5066, -inf
        %5113 = vmax.xlane.f32.xlu0 %v5112
        %v5114 = vpop.xlane.xlu0 %5113
        %v5115 = vsub.f32 %v5051, %v5069
        %v5116 = vsub.f32 %v5052, %v5072
        %v5117 = vsub.f32 %v5053, %v5075
        %v5118 = vsub.f32 %v5054, %v5078
        %v5119 = vsub.f32 %v5055, %v5081
        %v5120 = vsub.f32 %v5056, %v5084
        %v5121 = vsub.f32 %v5057, %v5087
        %v5122 = vsub.f32 %v5058, %v5090
        %v5123 = vsub.f32 %v5059, %v5093
        %v5124 = vsub.f32 %v5060, %v5096
        %v5125 = vsub.f32 %v5061, %v5099
        %v5126 = vsub.f32 %v5062, %v5102
        %v5127 = vsub.f32 %v5063, %v5105
        %v5128 = vsub.f32 %v5064, %v5108
        %v5129 = vsub.f32 %v5065, %v5111
        %v5130 = vsub.f32 %v5066, %v5114
        %v5131 = vmul.f32 %v5115, 1.442695
        %v5132 = vpow.pop %v5131
        %v5133 = vmul.f32 %v5116, 1.442695
        %v5134 = vpow.pop %v5133
        %v5135 = vmul.f32 %v5117, 1.442695
        %v5136 = vpow.pop %v5135
        %v5137 = vmul.f32 %v5118, 1.442695
        %v5138 = vpow.pop %v5137
        %v5139 = vmul.f32 %v5119, 1.442695
        %v5140 = vpow.pop %v5139
        %v5141 = vmul.f32 %v5120, 1.442695
        %v5142 = vpow.pop %v5141
        %v5143 = vmul.f32 %v5121, 1.442695
        %v5144 = vpow.pop %v5143
        %v5145 = vmul.f32 %v5122, 1.442695
        %v5146 = vpow.pop %v5145
        %v5147 = vmul.f32 %v5123, 1.442695
        %v5148 = vpow.pop %v5147
        %v5149 = vmul.f32 %v5124, 1.442695
        %v5150 = vpow.pop %v5149
        %v5151 = vmul.f32 %v5125, 1.442695
        %v5152 = vpow.pop %v5151
        %v5153 = vmul.f32 %v5126, 1.442695
        %v5154 = vpow.pop %v5153
        %v5155 = vmul.f32 %v5127, 1.442695
        %v5156 = vpow.pop %v5155
        %v5157 = vmul.f32 %v5128, 1.442695
        %v5158 = vpow.pop %v5157
        %v5159 = vmul.f32 %v5129, 1.442695
        %v5160 = vpow.pop %v5159
        %v5161 = vmul.f32 %v5130, 1.442695
        %v5162 = vpow.pop %v5161
        %v5163 = vsel %vm1231, %v5132, 0.0
        %5164 = vadd.xlane.f32.xlu0 %v5163
        %v5165 = vpop.xlane.xlu0 %5164
        %v5166 = vsel %vm1231, %v5134, 0.0
        %5167 = vadd.xlane.f32.xlu0 %v5166
        %v5168 = vpop.xlane.xlu0 %5167
        %v5169 = vsel %vm1231, %v5136, 0.0
        %5170 = vadd.xlane.f32.xlu0 %v5169
        %v5171 = vpop.xlane.xlu0 %5170
        %v5172 = vsel %vm1231, %v5138, 0.0
        %5173 = vadd.xlane.f32.xlu0 %v5172
        %v5174 = vpop.xlane.xlu0 %5173
        %v5175 = vsel %vm1231, %v5140, 0.0
        %5176 = vadd.xlane.f32.xlu0 %v5175
        %v5177 = vpop.xlane.xlu0 %5176
        %v5178 = vsel %vm1231, %v5142, 0.0
        %5179 = vadd.xlane.f32.xlu0 %v5178
        %v5180 = vpop.xlane.xlu0 %5179
        %v5181 = vsel %vm1231, %v5144, 0.0
        %5182 = vadd.xlane.f32.xlu0 %v5181
        %v5183 = vpop.xlane.xlu0 %5182
        %v5184 = vsel %vm1231, %v5146, 0.0
        %5185 = vadd.xlane.f32.xlu0 %v5184
        %v5186 = vpop.xlane.xlu0 %5185
        %v5187 = vsel %vm1231, %v5148, 0.0
        %5188 = vadd.xlane.f32.xlu0 %v5187
        %v5189 = vpop.xlane.xlu0 %5188
        %v5190 = vsel %vm1231, %v5150, 0.0
        %5191 = vadd.xlane.f32.xlu0 %v5190
        %v5192 = vpop.xlane.xlu0 %5191
        %v5193 = vsel %vm1231, %v5152, 0.0
        %5194 = vadd.xlane.f32.xlu0 %v5193
        %v5195 = vpop.xlane.xlu0 %5194
        %v5196 = vsel %vm1231, %v5154, 0.0
        %5197 = vadd.xlane.f32.xlu0 %v5196
        %v5198 = vpop.xlane.xlu0 %5197
        %v5199 = vsel %vm1231, %v5156, 0.0
        %5200 = vadd.xlane.f32.xlu0 %v5199
        %v5201 = vpop.xlane.xlu0 %5200
        %v5202 = vsel %vm1231, %v5158, 0.0
        %5203 = vadd.xlane.f32.xlu0 %v5202
        %v5204 = vpop.xlane.xlu0 %5203
        %v5205 = vsel %vm1231, %v5160, 0.0
        %5206 = vadd.xlane.f32.xlu0 %v5205
        %v5207 = vpop.xlane.xlu0 %5206
        %v5208 = vsel %vm1231, %v5162, 0.0
        %5209 = vadd.xlane.f32.xlu0 %v5208
        %v5210 = vpop.xlane.xlu0 %5209
        %v5211 = vrcp.pop %v5165
        %v5212 = vrcp.pop %v5168
        %v5213 = vrcp.pop %v5171
        %v5214 = vrcp.pop %v5174
        %v5215 = vrcp.pop %v5177
        %v5216 = vrcp.pop %v5180
        %v5217 = vrcp.pop %v5183
        %v5218 = vrcp.pop %v5186
        %v5219 = vrcp.pop %v5189
        %v5220 = vrcp.pop %v5192
        %v5221 = vrcp.pop %v5195
        %v5222 = vrcp.pop %v5198
        %v5223 = vrcp.pop %v5201
        %v5224 = vrcp.pop %v5204
        %v5225 = vrcp.pop %v5207
        %v5226 = vrcp.pop %v5210
        %v5227 = vmul.f32 %v5132, %v5211
        %v5228 = vmul.f32 %v5134, %v5212
        %v5229 = vmul.f32 %v5136, %v5213
        %v5230 = vmul.f32 %v5138, %v5214
        %v5231 = vmul.f32 %v5140, %v5215
        %v5232 = vmul.f32 %v5142, %v5216
        %v5233 = vmul.f32 %v5144, %v5217
        %v5234 = vmul.f32 %v5146, %v5218
        %v5235 = vmul.f32 %v5148, %v5219
        %v5236 = vmul.f32 %v5150, %v5220
        %v5237 = vmul.f32 %v5152, %v5221
        %v5238 = vmul.f32 %v5154, %v5222
        %v5239 = vmul.f32 %v5156, %v5223
        %v5240 = vmul.f32 %v5158, %v5224
        %v5241 = vmul.f32 %v5160, %v5225
        %v5242 = vmul.f32 %v5162, %v5226
        %v5243 = vpack.c.bf16 %v5228, %v5227
        %v5244 = vpack.c.bf16 %v5230, %v5229
        %v5245 = vpack.c.bf16 %v5232, %v5231
        %v5246 = vpack.c.bf16 %v5234, %v5233
        %v5247 = vpack.c.bf16 %v5236, %v5235
        %v5248 = vpack.c.bf16 %v5238, %v5237
        %v5249 = vpack.c.bf16 %v5240, %v5239
        %v5250 = vpack.c.bf16 %v5242, %v5241
        %5251 = vrot.lane.b32.xlu0 %v1221, 80
        %v5252 = vpop.permute.xlu0 %5251
        %v5255 = vsel %vm1231, %v5243, 0
        %5257 = vmatprep.subr.bf16.mxu0 0
        %5258 = vmatpush1.bf16.msra.mxu0 %v5252
        %5259 = vmatprep.subr.bf16.mxu0 0
        %5260 = vmatpush1.bf16.msra.mxu0 0
        %5261 = vmatprep.subr.bf16.mxu0 0
        %5262 = vmatpush1.bf16.msra.mxu0 0
        %5263 = vmatprep.subr.bf16.mxu0 0
        %5264 = vmatpush1.bf16.msra.mxu0 0
        %5265 = vmatprep.subr.bf16.mxu0 0
        %5266 = vmatpush1.bf16.msra.mxu0 0
        %5267 = vmatprep.subr.bf16.mxu0 0
        %5268 = vmatpush1.bf16.msra.mxu0 0
        %5269 = vmatprep.subr.bf16.mxu0 0
        %5270 = vmatpush1.bf16.msra.mxu0 0
        %5271 = vmatprep.subr.bf16.mxu0 0
        %5272 = vmatpush1.bf16.msra.mxu0 0
        %5273 = vmatprep.subr.bf16.mxu0 0
        %5274 = vmatpush1.bf16.msra.mxu0 0
        %5275 = vmatprep.subr.bf16.mxu0 0
        %5276 = vmatpush1.bf16.msra.mxu0 0
        %5277 = vmatprep.subr.bf16.mxu0 0
        %5278 = vmatpush1.bf16.msra.mxu0 0
        %5279 = vmatprep.subr.bf16.mxu0 0
        %5280 = vmatpush1.bf16.msra.mxu0 0
        %5281 = vmatprep.subr.bf16.mxu0 0
        %5282 = vmatpush1.bf16.msra.mxu0 0
        %5283 = vmatprep.subr.bf16.mxu0 0
        %5284 = vmatpush1.bf16.msra.mxu0 0
        %5285 = vmatprep.subr.bf16.mxu0 0
        %5286 = vmatpush1.bf16.msra.mxu0 0
        %5287 = vmatprep.subr.bf16.mxu0 0
        %5288 = vmatpush1.bf16.msra.mxu0 0
        %5289 = vmatprep.mubr.bf16.mxu0 0
        %5290 = vmatmul.mubr.bf16.gmra.mrb[0].mxu0 %v5255
        %v5291 = vpop.f32.mrb[0].mxu0
        %v5292 = vadd.f32 0.0, %v5291
        %v5293 = vpop.f32.mrb[0].mxu0
        %v5294 = vpop.f32.mrb[0].mxu0
        %v5295 = vadd.f32 0.0, %v5294
        %v5296 = vpop.f32.mrb[0].mxu0
        %5297 = vdwg.mxu0
        %5298 = vrot.lane.b32.xlu0 %v1222, 80
        %v5299 = vpop.permute.xlu0 %5298
        %v5302 = vsel %vm1231, %v5244, 0
        %5304 = vmatprep.subr.bf16.mxu0 0
        %5305 = vmatpush1.bf16.msra.mxu0 %v5299
        %5306 = vmatprep.subr.bf16.mxu0 0
        %5307 = vmatpush1.bf16.msra.mxu0 0
        %5308 = vmatprep.subr.bf16.mxu0 0
        %5309 = vmatpush1.bf16.msra.mxu0 0
        %5310 = vmatprep.subr.bf16.mxu0 0
        %5311 = vmatpush1.bf16.msra.mxu0 0
        %5312 = vmatprep.subr.bf16.mxu0 0
        %5313 = vmatpush1.bf16.msra.mxu0 0
        %5314 = vmatprep.subr.bf16.mxu0 0
        %5315 = vmatpush1.bf16.msra.mxu0 0
        %5316 = vmatprep.subr.bf16.mxu0 0
        %5317 = vmatpush1.bf16.msra.mxu0 0
        %5318 = vmatprep.subr.bf16.mxu0 0
        %5319 = vmatpush1.bf16.msra.mxu0 0
        %5320 = vmatprep.subr.bf16.mxu0 0
        %5321 = vmatpush1.bf16.msra.mxu0 0
        %5322 = vmatprep.subr.bf16.mxu0 0
        %5323 = vmatpush1.bf16.msra.mxu0 0
        %5324 = vmatprep.subr.bf16.mxu0 0
        %5325 = vmatpush1.bf16.msra.mxu0 0
        %5326 = vmatprep.subr.bf16.mxu0 0
        %5327 = vmatpush1.bf16.msra.mxu0 0
        %5328 = vmatprep.subr.bf16.mxu0 0
        %5329 = vmatpush1.bf16.msra.mxu0 0
        %5330 = vmatprep.subr.bf16.mxu0 0
        %5331 = vmatpush1.bf16.msra.mxu0 0
        %5332 = vmatprep.subr.bf16.mxu0 0
        %5333 = vmatpush1.bf16.msra.mxu0 0
        %5334 = vmatprep.subr.bf16.mxu0 0
        %5335 = vmatpush1.bf16.msra.mxu0 0
        %5336 = vmatprep.mubr.bf16.mxu0 0
        %5337 = vmatmul.mubr.bf16.gmra.mrb[0].mxu0 %v5302
        %v5338 = vpop.f32.mrb[0].mxu0
        %v5339 = vadd.f32 0.0, %v5338
        %v5340 = vpop.f32.mrb[0].mxu0
        %v5341 = vpop.f32.mrb[0].mxu0
        %v5342 = vadd.f32 0.0, %v5341
        %v5343 = vpop.f32.mrb[0].mxu0
        %5344 = vdwg.mxu0
        %5345 = vrot.lane.b32.xlu0 %v1223, 80
        %v5346 = vpop.permute.xlu0 %5345
        %v5349 = vsel %vm1231, %v5245, 0
        %5351 = vmatprep.subr.bf16.mxu0 0
        %5352 = vmatpush1.bf16.msra.mxu0 %v5346
        %5353 = vmatprep.subr.bf16.mxu0 0
        %5354 = vmatpush1.bf16.msra.mxu0 0
        %5355 = vmatprep.subr.bf16.mxu0 0
        %5356 = vmatpush1.bf16.msra.mxu0 0
        %5357 = vmatprep.subr.bf16.mxu0 0
        %5358 = vmatpush1.bf16.msra.mxu0 0
        %5359 = vmatprep.subr.bf16.mxu0 0
        %5360 = vmatpush1.bf16.msra.mxu0 0
        %5361 = vmatprep.subr.bf16.mxu0 0
        %5362 = vmatpush1.bf16.msra.mxu0 0
        %5363 = vmatprep.subr.bf16.mxu0 0
        %5364 = vmatpush1.bf16.msra.mxu0 0
        %5365 = vmatprep.subr.bf16.mxu0 0
        %5366 = vmatpush1.bf16.msra.mxu0 0
        %5367 = vmatprep.subr.bf16.mxu0 0
        %5368 = vmatpush1.bf16.msra.mxu0 0
        %5369 = vmatprep.subr.bf16.mxu0 0
        %5370 = vmatpush1.bf16.msra.mxu0 0
        %5371 = vmatprep.subr.bf16.mxu0 0
        %5372 = vmatpush1.bf16.msra.mxu0 0
        %5373 = vmatprep.subr.bf16.mxu0 0
        %5374 = vmatpush1.bf16.msra.mxu0 0
        %5375 = vmatprep.subr.bf16.mxu0 0
        %5376 = vmatpush1.bf16.msra.mxu0 0
        %5377 = vmatprep.subr.bf16.mxu0 0
        %5378 = vmatpush1.bf16.msra.mxu0 0
        %5379 = vmatprep.subr.bf16.mxu0 0
        %5380 = vmatpush1.bf16.msra.mxu0 0
        %5381 = vmatprep.subr.bf16.mxu0 0
        %5382 = vmatpush1.bf16.msra.mxu0 0
        %5383 = vmatprep.mubr.bf16.mxu0 0
        %5384 = vmatmul.mubr.bf16.gmra.mrb[0].mxu0 %v5349
        %v5385 = vpop.f32.mrb[0].mxu0
        %v5386 = vadd.f32 0.0, %v5385
        %v5387 = vpop.f32.mrb[0].mxu0
        %v5388 = vpop.f32.mrb[0].mxu0
        %v5389 = vadd.f32 0.0, %v5388
        %v5390 = vpop.f32.mrb[0].mxu0
        %5391 = vdwg.mxu0
        %5392 = vrot.lane.b32.xlu0 %v1224, 80
        %v5393 = vpop.permute.xlu0 %5392
        %v5396 = vsel %vm1231, %v5246, 0
        %5398 = vmatprep.subr.bf16.mxu0 0
        %5399 = vmatpush1.bf16.msra.mxu0 %v5393
        %5400 = vmatprep.subr.bf16.mxu0 0
        %5401 = vmatpush1.bf16.msra.mxu0 0
        %5402 = vmatprep.subr.bf16.mxu0 0
        %5403 = vmatpush1.bf16.msra.mxu0 0
        %5404 = vmatprep.subr.bf16.mxu0 0
        %5405 = vmatpush1.bf16.msra.mxu0 0
        %5406 = vmatprep.subr.bf16.mxu0 0
        %5407 = vmatpush1.bf16.msra.mxu0 0
        %5408 = vmatprep.subr.bf16.mxu0 0
        %5409 = vmatpush1.bf16.msra.mxu0 0
        %5410 = vmatprep.subr.bf16.mxu0 0
        %5411 = vmatpush1.bf16.msra.mxu0 0
        %5412 = vmatprep.subr.bf16.mxu0 0
        %5413 = vmatpush1.bf16.msra.mxu0 0
        %5414 = vmatprep.subr.bf16.mxu0 0
        %5415 = vmatpush1.bf16.msra.mxu0 0
        %5416 = vmatprep.subr.bf16.mxu0 0
        %5417 = vmatpush1.bf16.msra.mxu0 0
        %5418 = vmatprep.subr.bf16.mxu0 0
        %5419 = vmatpush1.bf16.msra.mxu0 0
        %5420 = vmatprep.subr.bf16.mxu0 0
        %5421 = vmatpush1.bf16.msra.mxu0 0
        %5422 = vmatprep.subr.bf16.mxu0 0
        %5423 = vmatpush1.bf16.msra.mxu0 0
        %5424 = vmatprep.subr.bf16.mxu0 0
        %5425 = vmatpush1.bf16.msra.mxu0 0
        %5426 = vmatprep.subr.bf16.mxu0 0
        %5427 = vmatpush1.bf16.msra.mxu0 0
        %5428 = vmatprep.subr.bf16.mxu0 0
        %5429 = vmatpush1.bf16.msra.mxu0 0
        %5430 = vmatprep.mubr.bf16.mxu0 0
        %5431 = vmatmul.mubr.bf16.gmra.mrb[0].mxu0 %v5396
        %v5432 = vpop.f32.mrb[0].mxu0
        %v5433 = vadd.f32 0.0, %v5432
        %v5434 = vpop.f32.mrb[0].mxu0
        %v5435 = vpop.f32.mrb[0].mxu0
        %v5436 = vadd.f32 0.0, %v5435
        %v5437 = vpop.f32.mrb[0].mxu0
        %5438 = vdwg.mxu0
        %5439 = vrot.lane.b32.xlu0 %v1225, 80
        %v5440 = vpop.permute.xlu0 %5439
        %v5443 = vsel %vm1231, %v5247, 0
        %5445 = vmatprep.subr.bf16.mxu0 0
        %5446 = vmatpush1.bf16.msra.mxu0 %v5440
        %5447 = vmatprep.subr.bf16.mxu0 0
        %5448 = vmatpush1.bf16.msra.mxu0 0
        %5449 = vmatprep.subr.bf16.mxu0 0
        %5450 = vmatpush1.bf16.msra.mxu0 0
        %5451 = vmatprep.subr.bf16.mxu0 0
        %5452 = vmatpush1.bf16.msra.mxu0 0
        %5453 = vmatprep.subr.bf16.mxu0 0
        %5454 = vmatpush1.bf16.msra.mxu0 0
        %5455 = vmatprep.subr.bf16.mxu0 0
        %5456 = vmatpush1.bf16.msra.mxu0 0
        %5457 = vmatprep.subr.bf16.mxu0 0
        %5458 = vmatpush1.bf16.msra.mxu0 0
        %5459 = vmatprep.subr.bf16.mxu0 0
        %5460 = vmatpush1.bf16.msra.mxu0 0
        %5461 = vmatprep.subr.bf16.mxu0 0
        %5462 = vmatpush1.bf16.msra.mxu0 0
        %5463 = vmatprep.subr.bf16.mxu0 0
        %5464 = vmatpush1.bf16.msra.mxu0 0
        %5465 = vmatprep.subr.bf16.mxu0 0
        %5466 = vmatpush1.bf16.msra.mxu0 0
        %5467 = vmatprep.subr.bf16.mxu0 0
        %5468 = vmatpush1.bf16.msra.mxu0 0
        %5469 = vmatprep.subr.bf16.mxu0 0
        %5470 = vmatpush1.bf16.msra.mxu0 0
        %5471 = vmatprep.subr.bf16.mxu0 0
        %5472 = vmatpush1.bf16.msra.mxu0 0
        %5473 = vmatprep.subr.bf16.mxu0 0
        %5474 = vmatpush1.bf16.msra.mxu0 0
        %5475 = vmatprep.subr.bf16.mxu0 0
        %5476 = vmatpush1.bf16.msra.mxu0 0
        %5477 = vmatprep.mubr.bf16.mxu0 0
        %5478 = vmatmul.mubr.bf16.gmra.mrb[0].mxu0 %v5443
        %v5479 = vpop.f32.mrb[0].mxu0
        %v5480 = vadd.f32 0.0, %v5479
        %v5481 = vpop.f32.mrb[0].mxu0
        %v5482 = vpop.f32.mrb[0].mxu0
        %v5483 = vadd.f32 0.0, %v5482
        %v5484 = vpop.f32.mrb[0].mxu0
        %5485 = vdwg.mxu0
        %5486 = vrot.lane.b32.xlu0 %v1226, 80
        %v5487 = vpop.permute.xlu0 %5486
        %v5490 = vsel %vm1231, %v5248, 0
        %5492 = vmatprep.subr.bf16.mxu0 0
        %5493 = vmatpush1.bf16.msra.mxu0 %v5487
        %5494 = vmatprep.subr.bf16.mxu0 0
        %5495 = vmatpush1.bf16.msra.mxu0 0
        %5496 = vmatprep.subr.bf16.mxu0 0
        %5497 = vmatpush1.bf16.msra.mxu0 0
        %5498 = vmatprep.subr.bf16.mxu0 0
        %5499 = vmatpush1.bf16.msra.mxu0 0
        %5500 = vmatprep.subr.bf16.mxu0 0
        %5501 = vmatpush1.bf16.msra.mxu0 0
        %5502 = vmatprep.subr.bf16.mxu0 0
        %5503 = vmatpush1.bf16.msra.mxu0 0
        %5504 = vmatprep.subr.bf16.mxu0 0
        %5505 = vmatpush1.bf16.msra.mxu0 0
        %5506 = vmatprep.subr.bf16.mxu0 0
        %5507 = vmatpush1.bf16.msra.mxu0 0
        %5508 = vmatprep.subr.bf16.mxu0 0
        %5509 = vmatpush1.bf16.msra.mxu0 0
        %5510 = vmatprep.subr.bf16.mxu0 0
        %5511 = vmatpush1.bf16.msra.mxu0 0
        %5512 = vmatprep.subr.bf16.mxu0 0
        %5513 = vmatpush1.bf16.msra.mxu0 0
        %5514 = vmatprep.subr.bf16.mxu0 0
        %5515 = vmatpush1.bf16.msra.mxu0 0
        %5516 = vmatprep.subr.bf16.mxu0 0
        %5517 = vmatpush1.bf16.msra.mxu0 0
        %5518 = vmatprep.subr.bf16.mxu0 0
        %5519 = vmatpush1.bf16.msra.mxu0 0
        %5520 = vmatprep.subr.bf16.mxu0 0
        %5521 = vmatpush1.bf16.msra.mxu0 0
        %5522 = vmatprep.subr.bf16.mxu0 0
        %5523 = vmatpush1.bf16.msra.mxu0 0
        %5524 = vmatprep.mubr.bf16.mxu0 0
        %5525 = vmatmul.mubr.bf16.gmra.mrb[0].mxu0 %v5490
        %v5526 = vpop.f32.mrb[0].mxu0
        %v5527 = vadd.f32 0.0, %v5526
        %v5528 = vpop.f32.mrb[0].mxu0
        %v5529 = vpop.f32.mrb[0].mxu0
        %v5530 = vadd.f32 0.0, %v5529
        %v5531 = vpop.f32.mrb[0].mxu0
        %5532 = vdwg.mxu0
        %5533 = vrot.lane.b32.xlu0 %v1227, 80
        %v5534 = vpop.permute.xlu0 %5533
        %v5537 = vsel %vm1231, %v5249, 0
        %5539 = vmatprep.subr.bf16.mxu0 0
        %5540 = vmatpush1.bf16.msra.mxu0 %v5534
        %5541 = vmatprep.subr.bf16.mxu0 0
        %5542 = vmatpush1.bf16.msra.mxu0 0
        %5543 = vmatprep.subr.bf16.mxu0 0
        %5544 = vmatpush1.bf16.msra.mxu0 0
        %5545 = vmatprep.subr.bf16.mxu0 0
        %5546 = vmatpush1.bf16.msra.mxu0 0
        %5547 = vmatprep.subr.bf16.mxu0 0
        %5548 = vmatpush1.bf16.msra.mxu0 0
        %5549 = vmatprep.subr.bf16.mxu0 0
        %5550 = vmatpush1.bf16.msra.mxu0 0
        %5551 = vmatprep.subr.bf16.mxu0 0
        %5552 = vmatpush1.bf16.msra.mxu0 0
        %5553 = vmatprep.subr.bf16.mxu0 0
        %5554 = vmatpush1.bf16.msra.mxu0 0
        %5555 = vmatprep.subr.bf16.mxu0 0
        %5556 = vmatpush1.bf16.msra.mxu0 0
        %5557 = vmatprep.subr.bf16.mxu0 0
        %5558 = vmatpush1.bf16.msra.mxu0 0
        %5559 = vmatprep.subr.bf16.mxu0 0
        %5560 = vmatpush1.bf16.msra.mxu0 0
        %5561 = vmatprep.subr.bf16.mxu0 0
        %5562 = vmatpush1.bf16.msra.mxu0 0
        %5563 = vmatprep.subr.bf16.mxu0 0
        %5564 = vmatpush1.bf16.msra.mxu0 0
        %5565 = vmatprep.subr.bf16.mxu0 0
        %5566 = vmatpush1.bf16.msra.mxu0 0
        %5567 = vmatprep.subr.bf16.mxu0 0
        %5568 = vmatpush1.bf16.msra.mxu0 0
        %5569 = vmatprep.subr.bf16.mxu0 0
        %5570 = vmatpush1.bf16.msra.mxu0 0
        %5571 = vmatprep.mubr.bf16.mxu0 0
        %5572 = vmatmul.mubr.bf16.gmra.mrb[0].mxu0 %v5537
        %v5573 = vpop.f32.mrb[0].mxu0
        %v5574 = vadd.f32 0.0, %v5573
        %v5575 = vpop.f32.mrb[0].mxu0
        %v5576 = vpop.f32.mrb[0].mxu0
        %v5577 = vadd.f32 0.0, %v5576
        %v5578 = vpop.f32.mrb[0].mxu0
        %5579 = vdwg.mxu0
        %5580 = vrot.lane.b32.xlu0 %v1228, 80
        %v5581 = vpop.permute.xlu0 %5580
        %v5584 = vsel %vm1231, %v5250, 0
        %5586 = vmatprep.subr.bf16.mxu0 0
        %5587 = vmatpush1.bf16.msra.mxu0 %v5581
        %5588 = vmatprep.subr.bf16.mxu0 0
        %5589 = vmatpush1.bf16.msra.mxu0 0
        %5590 = vmatprep.subr.bf16.mxu0 0
        %5591 = vmatpush1.bf16.msra.mxu0 0
        %5592 = vmatprep.subr.bf16.mxu0 0
        %5593 = vmatpush1.bf16.msra.mxu0 0
        %5594 = vmatprep.subr.bf16.mxu0 0
        %5595 = vmatpush1.bf16.msra.mxu0 0
        %5596 = vmatprep.subr.bf16.mxu0 0
        %5597 = vmatpush1.bf16.msra.mxu0 0
        %5598 = vmatprep.subr.bf16.mxu0 0
        %5599 = vmatpush1.bf16.msra.mxu0 0
        %5600 = vmatprep.subr.bf16.mxu0 0
        %5601 = vmatpush1.bf16.msra.mxu0 0
        %5602 = vmatprep.subr.bf16.mxu0 0
        %5603 = vmatpush1.bf16.msra.mxu0 0
        %5604 = vmatprep.subr.bf16.mxu0 0
        %5605 = vmatpush1.bf16.msra.mxu0 0
        %5606 = vmatprep.subr.bf16.mxu0 0
        %5607 = vmatpush1.bf16.msra.mxu0 0
        %5608 = vmatprep.subr.bf16.mxu0 0
        %5609 = vmatpush1.bf16.msra.mxu0 0
        %5610 = vmatprep.subr.bf16.mxu0 0
        %5611 = vmatpush1.bf16.msra.mxu0 0
        %5612 = vmatprep.subr.bf16.mxu0 0
        %5613 = vmatpush1.bf16.msra.mxu0 0
        %5614 = vmatprep.subr.bf16.mxu0 0
        %5615 = vmatpush1.bf16.msra.mxu0 0
        %5616 = vmatprep.subr.bf16.mxu0 0
        %5617 = vmatpush1.bf16.msra.mxu0 0
        %5618 = vmatprep.mubr.bf16.mxu0 0
        %5619 = vmatmul.mubr.bf16.gmra.mrb[0].mxu0 %v5584
        %v5620 = vpop.f32.mrb[0].mxu0
        %v5621 = vadd.f32 0.0, %v5620
        %v5622 = vpop.f32.mrb[0].mxu0
        %v5623 = vpop.f32.mrb[0].mxu0
        %v5624 = vadd.f32 0.0, %v5623
        %v5625 = vpop.f32.mrb[0].mxu0
        %5626 = vdwg.mxu0
        %v5627 = vpack.c.bf16 %v5295, %v5292
        %v5628 = vpack.c.bf16 %v5342, %v5339
        %v5629 = vpack.c.bf16 %v5389, %v5386
        %v5630 = vpack.c.bf16 %v5436, %v5433
        %v5631 = vpack.c.bf16 %v5483, %v5480
        %v5632 = vpack.c.bf16 %v5530, %v5527
        %v5633 = vpack.c.bf16 %v5577, %v5574
        %v5634 = vpack.c.bf16 %v5624, %v5621
        %v5635 = vld [vmem:[#allocation17 + $0x18] sm:$0xf]
        %v5636 = vld [vmem:[#allocation17 + $0x1c] sm:$0xf]
        %v5639 = vunpack.c.l.b16 %v5635
        %v5640 = vunpack.c.l.b16 %v5636
        %v5641 = vpack.c.b16 %v5640, %v5639
        %v5644 = vsel %vm1231, %v5627, 0
        %v5647 = vsel %vm1231, %v5628, 0
        %v5650 = vsel %vm1231, %v5629, 0
        %v5653 = vsel %vm1231, %v5630, 0
        %v5656 = vsel %vm1231, %v5631, 0
        %v5659 = vsel %vm1231, %v5632, 0
        %v5662 = vsel %vm1231, %v5633, 0
        %v5665 = vsel %vm1231, %v5634, 0
        %5667 = vmatprep.subr.bf16.mxu0 0
        %5668 = vmatpush1.bf16.msra.mxu0 %v5641
        %5669 = vmatprep.subr.bf16.mxu0 0
        %5670 = vmatpush1.bf16.msra.mxu0 0
        %5671 = vmatprep.subr.bf16.mxu0 0
        %5672 = vmatpush1.bf16.msra.mxu0 0
        %5673 = vmatprep.subr.bf16.mxu0 0
        %5674 = vmatpush1.bf16.msra.mxu0 0
        %5675 = vmatprep.subr.bf16.mxu0 0
        %5676 = vmatpush1.bf16.msra.mxu0 0
        %5677 = vmatprep.subr.bf16.mxu0 0
        %5678 = vmatpush1.bf16.msra.mxu0 0
        %5679 = vmatprep.subr.bf16.mxu0 0
        %5680 = vmatpush1.bf16.msra.mxu0 0
        %5681 = vmatprep.subr.bf16.mxu0 0
        %5682 = vmatpush1.bf16.msra.mxu0 0
        %5683 = vmatprep.subr.bf16.mxu0 0
        %5684 = vmatpush1.bf16.msra.mxu0 0
        %5685 = vmatprep.subr.bf16.mxu0 0
        %5686 = vmatpush1.bf16.msra.mxu0 0
        %5687 = vmatprep.subr.bf16.mxu0 0
        %5688 = vmatpush1.bf16.msra.mxu0 0
        %5689 = vmatprep.subr.bf16.mxu0 0
        %5690 = vmatpush1.bf16.msra.mxu0 0
        %5691 = vmatprep.subr.bf16.mxu0 0
        %5692 = vmatpush1.bf16.msra.mxu0 0
        %5693 = vmatprep.subr.bf16.mxu0 0
        %5694 = vmatpush1.bf16.msra.mxu0 0
        %5695 = vmatprep.subr.bf16.mxu0 0
        %5696 = vmatpush1.bf16.msra.mxu0 0
        %5697 = vmatprep.subr.bf16.mxu0 0
        %5698 = vmatpush1.bf16.msra.mxu0 0
        %5699 = vmatprep.mubr.bf16.mxu0 0
        %5700 = vmatmul.mubr.bf16.gmra.mrb[0].mxu0 %v5644
        %v5701 = vpop.f32.mrb[0].mxu0
        %v5702 = vadd.f32 0.0, %v5701
        %v5703 = vpop.f32.mrb[0].mxu0
        %v5704 = vpop.f32.mrb[0].mxu0
        %v5705 = vadd.f32 0.0, %v5704
        %v5706 = vpop.f32.mrb[0].mxu0
        %5707 = vmatprep.mubr.bf16.mxu0 0
        %5708 = vmatmul.mubr.bf16.gmra.mrb[0].mxu0 %v5647
        %v5709 = vpop.f32.mrb[0].mxu0
        %v5710 = vadd.f32 0.0, %v5709
        %v5711 = vpop.f32.mrb[0].mxu0
        %v5712 = vpop.f32.mrb[0].mxu0
        %v5713 = vadd.f32 0.0, %v5712
        %v5714 = vpop.f32.mrb[0].mxu0
        %5715 = vmatprep.mubr.bf16.mxu0 0
        %5716 = vmatmul.mubr.bf16.gmra.mrb[0].mxu0 %v5650
        %v5717 = vpop.f32.mrb[0].mxu0
        %v5718 = vadd.f32 0.0, %v5717
        %v5719 = vpop.f32.mrb[0].mxu0
        %v5720 = vpop.f32.mrb[0].mxu0
        %v5721 = vadd.f32 0.0, %v5720
        %v5722 = vpop.f32.mrb[0].mxu0
        %5723 = vmatprep.mubr.bf16.mxu0 0
        %5724 = vmatmul.mubr.bf16.gmra.mrb[0].mxu0 %v5653
        %v5725 = vpop.f32.mrb[0].mxu0
        %v5726 = vadd.f32 0.0, %v5725
        %v5727 = vpop.f32.mrb[0].mxu0
        %v5728 = vpop.f32.mrb[0].mxu0
        %v5729 = vadd.f32 0.0, %v5728
        %v5730 = vpop.f32.mrb[0].mxu0
        %5731 = vmatprep.mubr.bf16.mxu0 0
        %5732 = vmatmul.mubr.bf16.gmra.mrb[0].mxu0 %v5656
        %v5733 = vpop.f32.mrb[0].mxu0
        %v5734 = vadd.f32 0.0, %v5733
        %v5735 = vpop.f32.mrb[0].mxu0
        %v5736 = vpop.f32.mrb[0].mxu0
        %v5737 = vadd.f32 0.0, %v5736
        %v5738 = vpop.f32.mrb[0].mxu0
        %5739 = vmatprep.mubr.bf16.mxu0 0
        %5740 = vmatmul.mubr.bf16.gmra.mrb[0].mxu0 %v5659
        %v5741 = vpop.f32.mrb[0].mxu0
        %v5742 = vadd.f32 0.0, %v5741
        %v5743 = vpop.f32.mrb[0].mxu0
        %v5744 = vpop.f32.mrb[0].mxu0
        %v5745 = vadd.f32 0.0, %v5744
        %v5746 = vpop.f32.mrb[0].mxu0
        %5747 = vmatprep.mubr.bf16.mxu0 0
        %5748 = vmatmul.mubr.bf16.gmra.mrb[0].mxu0 %v5662
        %v5749 = vpop.f32.mrb[0].mxu0
        %v5750 = vadd.f32 0.0, %v5749
        %v5751 = vpop.f32.mrb[0].mxu0
        %v5752 = vpop.f32.mrb[0].mxu0
        %v5753 = vadd.f32 0.0, %v5752
        %v5754 = vpop.f32.mrb[0].mxu0
        %5755 = vmatprep.mubr.bf16.mxu0 0
        %5756 = vmatmul.mubr.bf16.gmra.mrb[0].mxu0 %v5665
        %v5757 = vpop.f32.mrb[0].mxu0
        %v5758 = vadd.f32 0.0, %v5757
        %v5759 = vpop.f32.mrb[0].mxu0
        %v5760 = vpop.f32.mrb[0].mxu0
        %v5761 = vadd.f32 0.0, %v5760
        %v5762 = vpop.f32.mrb[0].mxu0
        %5763 = vdwg.mxu0
        %v5764 = vadd.f32 %v4611, %v5702
        %v5765 = vadd.f32 %v4612, %v5705
        %v5766 = vadd.f32 %v4613, %v5710
        %v5767 = vadd.f32 %v4614, %v5713
        %v5768 = vadd.f32 %v4615, %v5718
        %v5769 = vadd.f32 %v4616, %v5721
        %v5770 = vadd.f32 %v4617, %v5726
        %v5771 = vadd.f32 %v4618, %v5729
        %v5772 = vadd.f32 %v4619, %v5734
        %v5773 = vadd.f32 %v4620, %v5737
        %v5774 = vadd.f32 %v4621, %v5742
        %v5775 = vadd.f32 %v4622, %v5745
        %v5776 = vadd.f32 %v4623, %v5750
        %v5777 = vadd.f32 %v4624, %v5753
        %v5778 = vadd.f32 %v4625, %v5758
        %v5779 = vadd.f32 %v4626, %v5761
        %5780 = vrot.lane.b32.xlu0 %v1205, 64
        %v5781 = vpop.permute.xlu0 %5780
        %5782 = vrot.lane.b32.xlu0 %v1213, 64
        %v5783 = vpop.permute.xlu0 %5782
        %v5785 = vsel %vm1231, %v5781, 0
        %v5788 = vsel %vm1231, %v5783, 0
        %5790 = vmatprep.subr.bf16.mxu0 0
        %5791 = vmatpush1.bf16.xpose.msra.mxu0 %v5788
        %5792 = vmatprep.subr.bf16.mxu0 0
        %5793 = vmatpush1.bf16.xpose.msra.mxu0 0
        %5794 = vmatprep.subr.bf16.mxu0 0
        %5795 = vmatpush1.bf16.xpose.msra.mxu0 0
        %5796 = vmatprep.subr.bf16.mxu0 0
        %5797 = vmatpush1.bf16.xpose.msra.mxu0 0
        %5798 = vmatprep.subr.bf16.mxu0 0
        %5799 = vmatpush1.bf16.xpose.msra.mxu0 0
        %5800 = vmatprep.subr.bf16.mxu0 0
        %5801 = vmatpush1.bf16.xpose.msra.mxu0 0
        %5802 = vmatprep.subr.bf16.mxu0 0
        %5803 = vmatpush1.bf16.xpose.msra.mxu0 0
        %5804 = vmatprep.subr.bf16.mxu0 0
        %5805 = vmatpush1.bf16.xpose.msra.mxu0 0
        %5806 = vmatprep.subr.bf16.mxu0 0
        %5807 = vmatpush1.bf16.xpose.msra.mxu0 0
        %5808 = vmatprep.subr.bf16.mxu0 0
        %5809 = vmatpush1.bf16.xpose.msra.mxu0 0
        %5810 = vmatprep.subr.bf16.mxu0 0
        %5811 = vmatpush1.bf16.xpose.msra.mxu0 0
        %5812 = vmatprep.subr.bf16.mxu0 0
        %5813 = vmatpush1.bf16.xpose.msra.mxu0 0
        %5814 = vmatprep.subr.bf16.mxu0 0
        %5815 = vmatpush1.bf16.xpose.msra.mxu0 0
        %5816 = vmatprep.subr.bf16.mxu0 0
        %5817 = vmatpush1.bf16.xpose.msra.mxu0 0
        %5818 = vmatprep.subr.bf16.mxu0 0
        %5819 = vmatpush1.bf16.xpose.msra.mxu0 0
        %5820 = vmatprep.subr.bf16.mxu0 0
        %5821 = vmatpush1.bf16.xpose.msra.mxu0 0
        %5822 = vmatprep.mubr.bf16.mxu0 0
        %5823 = vmatmul.mubr.bf16.gmra.mrb[0].mxu0 %v5785
        %v5824 = vpop.f32.mrb[0].mxu0
        %v5825 = vadd.f32 0.0, %v5824
        %v5826 = vpop.f32.mrb[0].mxu0
        %v5827 = vpop.f32.mrb[0].mxu0
        %v5828 = vadd.f32 0.0, %v5827
        %v5829 = vpop.f32.mrb[0].mxu0
        %5830 = vdwg.mxu0
        %5831 = vrot.lane.b32.xlu0 %v1206, 64
        %v5832 = vpop.permute.xlu0 %5831
        %5833 = vrot.lane.b32.xlu0 %v1214, 64
        %v5834 = vpop.permute.xlu0 %5833
        %v5836 = vsel %vm1231, %v5832, 0
        %v5839 = vsel %vm1231, %v5834, 0
        %5841 = vmatprep.subr.bf16.mxu0 0
        %5842 = vmatpush1.bf16.xpose.msra.mxu0 %v5839
        %5843 = vmatprep.subr.bf16.mxu0 0
        %5844 = vmatpush1.bf16.xpose.msra.mxu0 0
        %5845 = vmatprep.subr.bf16.mxu0 0
        %5846 = vmatpush1.bf16.xpose.msra.mxu0 0
        %5847 = vmatprep.subr.bf16.mxu0 0
        %5848 = vmatpush1.bf16.xpose.msra.mxu0 0
        %5849 = vmatprep.subr.bf16.mxu0 0
        %5850 = vmatpush1.bf16.xpose.msra.mxu0 0
        %5851 = vmatprep.subr.bf16.mxu0 0
        %5852 = vmatpush1.bf16.xpose.msra.mxu0 0
        %5853 = vmatprep.subr.bf16.mxu0 0
        %5854 = vmatpush1.bf16.xpose.msra.mxu0 0
        %5855 = vmatprep.subr.bf16.mxu0 0
        %5856 = vmatpush1.bf16.xpose.msra.mxu0 0
        %5857 = vmatprep.subr.bf16.mxu0 0
        %5858 = vmatpush1.bf16.xpose.msra.mxu0 0
        %5859 = vmatprep.subr.bf16.mxu0 0
        %5860 = vmatpush1.bf16.xpose.msra.mxu0 0
        %5861 = vmatprep.subr.bf16.mxu0 0
        %5862 = vmatpush1.bf16.xpose.msra.mxu0 0
        %5863 = vmatprep.subr.bf16.mxu0 0
        %5864 = vmatpush1.bf16.xpose.msra.mxu0 0
        %5865 = vmatprep.subr.bf16.mxu0 0
        %5866 = vmatpush1.bf16.xpose.msra.mxu0 0
        %5867 = vmatprep.subr.bf16.mxu0 0
        %5868 = vmatpush1.bf16.xpose.msra.mxu0 0
        %5869 = vmatprep.subr.bf16.mxu0 0
        %5870 = vmatpush1.bf16.xpose.msra.mxu0 0
        %5871 = vmatprep.subr.bf16.mxu0 0
        %5872 = vmatpush1.bf16.xpose.msra.mxu0 0
        %5873 = vmatprep.mubr.bf16.mxu0 0
        %5874 = vmatmul.mubr.bf16.gmra.mrb[0].mxu0 %v5836
        %v5875 = vpop.f32.mrb[0].mxu0
        %v5876 = vadd.f32 0.0, %v5875
        %v5877 = vpop.f32.mrb[0].mxu0
        %v5878 = vpop.f32.mrb[0].mxu0
        %v5879 = vadd.f32 0.0, %v5878
        %v5880 = vpop.f32.mrb[0].mxu0
        %5881 = vdwg.mxu0
        %5882 = vrot.lane.b32.xlu0 %v1207, 64
        %v5883 = vpop.permute.xlu0 %5882
        %5884 = vrot.lane.b32.xlu0 %v1215, 64
        %v5885 = vpop.permute.xlu0 %5884
        %v5887 = vsel %vm1231, %v5883, 0
        %v5890 = vsel %vm1231, %v5885, 0
        %5892 = vmatprep.subr.bf16.mxu0 0
        %5893 = vmatpush1.bf16.xpose.msra.mxu0 %v5890
        %5894 = vmatprep.subr.bf16.mxu0 0
        %5895 = vmatpush1.bf16.xpose.msra.mxu0 0
        %5896 = vmatprep.subr.bf16.mxu0 0
        %5897 = vmatpush1.bf16.xpose.msra.mxu0 0
        %5898 = vmatprep.subr.bf16.mxu0 0
        %5899 = vmatpush1.bf16.xpose.msra.mxu0 0
        %5900 = vmatprep.subr.bf16.mxu0 0
        %5901 = vmatpush1.bf16.xpose.msra.mxu0 0
        %5902 = vmatprep.subr.bf16.mxu0 0
        %5903 = vmatpush1.bf16.xpose.msra.mxu0 0
        %5904 = vmatprep.subr.bf16.mxu0 0
        %5905 = vmatpush1.bf16.xpose.msra.mxu0 0
        %5906 = vmatprep.subr.bf16.mxu0 0
        %5907 = vmatpush1.bf16.xpose.msra.mxu0 0
        %5908 = vmatprep.subr.bf16.mxu0 0
        %5909 = vmatpush1.bf16.xpose.msra.mxu0 0
        %5910 = vmatprep.subr.bf16.mxu0 0
        %5911 = vmatpush1.bf16.xpose.msra.mxu0 0
        %5912 = vmatprep.subr.bf16.mxu0 0
        %5913 = vmatpush1.bf16.xpose.msra.mxu0 0
        %5914 = vmatprep.subr.bf16.mxu0 0
        %5915 = vmatpush1.bf16.xpose.msra.mxu0 0
        %5916 = vmatprep.subr.bf16.mxu0 0
        %5917 = vmatpush1.bf16.xpose.msra.mxu0 0
        %5918 = vmatprep.subr.bf16.mxu0 0
        %5919 = vmatpush1.bf16.xpose.msra.mxu0 0
        %5920 = vmatprep.subr.bf16.mxu0 0
        %5921 = vmatpush1.bf16.xpose.msra.mxu0 0
        %5922 = vmatprep.subr.bf16.mxu0 0
        %5923 = vmatpush1.bf16.xpose.msra.mxu0 0
        %5924 = vmatprep.mubr.bf16.mxu0 0
        %5925 = vmatmul.mubr.bf16.gmra.mrb[0].mxu0 %v5887
        %v5926 = vpop.f32.mrb[0].mxu0
        %v5927 = vadd.f32 0.0, %v5926
        %v5928 = vpop.f32.mrb[0].mxu0
        %v5929 = vpop.f32.mrb[0].mxu0
        %v5930 = vadd.f32 0.0, %v5929
        %v5931 = vpop.f32.mrb[0].mxu0
        %5932 = vdwg.mxu0
        %5933 = vrot.lane.b32.xlu0 %v1208, 64
        %v5934 = vpop.permute.xlu0 %5933
        %5935 = vrot.lane.b32.xlu0 %v1216, 64
        %v5936 = vpop.permute.xlu0 %5935
        %v5938 = vsel %vm1231, %v5934, 0
        %v5941 = vsel %vm1231, %v5936, 0
        %5943 = vmatprep.subr.bf16.mxu0 0
        %5944 = vmatpush1.bf16.xpose.msra.mxu0 %v5941
        %5945 = vmatprep.subr.bf16.mxu0 0
        %5946 = vmatpush1.bf16.xpose.msra.mxu0 0
        %5947 = vmatprep.subr.bf16.mxu0 0
        %5948 = vmatpush1.bf16.xpose.msra.mxu0 0
        %5949 = vmatprep.subr.bf16.mxu0 0
        %5950 = vmatpush1.bf16.xpose.msra.mxu0 0
        %5951 = vmatprep.subr.bf16.mxu0 0
        %5952 = vmatpush1.bf16.xpose.msra.mxu0 0
        %5953 = vmatprep.subr.bf16.mxu0 0
        %5954 = vmatpush1.bf16.xpose.msra.mxu0 0
        %5955 = vmatprep.subr.bf16.mxu0 0
        %5956 = vmatpush1.bf16.xpose.msra.mxu0 0
        %5957 = vmatprep.subr.bf16.mxu0 0
        %5958 = vmatpush1.bf16.xpose.msra.mxu0 0
        %5959 = vmatprep.subr.bf16.mxu0 0
        %5960 = vmatpush1.bf16.xpose.msra.mxu0 0
        %5961 = vmatprep.subr.bf16.mxu0 0
        %5962 = vmatpush1.bf16.xpose.msra.mxu0 0
        %5963 = vmatprep.subr.bf16.mxu0 0
        %5964 = vmatpush1.bf16.xpose.msra.mxu0 0
        %5965 = vmatprep.subr.bf16.mxu0 0
        %5966 = vmatpush1.bf16.xpose.msra.mxu0 0
        %5967 = vmatprep.subr.bf16.mxu0 0
        %5968 = vmatpush1.bf16.xpose.msra.mxu0 0
        %5969 = vmatprep.subr.bf16.mxu0 0
        %5970 = vmatpush1.bf16.xpose.msra.mxu0 0
        %5971 = vmatprep.subr.bf16.mxu0 0
        %5972 = vmatpush1.bf16.xpose.msra.mxu0 0
        %5973 = vmatprep.subr.bf16.mxu0 0
        %5974 = vmatpush1.bf16.xpose.msra.mxu0 0
        %5975 = vmatprep.mubr.bf16.mxu0 0
        %5976 = vmatmul.mubr.bf16.gmra.mrb[0].mxu0 %v5938
        %v5977 = vpop.f32.mrb[0].mxu0
        %v5978 = vadd.f32 0.0, %v5977
        %v5979 = vpop.f32.mrb[0].mxu0
        %v5980 = vpop.f32.mrb[0].mxu0
        %v5981 = vadd.f32 0.0, %v5980
        %v5982 = vpop.f32.mrb[0].mxu0
        %5983 = vdwg.mxu0
        %5984 = vrot.lane.b32.xlu0 %v1209, 64
        %v5985 = vpop.permute.xlu0 %5984
        %5986 = vrot.lane.b32.xlu0 %v1217, 64
        %v5987 = vpop.permute.xlu0 %5986
        %v5989 = vsel %vm1231, %v5985, 0
        %v5992 = vsel %vm1231, %v5987, 0
        %5994 = vmatprep.subr.bf16.mxu0 0
        %5995 = vmatpush1.bf16.xpose.msra.mxu0 %v5992
        %5996 = vmatprep.subr.bf16.mxu0 0
        %5997 = vmatpush1.bf16.xpose.msra.mxu0 0
        %5998 = vmatprep.subr.bf16.mxu0 0
        %5999 = vmatpush1.bf16.xpose.msra.mxu0 0
        %6000 = vmatprep.subr.bf16.mxu0 0
        %6001 = vmatpush1.bf16.xpose.msra.mxu0 0
        %6002 = vmatprep.subr.bf16.mxu0 0
        %6003 = vmatpush1.bf16.xpose.msra.mxu0 0
        %6004 = vmatprep.subr.bf16.mxu0 0
        %6005 = vmatpush1.bf16.xpose.msra.mxu0 0
        %6006 = vmatprep.subr.bf16.mxu0 0
        %6007 = vmatpush1.bf16.xpose.msra.mxu0 0
        %6008 = vmatprep.subr.bf16.mxu0 0
        %6009 = vmatpush1.bf16.xpose.msra.mxu0 0
        %6010 = vmatprep.subr.bf16.mxu0 0
        %6011 = vmatpush1.bf16.xpose.msra.mxu0 0
        %6012 = vmatprep.subr.bf16.mxu0 0
        %6013 = vmatpush1.bf16.xpose.msra.mxu0 0
        %6014 = vmatprep.subr.bf16.mxu0 0
        %6015 = vmatpush1.bf16.xpose.msra.mxu0 0
        %6016 = vmatprep.subr.bf16.mxu0 0
        %6017 = vmatpush1.bf16.xpose.msra.mxu0 0
        %6018 = vmatprep.subr.bf16.mxu0 0
        %6019 = vmatpush1.bf16.xpose.msra.mxu0 0
        %6020 = vmatprep.subr.bf16.mxu0 0
        %6021 = vmatpush1.bf16.xpose.msra.mxu0 0
        %6022 = vmatprep.subr.bf16.mxu0 0
        %6023 = vmatpush1.bf16.xpose.msra.mxu0 0
        %6024 = vmatprep.subr.bf16.mxu0 0
        %6025 = vmatpush1.bf16.xpose.msra.mxu0 0
        %6026 = vmatprep.mubr.bf16.mxu0 0
        %6027 = vmatmul.mubr.bf16.gmra.mrb[0].mxu0 %v5989
        %v6028 = vpop.f32.mrb[0].mxu0
        %v6029 = vadd.f32 0.0, %v6028
        %v6030 = vpop.f32.mrb[0].mxu0
        %v6031 = vpop.f32.mrb[0].mxu0
        %v6032 = vadd.f32 0.0, %v6031
        %v6033 = vpop.f32.mrb[0].mxu0
        %6034 = vdwg.mxu0
        %6035 = vrot.lane.b32.xlu0 %v1210, 64
        %v6036 = vpop.permute.xlu0 %6035
        %6037 = vrot.lane.b32.xlu0 %v1218, 64
        %v6038 = vpop.permute.xlu0 %6037
        %v6040 = vsel %vm1231, %v6036, 0
        %v6043 = vsel %vm1231, %v6038, 0
        %6045 = vmatprep.subr.bf16.mxu0 0
        %6046 = vmatpush1.bf16.xpose.msra.mxu0 %v6043
        %6047 = vmatprep.subr.bf16.mxu0 0
        %6048 = vmatpush1.bf16.xpose.msra.mxu0 0
        %6049 = vmatprep.subr.bf16.mxu0 0
        %6050 = vmatpush1.bf16.xpose.msra.mxu0 0
        %6051 = vmatprep.subr.bf16.mxu0 0
        %6052 = vmatpush1.bf16.xpose.msra.mxu0 0
        %6053 = vmatprep.subr.bf16.mxu0 0
        %6054 = vmatpush1.bf16.xpose.msra.mxu0 0
        %6055 = vmatprep.subr.bf16.mxu0 0
        %6056 = vmatpush1.bf16.xpose.msra.mxu0 0
        %6057 = vmatprep.subr.bf16.mxu0 0
        %6058 = vmatpush1.bf16.xpose.msra.mxu0 0
        %6059 = vmatprep.subr.bf16.mxu0 0
        %6060 = vmatpush1.bf16.xpose.msra.mxu0 0
        %6061 = vmatprep.subr.bf16.mxu0 0
        %6062 = vmatpush1.bf16.xpose.msra.mxu0 0
        %6063 = vmatprep.subr.bf16.mxu0 0
        %6064 = vmatpush1.bf16.xpose.msra.mxu0 0
        %6065 = vmatprep.subr.bf16.mxu0 0
        %6066 = vmatpush1.bf16.xpose.msra.mxu0 0
        %6067 = vmatprep.subr.bf16.mxu0 0
        %6068 = vmatpush1.bf16.xpose.msra.mxu0 0
        %6069 = vmatprep.subr.bf16.mxu0 0
        %6070 = vmatpush1.bf16.xpose.msra.mxu0 0
        %6071 = vmatprep.subr.bf16.mxu0 0
        %6072 = vmatpush1.bf16.xpose.msra.mxu0 0
        %6073 = vmatprep.subr.bf16.mxu0 0
        %6074 = vmatpush1.bf16.xpose.msra.mxu0 0
        %6075 = vmatprep.subr.bf16.mxu0 0
        %6076 = vmatpush1.bf16.xpose.msra.mxu0 0
        %6077 = vmatprep.mubr.bf16.mxu0 0
        %6078 = vmatmul.mubr.bf16.gmra.mrb[0].mxu0 %v6040
        %v6079 = vpop.f32.mrb[0].mxu0
        %v6080 = vadd.f32 0.0, %v6079
        %v6081 = vpop.f32.mrb[0].mxu0
        %v6082 = vpop.f32.mrb[0].mxu0
        %v6083 = vadd.f32 0.0, %v6082
        %v6084 = vpop.f32.mrb[0].mxu0
        %6085 = vdwg.mxu0
        %6086 = vrot.lane.b32.xlu0 %v1211, 64
        %v6087 = vpop.permute.xlu0 %6086
        %6088 = vrot.lane.b32.xlu0 %v1219, 64
        %v6089 = vpop.permute.xlu0 %6088
        %v6091 = vsel %vm1231, %v6087, 0
        %v6094 = vsel %vm1231, %v6089, 0
        %6096 = vmatprep.subr.bf16.mxu0 0
        %6097 = vmatpush1.bf16.xpose.msra.mxu0 %v6094
        %6098 = vmatprep.subr.bf16.mxu0 0
        %6099 = vmatpush1.bf16.xpose.msra.mxu0 0
        %6100 = vmatprep.subr.bf16.mxu0 0
        %6101 = vmatpush1.bf16.xpose.msra.mxu0 0
        %6102 = vmatprep.subr.bf16.mxu0 0
        %6103 = vmatpush1.bf16.xpose.msra.mxu0 0
        %6104 = vmatprep.subr.bf16.mxu0 0
        %6105 = vmatpush1.bf16.xpose.msra.mxu0 0
        %6106 = vmatprep.subr.bf16.mxu0 0
        %6107 = vmatpush1.bf16.xpose.msra.mxu0 0
        %6108 = vmatprep.subr.bf16.mxu0 0
        %6109 = vmatpush1.bf16.xpose.msra.mxu0 0
        %6110 = vmatprep.subr.bf16.mxu0 0
        %6111 = vmatpush1.bf16.xpose.msra.mxu0 0
        %6112 = vmatprep.subr.bf16.mxu0 0
        %6113 = vmatpush1.bf16.xpose.msra.mxu0 0
        %6114 = vmatprep.subr.bf16.mxu0 0
        %6115 = vmatpush1.bf16.xpose.msra.mxu0 0
        %6116 = vmatprep.subr.bf16.mxu0 0
        %6117 = vmatpush1.bf16.xpose.msra.mxu0 0
        %6118 = vmatprep.subr.bf16.mxu0 0
        %6119 = vmatpush1.bf16.xpose.msra.mxu0 0
        %6120 = vmatprep.subr.bf16.mxu0 0
        %6121 = vmatpush1.bf16.xpose.msra.mxu0 0
        %6122 = vmatprep.subr.bf16.mxu0 0
        %6123 = vmatpush1.bf16.xpose.msra.mxu0 0
        %6124 = vmatprep.subr.bf16.mxu0 0
        %6125 = vmatpush1.bf16.xpose.msra.mxu0 0
        %6126 = vmatprep.subr.bf16.mxu0 0
        %6127 = vmatpush1.bf16.xpose.msra.mxu0 0
        %6128 = vmatprep.mubr.bf16.mxu0 0
        %6129 = vmatmul.mubr.bf16.gmra.mrb[0].mxu0 %v6091
        %v6130 = vpop.f32.mrb[0].mxu0
        %v6131 = vadd.f32 0.0, %v6130
        %v6132 = vpop.f32.mrb[0].mxu0
        %v6133 = vpop.f32.mrb[0].mxu0
        %v6134 = vadd.f32 0.0, %v6133
        %v6135 = vpop.f32.mrb[0].mxu0
        %6136 = vdwg.mxu0
        %6137 = vrot.lane.b32.xlu0 %v1212, 64
        %v6138 = vpop.permute.xlu0 %6137
        %6139 = vrot.lane.b32.xlu0 %v1220, 64
        %v6140 = vpop.permute.xlu0 %6139
        %v6142 = vsel %vm1231, %v6138, 0
        %v6145 = vsel %vm1231, %v6140, 0
        %6147 = vmatprep.subr.bf16.mxu0 0
        %6148 = vmatpush1.bf16.xpose.msra.mxu0 %v6145
        %6149 = vmatprep.subr.bf16.mxu0 0
        %6150 = vmatpush1.bf16.xpose.msra.mxu0 0
        %6151 = vmatprep.subr.bf16.mxu0 0
        %6152 = vmatpush1.bf16.xpose.msra.mxu0 0
        %6153 = vmatprep.subr.bf16.mxu0 0
        %6154 = vmatpush1.bf16.xpose.msra.mxu0 0
        %6155 = vmatprep.subr.bf16.mxu0 0
        %6156 = vmatpush1.bf16.xpose.msra.mxu0 0
        %6157 = vmatprep.subr.bf16.mxu0 0
        %6158 = vmatpush1.bf16.xpose.msra.mxu0 0
        %6159 = vmatprep.subr.bf16.mxu0 0
        %6160 = vmatpush1.bf16.xpose.msra.mxu0 0
        %6161 = vmatprep.subr.bf16.mxu0 0
        %6162 = vmatpush1.bf16.xpose.msra.mxu0 0
        %6163 = vmatprep.subr.bf16.mxu0 0
        %6164 = vmatpush1.bf16.xpose.msra.mxu0 0
        %6165 = vmatprep.subr.bf16.mxu0 0
        %6166 = vmatpush1.bf16.xpose.msra.mxu0 0
        %6167 = vmatprep.subr.bf16.mxu0 0
        %6168 = vmatpush1.bf16.xpose.msra.mxu0 0
        %6169 = vmatprep.subr.bf16.mxu0 0
        %6170 = vmatpush1.bf16.xpose.msra.mxu0 0
        %6171 = vmatprep.subr.bf16.mxu0 0
        %6172 = vmatpush1.bf16.xpose.msra.mxu0 0
        %6173 = vmatprep.subr.bf16.mxu0 0
        %6174 = vmatpush1.bf16.xpose.msra.mxu0 0
        %6175 = vmatprep.subr.bf16.mxu0 0
        %6176 = vmatpush1.bf16.xpose.msra.mxu0 0
        %6177 = vmatprep.subr.bf16.mxu0 0
        %6178 = vmatpush1.bf16.xpose.msra.mxu0 0
        %6179 = vmatprep.mubr.bf16.mxu0 0
        %6180 = vmatmul.mubr.bf16.gmra.mrb[0].mxu0 %v6142
        %v6181 = vpop.f32.mrb[0].mxu0
        %v6182 = vadd.f32 0.0, %v6181
        %v6183 = vpop.f32.mrb[0].mxu0
        %v6184 = vpop.f32.mrb[0].mxu0
        %v6185 = vadd.f32 0.0, %v6184
        %v6186 = vpop.f32.mrb[0].mxu0
        %6187 = vdwg.mxu0
        %v6188 = vmul.f32 %v5825, 0.25
        %v6189 = vmul.f32 %v5828, 0.25
        %v6190 = vmul.f32 %v5876, 0.25
        %v6191 = vmul.f32 %v5879, 0.25
        %v6192 = vmul.f32 %v5927, 0.25
        %v6193 = vmul.f32 %v5930, 0.25
        %v6194 = vmul.f32 %v5978, 0.25
        %v6195 = vmul.f32 %v5981, 0.25
        %v6196 = vmul.f32 %v6029, 0.25
        %v6197 = vmul.f32 %v6032, 0.25
        %v6198 = vmul.f32 %v6080, 0.25
        %v6199 = vmul.f32 %v6083, 0.25
        %v6200 = vmul.f32 %v6131, 0.25
        %v6201 = vmul.f32 %v6134, 0.25
        %v6202 = vmul.f32 %v6182, 0.25
        %v6203 = vmul.f32 %v6185, 0.25
        %v6204 = vadd.f32 %v6188, %v1229
        %v6205 = vadd.f32 %v6189, %v1230
        %v6206 = vadd.f32 %v6190, %v1229
        %v6207 = vadd.f32 %v6191, %v1230
        %v6208 = vadd.f32 %v6192, %v1229
        %v6209 = vadd.f32 %v6193, %v1230
        %v6210 = vadd.f32 %v6194, %v1229
        %v6211 = vadd.f32 %v6195, %v1230
        %v6212 = vadd.f32 %v6196, %v1229
        %v6213 = vadd.f32 %v6197, %v1230
        %v6214 = vadd.f32 %v6198, %v1229
        %v6215 = vadd.f32 %v6199, %v1230
        %v6216 = vadd.f32 %v6200, %v1229
        %v6217 = vadd.f32 %v6201, %v1230
        %v6218 = vadd.f32 %v6202, %v1229
        %v6219 = vadd.f32 %v6203, %v1230
        %v6220 = vsel %vm1231, %v6204, -inf
        %6221 = vmax.xlane.f32.xlu0 %v6220
        %v6222 = vpop.xlane.xlu0 %6221
        %v6223 = vsel %vm1231, %v6205, -inf
        %6224 = vmax.xlane.f32.xlu0 %v6223
        %v6225 = vpop.xlane.xlu0 %6224
        %v6226 = vsel %vm1231, %v6206, -inf
        %6227 = vmax.xlane.f32.xlu0 %v6226
        %v6228 = vpop.xlane.xlu0 %6227
        %v6229 = vsel %vm1231, %v6207, -inf
        %6230 = vmax.xlane.f32.xlu0 %v6229
        %v6231 = vpop.xlane.xlu0 %6230
        %v6232 = vsel %vm1231, %v6208, -inf
        %6233 = vmax.xlane.f32.xlu0 %v6232
        %v6234 = vpop.xlane.xlu0 %6233
        %v6235 = vsel %vm1231, %v6209, -inf
        %6236 = vmax.xlane.f32.xlu0 %v6235
        %v6237 = vpop.xlane.xlu0 %6236
        %v6238 = vsel %vm1231, %v6210, -inf
        %6239 = vmax.xlane.f32.xlu0 %v6238
        %v6240 = vpop.xlane.xlu0 %6239
        %v6241 = vsel %vm1231, %v6211, -inf
        %6242 = vmax.xlane.f32.xlu0 %v6241
        %v6243 = vpop.xlane.xlu0 %6242
        %v6244 = vsel %vm1231, %v6212, -inf
        %6245 = vmax.xlane.f32.xlu0 %v6244
        %v6246 = vpop.xlane.xlu0 %6245
        %v6247 = vsel %vm1231, %v6213, -inf
        %6248 = vmax.xlane.f32.xlu0 %v6247
        %v6249 = vpop.xlane.xlu0 %6248
        %v6250 = vsel %vm1231, %v6214, -inf
        %6251 = vmax.xlane.f32.xlu0 %v6250
        %v6252 = vpop.xlane.xlu0 %6251
        %v6253 = vsel %vm1231, %v6215, -inf
        %6254 = vmax.xlane.f32.xlu0 %v6253
        %v6255 = vpop.xlane.xlu0 %6254
        %v6256 = vsel %vm1231, %v6216, -inf
        %6257 = vmax.xlane.f32.xlu0 %v6256
        %v6258 = vpop.xlane.xlu0 %6257
        %v6259 = vsel %vm1231, %v6217, -inf
        %6260 = vmax.xlane.f32.xlu0 %v6259
        %v6261 = vpop.xlane.xlu0 %6260
        %v6262 = vsel %vm1231, %v6218, -inf
        %6263 = vmax.xlane.f32.xlu0 %v6262
        %v6264 = vpop.xlane.xlu0 %6263
        %v6265 = vsel %vm1231, %v6219, -inf
        %6266 = vmax.xlane.f32.xlu0 %v6265
        %v6267 = vpop.xlane.xlu0 %6266
        %v6268 = vsub.f32 %v6204, %v6222
        %v6269 = vsub.f32 %v6205, %v6225
        %v6270 = vsub.f32 %v6206, %v6228
        %v6271 = vsub.f32 %v6207, %v6231
        %v6272 = vsub.f32 %v6208, %v6234
        %v6273 = vsub.f32 %v6209, %v6237
        %v6274 = vsub.f32 %v6210, %v6240
        %v6275 = vsub.f32 %v6211, %v6243
        %v6276 = vsub.f32 %v6212, %v6246
        %v6277 = vsub.f32 %v6213, %v6249
        %v6278 = vsub.f32 %v6214, %v6252
        %v6279 = vsub.f32 %v6215, %v6255
        %v6280 = vsub.f32 %v6216, %v6258
        %v6281 = vsub.f32 %v6217, %v6261
        %v6282 = vsub.f32 %v6218, %v6264
        %v6283 = vsub.f32 %v6219, %v6267
        %v6284 = vmul.f32 %v6268, 1.442695
        %v6285 = vpow.pop %v6284
        %v6286 = vmul.f32 %v6269, 1.442695
        %v6287 = vpow.pop %v6286
        %v6288 = vmul.f32 %v6270, 1.442695
        %v6289 = vpow.pop %v6288
        %v6290 = vmul.f32 %v6271, 1.442695
        %v6291 = vpow.pop %v6290
        %v6292 = vmul.f32 %v6272, 1.442695
        %v6293 = vpow.pop %v6292
        %v6294 = vmul.f32 %v6273, 1.442695
        %v6295 = vpow.pop %v6294
        %v6296 = vmul.f32 %v6274, 1.442695
        %v6297 = vpow.pop %v6296
        %v6298 = vmul.f32 %v6275, 1.442695
        %v6299 = vpow.pop %v6298
        %v6300 = vmul.f32 %v6276, 1.442695
        %v6301 = vpow.pop %v6300
        %v6302 = vmul.f32 %v6277, 1.442695
        %v6303 = vpow.pop %v6302
        %v6304 = vmul.f32 %v6278, 1.442695
        %v6305 = vpow.pop %v6304
        %v6306 = vmul.f32 %v6279, 1.442695
        %v6307 = vpow.pop %v6306
        %v6308 = vmul.f32 %v6280, 1.442695
        %v6309 = vpow.pop %v6308
        %v6310 = vmul.f32 %v6281, 1.442695
        %v6311 = vpow.pop %v6310
        %v6312 = vmul.f32 %v6282, 1.442695
        %v6313 = vpow.pop %v6312
        %v6314 = vmul.f32 %v6283, 1.442695
        %v6315 = vpow.pop %v6314
        %v6316 = vsel %vm1231, %v6285, 0.0
        %6317 = vadd.xlane.f32.xlu0 %v6316
        %v6318 = vpop.xlane.xlu0 %6317
        %v6319 = vsel %vm1231, %v6287, 0.0
        %6320 = vadd.xlane.f32.xlu0 %v6319
        %v6321 = vpop.xlane.xlu0 %6320
        %v6322 = vsel %vm1231, %v6289, 0.0
        %6323 = vadd.xlane.f32.xlu0 %v6322
        %v6324 = vpop.xlane.xlu0 %6323
        %v6325 = vsel %vm1231, %v6291, 0.0
        %6326 = vadd.xlane.f32.xlu0 %v6325
        %v6327 = vpop.xlane.xlu0 %6326
        %v6328 = vsel %vm1231, %v6293, 0.0
        %6329 = vadd.xlane.f32.xlu0 %v6328
        %v6330 = vpop.xlane.xlu0 %6329
        %v6331 = vsel %vm1231, %v6295, 0.0
        %6332 = vadd.xlane.f32.xlu0 %v6331
        %v6333 = vpop.xlane.xlu0 %6332
        %v6334 = vsel %vm1231, %v6297, 0.0
        %6335 = vadd.xlane.f32.xlu0 %v6334
        %v6336 = vpop.xlane.xlu0 %6335
        %v6337 = vsel %vm1231, %v6299, 0.0
        %6338 = vadd.xlane.f32.xlu0 %v6337
        %v6339 = vpop.xlane.xlu0 %6338
        %v6340 = vsel %vm1231, %v6301, 0.0
        %6341 = vadd.xlane.f32.xlu0 %v6340
        %v6342 = vpop.xlane.xlu0 %6341
        %v6343 = vsel %vm1231, %v6303, 0.0
        %6344 = vadd.xlane.f32.xlu0 %v6343
        %v6345 = vpop.xlane.xlu0 %6344
        %v6346 = vsel %vm1231, %v6305, 0.0
        %6347 = vadd.xlane.f32.xlu0 %v6346
        %v6348 = vpop.xlane.xlu0 %6347
        %v6349 = vsel %vm1231, %v6307, 0.0
        %6350 = vadd.xlane.f32.xlu0 %v6349
        %v6351 = vpop.xlane.xlu0 %6350
        %v6352 = vsel %vm1231, %v6309, 0.0
        %6353 = vadd.xlane.f32.xlu0 %v6352
        %v6354 = vpop.xlane.xlu0 %6353
        %v6355 = vsel %vm1231, %v6311, 0.0
        %6356 = vadd.xlane.f32.xlu0 %v6355
        %v6357 = vpop.xlane.xlu0 %6356
        %v6358 = vsel %vm1231, %v6313, 0.0
        %6359 = vadd.xlane.f32.xlu0 %v6358
        %v6360 = vpop.xlane.xlu0 %6359
        %v6361 = vsel %vm1231, %v6315, 0.0
        %6362 = vadd.xlane.f32.xlu0 %v6361
        %v6363 = vpop.xlane.xlu0 %6362
        %v6364 = vrcp.pop %v6318
        %v6365 = vrcp.pop %v6321
        %v6366 = vrcp.pop %v6324
        %v6367 = vrcp.pop %v6327
        %v6368 = vrcp.pop %v6330
        %v6369 = vrcp.pop %v6333
        %v6370 = vrcp.pop %v6336
        %v6371 = vrcp.pop %v6339
        %v6372 = vrcp.pop %v6342
        %v6373 = vrcp.pop %v6345
        %v6374 = vrcp.pop %v6348
        %v6375 = vrcp.pop %v6351
        %v6376 = vrcp.pop %v6354
        %v6377 = vrcp.pop %v6357
        %v6378 = vrcp.pop %v6360
        %v6379 = vrcp.pop %v6363
        %v6380 = vmul.f32 %v6285, %v6364
        %v6381 = vmul.f32 %v6287, %v6365
        %v6382 = vmul.f32 %v6289, %v6366
        %v6383 = vmul.f32 %v6291, %v6367
        %v6384 = vmul.f32 %v6293, %v6368
        %v6385 = vmul.f32 %v6295, %v6369
        %v6386 = vmul.f32 %v6297, %v6370
        %v6387 = vmul.f32 %v6299, %v6371
        %v6388 = vmul.f32 %v6301, %v6372
        %v6389 = vmul.f32 %v6303, %v6373
        %v6390 = vmul.f32 %v6305, %v6374
        %v6391 = vmul.f32 %v6307, %v6375
        %v6392 = vmul.f32 %v6309, %v6376
        %v6393 = vmul.f32 %v6311, %v6377
        %v6394 = vmul.f32 %v6313, %v6378
        %v6395 = vmul.f32 %v6315, %v6379
        %v6396 = vpack.c.bf16 %v6381, %v6380
        %v6397 = vpack.c.bf16 %v6383, %v6382
        %v6398 = vpack.c.bf16 %v6385, %v6384
        %v6399 = vpack.c.bf16 %v6387, %v6386
        %v6400 = vpack.c.bf16 %v6389, %v6388
        %v6401 = vpack.c.bf16 %v6391, %v6390
        %v6402 = vpack.c.bf16 %v6393, %v6392
        %v6403 = vpack.c.bf16 %v6395, %v6394
        %6404 = vrot.lane.b32.xlu0 %v1221, 64
        %v6405 = vpop.permute.xlu0 %6404
        %v6408 = vsel %vm1231, %v6396, 0
        %6410 = vmatprep.subr.bf16.mxu0 0
        %6411 = vmatpush1.bf16.msra.mxu0 %v6405
        %6412 = vmatprep.subr.bf16.mxu0 0
        %6413 = vmatpush1.bf16.msra.mxu0 0
        %6414 = vmatprep.subr.bf16.mxu0 0
        %6415 = vmatpush1.bf16.msra.mxu0 0
        %6416 = vmatprep.subr.bf16.mxu0 0
        %6417 = vmatpush1.bf16.msra.mxu0 0
        %6418 = vmatprep.subr.bf16.mxu0 0
        %6419 = vmatpush1.bf16.msra.mxu0 0
        %6420 = vmatprep.subr.bf16.mxu0 0
        %6421 = vmatpush1.bf16.msra.mxu0 0
        %6422 = vmatprep.subr.bf16.mxu0 0
        %6423 = vmatpush1.bf16.msra.mxu0 0
        %6424 = vmatprep.subr.bf16.mxu0 0
        %6425 = vmatpush1.bf16.msra.mxu0 0
        %6426 = vmatprep.subr.bf16.mxu0 0
        %6427 = vmatpush1.bf16.msra.mxu0 0
        %6428 = vmatprep.subr.bf16.mxu0 0
        %6429 = vmatpush1.bf16.msra.mxu0 0
        %6430 = vmatprep.subr.bf16.mxu0 0
        %6431 = vmatpush1.bf16.msra.mxu0 0
        %6432 = vmatprep.subr.bf16.mxu0 0
        %6433 = vmatpush1.bf16.msra.mxu0 0
        %6434 = vmatprep.subr.bf16.mxu0 0
        %6435 = vmatpush1.bf16.msra.mxu0 0
        %6436 = vmatprep.subr.bf16.mxu0 0
        %6437 = vmatpush1.bf16.msra.mxu0 0
        %6438 = vmatprep.subr.bf16.mxu0 0
        %6439 = vmatpush1.bf16.msra.mxu0 0
        %6440 = vmatprep.subr.bf16.mxu0 0
        %6441 = vmatpush1.bf16.msra.mxu0 0
        %6442 = vmatprep.mubr.bf16.mxu0 0
        %6443 = vmatmul.mubr.bf16.gmra.mrb[0].mxu0 %v6408
        %v6444 = vpop.f32.mrb[0].mxu0
        %v6445 = vadd.f32 0.0, %v6444
        %v6446 = vpop.f32.mrb[0].mxu0
        %v6447 = vpop.f32.mrb[0].mxu0
        %v6448 = vadd.f32 0.0, %v6447
        %v6449 = vpop.f32.mrb[0].mxu0
        %6450 = vdwg.mxu0
        %6451 = vrot.lane.b32.xlu0 %v1222, 64
        %v6452 = vpop.permute.xlu0 %6451
        %v6455 = vsel %vm1231, %v6397, 0
        %6457 = vmatprep.subr.bf16.mxu0 0
        %6458 = vmatpush1.bf16.msra.mxu0 %v6452
        %6459 = vmatprep.subr.bf16.mxu0 0
        %6460 = vmatpush1.bf16.msra.mxu0 0
        %6461 = vmatprep.subr.bf16.mxu0 0
        %6462 = vmatpush1.bf16.msra.mxu0 0
        %6463 = vmatprep.subr.bf16.mxu0 0
        %6464 = vmatpush1.bf16.msra.mxu0 0
        %6465 = vmatprep.subr.bf16.mxu0 0
        %6466 = vmatpush1.bf16.msra.mxu0 0
        %6467 = vmatprep.subr.bf16.mxu0 0
        %6468 = vmatpush1.bf16.msra.mxu0 0
        %6469 = vmatprep.subr.bf16.mxu0 0
        %6470 = vmatpush1.bf16.msra.mxu0 0
        %6471 = vmatprep.subr.bf16.mxu0 0
        %6472 = vmatpush1.bf16.msra.mxu0 0
        %6473 = vmatprep.subr.bf16.mxu0 0
        %6474 = vmatpush1.bf16.msra.mxu0 0
        %6475 = vmatprep.subr.bf16.mxu0 0
        %6476 = vmatpush1.bf16.msra.mxu0 0
        %6477 = vmatprep.subr.bf16.mxu0 0
        %6478 = vmatpush1.bf16.msra.mxu0 0
        %6479 = vmatprep.subr.bf16.mxu0 0
        %6480 = vmatpush1.bf16.msra.mxu0 0
        %6481 = vmatprep.subr.bf16.mxu0 0
        %6482 = vmatpush1.bf16.msra.mxu0 0
        %6483 = vmatprep.subr.bf16.mxu0 0
        %6484 = vmatpush1.bf16.msra.mxu0 0
        %6485 = vmatprep.subr.bf16.mxu0 0
        %6486 = vmatpush1.bf16.msra.mxu0 0
        %6487 = vmatprep.subr.bf16.mxu0 0
        %6488 = vmatpush1.bf16.msra.mxu0 0
        %6489 = vmatprep.mubr.bf16.mxu0 0
        %6490 = vmatmul.mubr.bf16.gmra.mrb[0].mxu0 %v6455
        %v6491 = vpop.f32.mrb[0].mxu0
        %v6492 = vadd.f32 0.0, %v6491
        %v6493 = vpop.f32.mrb[0].mxu0
        %v6494 = vpop.f32.mrb[0].mxu0
        %v6495 = vadd.f32 0.0, %v6494
        %v6496 = vpop.f32.mrb[0].mxu0
        %6497 = vdwg.mxu0
        %6498 = vrot.lane.b32.xlu0 %v1223, 64
        %v6499 = vpop.permute.xlu0 %6498
        %v6502 = vsel %vm1231, %v6398, 0
        %6504 = vmatprep.subr.bf16.mxu0 0
        %6505 = vmatpush1.bf16.msra.mxu0 %v6499
        %6506 = vmatprep.subr.bf16.mxu0 0
        %6507 = vmatpush1.bf16.msra.mxu0 0
        %6508 = vmatprep.subr.bf16.mxu0 0
        %6509 = vmatpush1.bf16.msra.mxu0 0
        %6510 = vmatprep.subr.bf16.mxu0 0
        %6511 = vmatpush1.bf16.msra.mxu0 0
        %6512 = vmatprep.subr.bf16.mxu0 0
        %6513 = vmatpush1.bf16.msra.mxu0 0
        %6514 = vmatprep.subr.bf16.mxu0 0
        %6515 = vmatpush1.bf16.msra.mxu0 0
        %6516 = vmatprep.subr.bf16.mxu0 0
        %6517 = vmatpush1.bf16.msra.mxu0 0
        %6518 = vmatprep.subr.bf16.mxu0 0
        %6519 = vmatpush1.bf16.msra.mxu0 0
        %6520 = vmatprep.subr.bf16.mxu0 0
        %6521 = vmatpush1.bf16.msra.mxu0 0
        %6522 = vmatprep.subr.bf16.mxu0 0
        %6523 = vmatpush1.bf16.msra.mxu0 0
        %6524 = vmatprep.subr.bf16.mxu0 0
        %6525 = vmatpush1.bf16.msra.mxu0 0
        %6526 = vmatprep.subr.bf16.mxu0 0
        %6527 = vmatpush1.bf16.msra.mxu0 0
        %6528 = vmatprep.subr.bf16.mxu0 0
        %6529 = vmatpush1.bf16.msra.mxu0 0
        %6530 = vmatprep.subr.bf16.mxu0 0
        %6531 = vmatpush1.bf16.msra.mxu0 0
        %6532 = vmatprep.subr.bf16.mxu0 0
        %6533 = vmatpush1.bf16.msra.mxu0 0
        %6534 = vmatprep.subr.bf16.mxu0 0
        %6535 = vmatpush1.bf16.msra.mxu0 0
        %6536 = vmatprep.mubr.bf16.mxu0 0
        %6537 = vmatmul.mubr.bf16.gmra.mrb[0].mxu0 %v6502
        %v6538 = vpop.f32.mrb[0].mxu0
        %v6539 = vadd.f32 0.0, %v6538
        %v6540 = vpop.f32.mrb[0].mxu0
        %v6541 = vpop.f32.mrb[0].mxu0
        %v6542 = vadd.f32 0.0, %v6541
        %v6543 = vpop.f32.mrb[0].mxu0
        %6544 = vdwg.mxu0
        %6545 = vrot.lane.b32.xlu0 %v1224, 64
        %v6546 = vpop.permute.xlu0 %6545
        %v6549 = vsel %vm1231, %v6399, 0
        %6551 = vmatprep.subr.bf16.mxu0 0
        %6552 = vmatpush1.bf16.msra.mxu0 %v6546
        %6553 = vmatprep.subr.bf16.mxu0 0
        %6554 = vmatpush1.bf16.msra.mxu0 0
        %6555 = vmatprep.subr.bf16.mxu0 0
        %6556 = vmatpush1.bf16.msra.mxu0 0
        %6557 = vmatprep.subr.bf16.mxu0 0
        %6558 = vmatpush1.bf16.msra.mxu0 0
        %6559 = vmatprep.subr.bf16.mxu0 0
        %6560 = vmatpush1.bf16.msra.mxu0 0
        %6561 = vmatprep.subr.bf16.mxu0 0
        %6562 = vmatpush1.bf16.msra.mxu0 0
        %6563 = vmatprep.subr.bf16.mxu0 0
        %6564 = vmatpush1.bf16.msra.mxu0 0
        %6565 = vmatprep.subr.bf16.mxu0 0
        %6566 = vmatpush1.bf16.msra.mxu0 0
        %6567 = vmatprep.subr.bf16.mxu0 0
        %6568 = vmatpush1.bf16.msra.mxu0 0
        %6569 = vmatprep.subr.bf16.mxu0 0
        %6570 = vmatpush1.bf16.msra.mxu0 0
        %6571 = vmatprep.subr.bf16.mxu0 0
        %6572 = vmatpush1.bf16.msra.mxu0 0
        %6573 = vmatprep.subr.bf16.mxu0 0
        %6574 = vmatpush1.bf16.msra.mxu0 0
        %6575 = vmatprep.subr.bf16.mxu0 0
        %6576 = vmatpush1.bf16.msra.mxu0 0
        %6577 = vmatprep.subr.bf16.mxu0 0
        %6578 = vmatpush1.bf16.msra.mxu0 0
        %6579 = vmatprep.subr.bf16.mxu0 0
        %6580 = vmatpush1.bf16.msra.mxu0 0
        %6581 = vmatprep.subr.bf16.mxu0 0
        %6582 = vmatpush1.bf16.msra.mxu0 0
        %6583 = vmatprep.mubr.bf16.mxu0 0
        %6584 = vmatmul.mubr.bf16.gmra.mrb[0].mxu0 %v6549
        %v6585 = vpop.f32.mrb[0].mxu0
        %v6586 = vadd.f32 0.0, %v6585
        %v6587 = vpop.f32.mrb[0].mxu0
        %v6588 = vpop.f32.mrb[0].mxu0
        %v6589 = vadd.f32 0.0, %v6588
        %v6590 = vpop.f32.mrb[0].mxu0
        %6591 = vdwg.mxu0
        %6592 = vrot.lane.b32.xlu0 %v1225, 64
        %v6593 = vpop.permute.xlu0 %6592
        %v6596 = vsel %vm1231, %v6400, 0
        %6598 = vmatprep.subr.bf16.mxu0 0
        %6599 = vmatpush1.bf16.msra.mxu0 %v6593
        %6600 = vmatprep.subr.bf16.mxu0 0
        %6601 = vmatpush1.bf16.msra.mxu0 0
        %6602 = vmatprep.subr.bf16.mxu0 0
        %6603 = vmatpush1.bf16.msra.mxu0 0
        %6604 = vmatprep.subr.bf16.mxu0 0
        %6605 = vmatpush1.bf16.msra.mxu0 0
        %6606 = vmatprep.subr.bf16.mxu0 0
        %6607 = vmatpush1.bf16.msra.mxu0 0
        %6608 = vmatprep.subr.bf16.mxu0 0
        %6609 = vmatpush1.bf16.msra.mxu0 0
        %6610 = vmatprep.subr.bf16.mxu0 0
        %6611 = vmatpush1.bf16.msra.mxu0 0
        %6612 = vmatprep.subr.bf16.mxu0 0
        %6613 = vmatpush1.bf16.msra.mxu0 0
        %6614 = vmatprep.subr.bf16.mxu0 0
        %6615 = vmatpush1.bf16.msra.mxu0 0
        %6616 = vmatprep.subr.bf16.mxu0 0
        %6617 = vmatpush1.bf16.msra.mxu0 0
        %6618 = vmatprep.subr.bf16.mxu0 0
        %6619 = vmatpush1.bf16.msra.mxu0 0
        %6620 = vmatprep.subr.bf16.mxu0 0
        %6621 = vmatpush1.bf16.msra.mxu0 0
        %6622 = vmatprep.subr.bf16.mxu0 0
        %6623 = vmatpush1.bf16.msra.mxu0 0
        %6624 = vmatprep.subr.bf16.mxu0 0
        %6625 = vmatpush1.bf16.msra.mxu0 0
        %6626 = vmatprep.subr.bf16.mxu0 0
        %6627 = vmatpush1.bf16.msra.mxu0 0
        %6628 = vmatprep.subr.bf16.mxu0 0
        %6629 = vmatpush1.bf16.msra.mxu0 0
        %6630 = vmatprep.mubr.bf16.mxu0 0
        %6631 = vmatmul.mubr.bf16.gmra.mrb[0].mxu0 %v6596
        %v6632 = vpop.f32.mrb[0].mxu0
        %v6633 = vadd.f32 0.0, %v6632
        %v6634 = vpop.f32.mrb[0].mxu0
        %v6635 = vpop.f32.mrb[0].mxu0
        %v6636 = vadd.f32 0.0, %v6635
        %v6637 = vpop.f32.mrb[0].mxu0
        %6638 = vdwg.mxu0
        %6639 = vrot.lane.b32.xlu0 %v1226, 64
        %v6640 = vpop.permute.xlu0 %6639
        %v6643 = vsel %vm1231, %v6401, 0
        %6645 = vmatprep.subr.bf16.mxu0 0
        %6646 = vmatpush1.bf16.msra.mxu0 %v6640
        %6647 = vmatprep.subr.bf16.mxu0 0
        %6648 = vmatpush1.bf16.msra.mxu0 0
        %6649 = vmatprep.subr.bf16.mxu0 0
        %6650 = vmatpush1.bf16.msra.mxu0 0
        %6651 = vmatprep.subr.bf16.mxu0 0
        %6652 = vmatpush1.bf16.msra.mxu0 0
        %6653 = vmatprep.subr.bf16.mxu0 0
        %6654 = vmatpush1.bf16.msra.mxu0 0
        %6655 = vmatprep.subr.bf16.mxu0 0
        %6656 = vmatpush1.bf16.msra.mxu0 0
        %6657 = vmatprep.subr.bf16.mxu0 0
        %6658 = vmatpush1.bf16.msra.mxu0 0
        %6659 = vmatprep.subr.bf16.mxu0 0
        %6660 = vmatpush1.bf16.msra.mxu0 0
        %6661 = vmatprep.subr.bf16.mxu0 0
        %6662 = vmatpush1.bf16.msra.mxu0 0
        %6663 = vmatprep.subr.bf16.mxu0 0
        %6664 = vmatpush1.bf16.msra.mxu0 0
        %6665 = vmatprep.subr.bf16.mxu0 0
        %6666 = vmatpush1.bf16.msra.mxu0 0
        %6667 = vmatprep.subr.bf16.mxu0 0
        %6668 = vmatpush1.bf16.msra.mxu0 0
        %6669 = vmatprep.subr.bf16.mxu0 0
        %6670 = vmatpush1.bf16.msra.mxu0 0
        %6671 = vmatprep.subr.bf16.mxu0 0
        %6672 = vmatpush1.bf16.msra.mxu0 0
        %6673 = vmatprep.subr.bf16.mxu0 0
        %6674 = vmatpush1.bf16.msra.mxu0 0
        %6675 = vmatprep.subr.bf16.mxu0 0
        %6676 = vmatpush1.bf16.msra.mxu0 0
        %6677 = vmatprep.mubr.bf16.mxu0 0
        %6678 = vmatmul.mubr.bf16.gmra.mrb[0].mxu0 %v6643
        %v6679 = vpop.f32.mrb[0].mxu0
        %v6680 = vadd.f32 0.0, %v6679
        %v6681 = vpop.f32.mrb[0].mxu0
        %v6682 = vpop.f32.mrb[0].mxu0
        %v6683 = vadd.f32 0.0, %v6682
        %v6684 = vpop.f32.mrb[0].mxu0
        %6685 = vdwg.mxu0
        %6686 = vrot.lane.b32.xlu0 %v1227, 64
        %v6687 = vpop.permute.xlu0 %6686
        %v6690 = vsel %vm1231, %v6402, 0
        %6692 = vmatprep.subr.bf16.mxu0 0
        %6693 = vmatpush1.bf16.msra.mxu0 %v6687
        %6694 = vmatprep.subr.bf16.mxu0 0
        %6695 = vmatpush1.bf16.msra.mxu0 0
        %6696 = vmatprep.subr.bf16.mxu0 0
        %6697 = vmatpush1.bf16.msra.mxu0 0
        %6698 = vmatprep.subr.bf16.mxu0 0
        %6699 = vmatpush1.bf16.msra.mxu0 0
        %6700 = vmatprep.subr.bf16.mxu0 0
        %6701 = vmatpush1.bf16.msra.mxu0 0
        %6702 = vmatprep.subr.bf16.mxu0 0
        %6703 = vmatpush1.bf16.msra.mxu0 0
        %6704 = vmatprep.subr.bf16.mxu0 0
        %6705 = vmatpush1.bf16.msra.mxu0 0
        %6706 = vmatprep.subr.bf16.mxu0 0
        %6707 = vmatpush1.bf16.msra.mxu0 0
        %6708 = vmatprep.subr.bf16.mxu0 0
        %6709 = vmatpush1.bf16.msra.mxu0 0
        %6710 = vmatprep.subr.bf16.mxu0 0
        %6711 = vmatpush1.bf16.msra.mxu0 0
        %6712 = vmatprep.subr.bf16.mxu0 0
        %6713 = vmatpush1.bf16.msra.mxu0 0
        %6714 = vmatprep.subr.bf16.mxu0 0
        %6715 = vmatpush1.bf16.msra.mxu0 0
        %6716 = vmatprep.subr.bf16.mxu0 0
        %6717 = vmatpush1.bf16.msra.mxu0 0
        %6718 = vmatprep.subr.bf16.mxu0 0
        %6719 = vmatpush1.bf16.msra.mxu0 0
        %6720 = vmatprep.subr.bf16.mxu0 0
        %6721 = vmatpush1.bf16.msra.mxu0 0
        %6722 = vmatprep.subr.bf16.mxu0 0
        %6723 = vmatpush1.bf16.msra.mxu0 0
        %6724 = vmatprep.mubr.bf16.mxu0 0
        %6725 = vmatmul.mubr.bf16.gmra.mrb[0].mxu0 %v6690
        %v6726 = vpop.f32.mrb[0].mxu0
        %v6727 = vadd.f32 0.0, %v6726
        %v6728 = vpop.f32.mrb[0].mxu0
        %v6729 = vpop.f32.mrb[0].mxu0
        %v6730 = vadd.f32 0.0, %v6729
        %v6731 = vpop.f32.mrb[0].mxu0
        %6732 = vdwg.mxu0
        %6733 = vrot.lane.b32.xlu0 %v1228, 64
        %v6734 = vpop.permute.xlu0 %6733
        %v6737 = vsel %vm1231, %v6403, 0
        %6739 = vmatprep.subr.bf16.mxu0 0
        %6740 = vmatpush1.bf16.msra.mxu0 %v6734
        %6741 = vmatprep.subr.bf16.mxu0 0
        %6742 = vmatpush1.bf16.msra.mxu0 0
        %6743 = vmatprep.subr.bf16.mxu0 0
        %6744 = vmatpush1.bf16.msra.mxu0 0
        %6745 = vmatprep.subr.bf16.mxu0 0
        %6746 = vmatpush1.bf16.msra.mxu0 0
        %6747 = vmatprep.subr.bf16.mxu0 0
        %6748 = vmatpush1.bf16.msra.mxu0 0
        %6749 = vmatprep.subr.bf16.mxu0 0
        %6750 = vmatpush1.bf16.msra.mxu0 0
        %6751 = vmatprep.subr.bf16.mxu0 0
        %6752 = vmatpush1.bf16.msra.mxu0 0
        %6753 = vmatprep.subr.bf16.mxu0 0
        %6754 = vmatpush1.bf16.msra.mxu0 0
        %6755 = vmatprep.subr.bf16.mxu0 0
        %6756 = vmatpush1.bf16.msra.mxu0 0
        %6757 = vmatprep.subr.bf16.mxu0 0
        %6758 = vmatpush1.bf16.msra.mxu0 0
        %6759 = vmatprep.subr.bf16.mxu0 0
        %6760 = vmatpush1.bf16.msra.mxu0 0
        %6761 = vmatprep.subr.bf16.mxu0 0
        %6762 = vmatpush1.bf16.msra.mxu0 0
        %6763 = vmatprep.subr.bf16.mxu0 0
        %6764 = vmatpush1.bf16.msra.mxu0 0
        %6765 = vmatprep.subr.bf16.mxu0 0
        %6766 = vmatpush1.bf16.msra.mxu0 0
        %6767 = vmatprep.subr.bf16.mxu0 0
        %6768 = vmatpush1.bf16.msra.mxu0 0
        %6769 = vmatprep.subr.bf16.mxu0 0
        %6770 = vmatpush1.bf16.msra.mxu0 0
        %6771 = vmatprep.mubr.bf16.mxu0 0
        %6772 = vmatmul.mubr.bf16.gmra.mrb[0].mxu0 %v6737
        %v6773 = vpop.f32.mrb[0].mxu0
        %v6774 = vadd.f32 0.0, %v6773
        %v6775 = vpop.f32.mrb[0].mxu0
        %v6776 = vpop.f32.mrb[0].mxu0
        %v6777 = vadd.f32 0.0, %v6776
        %v6778 = vpop.f32.mrb[0].mxu0
        %6779 = vdwg.mxu0
        %v6780 = vpack.c.bf16 %v6448, %v6445
        %v6781 = vpack.c.bf16 %v6495, %v6492
        %v6782 = vpack.c.bf16 %v6542, %v6539
        %v6783 = vpack.c.bf16 %v6589, %v6586
        %v6784 = vpack.c.bf16 %v6636, %v6633
        %v6785 = vpack.c.bf16 %v6683, %v6680
        %v6786 = vpack.c.bf16 %v6730, %v6727
        %v6787 = vpack.c.bf16 %v6777, %v6774
        %v6788 = vld [vmem:[#allocation17 + $0x20] sm:$0xf]
        %v6789 = vld [vmem:[#allocation17 + $0x24] sm:$0xf]
        %v6792 = vunpack.c.l.b16 %v6788
        %v6793 = vunpack.c.l.b16 %v6789
        %v6794 = vpack.c.b16 %v6793, %v6792
        %v6797 = vsel %vm1231, %v6780, 0
        %v6800 = vsel %vm1231, %v6781, 0
        %v6803 = vsel %vm1231, %v6782, 0
        %v6806 = vsel %vm1231, %v6783, 0
        %v6809 = vsel %vm1231, %v6784, 0
        %v6812 = vsel %vm1231, %v6785, 0
        %v6815 = vsel %vm1231, %v6786, 0
        %v6818 = vsel %vm1231, %v6787, 0
        %6820 = vmatprep.subr.bf16.mxu0 0
        %6821 = vmatpush1.bf16.msra.mxu0 %v6794
        %6822 = vmatprep.subr.bf16.mxu0 0
        %6823 = vmatpush1.bf16.msra.mxu0 0
        %6824 = vmatprep.subr.bf16.mxu0 0
        %6825 = vmatpush1.bf16.msra.mxu0 0
        %6826 = vmatprep.subr.bf16.mxu0 0
        %6827 = vmatpush1.bf16.msra.mxu0 0
        %6828 = vmatprep.subr.bf16.mxu0 0
        %6829 = vmatpush1.bf16.msra.mxu0 0
        %6830 = vmatprep.subr.bf16.mxu0 0
        %6831 = vmatpush1.bf16.msra.mxu0 0
        %6832 = vmatprep.subr.bf16.mxu0 0
        %6833 = vmatpush1.bf16.msra.mxu0 0
        %6834 = vmatprep.subr.bf16.mxu0 0
        %6835 = vmatpush1.bf16.msra.mxu0 0
        %6836 = vmatprep.subr.bf16.mxu0 0
        %6837 = vmatpush1.bf16.msra.mxu0 0
        %6838 = vmatprep.subr.bf16.mxu0 0
        %6839 = vmatpush1.bf16.msra.mxu0 0
        %6840 = vmatprep.subr.bf16.mxu0 0
        %6841 = vmatpush1.bf16.msra.mxu0 0
        %6842 = vmatprep.subr.bf16.mxu0 0
        %6843 = vmatpush1.bf16.msra.mxu0 0
        %6844 = vmatprep.subr.bf16.mxu0 0
        %6845 = vmatpush1.bf16.msra.mxu0 0
        %6846 = vmatprep.subr.bf16.mxu0 0
        %6847 = vmatpush1.bf16.msra.mxu0 0
        %6848 = vmatprep.subr.bf16.mxu0 0
        %6849 = vmatpush1.bf16.msra.mxu0 0
        %6850 = vmatprep.subr.bf16.mxu0 0
        %6851 = vmatpush1.bf16.msra.mxu0 0
        %6852 = vmatprep.mubr.bf16.mxu0 0
        %6853 = vmatmul.mubr.bf16.gmra.mrb[0].mxu0 %v6797
        %v6854 = vpop.f32.mrb[0].mxu0
        %v6855 = vadd.f32 0.0, %v6854
        %v6856 = vpop.f32.mrb[0].mxu0
        %v6857 = vpop.f32.mrb[0].mxu0
        %v6858 = vadd.f32 0.0, %v6857
        %v6859 = vpop.f32.mrb[0].mxu0
        %6860 = vmatprep.mubr.bf16.mxu0 0
        %6861 = vmatmul.mubr.bf16.gmra.mrb[0].mxu0 %v6800
        %v6862 = vpop.f32.mrb[0].mxu0
        %v6863 = vadd.f32 0.0, %v6862
        %v6864 = vpop.f32.mrb[0].mxu0
        %v6865 = vpop.f32.mrb[0].mxu0
        %v6866 = vadd.f32 0.0, %v6865
        %v6867 = vpop.f32.mrb[0].mxu0
        %6868 = vmatprep.mubr.bf16.mxu0 0
        %6869 = vmatmul.mubr.bf16.gmra.mrb[0].mxu0 %v6803
        %v6870 = vpop.f32.mrb[0].mxu0
        %v6871 = vadd.f32 0.0, %v6870
        %v6872 = vpop.f32.mrb[0].mxu0
        %v6873 = vpop.f32.mrb[0].mxu0
        %v6874 = vadd.f32 0.0, %v6873
        %v6875 = vpop.f32.mrb[0].mxu0
        %6876 = vmatprep.mubr.bf16.mxu0 0
        %6877 = vmatmul.mubr.bf16.gmra.mrb[0].mxu0 %v6806
        %v6878 = vpop.f32.mrb[0].mxu0
        %v6879 = vadd.f32 0.0, %v6878
        %v6880 = vpop.f32.mrb[0].mxu0
        %v6881 = vpop.f32.mrb[0].mxu0
        %v6882 = vadd.f32 0.0, %v6881
        %v6883 = vpop.f32.mrb[0].mxu0
        %6884 = vmatprep.mubr.bf16.mxu0 0
        %6885 = vmatmul.mubr.bf16.gmra.mrb[0].mxu0 %v6809
        %v6886 = vpop.f32.mrb[0].mxu0
        %v6887 = vadd.f32 0.0, %v6886
        %v6888 = vpop.f32.mrb[0].mxu0
        %v6889 = vpop.f32.mrb[0].mxu0
        %v6890 = vadd.f32 0.0, %v6889
        %v6891 = vpop.f32.mrb[0].mxu0
        %6892 = vmatprep.mubr.bf16.mxu0 0
        %6893 = vmatmul.mubr.bf16.gmra.mrb[0].mxu0 %v6812
        %v6894 = vpop.f32.mrb[0].mxu0
        %v6895 = vadd.f32 0.0, %v6894
        %v6896 = vpop.f32.mrb[0].mxu0
        %v6897 = vpop.f32.mrb[0].mxu0
        %v6898 = vadd.f32 0.0, %v6897
        %v6899 = vpop.f32.mrb[0].mxu0
        %6900 = vmatprep.mubr.bf16.mxu0 0
        %6901 = vmatmul.mubr.bf16.gmra.mrb[0].mxu0 %v6815
        %v6902 = vpop.f32.mrb[0].mxu0
        %v6903 = vadd.f32 0.0, %v6902
        %v6904 = vpop.f32.mrb[0].mxu0
        %v6905 = vpop.f32.mrb[0].mxu0
        %v6906 = vadd.f32 0.0, %v6905
        %v6907 = vpop.f32.mrb[0].mxu0
        %6908 = vmatprep.mubr.bf16.mxu0 0
        %6909 = vmatmul.mubr.bf16.gmra.mrb[0].mxu0 %v6818
        %v6910 = vpop.f32.mrb[0].mxu0
        %v6911 = vadd.f32 0.0, %v6910
        %v6912 = vpop.f32.mrb[0].mxu0
        %v6913 = vpop.f32.mrb[0].mxu0
        %v6914 = vadd.f32 0.0, %v6913
        %v6915 = vpop.f32.mrb[0].mxu0
        %6916 = vdwg.mxu0
        %v6917 = vadd.f32 %v5764, %v6855
        %v6918 = vadd.f32 %v5765, %v6858
        %v6919 = vadd.f32 %v5766, %v6863
        %v6920 = vadd.f32 %v5767, %v6866
        %v6921 = vadd.f32 %v5768, %v6871
        %v6922 = vadd.f32 %v5769, %v6874
        %v6923 = vadd.f32 %v5770, %v6879
        %v6924 = vadd.f32 %v5771, %v6882
        %v6925 = vadd.f32 %v5772, %v6887
        %v6926 = vadd.f32 %v5773, %v6890
        %v6927 = vadd.f32 %v5774, %v6895
        %v6928 = vadd.f32 %v5775, %v6898
        %v6929 = vadd.f32 %v5776, %v6903
        %v6930 = vadd.f32 %v5777, %v6906
        %v6931 = vadd.f32 %v5778, %v6911
        %v6932 = vadd.f32 %v5779, %v6914
        %6933 = vrot.lane.b32.xlu0 %v1205, 48
        %v6934 = vpop.permute.xlu0 %6933
        %6935 = vrot.lane.b32.xlu0 %v1213, 48
        %v6936 = vpop.permute.xlu0 %6935
        %v6938 = vsel %vm1231, %v6934, 0
        %v6941 = vsel %vm1231, %v6936, 0
        %6943 = vmatprep.subr.bf16.mxu0 0
        %6944 = vmatpush1.bf16.xpose.msra.mxu0 %v6941
        %6945 = vmatprep.subr.bf16.mxu0 0
        %6946 = vmatpush1.bf16.xpose.msra.mxu0 0
        %6947 = vmatprep.subr.bf16.mxu0 0
        %6948 = vmatpush1.bf16.xpose.msra.mxu0 0
        %6949 = vmatprep.subr.bf16.mxu0 0
        %6950 = vmatpush1.bf16.xpose.msra.mxu0 0
        %6951 = vmatprep.subr.bf16.mxu0 0
        %6952 = vmatpush1.bf16.xpose.msra.mxu0 0
        %6953 = vmatprep.subr.bf16.mxu0 0
        %6954 = vmatpush1.bf16.xpose.msra.mxu0 0
        %6955 = vmatprep.subr.bf16.mxu0 0
        %6956 = vmatpush1.bf16.xpose.msra.mxu0 0
        %6957 = vmatprep.subr.bf16.mxu0 0
        %6958 = vmatpush1.bf16.xpose.msra.mxu0 0
        %6959 = vmatprep.subr.bf16.mxu0 0
        %6960 = vmatpush1.bf16.xpose.msra.mxu0 0
        %6961 = vmatprep.subr.bf16.mxu0 0
        %6962 = vmatpush1.bf16.xpose.msra.mxu0 0
        %6963 = vmatprep.subr.bf16.mxu0 0
        %6964 = vmatpush1.bf16.xpose.msra.mxu0 0
        %6965 = vmatprep.subr.bf16.mxu0 0
        %6966 = vmatpush1.bf16.xpose.msra.mxu0 0
        %6967 = vmatprep.subr.bf16.mxu0 0
        %6968 = vmatpush1.bf16.xpose.msra.mxu0 0
        %6969 = vmatprep.subr.bf16.mxu0 0
        %6970 = vmatpush1.bf16.xpose.msra.mxu0 0
        %6971 = vmatprep.subr.bf16.mxu0 0
        %6972 = vmatpush1.bf16.xpose.msra.mxu0 0
        %6973 = vmatprep.subr.bf16.mxu0 0
        %6974 = vmatpush1.bf16.xpose.msra.mxu0 0
        %6975 = vmatprep.mubr.bf16.mxu0 0
        %6976 = vmatmul.mubr.bf16.gmra.mrb[0].mxu0 %v6938
        %v6977 = vpop.f32.mrb[0].mxu0
        %v6978 = vadd.f32 0.0, %v6977
        %v6979 = vpop.f32.mrb[0].mxu0
        %v6980 = vpop.f32.mrb[0].mxu0
        %v6981 = vadd.f32 0.0, %v6980
        %v6982 = vpop.f32.mrb[0].mxu0
        %6983 = vdwg.mxu0
        %6984 = vrot.lane.b32.xlu0 %v1206, 48
        %v6985 = vpop.permute.xlu0 %6984
        %6986 = vrot.lane.b32.xlu0 %v1214, 48
        %v6987 = vpop.permute.xlu0 %6986
        %v6989 = vsel %vm1231, %v6985, 0
        %v6992 = vsel %vm1231, %v6987, 0
        %6994 = vmatprep.subr.bf16.mxu0 0
        %6995 = vmatpush1.bf16.xpose.msra.mxu0 %v6992
        %6996 = vmatprep.subr.bf16.mxu0 0
        %6997 = vmatpush1.bf16.xpose.msra.mxu0 0
        %6998 = vmatprep.subr.bf16.mxu0 0
        %6999 = vmatpush1.bf16.xpose.msra.mxu0 0
        %7000 = vmatprep.subr.bf16.mxu0 0
        %7001 = vmatpush1.bf16.xpose.msra.mxu0 0
        %7002 = vmatprep.subr.bf16.mxu0 0
        %7003 = vmatpush1.bf16.xpose.msra.mxu0 0
        %7004 = vmatprep.subr.bf16.mxu0 0
        %7005 = vmatpush1.bf16.xpose.msra.mxu0 0
        %7006 = vmatprep.subr.bf16.mxu0 0
        %7007 = vmatpush1.bf16.xpose.msra.mxu0 0
        %7008 = vmatprep.subr.bf16.mxu0 0
        %7009 = vmatpush1.bf16.xpose.msra.mxu0 0
        %7010 = vmatprep.subr.bf16.mxu0 0
        %7011 = vmatpush1.bf16.xpose.msra.mxu0 0
        %7012 = vmatprep.subr.bf16.mxu0 0
        %7013 = vmatpush1.bf16.xpose.msra.mxu0 0
        %7014 = vmatprep.subr.bf16.mxu0 0
        %7015 = vmatpush1.bf16.xpose.msra.mxu0 0
        %7016 = vmatprep.subr.bf16.mxu0 0
        %7017 = vmatpush1.bf16.xpose.msra.mxu0 0
        %7018 = vmatprep.subr.bf16.mxu0 0
        %7019 = vmatpush1.bf16.xpose.msra.mxu0 0
        %7020 = vmatprep.subr.bf16.mxu0 0
        %7021 = vmatpush1.bf16.xpose.msra.mxu0 0
        %7022 = vmatprep.subr.bf16.mxu0 0
        %7023 = vmatpush1.bf16.xpose.msra.mxu0 0
        %7024 = vmatprep.subr.bf16.mxu0 0
        %7025 = vmatpush1.bf16.xpose.msra.mxu0 0
        %7026 = vmatprep.mubr.bf16.mxu0 0
        %7027 = vmatmul.mubr.bf16.gmra.mrb[0].mxu0 %v6989
        %v7028 = vpop.f32.mrb[0].mxu0
        %v7029 = vadd.f32 0.0, %v7028
        %v7030 = vpop.f32.mrb[0].mxu0
        %v7031 = vpop.f32.mrb[0].mxu0
        %v7032 = vadd.f32 0.0, %v7031
        %v7033 = vpop.f32.mrb[0].mxu0
        %7034 = vdwg.mxu0
        %7035 = vrot.lane.b32.xlu0 %v1207, 48
        %v7036 = vpop.permute.xlu0 %7035
        %7037 = vrot.lane.b32.xlu0 %v1215, 48
        %v7038 = vpop.permute.xlu0 %7037
        %v7040 = vsel %vm1231, %v7036, 0
        %v7043 = vsel %vm1231, %v7038, 0
        %7045 = vmatprep.subr.bf16.mxu0 0
        %7046 = vmatpush1.bf16.xpose.msra.mxu0 %v7043
        %7047 = vmatprep.subr.bf16.mxu0 0
        %7048 = vmatpush1.bf16.xpose.msra.mxu0 0
        %7049 = vmatprep.subr.bf16.mxu0 0
        %7050 = vmatpush1.bf16.xpose.msra.mxu0 0
        %7051 = vmatprep.subr.bf16.mxu0 0
        %7052 = vmatpush1.bf16.xpose.msra.mxu0 0
        %7053 = vmatprep.subr.bf16.mxu0 0
        %7054 = vmatpush1.bf16.xpose.msra.mxu0 0
        %7055 = vmatprep.subr.bf16.mxu0 0
        %7056 = vmatpush1.bf16.xpose.msra.mxu0 0
        %7057 = vmatprep.subr.bf16.mxu0 0
        %7058 = vmatpush1.bf16.xpose.msra.mxu0 0
        %7059 = vmatprep.subr.bf16.mxu0 0
        %7060 = vmatpush1.bf16.xpose.msra.mxu0 0
        %7061 = vmatprep.subr.bf16.mxu0 0
        %7062 = vmatpush1.bf16.xpose.msra.mxu0 0
        %7063 = vmatprep.subr.bf16.mxu0 0
        %7064 = vmatpush1.bf16.xpose.msra.mxu0 0
        %7065 = vmatprep.subr.bf16.mxu0 0
        %7066 = vmatpush1.bf16.xpose.msra.mxu0 0
        %7067 = vmatprep.subr.bf16.mxu0 0
        %7068 = vmatpush1.bf16.xpose.msra.mxu0 0
        %7069 = vmatprep.subr.bf16.mxu0 0
        %7070 = vmatpush1.bf16.xpose.msra.mxu0 0
        %7071 = vmatprep.subr.bf16.mxu0 0
        %7072 = vmatpush1.bf16.xpose.msra.mxu0 0
        %7073 = vmatprep.subr.bf16.mxu0 0
        %7074 = vmatpush1.bf16.xpose.msra.mxu0 0
        %7075 = vmatprep.subr.bf16.mxu0 0
        %7076 = vmatpush1.bf16.xpose.msra.mxu0 0
        %7077 = vmatprep.mubr.bf16.mxu0 0
        %7078 = vmatmul.mubr.bf16.gmra.mrb[0].mxu0 %v7040
        %v7079 = vpop.f32.mrb[0].mxu0
        %v7080 = vadd.f32 0.0, %v7079
        %v7081 = vpop.f32.mrb[0].mxu0
        %v7082 = vpop.f32.mrb[0].mxu0
        %v7083 = vadd.f32 0.0, %v7082
        %v7084 = vpop.f32.mrb[0].mxu0
        %7085 = vdwg.mxu0
        %7086 = vrot.lane.b32.xlu0 %v1208, 48
        %v7087 = vpop.permute.xlu0 %7086
        %7088 = vrot.lane.b32.xlu0 %v1216, 48
        %v7089 = vpop.permute.xlu0 %7088
        %v7091 = vsel %vm1231, %v7087, 0
        %v7094 = vsel %vm1231, %v7089, 0
        %7096 = vmatprep.subr.bf16.mxu0 0
        %7097 = vmatpush1.bf16.xpose.msra.mxu0 %v7094
        %7098 = vmatprep.subr.bf16.mxu0 0
        %7099 = vmatpush1.bf16.xpose.msra.mxu0 0
        %7100 = vmatprep.subr.bf16.mxu0 0
        %7101 = vmatpush1.bf16.xpose.msra.mxu0 0
        %7102 = vmatprep.subr.bf16.mxu0 0
        %7103 = vmatpush1.bf16.xpose.msra.mxu0 0
        %7104 = vmatprep.subr.bf16.mxu0 0
        %7105 = vmatpush1.bf16.xpose.msra.mxu0 0
        %7106 = vmatprep.subr.bf16.mxu0 0
        %7107 = vmatpush1.bf16.xpose.msra.mxu0 0
        %7108 = vmatprep.subr.bf16.mxu0 0
        %7109 = vmatpush1.bf16.xpose.msra.mxu0 0
        %7110 = vmatprep.subr.bf16.mxu0 0
        %7111 = vmatpush1.bf16.xpose.msra.mxu0 0
        %7112 = vmatprep.subr.bf16.mxu0 0
        %7113 = vmatpush1.bf16.xpose.msra.mxu0 0
        %7114 = vmatprep.subr.bf16.mxu0 0
        %7115 = vmatpush1.bf16.xpose.msra.mxu0 0
        %7116 = vmatprep.subr.bf16.mxu0 0
        %7117 = vmatpush1.bf16.xpose.msra.mxu0 0
        %7118 = vmatprep.subr.bf16.mxu0 0
        %7119 = vmatpush1.bf16.xpose.msra.mxu0 0
        %7120 = vmatprep.subr.bf16.mxu0 0
        %7121 = vmatpush1.bf16.xpose.msra.mxu0 0
        %7122 = vmatprep.subr.bf16.mxu0 0
        %7123 = vmatpush1.bf16.xpose.msra.mxu0 0
        %7124 = vmatprep.subr.bf16.mxu0 0
        %7125 = vmatpush1.bf16.xpose.msra.mxu0 0
        %7126 = vmatprep.subr.bf16.mxu0 0
        %7127 = vmatpush1.bf16.xpose.msra.mxu0 0
        %7128 = vmatprep.mubr.bf16.mxu0 0
        %7129 = vmatmul.mubr.bf16.gmra.mrb[0].mxu0 %v7091
        %v7130 = vpop.f32.mrb[0].mxu0
        %v7131 = vadd.f32 0.0, %v7130
        %v7132 = vpop.f32.mrb[0].mxu0
        %v7133 = vpop.f32.mrb[0].mxu0
        %v7134 = vadd.f32 0.0, %v7133
        %v7135 = vpop.f32.mrb[0].mxu0
        %7136 = vdwg.mxu0
        %7137 = vrot.lane.b32.xlu0 %v1209, 48
        %v7138 = vpop.permute.xlu0 %7137
        %7139 = vrot.lane.b32.xlu0 %v1217, 48
        %v7140 = vpop.permute.xlu0 %7139
        %v7142 = vsel %vm1231, %v7138, 0
        %v7145 = vsel %vm1231, %v7140, 0
        %7147 = vmatprep.subr.bf16.mxu0 0
        %7148 = vmatpush1.bf16.xpose.msra.mxu0 %v7145
        %7149 = vmatprep.subr.bf16.mxu0 0
        %7150 = vmatpush1.bf16.xpose.msra.mxu0 0
        %7151 = vmatprep.subr.bf16.mxu0 0
        %7152 = vmatpush1.bf16.xpose.msra.mxu0 0
        %7153 = vmatprep.subr.bf16.mxu0 0
        %7154 = vmatpush1.bf16.xpose.msra.mxu0 0
        %7155 = vmatprep.subr.bf16.mxu0 0
        %7156 = vmatpush1.bf16.xpose.msra.mxu0 0
        %7157 = vmatprep.subr.bf16.mxu0 0
        %7158 = vmatpush1.bf16.xpose.msra.mxu0 0
        %7159 = vmatprep.subr.bf16.mxu0 0
        %7160 = vmatpush1.bf16.xpose.msra.mxu0 0
        %7161 = vmatprep.subr.bf16.mxu0 0
        %7162 = vmatpush1.bf16.xpose.msra.mxu0 0
        %7163 = vmatprep.subr.bf16.mxu0 0
        %7164 = vmatpush1.bf16.xpose.msra.mxu0 0
        %7165 = vmatprep.subr.bf16.mxu0 0
        %7166 = vmatpush1.bf16.xpose.msra.mxu0 0
        %7167 = vmatprep.subr.bf16.mxu0 0
        %7168 = vmatpush1.bf16.xpose.msra.mxu0 0
        %7169 = vmatprep.subr.bf16.mxu0 0
        %7170 = vmatpush1.bf16.xpose.msra.mxu0 0
        %7171 = vmatprep.subr.bf16.mxu0 0
        %7172 = vmatpush1.bf16.xpose.msra.mxu0 0
        %7173 = vmatprep.subr.bf16.mxu0 0
        %7174 = vmatpush1.bf16.xpose.msra.mxu0 0
        %7175 = vmatprep.subr.bf16.mxu0 0
        %7176 = vmatpush1.bf16.xpose.msra.mxu0 0
        %7177 = vmatprep.subr.bf16.mxu0 0
        %7178 = vmatpush1.bf16.xpose.msra.mxu0 0
        %7179 = vmatprep.mubr.bf16.mxu0 0
        %7180 = vmatmul.mubr.bf16.gmra.mrb[0].mxu0 %v7142
        %v7181 = vpop.f32.mrb[0].mxu0
        %v7182 = vadd.f32 0.0, %v7181
        %v7183 = vpop.f32.mrb[0].mxu0
        %v7184 = vpop.f32.mrb[0].mxu0
        %v7185 = vadd.f32 0.0, %v7184
        %v7186 = vpop.f32.mrb[0].mxu0
        %7187 = vdwg.mxu0
        %7188 = vrot.lane.b32.xlu0 %v1210, 48
        %v7189 = vpop.permute.xlu0 %7188
        %7190 = vrot.lane.b32.xlu0 %v1218, 48
        %v7191 = vpop.permute.xlu0 %7190
        %v7193 = vsel %vm1231, %v7189, 0
        %v7196 = vsel %vm1231, %v7191, 0
        %7198 = vmatprep.subr.bf16.mxu0 0
        %7199 = vmatpush1.bf16.xpose.msra.mxu0 %v7196
        %7200 = vmatprep.subr.bf16.mxu0 0
        %7201 = vmatpush1.bf16.xpose.msra.mxu0 0
        %7202 = vmatprep.subr.bf16.mxu0 0
        %7203 = vmatpush1.bf16.xpose.msra.mxu0 0
        %7204 = vmatprep.subr.bf16.mxu0 0
        %7205 = vmatpush1.bf16.xpose.msra.mxu0 0
        %7206 = vmatprep.subr.bf16.mxu0 0
        %7207 = vmatpush1.bf16.xpose.msra.mxu0 0
        %7208 = vmatprep.subr.bf16.mxu0 0
        %7209 = vmatpush1.bf16.xpose.msra.mxu0 0
        %7210 = vmatprep.subr.bf16.mxu0 0
        %7211 = vmatpush1.bf16.xpose.msra.mxu0 0
        %7212 = vmatprep.subr.bf16.mxu0 0
        %7213 = vmatpush1.bf16.xpose.msra.mxu0 0
        %7214 = vmatprep.subr.bf16.mxu0 0
        %7215 = vmatpush1.bf16.xpose.msra.mxu0 0
        %7216 = vmatprep.subr.bf16.mxu0 0
        %7217 = vmatpush1.bf16.xpose.msra.mxu0 0
        %7218 = vmatprep.subr.bf16.mxu0 0
        %7219 = vmatpush1.bf16.xpose.msra.mxu0 0
        %7220 = vmatprep.subr.bf16.mxu0 0
        %7221 = vmatpush1.bf16.xpose.msra.mxu0 0
        %7222 = vmatprep.subr.bf16.mxu0 0
        %7223 = vmatpush1.bf16.xpose.msra.mxu0 0
        %7224 = vmatprep.subr.bf16.mxu0 0
        %7225 = vmatpush1.bf16.xpose.msra.mxu0 0
        %7226 = vmatprep.subr.bf16.mxu0 0
        %7227 = vmatpush1.bf16.xpose.msra.mxu0 0
        %7228 = vmatprep.subr.bf16.mxu0 0
        %7229 = vmatpush1.bf16.xpose.msra.mxu0 0
        %7230 = vmatprep.mubr.bf16.mxu0 0
        %7231 = vmatmul.mubr.bf16.gmra.mrb[0].mxu0 %v7193
        %v7232 = vpop.f32.mrb[0].mxu0
        %v7233 = vadd.f32 0.0, %v7232
        %v7234 = vpop.f32.mrb[0].mxu0
        %v7235 = vpop.f32.mrb[0].mxu0
        %v7236 = vadd.f32 0.0, %v7235
        %v7237 = vpop.f32.mrb[0].mxu0
        %7238 = vdwg.mxu0
        %7239 = vrot.lane.b32.xlu0 %v1211, 48
        %v7240 = vpop.permute.xlu0 %7239
        %7241 = vrot.lane.b32.xlu0 %v1219, 48
        %v7242 = vpop.permute.xlu0 %7241
        %v7244 = vsel %vm1231, %v7240, 0
        %v7247 = vsel %vm1231, %v7242, 0
        %7249 = vmatprep.subr.bf16.mxu0 0
        %7250 = vmatpush1.bf16.xpose.msra.mxu0 %v7247
        %7251 = vmatprep.subr.bf16.mxu0 0
        %7252 = vmatpush1.bf16.xpose.msra.mxu0 0
        %7253 = vmatprep.subr.bf16.mxu0 0
        %7254 = vmatpush1.bf16.xpose.msra.mxu0 0
        %7255 = vmatprep.subr.bf16.mxu0 0
        %7256 = vmatpush1.bf16.xpose.msra.mxu0 0
        %7257 = vmatprep.subr.bf16.mxu0 0
        %7258 = vmatpush1.bf16.xpose.msra.mxu0 0
        %7259 = vmatprep.subr.bf16.mxu0 0
        %7260 = vmatpush1.bf16.xpose.msra.mxu0 0
        %7261 = vmatprep.subr.bf16.mxu0 0
        %7262 = vmatpush1.bf16.xpose.msra.mxu0 0
        %7263 = vmatprep.subr.bf16.mxu0 0
        %7264 = vmatpush1.bf16.xpose.msra.mxu0 0
        %7265 = vmatprep.subr.bf16.mxu0 0
        %7266 = vmatpush1.bf16.xpose.msra.mxu0 0
        %7267 = vmatprep.subr.bf16.mxu0 0
        %7268 = vmatpush1.bf16.xpose.msra.mxu0 0
        %7269 = vmatprep.subr.bf16.mxu0 0
        %7270 = vmatpush1.bf16.xpose.msra.mxu0 0
        %7271 = vmatprep.subr.bf16.mxu0 0
        %7272 = vmatpush1.bf16.xpose.msra.mxu0 0
        %7273 = vmatprep.subr.bf16.mxu0 0
        %7274 = vmatpush1.bf16.xpose.msra.mxu0 0
        %7275 = vmatprep.subr.bf16.mxu0 0
        %7276 = vmatpush1.bf16.xpose.msra.mxu0 0
        %7277 = vmatprep.subr.bf16.mxu0 0
        %7278 = vmatpush1.bf16.xpose.msra.mxu0 0
        %7279 = vmatprep.subr.bf16.mxu0 0
        %7280 = vmatpush1.bf16.xpose.msra.mxu0 0
        %7281 = vmatprep.mubr.bf16.mxu0 0
        %7282 = vmatmul.mubr.bf16.gmra.mrb[0].mxu0 %v7244
        %v7283 = vpop.f32.mrb[0].mxu0
        %v7284 = vadd.f32 0.0, %v7283
        %v7285 = vpop.f32.mrb[0].mxu0
        %v7286 = vpop.f32.mrb[0].mxu0
        %v7287 = vadd.f32 0.0, %v7286
        %v7288 = vpop.f32.mrb[0].mxu0
        %7289 = vdwg.mxu0
        %7290 = vrot.lane.b32.xlu0 %v1212, 48
        %v7291 = vpop.permute.xlu0 %7290
        %7292 = vrot.lane.b32.xlu0 %v1220, 48
        %v7293 = vpop.permute.xlu0 %7292
        %v7295 = vsel %vm1231, %v7291, 0
        %v7298 = vsel %vm1231, %v7293, 0
        %7300 = vmatprep.subr.bf16.mxu0 0
        %7301 = vmatpush1.bf16.xpose.msra.mxu0 %v7298
        %7302 = vmatprep.subr.bf16.mxu0 0
        %7303 = vmatpush1.bf16.xpose.msra.mxu0 0
        %7304 = vmatprep.subr.bf16.mxu0 0
        %7305 = vmatpush1.bf16.xpose.msra.mxu0 0
        %7306 = vmatprep.subr.bf16.mxu0 0
        %7307 = vmatpush1.bf16.xpose.msra.mxu0 0
        %7308 = vmatprep.subr.bf16.mxu0 0
        %7309 = vmatpush1.bf16.xpose.msra.mxu0 0
        %7310 = vmatprep.subr.bf16.mxu0 0
        %7311 = vmatpush1.bf16.xpose.msra.mxu0 0
        %7312 = vmatprep.subr.bf16.mxu0 0
        %7313 = vmatpush1.bf16.xpose.msra.mxu0 0
        %7314 = vmatprep.subr.bf16.mxu0 0
        %7315 = vmatpush1.bf16.xpose.msra.mxu0 0
        %7316 = vmatprep.subr.bf16.mxu0 0
        %7317 = vmatpush1.bf16.xpose.msra.mxu0 0
        %7318 = vmatprep.subr.bf16.mxu0 0
        %7319 = vmatpush1.bf16.xpose.msra.mxu0 0
        %7320 = vmatprep.subr.bf16.mxu0 0
        %7321 = vmatpush1.bf16.xpose.msra.mxu0 0
        %7322 = vmatprep.subr.bf16.mxu0 0
        %7323 = vmatpush1.bf16.xpose.msra.mxu0 0
        %7324 = vmatprep.subr.bf16.mxu0 0
        %7325 = vmatpush1.bf16.xpose.msra.mxu0 0
        %7326 = vmatprep.subr.bf16.mxu0 0
        %7327 = vmatpush1.bf16.xpose.msra.mxu0 0
        %7328 = vmatprep.subr.bf16.mxu0 0
        %7329 = vmatpush1.bf16.xpose.msra.mxu0 0
        %7330 = vmatprep.subr.bf16.mxu0 0
        %7331 = vmatpush1.bf16.xpose.msra.mxu0 0
        %7332 = vmatprep.mubr.bf16.mxu0 0
        %7333 = vmatmul.mubr.bf16.gmra.mrb[0].mxu0 %v7295
        %v7334 = vpop.f32.mrb[0].mxu0
        %v7335 = vadd.f32 0.0, %v7334
        %v7336 = vpop.f32.mrb[0].mxu0
        %v7337 = vpop.f32.mrb[0].mxu0
        %v7338 = vadd.f32 0.0, %v7337
        %v7339 = vpop.f32.mrb[0].mxu0
        %7340 = vdwg.mxu0
        %v7341 = vmul.f32 %v6978, 0.25
        %v7342 = vmul.f32 %v6981, 0.25
        %v7343 = vmul.f32 %v7029, 0.25
        %v7344 = vmul.f32 %v7032, 0.25
        %v7345 = vmul.f32 %v7080, 0.25
        %v7346 = vmul.f32 %v7083, 0.25
        %v7347 = vmul.f32 %v7131, 0.25
        %v7348 = vmul.f32 %v7134, 0.25
        %v7349 = vmul.f32 %v7182, 0.25
        %v7350 = vmul.f32 %v7185, 0.25
        %v7351 = vmul.f32 %v7233, 0.25
        %v7352 = vmul.f32 %v7236, 0.25
        %v7353 = vmul.f32 %v7284, 0.25
        %v7354 = vmul.f32 %v7287, 0.25
        %v7355 = vmul.f32 %v7335, 0.25
        %v7356 = vmul.f32 %v7338, 0.25
        %v7357 = vadd.f32 %v7341, %v1229
        %v7358 = vadd.f32 %v7342, %v1230
        %v7359 = vadd.f32 %v7343, %v1229
        %v7360 = vadd.f32 %v7344, %v1230
        %v7361 = vadd.f32 %v7345, %v1229
        %v7362 = vadd.f32 %v7346, %v1230
        %v7363 = vadd.f32 %v7347, %v1229
        %v7364 = vadd.f32 %v7348, %v1230
        %v7365 = vadd.f32 %v7349, %v1229
        %v7366 = vadd.f32 %v7350, %v1230
        %v7367 = vadd.f32 %v7351, %v1229
        %v7368 = vadd.f32 %v7352, %v1230
        %v7369 = vadd.f32 %v7353, %v1229
        %v7370 = vadd.f32 %v7354, %v1230
        %v7371 = vadd.f32 %v7355, %v1229
        %v7372 = vadd.f32 %v7356, %v1230
        %v7373 = vsel %vm1231, %v7357, -inf
        %7374 = vmax.xlane.f32.xlu0 %v7373
        %v7375 = vpop.xlane.xlu0 %7374
        %v7376 = vsel %vm1231, %v7358, -inf
        %7377 = vmax.xlane.f32.xlu0 %v7376
        %v7378 = vpop.xlane.xlu0 %7377
        %v7379 = vsel %vm1231, %v7359, -inf
        %7380 = vmax.xlane.f32.xlu0 %v7379
        %v7381 = vpop.xlane.xlu0 %7380
        %v7382 = vsel %vm1231, %v7360, -inf
        %7383 = vmax.xlane.f32.xlu0 %v7382
        %v7384 = vpop.xlane.xlu0 %7383
        %v7385 = vsel %vm1231, %v7361, -inf
        %7386 = vmax.xlane.f32.xlu0 %v7385
        %v7387 = vpop.xlane.xlu0 %7386
        %v7388 = vsel %vm1231, %v7362, -inf
        %7389 = vmax.xlane.f32.xlu0 %v7388
        %v7390 = vpop.xlane.xlu0 %7389
        %v7391 = vsel %vm1231, %v7363, -inf
        %7392 = vmax.xlane.f32.xlu0 %v7391
        %v7393 = vpop.xlane.xlu0 %7392
        %v7394 = vsel %vm1231, %v7364, -inf
        %7395 = vmax.xlane.f32.xlu0 %v7394
        %v7396 = vpop.xlane.xlu0 %7395
        %v7397 = vsel %vm1231, %v7365, -inf
        %7398 = vmax.xlane.f32.xlu0 %v7397
        %v7399 = vpop.xlane.xlu0 %7398
        %v7400 = vsel %vm1231, %v7366, -inf
        %7401 = vmax.xlane.f32.xlu0 %v7400
        %v7402 = vpop.xlane.xlu0 %7401
        %v7403 = vsel %vm1231, %v7367, -inf
        %7404 = vmax.xlane.f32.xlu0 %v7403
        %v7405 = vpop.xlane.xlu0 %7404
        %v7406 = vsel %vm1231, %v7368, -inf
        %7407 = vmax.xlane.f32.xlu0 %v7406
        %v7408 = vpop.xlane.xlu0 %7407
        %v7409 = vsel %vm1231, %v7369, -inf
        %7410 = vmax.xlane.f32.xlu0 %v7409
        %v7411 = vpop.xlane.xlu0 %7410
        %v7412 = vsel %vm1231, %v7370, -inf
        %7413 = vmax.xlane.f32.xlu0 %v7412
        %v7414 = vpop.xlane.xlu0 %7413
        %v7415 = vsel %vm1231, %v7371, -inf
        %7416 = vmax.xlane.f32.xlu0 %v7415
        %v7417 = vpop.xlane.xlu0 %7416
        %v7418 = vsel %vm1231, %v7372, -inf
        %7419 = vmax.xlane.f32.xlu0 %v7418
        %v7420 = vpop.xlane.xlu0 %7419
        %v7421 = vsub.f32 %v7357, %v7375
        %v7422 = vsub.f32 %v7358, %v7378
        %v7423 = vsub.f32 %v7359, %v7381
        %v7424 = vsub.f32 %v7360, %v7384
        %v7425 = vsub.f32 %v7361, %v7387
        %v7426 = vsub.f32 %v7362, %v7390
        %v7427 = vsub.f32 %v7363, %v7393
        %v7428 = vsub.f32 %v7364, %v7396
        %v7429 = vsub.f32 %v7365, %v7399
        %v7430 = vsub.f32 %v7366, %v7402
        %v7431 = vsub.f32 %v7367, %v7405
        %v7432 = vsub.f32 %v7368, %v7408
        %v7433 = vsub.f32 %v7369, %v7411
        %v7434 = vsub.f32 %v7370, %v7414
        %v7435 = vsub.f32 %v7371, %v7417
        %v7436 = vsub.f32 %v7372, %v7420
        %v7437 = vmul.f32 %v7421, 1.442695
        %v7438 = vpow.pop %v7437
        %v7439 = vmul.f32 %v7422, 1.442695
        %v7440 = vpow.pop %v7439
        %v7441 = vmul.f32 %v7423, 1.442695
        %v7442 = vpow.pop %v7441
        %v7443 = vmul.f32 %v7424, 1.442695
        %v7444 = vpow.pop %v7443
        %v7445 = vmul.f32 %v7425, 1.442695
        %v7446 = vpow.pop %v7445
        %v7447 = vmul.f32 %v7426, 1.442695
        %v7448 = vpow.pop %v7447
        %v7449 = vmul.f32 %v7427, 1.442695
        %v7450 = vpow.pop %v7449
        %v7451 = vmul.f32 %v7428, 1.442695
        %v7452 = vpow.pop %v7451
        %v7453 = vmul.f32 %v7429, 1.442695
        %v7454 = vpow.pop %v7453
        %v7455 = vmul.f32 %v7430, 1.442695
        %v7456 = vpow.pop %v7455
        %v7457 = vmul.f32 %v7431, 1.442695
        %v7458 = vpow.pop %v7457
        %v7459 = vmul.f32 %v7432, 1.442695
        %v7460 = vpow.pop %v7459
        %v7461 = vmul.f32 %v7433, 1.442695
        %v7462 = vpow.pop %v7461
        %v7463 = vmul.f32 %v7434, 1.442695
        %v7464 = vpow.pop %v7463
        %v7465 = vmul.f32 %v7435, 1.442695
        %v7466 = vpow.pop %v7465
        %v7467 = vmul.f32 %v7436, 1.442695
        %v7468 = vpow.pop %v7467
        %v7469 = vsel %vm1231, %v7438, 0.0
        %7470 = vadd.xlane.f32.xlu0 %v7469
        %v7471 = vpop.xlane.xlu0 %7470
        %v7472 = vsel %vm1231, %v7440, 0.0
        %7473 = vadd.xlane.f32.xlu0 %v7472
        %v7474 = vpop.xlane.xlu0 %7473
        %v7475 = vsel %vm1231, %v7442, 0.0
        %7476 = vadd.xlane.f32.xlu0 %v7475
        %v7477 = vpop.xlane.xlu0 %7476
        %v7478 = vsel %vm1231, %v7444, 0.0
        %7479 = vadd.xlane.f32.xlu0 %v7478
        %v7480 = vpop.xlane.xlu0 %7479
        %v7481 = vsel %vm1231, %v7446, 0.0
        %7482 = vadd.xlane.f32.xlu0 %v7481
        %v7483 = vpop.xlane.xlu0 %7482
        %v7484 = vsel %vm1231, %v7448, 0.0
        %7485 = vadd.xlane.f32.xlu0 %v7484
        %v7486 = vpop.xlane.xlu0 %7485
        %v7487 = vsel %vm1231, %v7450, 0.0
        %7488 = vadd.xlane.f32.xlu0 %v7487
        %v7489 = vpop.xlane.xlu0 %7488
        %v7490 = vsel %vm1231, %v7452, 0.0
        %7491 = vadd.xlane.f32.xlu0 %v7490
        %v7492 = vpop.xlane.xlu0 %7491
        %v7493 = vsel %vm1231, %v7454, 0.0
        %7494 = vadd.xlane.f32.xlu0 %v7493
        %v7495 = vpop.xlane.xlu0 %7494
        %v7496 = vsel %vm1231, %v7456, 0.0
        %7497 = vadd.xlane.f32.xlu0 %v7496
        %v7498 = vpop.xlane.xlu0 %7497
        %v7499 = vsel %vm1231, %v7458, 0.0
        %7500 = vadd.xlane.f32.xlu0 %v7499
        %v7501 = vpop.xlane.xlu0 %7500
        %v7502 = vsel %vm1231, %v7460, 0.0
        %7503 = vadd.xlane.f32.xlu0 %v7502
        %v7504 = vpop.xlane.xlu0 %7503
        %v7505 = vsel %vm1231, %v7462, 0.0
        %7506 = vadd.xlane.f32.xlu0 %v7505
        %v7507 = vpop.xlane.xlu0 %7506
        %v7508 = vsel %vm1231, %v7464, 0.0
        %7509 = vadd.xlane.f32.xlu0 %v7508
        %v7510 = vpop.xlane.xlu0 %7509
        %v7511 = vsel %vm1231, %v7466, 0.0
        %7512 = vadd.xlane.f32.xlu0 %v7511
        %v7513 = vpop.xlane.xlu0 %7512
        %v7514 = vsel %vm1231, %v7468, 0.0
        %7515 = vadd.xlane.f32.xlu0 %v7514
        %v7516 = vpop.xlane.xlu0 %7515
        %v7517 = vrcp.pop %v7471
        %v7518 = vrcp.pop %v7474
        %v7519 = vrcp.pop %v7477
        %v7520 = vrcp.pop %v7480
        %v7521 = vrcp.pop %v7483
        %v7522 = vrcp.pop %v7486
        %v7523 = vrcp.pop %v7489
        %v7524 = vrcp.pop %v7492
        %v7525 = vrcp.pop %v7495
        %v7526 = vrcp.pop %v7498
        %v7527 = vrcp.pop %v7501
        %v7528 = vrcp.pop %v7504
        %v7529 = vrcp.pop %v7507
        %v7530 = vrcp.pop %v7510
        %v7531 = vrcp.pop %v7513
        %v7532 = vrcp.pop %v7516
        %v7533 = vmul.f32 %v7438, %v7517
        %v7534 = vmul.f32 %v7440, %v7518
        %v7535 = vmul.f32 %v7442, %v7519
        %v7536 = vmul.f32 %v7444, %v7520
        %v7537 = vmul.f32 %v7446, %v7521
        %v7538 = vmul.f32 %v7448, %v7522
        %v7539 = vmul.f32 %v7450, %v7523
        %v7540 = vmul.f32 %v7452, %v7524
        %v7541 = vmul.f32 %v7454, %v7525
        %v7542 = vmul.f32 %v7456, %v7526
        %v7543 = vmul.f32 %v7458, %v7527
        %v7544 = vmul.f32 %v7460, %v7528
        %v7545 = vmul.f32 %v7462, %v7529
        %v7546 = vmul.f32 %v7464, %v7530
        %v7547 = vmul.f32 %v7466, %v7531
        %v7548 = vmul.f32 %v7468, %v7532
        %v7549 = vpack.c.bf16 %v7534, %v7533
        %v7550 = vpack.c.bf16 %v7536, %v7535
        %v7551 = vpack.c.bf16 %v7538, %v7537
        %v7552 = vpack.c.bf16 %v7540, %v7539
        %v7553 = vpack.c.bf16 %v7542, %v7541
        %v7554 = vpack.c.bf16 %v7544, %v7543
        %v7555 = vpack.c.bf16 %v7546, %v7545
        %v7556 = vpack.c.bf16 %v7548, %v7547
        %7557 = vrot.lane.b32.xlu0 %v1221, 48
        %v7558 = vpop.permute.xlu0 %7557
        %v7561 = vsel %vm1231, %v7549, 0
        %7563 = vmatprep.subr.bf16.mxu0 0
        %7564 = vmatpush1.bf16.msra.mxu0 %v7558
        %7565 = vmatprep.subr.bf16.mxu0 0
        %7566 = vmatpush1.bf16.msra.mxu0 0
        %7567 = vmatprep.subr.bf16.mxu0 0
        %7568 = vmatpush1.bf16.msra.mxu0 0
        %7569 = vmatprep.subr.bf16.mxu0 0
        %7570 = vmatpush1.bf16.msra.mxu0 0
        %7571 = vmatprep.subr.bf16.mxu0 0
        %7572 = vmatpush1.bf16.msra.mxu0 0
        %7573 = vmatprep.subr.bf16.mxu0 0
        %7574 = vmatpush1.bf16.msra.mxu0 0
        %7575 = vmatprep.subr.bf16.mxu0 0
        %7576 = vmatpush1.bf16.msra.mxu0 0
        %7577 = vmatprep.subr.bf16.mxu0 0
        %7578 = vmatpush1.bf16.msra.mxu0 0
        %7579 = vmatprep.subr.bf16.mxu0 0
        %7580 = vmatpush1.bf16.msra.mxu0 0
        %7581 = vmatprep.subr.bf16.mxu0 0
        %7582 = vmatpush1.bf16.msra.mxu0 0
        %7583 = vmatprep.subr.bf16.mxu0 0
        %7584 = vmatpush1.bf16.msra.mxu0 0
        %7585 = vmatprep.subr.bf16.mxu0 0
        %7586 = vmatpush1.bf16.msra.mxu0 0
        %7587 = vmatprep.subr.bf16.mxu0 0
        %7588 = vmatpush1.bf16.msra.mxu0 0
        %7589 = vmatprep.subr.bf16.mxu0 0
        %7590 = vmatpush1.bf16.msra.mxu0 0
        %7591 = vmatprep.subr.bf16.mxu0 0
        %7592 = vmatpush1.bf16.msra.mxu0 0
        %7593 = vmatprep.subr.bf16.mxu0 0
        %7594 = vmatpush1.bf16.msra.mxu0 0
        %7595 = vmatprep.mubr.bf16.mxu0 0
        %7596 = vmatmul.mubr.bf16.gmra.mrb[0].mxu0 %v7561
        %v7597 = vpop.f32.mrb[0].mxu0
        %v7598 = vadd.f32 0.0, %v7597
        %v7599 = vpop.f32.mrb[0].mxu0
        %v7600 = vpop.f32.mrb[0].mxu0
        %v7601 = vadd.f32 0.0, %v7600
        %v7602 = vpop.f32.mrb[0].mxu0
        %7603 = vdwg.mxu0
        %7604 = vrot.lane.b32.xlu0 %v1222, 48
        %v7605 = vpop.permute.xlu0 %7604
        %v7608 = vsel %vm1231, %v7550, 0
        %7610 = vmatprep.subr.bf16.mxu0 0
        %7611 = vmatpush1.bf16.msra.mxu0 %v7605
        %7612 = vmatprep.subr.bf16.mxu0 0
        %7613 = vmatpush1.bf16.msra.mxu0 0
        %7614 = vmatprep.subr.bf16.mxu0 0
        %7615 = vmatpush1.bf16.msra.mxu0 0
        %7616 = vmatprep.subr.bf16.mxu0 0
        %7617 = vmatpush1.bf16.msra.mxu0 0
        %7618 = vmatprep.subr.bf16.mxu0 0
        %7619 = vmatpush1.bf16.msra.mxu0 0
        %7620 = vmatprep.subr.bf16.mxu0 0
        %7621 = vmatpush1.bf16.msra.mxu0 0
        %7622 = vmatprep.subr.bf16.mxu0 0
        %7623 = vmatpush1.bf16.msra.mxu0 0
        %7624 = vmatprep.subr.bf16.mxu0 0
        %7625 = vmatpush1.bf16.msra.mxu0 0
        %7626 = vmatprep.subr.bf16.mxu0 0
        %7627 = vmatpush1.bf16.msra.mxu0 0
        %7628 = vmatprep.subr.bf16.mxu0 0
        %7629 = vmatpush1.bf16.msra.mxu0 0
        %7630 = vmatprep.subr.bf16.mxu0 0
        %7631 = vmatpush1.bf16.msra.mxu0 0
        %7632 = vmatprep.subr.bf16.mxu0 0
        %7633 = vmatpush1.bf16.msra.mxu0 0
        %7634 = vmatprep.subr.bf16.mxu0 0
        %7635 = vmatpush1.bf16.msra.mxu0 0
        %7636 = vmatprep.subr.bf16.mxu0 0
        %7637 = vmatpush1.bf16.msra.mxu0 0
        %7638 = vmatprep.subr.bf16.mxu0 0
        %7639 = vmatpush1.bf16.msra.mxu0 0
        %7640 = vmatprep.subr.bf16.mxu0 0
        %7641 = vmatpush1.bf16.msra.mxu0 0
        %7642 = vmatprep.mubr.bf16.mxu0 0
        %7643 = vmatmul.mubr.bf16.gmra.mrb[0].mxu0 %v7608
        %v7644 = vpop.f32.mrb[0].mxu0
        %v7645 = vadd.f32 0.0, %v7644
        %v7646 = vpop.f32.mrb[0].mxu0
        %v7647 = vpop.f32.mrb[0].mxu0
        %v7648 = vadd.f32 0.0, %v7647
        %v7649 = vpop.f32.mrb[0].mxu0
        %7650 = vdwg.mxu0
        %7651 = vrot.lane.b32.xlu0 %v1223, 48
        %v7652 = vpop.permute.xlu0 %7651
        %v7655 = vsel %vm1231, %v7551, 0
        %7657 = vmatprep.subr.bf16.mxu0 0
        %7658 = vmatpush1.bf16.msra.mxu0 %v7652
        %7659 = vmatprep.subr.bf16.mxu0 0
        %7660 = vmatpush1.bf16.msra.mxu0 0
        %7661 = vmatprep.subr.bf16.mxu0 0
        %7662 = vmatpush1.bf16.msra.mxu0 0
        %7663 = vmatprep.subr.bf16.mxu0 0
        %7664 = vmatpush1.bf16.msra.mxu0 0
        %7665 = vmatprep.subr.bf16.mxu0 0
        %7666 = vmatpush1.bf16.msra.mxu0 0
        %7667 = vmatprep.subr.bf16.mxu0 0
        %7668 = vmatpush1.bf16.msra.mxu0 0
        %7669 = vmatprep.subr.bf16.mxu0 0
        %7670 = vmatpush1.bf16.msra.mxu0 0
        %7671 = vmatprep.subr.bf16.mxu0 0
        %7672 = vmatpush1.bf16.msra.mxu0 0
        %7673 = vmatprep.subr.bf16.mxu0 0
        %7674 = vmatpush1.bf16.msra.mxu0 0
        %7675 = vmatprep.subr.bf16.mxu0 0
        %7676 = vmatpush1.bf16.msra.mxu0 0
        %7677 = vmatprep.subr.bf16.mxu0 0
        %7678 = vmatpush1.bf16.msra.mxu0 0
        %7679 = vmatprep.subr.bf16.mxu0 0
        %7680 = vmatpush1.bf16.msra.mxu0 0
        %7681 = vmatprep.subr.bf16.mxu0 0
        %7682 = vmatpush1.bf16.msra.mxu0 0
        %7683 = vmatprep.subr.bf16.mxu0 0
        %7684 = vmatpush1.bf16.msra.mxu0 0
        %7685 = vmatprep.subr.bf16.mxu0 0
        %7686 = vmatpush1.bf16.msra.mxu0 0
        %7687 = vmatprep.subr.bf16.mxu0 0
        %7688 = vmatpush1.bf16.msra.mxu0 0
        %7689 = vmatprep.mubr.bf16.mxu0 0
        %7690 = vmatmul.mubr.bf16.gmra.mrb[0].mxu0 %v7655
        %v7691 = vpop.f32.mrb[0].mxu0
        %v7692 = vadd.f32 0.0, %v7691
        %v7693 = vpop.f32.mrb[0].mxu0
        %v7694 = vpop.f32.mrb[0].mxu0
        %v7695 = vadd.f32 0.0, %v7694
        %v7696 = vpop.f32.mrb[0].mxu0
        %7697 = vdwg.mxu0
        %7698 = vrot.lane.b32.xlu0 %v1224, 48
        %v7699 = vpop.permute.xlu0 %7698
        %v7702 = vsel %vm1231, %v7552, 0
        %7704 = vmatprep.subr.bf16.mxu0 0
        %7705 = vmatpush1.bf16.msra.mxu0 %v7699
        %7706 = vmatprep.subr.bf16.mxu0 0
        %7707 = vmatpush1.bf16.msra.mxu0 0
        %7708 = vmatprep.subr.bf16.mxu0 0
        %7709 = vmatpush1.bf16.msra.mxu0 0
        %7710 = vmatprep.subr.bf16.mxu0 0
        %7711 = vmatpush1.bf16.msra.mxu0 0
        %7712 = vmatprep.subr.bf16.mxu0 0
        %7713 = vmatpush1.bf16.msra.mxu0 0
        %7714 = vmatprep.subr.bf16.mxu0 0
        %7715 = vmatpush1.bf16.msra.mxu0 0
        %7716 = vmatprep.subr.bf16.mxu0 0
        %7717 = vmatpush1.bf16.msra.mxu0 0
        %7718 = vmatprep.subr.bf16.mxu0 0
        %7719 = vmatpush1.bf16.msra.mxu0 0
        %7720 = vmatprep.subr.bf16.mxu0 0
        %7721 = vmatpush1.bf16.msra.mxu0 0
        %7722 = vmatprep.subr.bf16.mxu0 0
        %7723 = vmatpush1.bf16.msra.mxu0 0
        %7724 = vmatprep.subr.bf16.mxu0 0
        %7725 = vmatpush1.bf16.msra.mxu0 0
        %7726 = vmatprep.subr.bf16.mxu0 0
        %7727 = vmatpush1.bf16.msra.mxu0 0
        %7728 = vmatprep.subr.bf16.mxu0 0
        %7729 = vmatpush1.bf16.msra.mxu0 0
        %7730 = vmatprep.subr.bf16.mxu0 0
        %7731 = vmatpush1.bf16.msra.mxu0 0
        %7732 = vmatprep.subr.bf16.mxu0 0
        %7733 = vmatpush1.bf16.msra.mxu0 0
        %7734 = vmatprep.subr.bf16.mxu0 0
        %7735 = vmatpush1.bf16.msra.mxu0 0
        %7736 = vmatprep.mubr.bf16.mxu0 0
        %7737 = vmatmul.mubr.bf16.gmra.mrb[0].mxu0 %v7702
        %v7738 = vpop.f32.mrb[0].mxu0
        %v7739 = vadd.f32 0.0, %v7738
        %v7740 = vpop.f32.mrb[0].mxu0
        %v7741 = vpop.f32.mrb[0].mxu0
        %v7742 = vadd.f32 0.0, %v7741
        %v7743 = vpop.f32.mrb[0].mxu0
        %7744 = vdwg.mxu0
        %7745 = vrot.lane.b32.xlu0 %v1225, 48
        %v7746 = vpop.permute.xlu0 %7745
        %v7749 = vsel %vm1231, %v7553, 0
        %7751 = vmatprep.subr.bf16.mxu0 0
        %7752 = vmatpush1.bf16.msra.mxu0 %v7746
        %7753 = vmatprep.subr.bf16.mxu0 0
        %7754 = vmatpush1.bf16.msra.mxu0 0
        %7755 = vmatprep.subr.bf16.mxu0 0
        %7756 = vmatpush1.bf16.msra.mxu0 0
        %7757 = vmatprep.subr.bf16.mxu0 0
        %7758 = vmatpush1.bf16.msra.mxu0 0
        %7759 = vmatprep.subr.bf16.mxu0 0
        %7760 = vmatpush1.bf16.msra.mxu0 0
        %7761 = vmatprep.subr.bf16.mxu0 0
        %7762 = vmatpush1.bf16.msra.mxu0 0
        %7763 = vmatprep.subr.bf16.mxu0 0
        %7764 = vmatpush1.bf16.msra.mxu0 0
        %7765 = vmatprep.subr.bf16.mxu0 0
        %7766 = vmatpush1.bf16.msra.mxu0 0
        %7767 = vmatprep.subr.bf16.mxu0 0
        %7768 = vmatpush1.bf16.msra.mxu0 0
        %7769 = vmatprep.subr.bf16.mxu0 0
        %7770 = vmatpush1.bf16.msra.mxu0 0
        %7771 = vmatprep.subr.bf16.mxu0 0
        %7772 = vmatpush1.bf16.msra.mxu0 0
        %7773 = vmatprep.subr.bf16.mxu0 0
        %7774 = vmatpush1.bf16.msra.mxu0 0
        %7775 = vmatprep.subr.bf16.mxu0 0
        %7776 = vmatpush1.bf16.msra.mxu0 0
        %7777 = vmatprep.subr.bf16.mxu0 0
        %7778 = vmatpush1.bf16.msra.mxu0 0
        %7779 = vmatprep.subr.bf16.mxu0 0
        %7780 = vmatpush1.bf16.msra.mxu0 0
        %7781 = vmatprep.subr.bf16.mxu0 0
        %7782 = vmatpush1.bf16.msra.mxu0 0
        %7783 = vmatprep.mubr.bf16.mxu0 0
        %7784 = vmatmul.mubr.bf16.gmra.mrb[0].mxu0 %v7749
        %v7785 = vpop.f32.mrb[0].mxu0
        %v7786 = vadd.f32 0.0, %v7785
        %v7787 = vpop.f32.mrb[0].mxu0
        %v7788 = vpop.f32.mrb[0].mxu0
        %v7789 = vadd.f32 0.0, %v7788
        %v7790 = vpop.f32.mrb[0].mxu0
        %7791 = vdwg.mxu0
        %7792 = vrot.lane.b32.xlu0 %v1226, 48
        %v7793 = vpop.permute.xlu0 %7792
        %v7796 = vsel %vm1231, %v7554, 0
        %7798 = vmatprep.subr.bf16.mxu0 0
        %7799 = vmatpush1.bf16.msra.mxu0 %v7793
        %7800 = vmatprep.subr.bf16.mxu0 0
        %7801 = vmatpush1.bf16.msra.mxu0 0
        %7802 = vmatprep.subr.bf16.mxu0 0
        %7803 = vmatpush1.bf16.msra.mxu0 0
        %7804 = vmatprep.subr.bf16.mxu0 0
        %7805 = vmatpush1.bf16.msra.mxu0 0
        %7806 = vmatprep.subr.bf16.mxu0 0
        %7807 = vmatpush1.bf16.msra.mxu0 0
        %7808 = vmatprep.subr.bf16.mxu0 0
        %7809 = vmatpush1.bf16.msra.mxu0 0
        %7810 = vmatprep.subr.bf16.mxu0 0
        %7811 = vmatpush1.bf16.msra.mxu0 0
        %7812 = vmatprep.subr.bf16.mxu0 0
        %7813 = vmatpush1.bf16.msra.mxu0 0
        %7814 = vmatprep.subr.bf16.mxu0 0
        %7815 = vmatpush1.bf16.msra.mxu0 0
        %7816 = vmatprep.subr.bf16.mxu0 0
        %7817 = vmatpush1.bf16.msra.mxu0 0
        %7818 = vmatprep.subr.bf16.mxu0 0
        %7819 = vmatpush1.bf16.msra.mxu0 0
        %7820 = vmatprep.subr.bf16.mxu0 0
        %7821 = vmatpush1.bf16.msra.mxu0 0
        %7822 = vmatprep.subr.bf16.mxu0 0
        %7823 = vmatpush1.bf16.msra.mxu0 0
        %7824 = vmatprep.subr.bf16.mxu0 0
        %7825 = vmatpush1.bf16.msra.mxu0 0
        %7826 = vmatprep.subr.bf16.mxu0 0
        %7827 = vmatpush1.bf16.msra.mxu0 0
        %7828 = vmatprep.subr.bf16.mxu0 0
        %7829 = vmatpush1.bf16.msra.mxu0 0
        %7830 = vmatprep.mubr.bf16.mxu0 0
        %7831 = vmatmul.mubr.bf16.gmra.mrb[0].mxu0 %v7796
        %v7832 = vpop.f32.mrb[0].mxu0
        %v7833 = vadd.f32 0.0, %v7832
        %v7834 = vpop.f32.mrb[0].mxu0
        %v7835 = vpop.f32.mrb[0].mxu0
        %v7836 = vadd.f32 0.0, %v7835
        %v7837 = vpop.f32.mrb[0].mxu0
        %7838 = vdwg.mxu0
        %7839 = vrot.lane.b32.xlu0 %v1227, 48
        %v7840 = vpop.permute.xlu0 %7839
        %v7843 = vsel %vm1231, %v7555, 0
        %7845 = vmatprep.subr.bf16.mxu0 0
        %7846 = vmatpush1.bf16.msra.mxu0 %v7840
        %7847 = vmatprep.subr.bf16.mxu0 0
        %7848 = vmatpush1.bf16.msra.mxu0 0
        %7849 = vmatprep.subr.bf16.mxu0 0
        %7850 = vmatpush1.bf16.msra.mxu0 0
        %7851 = vmatprep.subr.bf16.mxu0 0
        %7852 = vmatpush1.bf16.msra.mxu0 0
        %7853 = vmatprep.subr.bf16.mxu0 0
        %7854 = vmatpush1.bf16.msra.mxu0 0
        %7855 = vmatprep.subr.bf16.mxu0 0
        %7856 = vmatpush1.bf16.msra.mxu0 0
        %7857 = vmatprep.subr.bf16.mxu0 0
        %7858 = vmatpush1.bf16.msra.mxu0 0
        %7859 = vmatprep.subr.bf16.mxu0 0
        %7860 = vmatpush1.bf16.msra.mxu0 0
        %7861 = vmatprep.subr.bf16.mxu0 0
        %7862 = vmatpush1.bf16.msra.mxu0 0
        %7863 = vmatprep.subr.bf16.mxu0 0
        %7864 = vmatpush1.bf16.msra.mxu0 0
        %7865 = vmatprep.subr.bf16.mxu0 0
        %7866 = vmatpush1.bf16.msra.mxu0 0
        %7867 = vmatprep.subr.bf16.mxu0 0
        %7868 = vmatpush1.bf16.msra.mxu0 0
        %7869 = vmatprep.subr.bf16.mxu0 0
        %7870 = vmatpush1.bf16.msra.mxu0 0
        %7871 = vmatprep.subr.bf16.mxu0 0
        %7872 = vmatpush1.bf16.msra.mxu0 0
        %7873 = vmatprep.subr.bf16.mxu0 0
        %7874 = vmatpush1.bf16.msra.mxu0 0
        %7875 = vmatprep.subr.bf16.mxu0 0
        %7876 = vmatpush1.bf16.msra.mxu0 0
        %7877 = vmatprep.mubr.bf16.mxu0 0
        %7878 = vmatmul.mubr.bf16.gmra.mrb[0].mxu0 %v7843
        %v7879 = vpop.f32.mrb[0].mxu0
        %v7880 = vadd.f32 0.0, %v7879
        %v7881 = vpop.f32.mrb[0].mxu0
        %v7882 = vpop.f32.mrb[0].mxu0
        %v7883 = vadd.f32 0.0, %v7882
        %v7884 = vpop.f32.mrb[0].mxu0
        %7885 = vdwg.mxu0
        %7886 = vrot.lane.b32.xlu0 %v1228, 48
        %v7887 = vpop.permute.xlu0 %7886
        %v7890 = vsel %vm1231, %v7556, 0
        %7892 = vmatprep.subr.bf16.mxu0 0
        %7893 = vmatpush1.bf16.msra.mxu0 %v7887
        %7894 = vmatprep.subr.bf16.mxu0 0
        %7895 = vmatpush1.bf16.msra.mxu0 0
        %7896 = vmatprep.subr.bf16.mxu0 0
        %7897 = vmatpush1.bf16.msra.mxu0 0
        %7898 = vmatprep.subr.bf16.mxu0 0
        %7899 = vmatpush1.bf16.msra.mxu0 0
        %7900 = vmatprep.subr.bf16.mxu0 0
        %7901 = vmatpush1.bf16.msra.mxu0 0
        %7902 = vmatprep.subr.bf16.mxu0 0
        %7903 = vmatpush1.bf16.msra.mxu0 0
        %7904 = vmatprep.subr.bf16.mxu0 0
        %7905 = vmatpush1.bf16.msra.mxu0 0
        %7906 = vmatprep.subr.bf16.mxu0 0
        %7907 = vmatpush1.bf16.msra.mxu0 0
        %7908 = vmatprep.subr.bf16.mxu0 0
        %7909 = vmatpush1.bf16.msra.mxu0 0
        %7910 = vmatprep.subr.bf16.mxu0 0
        %7911 = vmatpush1.bf16.msra.mxu0 0
        %7912 = vmatprep.subr.bf16.mxu0 0
        %7913 = vmatpush1.bf16.msra.mxu0 0
        %7914 = vmatprep.subr.bf16.mxu0 0
        %7915 = vmatpush1.bf16.msra.mxu0 0
        %7916 = vmatprep.subr.bf16.mxu0 0
        %7917 = vmatpush1.bf16.msra.mxu0 0
        %7918 = vmatprep.subr.bf16.mxu0 0
        %7919 = vmatpush1.bf16.msra.mxu0 0
        %7920 = vmatprep.subr.bf16.mxu0 0
        %7921 = vmatpush1.bf16.msra.mxu0 0
        %7922 = vmatprep.subr.bf16.mxu0 0
        %7923 = vmatpush1.bf16.msra.mxu0 0
        %7924 = vmatprep.mubr.bf16.mxu0 0
        %7925 = vmatmul.mubr.bf16.gmra.mrb[0].mxu0 %v7890
        %v7926 = vpop.f32.mrb[0].mxu0
        %v7927 = vadd.f32 0.0, %v7926
        %v7928 = vpop.f32.mrb[0].mxu0
        %v7929 = vpop.f32.mrb[0].mxu0
        %v7930 = vadd.f32 0.0, %v7929
        %v7931 = vpop.f32.mrb[0].mxu0
        %7932 = vdwg.mxu0
        %v7933 = vpack.c.bf16 %v7601, %v7598
        %v7934 = vpack.c.bf16 %v7648, %v7645
        %v7935 = vpack.c.bf16 %v7695, %v7692
        %v7936 = vpack.c.bf16 %v7742, %v7739
        %v7937 = vpack.c.bf16 %v7789, %v7786
        %v7938 = vpack.c.bf16 %v7836, %v7833
        %v7939 = vpack.c.bf16 %v7883, %v7880
        %v7940 = vpack.c.bf16 %v7930, %v7927
        %v7941 = vld [vmem:[#allocation17 + $0x28] sm:$0xf]
        %v7942 = vld [vmem:[#allocation17 + $0x2c] sm:$0xf]
        %v7945 = vunpack.c.l.b16 %v7941
        %v7946 = vunpack.c.l.b16 %v7942
        %v7947 = vpack.c.b16 %v7946, %v7945
        %v7950 = vsel %vm1231, %v7933, 0
        %v7953 = vsel %vm1231, %v7934, 0
        %v7956 = vsel %vm1231, %v7935, 0
        %v7959 = vsel %vm1231, %v7936, 0
        %v7962 = vsel %vm1231, %v7937, 0
        %v7965 = vsel %vm1231, %v7938, 0
        %v7968 = vsel %vm1231, %v7939, 0
        %v7971 = vsel %vm1231, %v7940, 0
        %7973 = vmatprep.subr.bf16.mxu0 0
        %7974 = vmatpush1.bf16.msra.mxu0 %v7947
        %7975 = vmatprep.subr.bf16.mxu0 0
        %7976 = vmatpush1.bf16.msra.mxu0 0
        %7977 = vmatprep.subr.bf16.mxu0 0
        %7978 = vmatpush1.bf16.msra.mxu0 0
        %7979 = vmatprep.subr.bf16.mxu0 0
        %7980 = vmatpush1.bf16.msra.mxu0 0
        %7981 = vmatprep.subr.bf16.mxu0 0
        %7982 = vmatpush1.bf16.msra.mxu0 0
        %7983 = vmatprep.subr.bf16.mxu0 0
        %7984 = vmatpush1.bf16.msra.mxu0 0
        %7985 = vmatprep.subr.bf16.mxu0 0
        %7986 = vmatpush1.bf16.msra.mxu0 0
        %7987 = vmatprep.subr.bf16.mxu0 0
        %7988 = vmatpush1.bf16.msra.mxu0 0
        %7989 = vmatprep.subr.bf16.mxu0 0
        %7990 = vmatpush1.bf16.msra.mxu0 0
        %7991 = vmatprep.subr.bf16.mxu0 0
        %7992 = vmatpush1.bf16.msra.mxu0 0
        %7993 = vmatprep.subr.bf16.mxu0 0
        %7994 = vmatpush1.bf16.msra.mxu0 0
        %7995 = vmatprep.subr.bf16.mxu0 0
        %7996 = vmatpush1.bf16.msra.mxu0 0
        %7997 = vmatprep.subr.bf16.mxu0 0
        %7998 = vmatpush1.bf16.msra.mxu0 0
        %7999 = vmatprep.subr.bf16.mxu0 0
        %8000 = vmatpush1.bf16.msra.mxu0 0
        %8001 = vmatprep.subr.bf16.mxu0 0
        %8002 = vmatpush1.bf16.msra.mxu0 0
        %8003 = vmatprep.subr.bf16.mxu0 0
        %8004 = vmatpush1.bf16.msra.mxu0 0
        %8005 = vmatprep.mubr.bf16.mxu0 0
        %8006 = vmatmul.mubr.bf16.gmra.mrb[0].mxu0 %v7950
        %v8007 = vpop.f32.mrb[0].mxu0
        %v8008 = vadd.f32 0.0, %v8007
        %v8009 = vpop.f32.mrb[0].mxu0
        %v8010 = vpop.f32.mrb[0].mxu0
        %v8011 = vadd.f32 0.0, %v8010
        %v8012 = vpop.f32.mrb[0].mxu0
        %8013 = vmatprep.mubr.bf16.mxu0 0
        %8014 = vmatmul.mubr.bf16.gmra.mrb[0].mxu0 %v7953
        %v8015 = vpop.f32.mrb[0].mxu0
        %v8016 = vadd.f32 0.0, %v8015
        %v8017 = vpop.f32.mrb[0].mxu0
        %v8018 = vpop.f32.mrb[0].mxu0
        %v8019 = vadd.f32 0.0, %v8018
        %v8020 = vpop.f32.mrb[0].mxu0
        %8021 = vmatprep.mubr.bf16.mxu0 0
        %8022 = vmatmul.mubr.bf16.gmra.mrb[0].mxu0 %v7956
        %v8023 = vpop.f32.mrb[0].mxu0
        %v8024 = vadd.f32 0.0, %v8023
        %v8025 = vpop.f32.mrb[0].mxu0
        %v8026 = vpop.f32.mrb[0].mxu0
        %v8027 = vadd.f32 0.0, %v8026
        %v8028 = vpop.f32.mrb[0].mxu0
        %8029 = vmatprep.mubr.bf16.mxu0 0
        %8030 = vmatmul.mubr.bf16.gmra.mrb[0].mxu0 %v7959
        %v8031 = vpop.f32.mrb[0].mxu0
        %v8032 = vadd.f32 0.0, %v8031
        %v8033 = vpop.f32.mrb[0].mxu0
        %v8034 = vpop.f32.mrb[0].mxu0
        %v8035 = vadd.f32 0.0, %v8034
        %v8036 = vpop.f32.mrb[0].mxu0
        %8037 = vmatprep.mubr.bf16.mxu0 0
        %8038 = vmatmul.mubr.bf16.gmra.mrb[0].mxu0 %v7962
        %v8039 = vpop.f32.mrb[0].mxu0
        %v8040 = vadd.f32 0.0, %v8039
        %v8041 = vpop.f32.mrb[0].mxu0
        %v8042 = vpop.f32.mrb[0].mxu0
        %v8043 = vadd.f32 0.0, %v8042
        %v8044 = vpop.f32.mrb[0].mxu0
        %8045 = vmatprep.mubr.bf16.mxu0 0
        %8046 = vmatmul.mubr.bf16.gmra.mrb[0].mxu0 %v7965
        %v8047 = vpop.f32.mrb[0].mxu0
        %v8048 = vadd.f32 0.0, %v8047
        %v8049 = vpop.f32.mrb[0].mxu0
        %v8050 = vpop.f32.mrb[0].mxu0
        %v8051 = vadd.f32 0.0, %v8050
        %v8052 = vpop.f32.mrb[0].mxu0
        %8053 = vmatprep.mubr.bf16.mxu0 0
        %8054 = vmatmul.mubr.bf16.gmra.mrb[0].mxu0 %v7968
        %v8055 = vpop.f32.mrb[0].mxu0
        %v8056 = vadd.f32 0.0, %v8055
        %v8057 = vpop.f32.mrb[0].mxu0
        %v8058 = vpop.f32.mrb[0].mxu0
        %v8059 = vadd.f32 0.0, %v8058
        %v8060 = vpop.f32.mrb[0].mxu0
        %8061 = vmatprep.mubr.bf16.mxu0 0
        %8062 = vmatmul.mubr.bf16.gmra.mrb[0].mxu0 %v7971
        %v8063 = vpop.f32.mrb[0].mxu0
        %v8064 = vadd.f32 0.0, %v8063
        %v8065 = vpop.f32.mrb[0].mxu0
        %v8066 = vpop.f32.mrb[0].mxu0
        %v8067 = vadd.f32 0.0, %v8066
        %v8068 = vpop.f32.mrb[0].mxu0
        %8069 = vdwg.mxu0
        %v8070 = vadd.f32 %v6917, %v8008
        %v8071 = vadd.f32 %v6918, %v8011
        %v8072 = vadd.f32 %v6919, %v8016
        %v8073 = vadd.f32 %v6920, %v8019
        %v8074 = vadd.f32 %v6921, %v8024
        %v8075 = vadd.f32 %v6922, %v8027
        %v8076 = vadd.f32 %v6923, %v8032
        %v8077 = vadd.f32 %v6924, %v8035
        %v8078 = vadd.f32 %v6925, %v8040
        %v8079 = vadd.f32 %v6926, %v8043
        %v8080 = vadd.f32 %v6927, %v8048
        %v8081 = vadd.f32 %v6928, %v8051
        %v8082 = vadd.f32 %v6929, %v8056
        %v8083 = vadd.f32 %v6930, %v8059
        %v8084 = vadd.f32 %v6931, %v8064
        %v8085 = vadd.f32 %v6932, %v8067
        %8086 = vrot.lane.b32.xlu0 %v1205, 32
        %v8087 = vpop.permute.xlu0 %8086
        %8088 = vrot.lane.b32.xlu0 %v1213, 32
        %v8089 = vpop.permute.xlu0 %8088
        %v8091 = vsel %vm1231, %v8087, 0
        %v8094 = vsel %vm1231, %v8089, 0
        %8096 = vmatprep.subr.bf16.mxu0 0
        %8097 = vmatpush1.bf16.xpose.msra.mxu0 %v8094
        %8098 = vmatprep.subr.bf16.mxu0 0
        %8099 = vmatpush1.bf16.xpose.msra.mxu0 0
        %8100 = vmatprep.subr.bf16.mxu0 0
        %8101 = vmatpush1.bf16.xpose.msra.mxu0 0
        %8102 = vmatprep.subr.bf16.mxu0 0
        %8103 = vmatpush1.bf16.xpose.msra.mxu0 0
        %8104 = vmatprep.subr.bf16.mxu0 0
        %8105 = vmatpush1.bf16.xpose.msra.mxu0 0
        %8106 = vmatprep.subr.bf16.mxu0 0
        %8107 = vmatpush1.bf16.xpose.msra.mxu0 0
        %8108 = vmatprep.subr.bf16.mxu0 0
        %8109 = vmatpush1.bf16.xpose.msra.mxu0 0
        %8110 = vmatprep.subr.bf16.mxu0 0
        %8111 = vmatpush1.bf16.xpose.msra.mxu0 0
        %8112 = vmatprep.subr.bf16.mxu0 0
        %8113 = vmatpush1.bf16.xpose.msra.mxu0 0
        %8114 = vmatprep.subr.bf16.mxu0 0
        %8115 = vmatpush1.bf16.xpose.msra.mxu0 0
        %8116 = vmatprep.subr.bf16.mxu0 0
        %8117 = vmatpush1.bf16.xpose.msra.mxu0 0
        %8118 = vmatprep.subr.bf16.mxu0 0
        %8119 = vmatpush1.bf16.xpose.msra.mxu0 0
        %8120 = vmatprep.subr.bf16.mxu0 0
        %8121 = vmatpush1.bf16.xpose.msra.mxu0 0
        %8122 = vmatprep.subr.bf16.mxu0 0
        %8123 = vmatpush1.bf16.xpose.msra.mxu0 0
        %8124 = vmatprep.subr.bf16.mxu0 0
        %8125 = vmatpush1.bf16.xpose.msra.mxu0 0
        %8126 = vmatprep.subr.bf16.mxu0 0
        %8127 = vmatpush1.bf16.xpose.msra.mxu0 0
        %8128 = vmatprep.mubr.bf16.mxu0 0
        %8129 = vmatmul.mubr.bf16.gmra.mrb[0].mxu0 %v8091
        %v8130 = vpop.f32.mrb[0].mxu0
        %v8131 = vadd.f32 0.0, %v8130
        %v8132 = vpop.f32.mrb[0].mxu0
        %v8133 = vpop.f32.mrb[0].mxu0
        %v8134 = vadd.f32 0.0, %v8133
        %v8135 = vpop.f32.mrb[0].mxu0
        %8136 = vdwg.mxu0
        %8137 = vrot.lane.b32.xlu0 %v1206, 32
        %v8138 = vpop.permute.xlu0 %8137
        %8139 = vrot.lane.b32.xlu0 %v1214, 32
        %v8140 = vpop.permute.xlu0 %8139
        %v8142 = vsel %vm1231, %v8138, 0
        %v8145 = vsel %vm1231, %v8140, 0
        %8147 = vmatprep.subr.bf16.mxu0 0
        %8148 = vmatpush1.bf16.xpose.msra.mxu0 %v8145
        %8149 = vmatprep.subr.bf16.mxu0 0
        %8150 = vmatpush1.bf16.xpose.msra.mxu0 0
        %8151 = vmatprep.subr.bf16.mxu0 0
        %8152 = vmatpush1.bf16.xpose.msra.mxu0 0
        %8153 = vmatprep.subr.bf16.mxu0 0
        %8154 = vmatpush1.bf16.xpose.msra.mxu0 0
        %8155 = vmatprep.subr.bf16.mxu0 0
        %8156 = vmatpush1.bf16.xpose.msra.mxu0 0
        %8157 = vmatprep.subr.bf16.mxu0 0
        %8158 = vmatpush1.bf16.xpose.msra.mxu0 0
        %8159 = vmatprep.subr.bf16.mxu0 0
        %8160 = vmatpush1.bf16.xpose.msra.mxu0 0
        %8161 = vmatprep.subr.bf16.mxu0 0
        %8162 = vmatpush1.bf16.xpose.msra.mxu0 0
        %8163 = vmatprep.subr.bf16.mxu0 0
        %8164 = vmatpush1.bf16.xpose.msra.mxu0 0
        %8165 = vmatprep.subr.bf16.mxu0 0
        %8166 = vmatpush1.bf16.xpose.msra.mxu0 0
        %8167 = vmatprep.subr.bf16.mxu0 0
        %8168 = vmatpush1.bf16.xpose.msra.mxu0 0
        %8169 = vmatprep.subr.bf16.mxu0 0
        %8170 = vmatpush1.bf16.xpose.msra.mxu0 0
        %8171 = vmatprep.subr.bf16.mxu0 0
        %8172 = vmatpush1.bf16.xpose.msra.mxu0 0
        %8173 = vmatprep.subr.bf16.mxu0 0
        %8174 = vmatpush1.bf16.xpose.msra.mxu0 0
        %8175 = vmatprep.subr.bf16.mxu0 0
        %8176 = vmatpush1.bf16.xpose.msra.mxu0 0
        %8177 = vmatprep.subr.bf16.mxu0 0
        %8178 = vmatpush1.bf16.xpose.msra.mxu0 0
        %8179 = vmatprep.mubr.bf16.mxu0 0
        %8180 = vmatmul.mubr.bf16.gmra.mrb[0].mxu0 %v8142
        %v8181 = vpop.f32.mrb[0].mxu0
        %v8182 = vadd.f32 0.0, %v8181
        %v8183 = vpop.f32.mrb[0].mxu0
        %v8184 = vpop.f32.mrb[0].mxu0
        %v8185 = vadd.f32 0.0, %v8184
        %v8186 = vpop.f32.mrb[0].mxu0
        %8187 = vdwg.mxu0
        %8188 = vrot.lane.b32.xlu0 %v1207, 32
        %v8189 = vpop.permute.xlu0 %8188
        %8190 = vrot.lane.b32.xlu0 %v1215, 32
        %v8191 = vpop.permute.xlu0 %8190
        %v8193 = vsel %vm1231, %v8189, 0
        %v8196 = vsel %vm1231, %v8191, 0
        %8198 = vmatprep.subr.bf16.mxu0 0
        %8199 = vmatpush1.bf16.xpose.msra.mxu0 %v8196
        %8200 = vmatprep.subr.bf16.mxu0 0
        %8201 = vmatpush1.bf16.xpose.msra.mxu0 0
        %8202 = vmatprep.subr.bf16.mxu0 0
        %8203 = vmatpush1.bf16.xpose.msra.mxu0 0
        %8204 = vmatprep.subr.bf16.mxu0 0
        %8205 = vmatpush1.bf16.xpose.msra.mxu0 0
        %8206 = vmatprep.subr.bf16.mxu0 0
        %8207 = vmatpush1.bf16.xpose.msra.mxu0 0
        %8208 = vmatprep.subr.bf16.mxu0 0
        %8209 = vmatpush1.bf16.xpose.msra.mxu0 0
        %8210 = vmatprep.subr.bf16.mxu0 0
        %8211 = vmatpush1.bf16.xpose.msra.mxu0 0
        %8212 = vmatprep.subr.bf16.mxu0 0
        %8213 = vmatpush1.bf16.xpose.msra.mxu0 0
        %8214 = vmatprep.subr.bf16.mxu0 0
        %8215 = vmatpush1.bf16.xpose.msra.mxu0 0
        %8216 = vmatprep.subr.bf16.mxu0 0
        %8217 = vmatpush1.bf16.xpose.msra.mxu0 0
        %8218 = vmatprep.subr.bf16.mxu0 0
        %8219 = vmatpush1.bf16.xpose.msra.mxu0 0
        %8220 = vmatprep.subr.bf16.mxu0 0
        %8221 = vmatpush1.bf16.xpose.msra.mxu0 0
        %8222 = vmatprep.subr.bf16.mxu0 0
        %8223 = vmatpush1.bf16.xpose.msra.mxu0 0
        %8224 = vmatprep.subr.bf16.mxu0 0
        %8225 = vmatpush1.bf16.xpose.msra.mxu0 0
        %8226 = vmatprep.subr.bf16.mxu0 0
        %8227 = vmatpush1.bf16.xpose.msra.mxu0 0
        %8228 = vmatprep.subr.bf16.mxu0 0
        %8229 = vmatpush1.bf16.xpose.msra.mxu0 0
        %8230 = vmatprep.mubr.bf16.mxu0 0
        %8231 = vmatmul.mubr.bf16.gmra.mrb[0].mxu0 %v8193
        %v8232 = vpop.f32.mrb[0].mxu0
        %v8233 = vadd.f32 0.0, %v8232
        %v8234 = vpop.f32.mrb[0].mxu0
        %v8235 = vpop.f32.mrb[0].mxu0
        %v8236 = vadd.f32 0.0, %v8235
        %v8237 = vpop.f32.mrb[0].mxu0
        %8238 = vdwg.mxu0
        %8239 = vrot.lane.b32.xlu0 %v1208, 32
        %v8240 = vpop.permute.xlu0 %8239
        %8241 = vrot.lane.b32.xlu0 %v1216, 32
        %v8242 = vpop.permute.xlu0 %8241
        %v8244 = vsel %vm1231, %v8240, 0
        %v8247 = vsel %vm1231, %v8242, 0
        %8249 = vmatprep.subr.bf16.mxu0 0
        %8250 = vmatpush1.bf16.xpose.msra.mxu0 %v8247
        %8251 = vmatprep.subr.bf16.mxu0 0
        %8252 = vmatpush1.bf16.xpose.msra.mxu0 0
        %8253 = vmatprep.subr.bf16.mxu0 0
        %8254 = vmatpush1.bf16.xpose.msra.mxu0 0
        %8255 = vmatprep.subr.bf16.mxu0 0
        %8256 = vmatpush1.bf16.xpose.msra.mxu0 0
        %8257 = vmatprep.subr.bf16.mxu0 0
        %8258 = vmatpush1.bf16.xpose.msra.mxu0 0
        %8259 = vmatprep.subr.bf16.mxu0 0
        %8260 = vmatpush1.bf16.xpose.msra.mxu0 0
        %8261 = vmatprep.subr.bf16.mxu0 0
        %8262 = vmatpush1.bf16.xpose.msra.mxu0 0
        %8263 = vmatprep.subr.bf16.mxu0 0
        %8264 = vmatpush1.bf16.xpose.msra.mxu0 0
        %8265 = vmatprep.subr.bf16.mxu0 0
        %8266 = vmatpush1.bf16.xpose.msra.mxu0 0
        %8267 = vmatprep.subr.bf16.mxu0 0
        %8268 = vmatpush1.bf16.xpose.msra.mxu0 0
        %8269 = vmatprep.subr.bf16.mxu0 0
        %8270 = vmatpush1.bf16.xpose.msra.mxu0 0
        %8271 = vmatprep.subr.bf16.mxu0 0
        %8272 = vmatpush1.bf16.xpose.msra.mxu0 0
        %8273 = vmatprep.subr.bf16.mxu0 0
        %8274 = vmatpush1.bf16.xpose.msra.mxu0 0
        %8275 = vmatprep.subr.bf16.mxu0 0
        %8276 = vmatpush1.bf16.xpose.msra.mxu0 0
        %8277 = vmatprep.subr.bf16.mxu0 0
        %8278 = vmatpush1.bf16.xpose.msra.mxu0 0
        %8279 = vmatprep.subr.bf16.mxu0 0
        %8280 = vmatpush1.bf16.xpose.msra.mxu0 0
        %8281 = vmatprep.mubr.bf16.mxu0 0
        %8282 = vmatmul.mubr.bf16.gmra.mrb[0].mxu0 %v8244
        %v8283 = vpop.f32.mrb[0].mxu0
        %v8284 = vadd.f32 0.0, %v8283
        %v8285 = vpop.f32.mrb[0].mxu0
        %v8286 = vpop.f32.mrb[0].mxu0
        %v8287 = vadd.f32 0.0, %v8286
        %v8288 = vpop.f32.mrb[0].mxu0
        %8289 = vdwg.mxu0
        %8290 = vrot.lane.b32.xlu0 %v1209, 32
        %v8291 = vpop.permute.xlu0 %8290
        %8292 = vrot.lane.b32.xlu0 %v1217, 32
        %v8293 = vpop.permute.xlu0 %8292
        %v8295 = vsel %vm1231, %v8291, 0
        %v8298 = vsel %vm1231, %v8293, 0
        %8300 = vmatprep.subr.bf16.mxu0 0
        %8301 = vmatpush1.bf16.xpose.msra.mxu0 %v8298
        %8302 = vmatprep.subr.bf16.mxu0 0
        %8303 = vmatpush1.bf16.xpose.msra.mxu0 0
        %8304 = vmatprep.subr.bf16.mxu0 0
        %8305 = vmatpush1.bf16.xpose.msra.mxu0 0
        %8306 = vmatprep.subr.bf16.mxu0 0
        %8307 = vmatpush1.bf16.xpose.msra.mxu0 0
        %8308 = vmatprep.subr.bf16.mxu0 0
        %8309 = vmatpush1.bf16.xpose.msra.mxu0 0
        %8310 = vmatprep.subr.bf16.mxu0 0
        %8311 = vmatpush1.bf16.xpose.msra.mxu0 0
        %8312 = vmatprep.subr.bf16.mxu0 0
        %8313 = vmatpush1.bf16.xpose.msra.mxu0 0
        %8314 = vmatprep.subr.bf16.mxu0 0
        %8315 = vmatpush1.bf16.xpose.msra.mxu0 0
        %8316 = vmatprep.subr.bf16.mxu0 0
        %8317 = vmatpush1.bf16.xpose.msra.mxu0 0
        %8318 = vmatprep.subr.bf16.mxu0 0
        %8319 = vmatpush1.bf16.xpose.msra.mxu0 0
        %8320 = vmatprep.subr.bf16.mxu0 0
        %8321 = vmatpush1.bf16.xpose.msra.mxu0 0
        %8322 = vmatprep.subr.bf16.mxu0 0
        %8323 = vmatpush1.bf16.xpose.msra.mxu0 0
        %8324 = vmatprep.subr.bf16.mxu0 0
        %8325 = vmatpush1.bf16.xpose.msra.mxu0 0
        %8326 = vmatprep.subr.bf16.mxu0 0
        %8327 = vmatpush1.bf16.xpose.msra.mxu0 0
        %8328 = vmatprep.subr.bf16.mxu0 0
        %8329 = vmatpush1.bf16.xpose.msra.mxu0 0
        %8330 = vmatprep.subr.bf16.mxu0 0
        %8331 = vmatpush1.bf16.xpose.msra.mxu0 0
        %8332 = vmatprep.mubr.bf16.mxu0 0
        %8333 = vmatmul.mubr.bf16.gmra.mrb[0].mxu0 %v8295
        %v8334 = vpop.f32.mrb[0].mxu0
        %v8335 = vadd.f32 0.0, %v8334
        %v8336 = vpop.f32.mrb[0].mxu0
        %v8337 = vpop.f32.mrb[0].mxu0
        %v8338 = vadd.f32 0.0, %v8337
        %v8339 = vpop.f32.mrb[0].mxu0
        %8340 = vdwg.mxu0
        %8341 = vrot.lane.b32.xlu0 %v1210, 32
        %v8342 = vpop.permute.xlu0 %8341
        %8343 = vrot.lane.b32.xlu0 %v1218, 32
        %v8344 = vpop.permute.xlu0 %8343
        %v8346 = vsel %vm1231, %v8342, 0
        %v8349 = vsel %vm1231, %v8344, 0
        %8351 = vmatprep.subr.bf16.mxu0 0
        %8352 = vmatpush1.bf16.xpose.msra.mxu0 %v8349
        %8353 = vmatprep.subr.bf16.mxu0 0
        %8354 = vmatpush1.bf16.xpose.msra.mxu0 0
        %8355 = vmatprep.subr.bf16.mxu0 0
        %8356 = vmatpush1.bf16.xpose.msra.mxu0 0
        %8357 = vmatprep.subr.bf16.mxu0 0
        %8358 = vmatpush1.bf16.xpose.msra.mxu0 0
        %8359 = vmatprep.subr.bf16.mxu0 0
        %8360 = vmatpush1.bf16.xpose.msra.mxu0 0
        %8361 = vmatprep.subr.bf16.mxu0 0
        %8362 = vmatpush1.bf16.xpose.msra.mxu0 0
        %8363 = vmatprep.subr.bf16.mxu0 0
        %8364 = vmatpush1.bf16.xpose.msra.mxu0 0
        %8365 = vmatprep.subr.bf16.mxu0 0
        %8366 = vmatpush1.bf16.xpose.msra.mxu0 0
        %8367 = vmatprep.subr.bf16.mxu0 0
        %8368 = vmatpush1.bf16.xpose.msra.mxu0 0
        %8369 = vmatprep.subr.bf16.mxu0 0
        %8370 = vmatpush1.bf16.xpose.msra.mxu0 0
        %8371 = vmatprep.subr.bf16.mxu0 0
        %8372 = vmatpush1.bf16.xpose.msra.mxu0 0
        %8373 = vmatprep.subr.bf16.mxu0 0
        %8374 = vmatpush1.bf16.xpose.msra.mxu0 0
        %8375 = vmatprep.subr.bf16.mxu0 0
        %8376 = vmatpush1.bf16.xpose.msra.mxu0 0
        %8377 = vmatprep.subr.bf16.mxu0 0
        %8378 = vmatpush1.bf16.xpose.msra.mxu0 0
        %8379 = vmatprep.subr.bf16.mxu0 0
        %8380 = vmatpush1.bf16.xpose.msra.mxu0 0
        %8381 = vmatprep.subr.bf16.mxu0 0
        %8382 = vmatpush1.bf16.xpose.msra.mxu0 0
        %8383 = vmatprep.mubr.bf16.mxu0 0
        %8384 = vmatmul.mubr.bf16.gmra.mrb[0].mxu0 %v8346
        %v8385 = vpop.f32.mrb[0].mxu0
        %v8386 = vadd.f32 0.0, %v8385
        %v8387 = vpop.f32.mrb[0].mxu0
        %v8388 = vpop.f32.mrb[0].mxu0
        %v8389 = vadd.f32 0.0, %v8388
        %v8390 = vpop.f32.mrb[0].mxu0
        %8391 = vdwg.mxu0
        %8392 = vrot.lane.b32.xlu0 %v1211, 32
        %v8393 = vpop.permute.xlu0 %8392
        %8394 = vrot.lane.b32.xlu0 %v1219, 32
        %v8395 = vpop.permute.xlu0 %8394
        %v8397 = vsel %vm1231, %v8393, 0
        %v8400 = vsel %vm1231, %v8395, 0
        %8402 = vmatprep.subr.bf16.mxu0 0
        %8403 = vmatpush1.bf16.xpose.msra.mxu0 %v8400
        %8404 = vmatprep.subr.bf16.mxu0 0
        %8405 = vmatpush1.bf16.xpose.msra.mxu0 0
        %8406 = vmatprep.subr.bf16.mxu0 0
        %8407 = vmatpush1.bf16.xpose.msra.mxu0 0
        %8408 = vmatprep.subr.bf16.mxu0 0
        %8409 = vmatpush1.bf16.xpose.msra.mxu0 0
        %8410 = vmatprep.subr.bf16.mxu0 0
        %8411 = vmatpush1.bf16.xpose.msra.mxu0 0
        %8412 = vmatprep.subr.bf16.mxu0 0
        %8413 = vmatpush1.bf16.xpose.msra.mxu0 0
        %8414 = vmatprep.subr.bf16.mxu0 0
        %8415 = vmatpush1.bf16.xpose.msra.mxu0 0
        %8416 = vmatprep.subr.bf16.mxu0 0
        %8417 = vmatpush1.bf16.xpose.msra.mxu0 0
        %8418 = vmatprep.subr.bf16.mxu0 0
        %8419 = vmatpush1.bf16.xpose.msra.mxu0 0
        %8420 = vmatprep.subr.bf16.mxu0 0
        %8421 = vmatpush1.bf16.xpose.msra.mxu0 0
        %8422 = vmatprep.subr.bf16.mxu0 0
        %8423 = vmatpush1.bf16.xpose.msra.mxu0 0
        %8424 = vmatprep.subr.bf16.mxu0 0
        %8425 = vmatpush1.bf16.xpose.msra.mxu0 0
        %8426 = vmatprep.subr.bf16.mxu0 0
        %8427 = vmatpush1.bf16.xpose.msra.mxu0 0
        %8428 = vmatprep.subr.bf16.mxu0 0
        %8429 = vmatpush1.bf16.xpose.msra.mxu0 0
        %8430 = vmatprep.subr.bf16.mxu0 0
        %8431 = vmatpush1.bf16.xpose.msra.mxu0 0
        %8432 = vmatprep.subr.bf16.mxu0 0
        %8433 = vmatpush1.bf16.xpose.msra.mxu0 0
        %8434 = vmatprep.mubr.bf16.mxu0 0
        %8435 = vmatmul.mubr.bf16.gmra.mrb[0].mxu0 %v8397
        %v8436 = vpop.f32.mrb[0].mxu0
        %v8437 = vadd.f32 0.0, %v8436
        %v8438 = vpop.f32.mrb[0].mxu0
        %v8439 = vpop.f32.mrb[0].mxu0
        %v8440 = vadd.f32 0.0, %v8439
        %v8441 = vpop.f32.mrb[0].mxu0
        %8442 = vdwg.mxu0
        %8443 = vrot.lane.b32.xlu0 %v1212, 32
        %v8444 = vpop.permute.xlu0 %8443
        %8445 = vrot.lane.b32.xlu0 %v1220, 32
        %v8446 = vpop.permute.xlu0 %8445
        %v8448 = vsel %vm1231, %v8444, 0
        %v8451 = vsel %vm1231, %v8446, 0
        %8453 = vmatprep.subr.bf16.mxu0 0
        %8454 = vmatpush1.bf16.xpose.msra.mxu0 %v8451
        %8455 = vmatprep.subr.bf16.mxu0 0
        %8456 = vmatpush1.bf16.xpose.msra.mxu0 0
        %8457 = vmatprep.subr.bf16.mxu0 0
        %8458 = vmatpush1.bf16.xpose.msra.mxu0 0
        %8459 = vmatprep.subr.bf16.mxu0 0
        %8460 = vmatpush1.bf16.xpose.msra.mxu0 0
        %8461 = vmatprep.subr.bf16.mxu0 0
        %8462 = vmatpush1.bf16.xpose.msra.mxu0 0
        %8463 = vmatprep.subr.bf16.mxu0 0
        %8464 = vmatpush1.bf16.xpose.msra.mxu0 0
        %8465 = vmatprep.subr.bf16.mxu0 0
        %8466 = vmatpush1.bf16.xpose.msra.mxu0 0
        %8467 = vmatprep.subr.bf16.mxu0 0
        %8468 = vmatpush1.bf16.xpose.msra.mxu0 0
        %8469 = vmatprep.subr.bf16.mxu0 0
        %8470 = vmatpush1.bf16.xpose.msra.mxu0 0
        %8471 = vmatprep.subr.bf16.mxu0 0
        %8472 = vmatpush1.bf16.xpose.msra.mxu0 0
        %8473 = vmatprep.subr.bf16.mxu0 0
        %8474 = vmatpush1.bf16.xpose.msra.mxu0 0
        %8475 = vmatprep.subr.bf16.mxu0 0
        %8476 = vmatpush1.bf16.xpose.msra.mxu0 0
        %8477 = vmatprep.subr.bf16.mxu0 0
        %8478 = vmatpush1.bf16.xpose.msra.mxu0 0
        %8479 = vmatprep.subr.bf16.mxu0 0
        %8480 = vmatpush1.bf16.xpose.msra.mxu0 0
        %8481 = vmatprep.subr.bf16.mxu0 0
        %8482 = vmatpush1.bf16.xpose.msra.mxu0 0
        %8483 = vmatprep.subr.bf16.mxu0 0
        %8484 = vmatpush1.bf16.xpose.msra.mxu0 0
        %8485 = vmatprep.mubr.bf16.mxu0 0
        %8486 = vmatmul.mubr.bf16.gmra.mrb[0].mxu0 %v8448
        %v8487 = vpop.f32.mrb[0].mxu0
        %v8488 = vadd.f32 0.0, %v8487
        %v8489 = vpop.f32.mrb[0].mxu0
        %v8490 = vpop.f32.mrb[0].mxu0
        %v8491 = vadd.f32 0.0, %v8490
        %v8492 = vpop.f32.mrb[0].mxu0
        %8493 = vdwg.mxu0
        %v8494 = vmul.f32 %v8131, 0.25
        %v8495 = vmul.f32 %v8134, 0.25
        %v8496 = vmul.f32 %v8182, 0.25
        %v8497 = vmul.f32 %v8185, 0.25
        %v8498 = vmul.f32 %v8233, 0.25
        %v8499 = vmul.f32 %v8236, 0.25
        %v8500 = vmul.f32 %v8284, 0.25
        %v8501 = vmul.f32 %v8287, 0.25
        %v8502 = vmul.f32 %v8335, 0.25
        %v8503 = vmul.f32 %v8338, 0.25
        %v8504 = vmul.f32 %v8386, 0.25
        %v8505 = vmul.f32 %v8389, 0.25
        %v8506 = vmul.f32 %v8437, 0.25
        %v8507 = vmul.f32 %v8440, 0.25
        %v8508 = vmul.f32 %v8488, 0.25
        %v8509 = vmul.f32 %v8491, 0.25
        %v8510 = vadd.f32 %v8494, %v1229
        %v8511 = vadd.f32 %v8495, %v1230
        %v8512 = vadd.f32 %v8496, %v1229
        %v8513 = vadd.f32 %v8497, %v1230
        %v8514 = vadd.f32 %v8498, %v1229
        %v8515 = vadd.f32 %v8499, %v1230
        %v8516 = vadd.f32 %v8500, %v1229
        %v8517 = vadd.f32 %v8501, %v1230
        %v8518 = vadd.f32 %v8502, %v1229
        %v8519 = vadd.f32 %v8503, %v1230
        %v8520 = vadd.f32 %v8504, %v1229
        %v8521 = vadd.f32 %v8505, %v1230
        %v8522 = vadd.f32 %v8506, %v1229
        %v8523 = vadd.f32 %v8507, %v1230
        %v8524 = vadd.f32 %v8508, %v1229
        %v8525 = vadd.f32 %v8509, %v1230
        %v8526 = vsel %vm1231, %v8510, -inf
        %8527 = vmax.xlane.f32.xlu0 %v8526
        %v8528 = vpop.xlane.xlu0 %8527
        %v8529 = vsel %vm1231, %v8511, -inf
        %8530 = vmax.xlane.f32.xlu0 %v8529
        %v8531 = vpop.xlane.xlu0 %8530
        %v8532 = vsel %vm1231, %v8512, -inf
        %8533 = vmax.xlane.f32.xlu0 %v8532
        %v8534 = vpop.xlane.xlu0 %8533
        %v8535 = vsel %vm1231, %v8513, -inf
        %8536 = vmax.xlane.f32.xlu0 %v8535
        %v8537 = vpop.xlane.xlu0 %8536
        %v8538 = vsel %vm1231, %v8514, -inf
        %8539 = vmax.xlane.f32.xlu0 %v8538
        %v8540 = vpop.xlane.xlu0 %8539
        %v8541 = vsel %vm1231, %v8515, -inf
        %8542 = vmax.xlane.f32.xlu0 %v8541
        %v8543 = vpop.xlane.xlu0 %8542
        %v8544 = vsel %vm1231, %v8516, -inf
        %8545 = vmax.xlane.f32.xlu0 %v8544
        %v8546 = vpop.xlane.xlu0 %8545
        %v8547 = vsel %vm1231, %v8517, -inf
        %8548 = vmax.xlane.f32.xlu0 %v8547
        %v8549 = vpop.xlane.xlu0 %8548
        %v8550 = vsel %vm1231, %v8518, -inf
        %8551 = vmax.xlane.f32.xlu0 %v8550
        %v8552 = vpop.xlane.xlu0 %8551
        %v8553 = vsel %vm1231, %v8519, -inf
        %8554 = vmax.xlane.f32.xlu0 %v8553
        %v8555 = vpop.xlane.xlu0 %8554
        %v8556 = vsel %vm1231, %v8520, -inf
        %8557 = vmax.xlane.f32.xlu0 %v8556
        %v8558 = vpop.xlane.xlu0 %8557
        %v8559 = vsel %vm1231, %v8521, -inf
        %8560 = vmax.xlane.f32.xlu0 %v8559
        %v8561 = vpop.xlane.xlu0 %8560
        %v8562 = vsel %vm1231, %v8522, -inf
        %8563 = vmax.xlane.f32.xlu0 %v8562
        %v8564 = vpop.xlane.xlu0 %8563
        %v8565 = vsel %vm1231, %v8523, -inf
        %8566 = vmax.xlane.f32.xlu0 %v8565
        %v8567 = vpop.xlane.xlu0 %8566
        %v8568 = vsel %vm1231, %v8524, -inf
        %8569 = vmax.xlane.f32.xlu0 %v8568
        %v8570 = vpop.xlane.xlu0 %8569
        %v8571 = vsel %vm1231, %v8525, -inf
        %8572 = vmax.xlane.f32.xlu0 %v8571
        %v8573 = vpop.xlane.xlu0 %8572
        %v8574 = vsub.f32 %v8510, %v8528
        %v8575 = vsub.f32 %v8511, %v8531
        %v8576 = vsub.f32 %v8512, %v8534
        %v8577 = vsub.f32 %v8513, %v8537
        %v8578 = vsub.f32 %v8514, %v8540
        %v8579 = vsub.f32 %v8515, %v8543
        %v8580 = vsub.f32 %v8516, %v8546
        %v8581 = vsub.f32 %v8517, %v8549
        %v8582 = vsub.f32 %v8518, %v8552
        %v8583 = vsub.f32 %v8519, %v8555
        %v8584 = vsub.f32 %v8520, %v8558
        %v8585 = vsub.f32 %v8521, %v8561
        %v8586 = vsub.f32 %v8522, %v8564
        %v8587 = vsub.f32 %v8523, %v8567
        %v8588 = vsub.f32 %v8524, %v8570
        %v8589 = vsub.f32 %v8525, %v8573
        %v8590 = vmul.f32 %v8574, 1.442695
        %v8591 = vpow.pop %v8590
        %v8592 = vmul.f32 %v8575, 1.442695
        %v8593 = vpow.pop %v8592
        %v8594 = vmul.f32 %v8576, 1.442695
        %v8595 = vpow.pop %v8594
        %v8596 = vmul.f32 %v8577, 1.442695
        %v8597 = vpow.pop %v8596
        %v8598 = vmul.f32 %v8578, 1.442695
        %v8599 = vpow.pop %v8598
        %v8600 = vmul.f32 %v8579, 1.442695
        %v8601 = vpow.pop %v8600
        %v8602 = vmul.f32 %v8580, 1.442695
        %v8603 = vpow.pop %v8602
        %v8604 = vmul.f32 %v8581, 1.442695
        %v8605 = vpow.pop %v8604
        %v8606 = vmul.f32 %v8582, 1.442695
        %v8607 = vpow.pop %v8606
        %v8608 = vmul.f32 %v8583, 1.442695
        %v8609 = vpow.pop %v8608
        %v8610 = vmul.f32 %v8584, 1.442695
        %v8611 = vpow.pop %v8610
        %v8612 = vmul.f32 %v8585, 1.442695
        %v8613 = vpow.pop %v8612
        %v8614 = vmul.f32 %v8586, 1.442695
        %v8615 = vpow.pop %v8614
        %v8616 = vmul.f32 %v8587, 1.442695
        %v8617 = vpow.pop %v8616
        %v8618 = vmul.f32 %v8588, 1.442695
        %v8619 = vpow.pop %v8618
        %v8620 = vmul.f32 %v8589, 1.442695
        %v8621 = vpow.pop %v8620
        %v8622 = vsel %vm1231, %v8591, 0.0
        %8623 = vadd.xlane.f32.xlu0 %v8622
        %v8624 = vpop.xlane.xlu0 %8623
        %v8625 = vsel %vm1231, %v8593, 0.0
        %8626 = vadd.xlane.f32.xlu0 %v8625
        %v8627 = vpop.xlane.xlu0 %8626
        %v8628 = vsel %vm1231, %v8595, 0.0
        %8629 = vadd.xlane.f32.xlu0 %v8628
        %v8630 = vpop.xlane.xlu0 %8629
        %v8631 = vsel %vm1231, %v8597, 0.0
        %8632 = vadd.xlane.f32.xlu0 %v8631
        %v8633 = vpop.xlane.xlu0 %8632
        %v8634 = vsel %vm1231, %v8599, 0.0
        %8635 = vadd.xlane.f32.xlu0 %v8634
        %v8636 = vpop.xlane.xlu0 %8635
        %v8637 = vsel %vm1231, %v8601, 0.0
        %8638 = vadd.xlane.f32.xlu0 %v8637
        %v8639 = vpop.xlane.xlu0 %8638
        %v8640 = vsel %vm1231, %v8603, 0.0
        %8641 = vadd.xlane.f32.xlu0 %v8640
        %v8642 = vpop.xlane.xlu0 %8641
        %v8643 = vsel %vm1231, %v8605, 0.0
        %8644 = vadd.xlane.f32.xlu0 %v8643
        %v8645 = vpop.xlane.xlu0 %8644
        %v8646 = vsel %vm1231, %v8607, 0.0
        %8647 = vadd.xlane.f32.xlu0 %v8646
        %v8648 = vpop.xlane.xlu0 %8647
        %v8649 = vsel %vm1231, %v8609, 0.0
        %8650 = vadd.xlane.f32.xlu0 %v8649
        %v8651 = vpop.xlane.xlu0 %8650
        %v8652 = vsel %vm1231, %v8611, 0.0
        %8653 = vadd.xlane.f32.xlu0 %v8652
        %v8654 = vpop.xlane.xlu0 %8653
        %v8655 = vsel %vm1231, %v8613, 0.0
        %8656 = vadd.xlane.f32.xlu0 %v8655
        %v8657 = vpop.xlane.xlu0 %8656
        %v8658 = vsel %vm1231, %v8615, 0.0
        %8659 = vadd.xlane.f32.xlu0 %v8658
        %v8660 = vpop.xlane.xlu0 %8659
        %v8661 = vsel %vm1231, %v8617, 0.0
        %8662 = vadd.xlane.f32.xlu0 %v8661
        %v8663 = vpop.xlane.xlu0 %8662
        %v8664 = vsel %vm1231, %v8619, 0.0
        %8665 = vadd.xlane.f32.xlu0 %v8664
        %v8666 = vpop.xlane.xlu0 %8665
        %v8667 = vsel %vm1231, %v8621, 0.0
        %8668 = vadd.xlane.f32.xlu0 %v8667
        %v8669 = vpop.xlane.xlu0 %8668
        %v8670 = vrcp.pop %v8624
        %v8671 = vrcp.pop %v8627
        %v8672 = vrcp.pop %v8630
        %v8673 = vrcp.pop %v8633
        %v8674 = vrcp.pop %v8636
        %v8675 = vrcp.pop %v8639
        %v8676 = vrcp.pop %v8642
        %v8677 = vrcp.pop %v8645
        %v8678 = vrcp.pop %v8648
        %v8679 = vrcp.pop %v8651
        %v8680 = vrcp.pop %v8654
        %v8681 = vrcp.pop %v8657
        %v8682 = vrcp.pop %v8660
        %v8683 = vrcp.pop %v8663
        %v8684 = vrcp.pop %v8666
        %v8685 = vrcp.pop %v8669
        %v8686 = vmul.f32 %v8591, %v8670
        %v8687 = vmul.f32 %v8593, %v8671
        %v8688 = vmul.f32 %v8595, %v8672
        %v8689 = vmul.f32 %v8597, %v8673
        %v8690 = vmul.f32 %v8599, %v8674
        %v8691 = vmul.f32 %v8601, %v8675
        %v8692 = vmul.f32 %v8603, %v8676
        %v8693 = vmul.f32 %v8605, %v8677
        %v8694 = vmul.f32 %v8607, %v8678
        %v8695 = vmul.f32 %v8609, %v8679
        %v8696 = vmul.f32 %v8611, %v8680
        %v8697 = vmul.f32 %v8613, %v8681
        %v8698 = vmul.f32 %v8615, %v8682
        %v8699 = vmul.f32 %v8617, %v8683
        %v8700 = vmul.f32 %v8619, %v8684
        %v8701 = vmul.f32 %v8621, %v8685
        %v8702 = vpack.c.bf16 %v8687, %v8686
        %v8703 = vpack.c.bf16 %v8689, %v8688
        %v8704 = vpack.c.bf16 %v8691, %v8690
        %v8705 = vpack.c.bf16 %v8693, %v8692
        %v8706 = vpack.c.bf16 %v8695, %v8694
        %v8707 = vpack.c.bf16 %v8697, %v8696
        %v8708 = vpack.c.bf16 %v8699, %v8698
        %v8709 = vpack.c.bf16 %v8701, %v8700
        %8710 = vrot.lane.b32.xlu0 %v1221, 32
        %v8711 = vpop.permute.xlu0 %8710
        %v8714 = vsel %vm1231, %v8702, 0
        %8716 = vmatprep.subr.bf16.mxu0 0
        %8717 = vmatpush1.bf16.msra.mxu0 %v8711
        %8718 = vmatprep.subr.bf16.mxu0 0
        %8719 = vmatpush1.bf16.msra.mxu0 0
        %8720 = vmatprep.subr.bf16.mxu0 0
        %8721 = vmatpush1.bf16.msra.mxu0 0
        %8722 = vmatprep.subr.bf16.mxu0 0
        %8723 = vmatpush1.bf16.msra.mxu0 0
        %8724 = vmatprep.subr.bf16.mxu0 0
        %8725 = vmatpush1.bf16.msra.mxu0 0
        %8726 = vmatprep.subr.bf16.mxu0 0
        %8727 = vmatpush1.bf16.msra.mxu0 0
        %8728 = vmatprep.subr.bf16.mxu0 0
        %8729 = vmatpush1.bf16.msra.mxu0 0
        %8730 = vmatprep.subr.bf16.mxu0 0
        %8731 = vmatpush1.bf16.msra.mxu0 0
        %8732 = vmatprep.subr.bf16.mxu0 0
        %8733 = vmatpush1.bf16.msra.mxu0 0
        %8734 = vmatprep.subr.bf16.mxu0 0
        %8735 = vmatpush1.bf16.msra.mxu0 0
        %8736 = vmatprep.subr.bf16.mxu0 0
        %8737 = vmatpush1.bf16.msra.mxu0 0
        %8738 = vmatprep.subr.bf16.mxu0 0
        %8739 = vmatpush1.bf16.msra.mxu0 0
        %8740 = vmatprep.subr.bf16.mxu0 0
        %8741 = vmatpush1.bf16.msra.mxu0 0
        %8742 = vmatprep.subr.bf16.mxu0 0
        %8743 = vmatpush1.bf16.msra.mxu0 0
        %8744 = vmatprep.subr.bf16.mxu0 0
        %8745 = vmatpush1.bf16.msra.mxu0 0
        %8746 = vmatprep.subr.bf16.mxu0 0
        %8747 = vmatpush1.bf16.msra.mxu0 0
        %8748 = vmatprep.mubr.bf16.mxu0 0
        %8749 = vmatmul.mubr.bf16.gmra.mrb[0].mxu0 %v8714
        %v8750 = vpop.f32.mrb[0].mxu0
        %v8751 = vadd.f32 0.0, %v8750
        %v8752 = vpop.f32.mrb[0].mxu0
        %v8753 = vpop.f32.mrb[0].mxu0
        %v8754 = vadd.f32 0.0, %v8753
        %v8755 = vpop.f32.mrb[0].mxu0
        %8756 = vdwg.mxu0
        %8757 = vrot.lane.b32.xlu0 %v1222, 32
        %v8758 = vpop.permute.xlu0 %8757
        %v8761 = vsel %vm1231, %v8703, 0
        %8763 = vmatprep.subr.bf16.mxu0 0
        %8764 = vmatpush1.bf16.msra.mxu0 %v8758
        %8765 = vmatprep.subr.bf16.mxu0 0
        %8766 = vmatpush1.bf16.msra.mxu0 0
        %8767 = vmatprep.subr.bf16.mxu0 0
        %8768 = vmatpush1.bf16.msra.mxu0 0
        %8769 = vmatprep.subr.bf16.mxu0 0
        %8770 = vmatpush1.bf16.msra.mxu0 0
        %8771 = vmatprep.subr.bf16.mxu0 0
        %8772 = vmatpush1.bf16.msra.mxu0 0
        %8773 = vmatprep.subr.bf16.mxu0 0
        %8774 = vmatpush1.bf16.msra.mxu0 0
        %8775 = vmatprep.subr.bf16.mxu0 0
        %8776 = vmatpush1.bf16.msra.mxu0 0
        %8777 = vmatprep.subr.bf16.mxu0 0
        %8778 = vmatpush1.bf16.msra.mxu0 0
        %8779 = vmatprep.subr.bf16.mxu0 0
        %8780 = vmatpush1.bf16.msra.mxu0 0
        %8781 = vmatprep.subr.bf16.mxu0 0
        %8782 = vmatpush1.bf16.msra.mxu0 0
        %8783 = vmatprep.subr.bf16.mxu0 0
        %8784 = vmatpush1.bf16.msra.mxu0 0
        %8785 = vmatprep.subr.bf16.mxu0 0
        %8786 = vmatpush1.bf16.msra.mxu0 0
        %8787 = vmatprep.subr.bf16.mxu0 0
        %8788 = vmatpush1.bf16.msra.mxu0 0
        %8789 = vmatprep.subr.bf16.mxu0 0
        %8790 = vmatpush1.bf16.msra.mxu0 0
        %8791 = vmatprep.subr.bf16.mxu0 0
        %8792 = vmatpush1.bf16.msra.mxu0 0
        %8793 = vmatprep.subr.bf16.mxu0 0
        %8794 = vmatpush1.bf16.msra.mxu0 0
        %8795 = vmatprep.mubr.bf16.mxu0 0
        %8796 = vmatmul.mubr.bf16.gmra.mrb[0].mxu0 %v8761
        %v8797 = vpop.f32.mrb[0].mxu0
        %v8798 = vadd.f32 0.0, %v8797
        %v8799 = vpop.f32.mrb[0].mxu0
        %v8800 = vpop.f32.mrb[0].mxu0
        %v8801 = vadd.f32 0.0, %v8800
        %v8802 = vpop.f32.mrb[0].mxu0
        %8803 = vdwg.mxu0
        %8804 = vrot.lane.b32.xlu0 %v1223, 32
        %v8805 = vpop.permute.xlu0 %8804
        %v8808 = vsel %vm1231, %v8704, 0
        %8810 = vmatprep.subr.bf16.mxu0 0
        %8811 = vmatpush1.bf16.msra.mxu0 %v8805
        %8812 = vmatprep.subr.bf16.mxu0 0
        %8813 = vmatpush1.bf16.msra.mxu0 0
        %8814 = vmatprep.subr.bf16.mxu0 0
        %8815 = vmatpush1.bf16.msra.mxu0 0
        %8816 = vmatprep.subr.bf16.mxu0 0
        %8817 = vmatpush1.bf16.msra.mxu0 0
        %8818 = vmatprep.subr.bf16.mxu0 0
        %8819 = vmatpush1.bf16.msra.mxu0 0
        %8820 = vmatprep.subr.bf16.mxu0 0
        %8821 = vmatpush1.bf16.msra.mxu0 0
        %8822 = vmatprep.subr.bf16.mxu0 0
        %8823 = vmatpush1.bf16.msra.mxu0 0
        %8824 = vmatprep.subr.bf16.mxu0 0
        %8825 = vmatpush1.bf16.msra.mxu0 0
        %8826 = vmatprep.subr.bf16.mxu0 0
        %8827 = vmatpush1.bf16.msra.mxu0 0
        %8828 = vmatprep.subr.bf16.mxu0 0
        %8829 = vmatpush1.bf16.msra.mxu0 0
        %8830 = vmatprep.subr.bf16.mxu0 0
        %8831 = vmatpush1.bf16.msra.mxu0 0
        %8832 = vmatprep.subr.bf16.mxu0 0
        %8833 = vmatpush1.bf16.msra.mxu0 0
        %8834 = vmatprep.subr.bf16.mxu0 0
        %8835 = vmatpush1.bf16.msra.mxu0 0
        %8836 = vmatprep.subr.bf16.mxu0 0
        %8837 = vmatpush1.bf16.msra.mxu0 0
        %8838 = vmatprep.subr.bf16.mxu0 0
        %8839 = vmatpush1.bf16.msra.mxu0 0
        %8840 = vmatprep.subr.bf16.mxu0 0
        %8841 = vmatpush1.bf16.msra.mxu0 0
        %8842 = vmatprep.mubr.bf16.mxu0 0
        %8843 = vmatmul.mubr.bf16.gmra.mrb[0].mxu0 %v8808
        %v8844 = vpop.f32.mrb[0].mxu0
        %v8845 = vadd.f32 0.0, %v8844
        %v8846 = vpop.f32.mrb[0].mxu0
        %v8847 = vpop.f32.mrb[0].mxu0
        %v8848 = vadd.f32 0.0, %v8847
        %v8849 = vpop.f32.mrb[0].mxu0
        %8850 = vdwg.mxu0
        %8851 = vrot.lane.b32.xlu0 %v1224, 32
        %v8852 = vpop.permute.xlu0 %8851
        %v8855 = vsel %vm1231, %v8705, 0
        %8857 = vmatprep.subr.bf16.mxu0 0
        %8858 = vmatpush1.bf16.msra.mxu0 %v8852
        %8859 = vmatprep.subr.bf16.mxu0 0
        %8860 = vmatpush1.bf16.msra.mxu0 0
        %8861 = vmatprep.subr.bf16.mxu0 0
        %8862 = vmatpush1.bf16.msra.mxu0 0
        %8863 = vmatprep.subr.bf16.mxu0 0
        %8864 = vmatpush1.bf16.msra.mxu0 0
        %8865 = vmatprep.subr.bf16.mxu0 0
        %8866 = vmatpush1.bf16.msra.mxu0 0
        %8867 = vmatprep.subr.bf16.mxu0 0
        %8868 = vmatpush1.bf16.msra.mxu0 0
        %8869 = vmatprep.subr.bf16.mxu0 0
        %8870 = vmatpush1.bf16.msra.mxu0 0
        %8871 = vmatprep.subr.bf16.mxu0 0
        %8872 = vmatpush1.bf16.msra.mxu0 0
        %8873 = vmatprep.subr.bf16.mxu0 0
        %8874 = vmatpush1.bf16.msra.mxu0 0
        %8875 = vmatprep.subr.bf16.mxu0 0
        %8876 = vmatpush1.bf16.msra.mxu0 0
        %8877 = vmatprep.subr.bf16.mxu0 0
        %8878 = vmatpush1.bf16.msra.mxu0 0
        %8879 = vmatprep.subr.bf16.mxu0 0
        %8880 = vmatpush1.bf16.msra.mxu0 0
        %8881 = vmatprep.subr.bf16.mxu0 0
        %8882 = vmatpush1.bf16.msra.mxu0 0
        %8883 = vmatprep.subr.bf16.mxu0 0
        %8884 = vmatpush1.bf16.msra.mxu0 0
        %8885 = vmatprep.subr.bf16.mxu0 0
        %8886 = vmatpush1.bf16.msra.mxu0 0
        %8887 = vmatprep.subr.bf16.mxu0 0
        %8888 = vmatpush1.bf16.msra.mxu0 0
        %8889 = vmatprep.mubr.bf16.mxu0 0
        %8890 = vmatmul.mubr.bf16.gmra.mrb[0].mxu0 %v8855
        %v8891 = vpop.f32.mrb[0].mxu0
        %v8892 = vadd.f32 0.0, %v8891
        %v8893 = vpop.f32.mrb[0].mxu0
        %v8894 = vpop.f32.mrb[0].mxu0
        %v8895 = vadd.f32 0.0, %v8894
        %v8896 = vpop.f32.mrb[0].mxu0
        %8897 = vdwg.mxu0
        %8898 = vrot.lane.b32.xlu0 %v1225, 32
        %v8899 = vpop.permute.xlu0 %8898
        %v8902 = vsel %vm1231, %v8706, 0
        %8904 = vmatprep.subr.bf16.mxu0 0
        %8905 = vmatpush1.bf16.msra.mxu0 %v8899
        %8906 = vmatprep.subr.bf16.mxu0 0
        %8907 = vmatpush1.bf16.msra.mxu0 0
        %8908 = vmatprep.subr.bf16.mxu0 0
        %8909 = vmatpush1.bf16.msra.mxu0 0
        %8910 = vmatprep.subr.bf16.mxu0 0
        %8911 = vmatpush1.bf16.msra.mxu0 0
        %8912 = vmatprep.subr.bf16.mxu0 0
        %8913 = vmatpush1.bf16.msra.mxu0 0
        %8914 = vmatprep.subr.bf16.mxu0 0
        %8915 = vmatpush1.bf16.msra.mxu0 0
        %8916 = vmatprep.subr.bf16.mxu0 0
        %8917 = vmatpush1.bf16.msra.mxu0 0
        %8918 = vmatprep.subr.bf16.mxu0 0
        %8919 = vmatpush1.bf16.msra.mxu0 0
        %8920 = vmatprep.subr.bf16.mxu0 0
        %8921 = vmatpush1.bf16.msra.mxu0 0
        %8922 = vmatprep.subr.bf16.mxu0 0
        %8923 = vmatpush1.bf16.msra.mxu0 0
        %8924 = vmatprep.subr.bf16.mxu0 0
        %8925 = vmatpush1.bf16.msra.mxu0 0
        %8926 = vmatprep.subr.bf16.mxu0 0
        %8927 = vmatpush1.bf16.msra.mxu0 0
        %8928 = vmatprep.subr.bf16.mxu0 0
        %8929 = vmatpush1.bf16.msra.mxu0 0
        %8930 = vmatprep.subr.bf16.mxu0 0
        %8931 = vmatpush1.bf16.msra.mxu0 0
        %8932 = vmatprep.subr.bf16.mxu0 0
        %8933 = vmatpush1.bf16.msra.mxu0 0
        %8934 = vmatprep.subr.bf16.mxu0 0
        %8935 = vmatpush1.bf16.msra.mxu0 0
        %8936 = vmatprep.mubr.bf16.mxu0 0
        %8937 = vmatmul.mubr.bf16.gmra.mrb[0].mxu0 %v8902
        %v8938 = vpop.f32.mrb[0].mxu0
        %v8939 = vadd.f32 0.0, %v8938
        %v8940 = vpop.f32.mrb[0].mxu0
        %v8941 = vpop.f32.mrb[0].mxu0
        %v8942 = vadd.f32 0.0, %v8941
        %v8943 = vpop.f32.mrb[0].mxu0
        %8944 = vdwg.mxu0
        %8945 = vrot.lane.b32.xlu0 %v1226, 32
        %v8946 = vpop.permute.xlu0 %8945
        %v8949 = vsel %vm1231, %v8707, 0
        %8951 = vmatprep.subr.bf16.mxu0 0
        %8952 = vmatpush1.bf16.msra.mxu0 %v8946
        %8953 = vmatprep.subr.bf16.mxu0 0
        %8954 = vmatpush1.bf16.msra.mxu0 0
        %8955 = vmatprep.subr.bf16.mxu0 0
        %8956 = vmatpush1.bf16.msra.mxu0 0
        %8957 = vmatprep.subr.bf16.mxu0 0
        %8958 = vmatpush1.bf16.msra.mxu0 0
        %8959 = vmatprep.subr.bf16.mxu0 0
        %8960 = vmatpush1.bf16.msra.mxu0 0
        %8961 = vmatprep.subr.bf16.mxu0 0
        %8962 = vmatpush1.bf16.msra.mxu0 0
        %8963 = vmatprep.subr.bf16.mxu0 0
        %8964 = vmatpush1.bf16.msra.mxu0 0
        %8965 = vmatprep.subr.bf16.mxu0 0
        %8966 = vmatpush1.bf16.msra.mxu0 0
        %8967 = vmatprep.subr.bf16.mxu0 0
        %8968 = vmatpush1.bf16.msra.mxu0 0
        %8969 = vmatprep.subr.bf16.mxu0 0
        %8970 = vmatpush1.bf16.msra.mxu0 0
        %8971 = vmatprep.subr.bf16.mxu0 0
        %8972 = vmatpush1.bf16.msra.mxu0 0
        %8973 = vmatprep.subr.bf16.mxu0 0
        %8974 = vmatpush1.bf16.msra.mxu0 0
        %8975 = vmatprep.subr.bf16.mxu0 0
        %8976 = vmatpush1.bf16.msra.mxu0 0
        %8977 = vmatprep.subr.bf16.mxu0 0
        %8978 = vmatpush1.bf16.msra.mxu0 0
        %8979 = vmatprep.subr.bf16.mxu0 0
        %8980 = vmatpush1.bf16.msra.mxu0 0
        %8981 = vmatprep.subr.bf16.mxu0 0
        %8982 = vmatpush1.bf16.msra.mxu0 0
        %8983 = vmatprep.mubr.bf16.mxu0 0
        %8984 = vmatmul.mubr.bf16.gmra.mrb[0].mxu0 %v8949
        %v8985 = vpop.f32.mrb[0].mxu0
        %v8986 = vadd.f32 0.0, %v8985
        %v8987 = vpop.f32.mrb[0].mxu0
        %v8988 = vpop.f32.mrb[0].mxu0
        %v8989 = vadd.f32 0.0, %v8988
        %v8990 = vpop.f32.mrb[0].mxu0
        %8991 = vdwg.mxu0
        %8992 = vrot.lane.b32.xlu0 %v1227, 32
        %v8993 = vpop.permute.xlu0 %8992
        %v8996 = vsel %vm1231, %v8708, 0
        %8998 = vmatprep.subr.bf16.mxu0 0
        %8999 = vmatpush1.bf16.msra.mxu0 %v8993
        %9000 = vmatprep.subr.bf16.mxu0 0
        %9001 = vmatpush1.bf16.msra.mxu0 0
        %9002 = vmatprep.subr.bf16.mxu0 0
        %9003 = vmatpush1.bf16.msra.mxu0 0
        %9004 = vmatprep.subr.bf16.mxu0 0
        %9005 = vmatpush1.bf16.msra.mxu0 0
        %9006 = vmatprep.subr.bf16.mxu0 0
        %9007 = vmatpush1.bf16.msra.mxu0 0
        %9008 = vmatprep.subr.bf16.mxu0 0
        %9009 = vmatpush1.bf16.msra.mxu0 0
        %9010 = vmatprep.subr.bf16.mxu0 0
        %9011 = vmatpush1.bf16.msra.mxu0 0
        %9012 = vmatprep.subr.bf16.mxu0 0
        %9013 = vmatpush1.bf16.msra.mxu0 0
        %9014 = vmatprep.subr.bf16.mxu0 0
        %9015 = vmatpush1.bf16.msra.mxu0 0
        %9016 = vmatprep.subr.bf16.mxu0 0
        %9017 = vmatpush1.bf16.msra.mxu0 0
        %9018 = vmatprep.subr.bf16.mxu0 0
        %9019 = vmatpush1.bf16.msra.mxu0 0
        %9020 = vmatprep.subr.bf16.mxu0 0
        %9021 = vmatpush1.bf16.msra.mxu0 0
        %9022 = vmatprep.subr.bf16.mxu0 0
        %9023 = vmatpush1.bf16.msra.mxu0 0
        %9024 = vmatprep.subr.bf16.mxu0 0
        %9025 = vmatpush1.bf16.msra.mxu0 0
        %9026 = vmatprep.subr.bf16.mxu0 0
        %9027 = vmatpush1.bf16.msra.mxu0 0
        %9028 = vmatprep.subr.bf16.mxu0 0
        %9029 = vmatpush1.bf16.msra.mxu0 0
        %9030 = vmatprep.mubr.bf16.mxu0 0
        %9031 = vmatmul.mubr.bf16.gmra.mrb[0].mxu0 %v8996
        %v9032 = vpop.f32.mrb[0].mxu0
        %v9033 = vadd.f32 0.0, %v9032
        %v9034 = vpop.f32.mrb[0].mxu0
        %v9035 = vpop.f32.mrb[0].mxu0
        %v9036 = vadd.f32 0.0, %v9035
        %v9037 = vpop.f32.mrb[0].mxu0
        %9038 = vdwg.mxu0
        %9039 = vrot.lane.b32.xlu0 %v1228, 32
        %v9040 = vpop.permute.xlu0 %9039
        %v9043 = vsel %vm1231, %v8709, 0
        %9045 = vmatprep.subr.bf16.mxu0 0
        %9046 = vmatpush1.bf16.msra.mxu0 %v9040
        %9047 = vmatprep.subr.bf16.mxu0 0
        %9048 = vmatpush1.bf16.msra.mxu0 0
        %9049 = vmatprep.subr.bf16.mxu0 0
        %9050 = vmatpush1.bf16.msra.mxu0 0
        %9051 = vmatprep.subr.bf16.mxu0 0
        %9052 = vmatpush1.bf16.msra.mxu0 0
        %9053 = vmatprep.subr.bf16.mxu0 0
        %9054 = vmatpush1.bf16.msra.mxu0 0
        %9055 = vmatprep.subr.bf16.mxu0 0
        %9056 = vmatpush1.bf16.msra.mxu0 0
        %9057 = vmatprep.subr.bf16.mxu0 0
        %9058 = vmatpush1.bf16.msra.mxu0 0
        %9059 = vmatprep.subr.bf16.mxu0 0
        %9060 = vmatpush1.bf16.msra.mxu0 0
        %9061 = vmatprep.subr.bf16.mxu0 0
        %9062 = vmatpush1.bf16.msra.mxu0 0
        %9063 = vmatprep.subr.bf16.mxu0 0
        %9064 = vmatpush1.bf16.msra.mxu0 0
        %9065 = vmatprep.subr.bf16.mxu0 0
        %9066 = vmatpush1.bf16.msra.mxu0 0
        %9067 = vmatprep.subr.bf16.mxu0 0
        %9068 = vmatpush1.bf16.msra.mxu0 0
        %9069 = vmatprep.subr.bf16.mxu0 0
        %9070 = vmatpush1.bf16.msra.mxu0 0
        %9071 = vmatprep.subr.bf16.mxu0 0
        %9072 = vmatpush1.bf16.msra.mxu0 0
        %9073 = vmatprep.subr.bf16.mxu0 0
        %9074 = vmatpush1.bf16.msra.mxu0 0
        %9075 = vmatprep.subr.bf16.mxu0 0
        %9076 = vmatpush1.bf16.msra.mxu0 0
        %9077 = vmatprep.mubr.bf16.mxu0 0
        %9078 = vmatmul.mubr.bf16.gmra.mrb[0].mxu0 %v9043
        %v9079 = vpop.f32.mrb[0].mxu0
        %v9080 = vadd.f32 0.0, %v9079
        %v9081 = vpop.f32.mrb[0].mxu0
        %v9082 = vpop.f32.mrb[0].mxu0
        %v9083 = vadd.f32 0.0, %v9082
        %v9084 = vpop.f32.mrb[0].mxu0
        %9085 = vdwg.mxu0
        %v9086 = vpack.c.bf16 %v8754, %v8751
        %v9087 = vpack.c.bf16 %v8801, %v8798
        %v9088 = vpack.c.bf16 %v8848, %v8845
        %v9089 = vpack.c.bf16 %v8895, %v8892
        %v9090 = vpack.c.bf16 %v8942, %v8939
        %v9091 = vpack.c.bf16 %v8989, %v8986
        %v9092 = vpack.c.bf16 %v9036, %v9033
        %v9093 = vpack.c.bf16 %v9083, %v9080
        %v9094 = vld [vmem:[#allocation17 + $0x30] sm:$0xf]
        %v9095 = vld [vmem:[#allocation17 + $0x34] sm:$0xf]
        %v9098 = vunpack.c.l.b16 %v9094
        %v9099 = vunpack.c.l.b16 %v9095
        %v9100 = vpack.c.b16 %v9099, %v9098
        %v9103 = vsel %vm1231, %v9086, 0
        %v9106 = vsel %vm1231, %v9087, 0
        %v9109 = vsel %vm1231, %v9088, 0
        %v9112 = vsel %vm1231, %v9089, 0
        %v9115 = vsel %vm1231, %v9090, 0
        %v9118 = vsel %vm1231, %v9091, 0
        %v9121 = vsel %vm1231, %v9092, 0
        %v9124 = vsel %vm1231, %v9093, 0
        %9126 = vmatprep.subr.bf16.mxu0 0
        %9127 = vmatpush1.bf16.msra.mxu0 %v9100
        %9128 = vmatprep.subr.bf16.mxu0 0
        %9129 = vmatpush1.bf16.msra.mxu0 0
        %9130 = vmatprep.subr.bf16.mxu0 0
        %9131 = vmatpush1.bf16.msra.mxu0 0
        %9132 = vmatprep.subr.bf16.mxu0 0
        %9133 = vmatpush1.bf16.msra.mxu0 0
        %9134 = vmatprep.subr.bf16.mxu0 0
        %9135 = vmatpush1.bf16.msra.mxu0 0
        %9136 = vmatprep.subr.bf16.mxu0 0
        %9137 = vmatpush1.bf16.msra.mxu0 0
        %9138 = vmatprep.subr.bf16.mxu0 0
        %9139 = vmatpush1.bf16.msra.mxu0 0
        %9140 = vmatprep.subr.bf16.mxu0 0
        %9141 = vmatpush1.bf16.msra.mxu0 0
        %9142 = vmatprep.subr.bf16.mxu0 0
        %9143 = vmatpush1.bf16.msra.mxu0 0
        %9144 = vmatprep.subr.bf16.mxu0 0
        %9145 = vmatpush1.bf16.msra.mxu0 0
        %9146 = vmatprep.subr.bf16.mxu0 0
        %9147 = vmatpush1.bf16.msra.mxu0 0
        %9148 = vmatprep.subr.bf16.mxu0 0
        %9149 = vmatpush1.bf16.msra.mxu0 0
        %9150 = vmatprep.subr.bf16.mxu0 0
        %9151 = vmatpush1.bf16.msra.mxu0 0
        %9152 = vmatprep.subr.bf16.mxu0 0
        %9153 = vmatpush1.bf16.msra.mxu0 0
        %9154 = vmatprep.subr.bf16.mxu0 0
        %9155 = vmatpush1.bf16.msra.mxu0 0
        %9156 = vmatprep.subr.bf16.mxu0 0
        %9157 = vmatpush1.bf16.msra.mxu0 0
        %9158 = vmatprep.mubr.bf16.mxu0 0
        %9159 = vmatmul.mubr.bf16.gmra.mrb[0].mxu0 %v9103
        %v9160 = vpop.f32.mrb[0].mxu0
        %v9161 = vadd.f32 0.0, %v9160
        %v9162 = vpop.f32.mrb[0].mxu0
        %v9163 = vpop.f32.mrb[0].mxu0
        %v9164 = vadd.f32 0.0, %v9163
        %v9165 = vpop.f32.mrb[0].mxu0
        %9166 = vmatprep.mubr.bf16.mxu0 0
        %9167 = vmatmul.mubr.bf16.gmra.mrb[0].mxu0 %v9106
        %v9168 = vpop.f32.mrb[0].mxu0
        %v9169 = vadd.f32 0.0, %v9168
        %v9170 = vpop.f32.mrb[0].mxu0
        %v9171 = vpop.f32.mrb[0].mxu0
        %v9172 = vadd.f32 0.0, %v9171
        %v9173 = vpop.f32.mrb[0].mxu0
        %9174 = vmatprep.mubr.bf16.mxu0 0
        %9175 = vmatmul.mubr.bf16.gmra.mrb[0].mxu0 %v9109
        %v9176 = vpop.f32.mrb[0].mxu0
        %v9177 = vadd.f32 0.0, %v9176
        %v9178 = vpop.f32.mrb[0].mxu0
        %v9179 = vpop.f32.mrb[0].mxu0
        %v9180 = vadd.f32 0.0, %v9179
        %v9181 = vpop.f32.mrb[0].mxu0
        %9182 = vmatprep.mubr.bf16.mxu0 0
        %9183 = vmatmul.mubr.bf16.gmra.mrb[0].mxu0 %v9112
        %v9184 = vpop.f32.mrb[0].mxu0
        %v9185 = vadd.f32 0.0, %v9184
        %v9186 = vpop.f32.mrb[0].mxu0
        %v9187 = vpop.f32.mrb[0].mxu0
        %v9188 = vadd.f32 0.0, %v9187
        %v9189 = vpop.f32.mrb[0].mxu0
        %9190 = vmatprep.mubr.bf16.mxu0 0
        %9191 = vmatmul.mubr.bf16.gmra.mrb[0].mxu0 %v9115
        %v9192 = vpop.f32.mrb[0].mxu0
        %v9193 = vadd.f32 0.0, %v9192
        %v9194 = vpop.f32.mrb[0].mxu0
        %v9195 = vpop.f32.mrb[0].mxu0
        %v9196 = vadd.f32 0.0, %v9195
        %v9197 = vpop.f32.mrb[0].mxu0
        %9198 = vmatprep.mubr.bf16.mxu0 0
        %9199 = vmatmul.mubr.bf16.gmra.mrb[0].mxu0 %v9118
        %v9200 = vpop.f32.mrb[0].mxu0
        %v9201 = vadd.f32 0.0, %v9200
        %v9202 = vpop.f32.mrb[0].mxu0
        %v9203 = vpop.f32.mrb[0].mxu0
        %v9204 = vadd.f32 0.0, %v9203
        %v9205 = vpop.f32.mrb[0].mxu0
        %9206 = vmatprep.mubr.bf16.mxu0 0
        %9207 = vmatmul.mubr.bf16.gmra.mrb[0].mxu0 %v9121
        %v9208 = vpop.f32.mrb[0].mxu0
        %v9209 = vadd.f32 0.0, %v9208
        %v9210 = vpop.f32.mrb[0].mxu0
        %v9211 = vpop.f32.mrb[0].mxu0
        %v9212 = vadd.f32 0.0, %v9211
        %v9213 = vpop.f32.mrb[0].mxu0
        %9214 = vmatprep.mubr.bf16.mxu0 0
        %9215 = vmatmul.mubr.bf16.gmra.mrb[0].mxu0 %v9124
        %v9216 = vpop.f32.mrb[0].mxu0
        %v9217 = vadd.f32 0.0, %v9216
        %v9218 = vpop.f32.mrb[0].mxu0
        %v9219 = vpop.f32.mrb[0].mxu0
        %v9220 = vadd.f32 0.0, %v9219
        %v9221 = vpop.f32.mrb[0].mxu0
        %9222 = vdwg.mxu0
        %v9223 = vadd.f32 %v8070, %v9161
        %v9224 = vadd.f32 %v8071, %v9164
        %v9225 = vadd.f32 %v8072, %v9169
        %v9226 = vadd.f32 %v8073, %v9172
        %v9227 = vadd.f32 %v8074, %v9177
        %v9228 = vadd.f32 %v8075, %v9180
        %v9229 = vadd.f32 %v8076, %v9185
        %v9230 = vadd.f32 %v8077, %v9188
        %v9231 = vadd.f32 %v8078, %v9193
        %v9232 = vadd.f32 %v8079, %v9196
        %v9233 = vadd.f32 %v8080, %v9201
        %v9234 = vadd.f32 %v8081, %v9204
        %v9235 = vadd.f32 %v8082, %v9209
        %v9236 = vadd.f32 %v8083, %v9212
        %v9237 = vadd.f32 %v8084, %v9217
        %v9238 = vadd.f32 %v8085, %v9220
        %9239 = vrot.lane.b32.xlu0 %v1205, 16
        %v9240 = vpop.permute.xlu0 %9239
        %9241 = vrot.lane.b32.xlu0 %v1213, 16
        %v9242 = vpop.permute.xlu0 %9241
        %v9244 = vsel %vm1231, %v9240, 0
        %v9247 = vsel %vm1231, %v9242, 0
        %9249 = vmatprep.subr.bf16.mxu0 0
        %9250 = vmatpush1.bf16.xpose.msra.mxu0 %v9247
        %9251 = vmatprep.subr.bf16.mxu0 0
        %9252 = vmatpush1.bf16.xpose.msra.mxu0 0
        %9253 = vmatprep.subr.bf16.mxu0 0
        %9254 = vmatpush1.bf16.xpose.msra.mxu0 0
        %9255 = vmatprep.subr.bf16.mxu0 0
        %9256 = vmatpush1.bf16.xpose.msra.mxu0 0
        %9257 = vmatprep.subr.bf16.mxu0 0
        %9258 = vmatpush1.bf16.xpose.msra.mxu0 0
        %9259 = vmatprep.subr.bf16.mxu0 0
        %9260 = vmatpush1.bf16.xpose.msra.mxu0 0
        %9261 = vmatprep.subr.bf16.mxu0 0
        %9262 = vmatpush1.bf16.xpose.msra.mxu0 0
        %9263 = vmatprep.subr.bf16.mxu0 0
        %9264 = vmatpush1.bf16.xpose.msra.mxu0 0
        %9265 = vmatprep.subr.bf16.mxu0 0
        %9266 = vmatpush1.bf16.xpose.msra.mxu0 0
        %9267 = vmatprep.subr.bf16.mxu0 0
        %9268 = vmatpush1.bf16.xpose.msra.mxu0 0
        %9269 = vmatprep.subr.bf16.mxu0 0
        %9270 = vmatpush1.bf16.xpose.msra.mxu0 0
        %9271 = vmatprep.subr.bf16.mxu0 0
        %9272 = vmatpush1.bf16.xpose.msra.mxu0 0
        %9273 = vmatprep.subr.bf16.mxu0 0
        %9274 = vmatpush1.bf16.xpose.msra.mxu0 0
        %9275 = vmatprep.subr.bf16.mxu0 0
        %9276 = vmatpush1.bf16.xpose.msra.mxu0 0
        %9277 = vmatprep.subr.bf16.mxu0 0
        %9278 = vmatpush1.bf16.xpose.msra.mxu0 0
        %9279 = vmatprep.subr.bf16.mxu0 0
        %9280 = vmatpush1.bf16.xpose.msra.mxu0 0
        %9281 = vmatprep.mubr.bf16.mxu0 0
        %9282 = vmatmul.mubr.bf16.gmra.mrb[0].mxu0 %v9244
        %v9283 = vpop.f32.mrb[0].mxu0
        %v9284 = vadd.f32 0.0, %v9283
        %v9285 = vpop.f32.mrb[0].mxu0
        %v9286 = vpop.f32.mrb[0].mxu0
        %v9287 = vadd.f32 0.0, %v9286
        %v9288 = vpop.f32.mrb[0].mxu0
        %9289 = vdwg.mxu0
        %9290 = vrot.lane.b32.xlu0 %v1206, 16
        %v9291 = vpop.permute.xlu0 %9290
        %9292 = vrot.lane.b32.xlu0 %v1214, 16
        %v9293 = vpop.permute.xlu0 %9292
        %v9295 = vsel %vm1231, %v9291, 0
        %v9298 = vsel %vm1231, %v9293, 0
        %9300 = vmatprep.subr.bf16.mxu0 0
        %9301 = vmatpush1.bf16.xpose.msra.mxu0 %v9298
        %9302 = vmatprep.subr.bf16.mxu0 0
        %9303 = vmatpush1.bf16.xpose.msra.mxu0 0
        %9304 = vmatprep.subr.bf16.mxu0 0
        %9305 = vmatpush1.bf16.xpose.msra.mxu0 0
        %9306 = vmatprep.subr.bf16.mxu0 0
        %9307 = vmatpush1.bf16.xpose.msra.mxu0 0
        %9308 = vmatprep.subr.bf16.mxu0 0
        %9309 = vmatpush1.bf16.xpose.msra.mxu0 0
        %9310 = vmatprep.subr.bf16.mxu0 0
        %9311 = vmatpush1.bf16.xpose.msra.mxu0 0
        %9312 = vmatprep.subr.bf16.mxu0 0
        %9313 = vmatpush1.bf16.xpose.msra.mxu0 0
        %9314 = vmatprep.subr.bf16.mxu0 0
        %9315 = vmatpush1.bf16.xpose.msra.mxu0 0
        %9316 = vmatprep.subr.bf16.mxu0 0
        %9317 = vmatpush1.bf16.xpose.msra.mxu0 0
        %9318 = vmatprep.subr.bf16.mxu0 0
        %9319 = vmatpush1.bf16.xpose.msra.mxu0 0
        %9320 = vmatprep.subr.bf16.mxu0 0
        %9321 = vmatpush1.bf16.xpose.msra.mxu0 0
        %9322 = vmatprep.subr.bf16.mxu0 0
        %9323 = vmatpush1.bf16.xpose.msra.mxu0 0
        %9324 = vmatprep.subr.bf16.mxu0 0
        %9325 = vmatpush1.bf16.xpose.msra.mxu0 0
        %9326 = vmatprep.subr.bf16.mxu0 0
        %9327 = vmatpush1.bf16.xpose.msra.mxu0 0
        %9328 = vmatprep.subr.bf16.mxu0 0
        %9329 = vmatpush1.bf16.xpose.msra.mxu0 0
        %9330 = vmatprep.subr.bf16.mxu0 0
        %9331 = vmatpush1.bf16.xpose.msra.mxu0 0
        %9332 = vmatprep.mubr.bf16.mxu0 0
        %9333 = vmatmul.mubr.bf16.gmra.mrb[0].mxu0 %v9295
        %v9334 = vpop.f32.mrb[0].mxu0
        %v9335 = vadd.f32 0.0, %v9334
        %v9336 = vpop.f32.mrb[0].mxu0
        %v9337 = vpop.f32.mrb[0].mxu0
        %v9338 = vadd.f32 0.0, %v9337
        %v9339 = vpop.f32.mrb[0].mxu0
        %9340 = vdwg.mxu0
        %9341 = vrot.lane.b32.xlu0 %v1207, 16
        %v9342 = vpop.permute.xlu0 %9341
        %9343 = vrot.lane.b32.xlu0 %v1215, 16
        %v9344 = vpop.permute.xlu0 %9343
        %v9346 = vsel %vm1231, %v9342, 0
        %v9349 = vsel %vm1231, %v9344, 0
        %9351 = vmatprep.subr.bf16.mxu0 0
        %9352 = vmatpush1.bf16.xpose.msra.mxu0 %v9349
        %9353 = vmatprep.subr.bf16.mxu0 0
        %9354 = vmatpush1.bf16.xpose.msra.mxu0 0
        %9355 = vmatprep.subr.bf16.mxu0 0
        %9356 = vmatpush1.bf16.xpose.msra.mxu0 0
        %9357 = vmatprep.subr.bf16.mxu0 0
        %9358 = vmatpush1.bf16.xpose.msra.mxu0 0
        %9359 = vmatprep.subr.bf16.mxu0 0
        %9360 = vmatpush1.bf16.xpose.msra.mxu0 0
        %9361 = vmatprep.subr.bf16.mxu0 0
        %9362 = vmatpush1.bf16.xpose.msra.mxu0 0
        %9363 = vmatprep.subr.bf16.mxu0 0
        %9364 = vmatpush1.bf16.xpose.msra.mxu0 0
        %9365 = vmatprep.subr.bf16.mxu0 0
        %9366 = vmatpush1.bf16.xpose.msra.mxu0 0
        %9367 = vmatprep.subr.bf16.mxu0 0
        %9368 = vmatpush1.bf16.xpose.msra.mxu0 0
        %9369 = vmatprep.subr.bf16.mxu0 0
        %9370 = vmatpush1.bf16.xpose.msra.mxu0 0
        %9371 = vmatprep.subr.bf16.mxu0 0
        %9372 = vmatpush1.bf16.xpose.msra.mxu0 0
        %9373 = vmatprep.subr.bf16.mxu0 0
        %9374 = vmatpush1.bf16.xpose.msra.mxu0 0
        %9375 = vmatprep.subr.bf16.mxu0 0
        %9376 = vmatpush1.bf16.xpose.msra.mxu0 0
        %9377 = vmatprep.subr.bf16.mxu0 0
        %9378 = vmatpush1.bf16.xpose.msra.mxu0 0
        %9379 = vmatprep.subr.bf16.mxu0 0
        %9380 = vmatpush1.bf16.xpose.msra.mxu0 0
        %9381 = vmatprep.subr.bf16.mxu0 0
        %9382 = vmatpush1.bf16.xpose.msra.mxu0 0
        %9383 = vmatprep.mubr.bf16.mxu0 0
        %9384 = vmatmul.mubr.bf16.gmra.mrb[0].mxu0 %v9346
        %v9385 = vpop.f32.mrb[0].mxu0
        %v9386 = vadd.f32 0.0, %v9385
        %v9387 = vpop.f32.mrb[0].mxu0
        %v9388 = vpop.f32.mrb[0].mxu0
        %v9389 = vadd.f32 0.0, %v9388
        %v9390 = vpop.f32.mrb[0].mxu0
        %9391 = vdwg.mxu0
        %9392 = vrot.lane.b32.xlu0 %v1208, 16
        %v9393 = vpop.permute.xlu0 %9392
        %9394 = vrot.lane.b32.xlu0 %v1216, 16
        %v9395 = vpop.permute.xlu0 %9394
        %v9397 = vsel %vm1231, %v9393, 0
        %v9400 = vsel %vm1231, %v9395, 0
        %9402 = vmatprep.subr.bf16.mxu0 0
        %9403 = vmatpush1.bf16.xpose.msra.mxu0 %v9400
        %9404 = vmatprep.subr.bf16.mxu0 0
        %9405 = vmatpush1.bf16.xpose.msra.mxu0 0
        %9406 = vmatprep.subr.bf16.mxu0 0
        %9407 = vmatpush1.bf16.xpose.msra.mxu0 0
        %9408 = vmatprep.subr.bf16.mxu0 0
        %9409 = vmatpush1.bf16.xpose.msra.mxu0 0
        %9410 = vmatprep.subr.bf16.mxu0 0
        %9411 = vmatpush1.bf16.xpose.msra.mxu0 0
        %9412 = vmatprep.subr.bf16.mxu0 0
        %9413 = vmatpush1.bf16.xpose.msra.mxu0 0
        %9414 = vmatprep.subr.bf16.mxu0 0
        %9415 = vmatpush1.bf16.xpose.msra.mxu0 0
        %9416 = vmatprep.subr.bf16.mxu0 0
        %9417 = vmatpush1.bf16.xpose.msra.mxu0 0
        %9418 = vmatprep.subr.bf16.mxu0 0
        %9419 = vmatpush1.bf16.xpose.msra.mxu0 0
        %9420 = vmatprep.subr.bf16.mxu0 0
        %9421 = vmatpush1.bf16.xpose.msra.mxu0 0
        %9422 = vmatprep.subr.bf16.mxu0 0
        %9423 = vmatpush1.bf16.xpose.msra.mxu0 0
        %9424 = vmatprep.subr.bf16.mxu0 0
        %9425 = vmatpush1.bf16.xpose.msra.mxu0 0
        %9426 = vmatprep.subr.bf16.mxu0 0
        %9427 = vmatpush1.bf16.xpose.msra.mxu0 0
        %9428 = vmatprep.subr.bf16.mxu0 0
        %9429 = vmatpush1.bf16.xpose.msra.mxu0 0
        %9430 = vmatprep.subr.bf16.mxu0 0
        %9431 = vmatpush1.bf16.xpose.msra.mxu0 0
        %9432 = vmatprep.subr.bf16.mxu0 0
        %9433 = vmatpush1.bf16.xpose.msra.mxu0 0
        %9434 = vmatprep.mubr.bf16.mxu0 0
        %9435 = vmatmul.mubr.bf16.gmra.mrb[0].mxu0 %v9397
        %v9436 = vpop.f32.mrb[0].mxu0
        %v9437 = vadd.f32 0.0, %v9436
        %v9438 = vpop.f32.mrb[0].mxu0
        %v9439 = vpop.f32.mrb[0].mxu0
        %v9440 = vadd.f32 0.0, %v9439
        %v9441 = vpop.f32.mrb[0].mxu0
        %9442 = vdwg.mxu0
        %9443 = vrot.lane.b32.xlu0 %v1209, 16
        %v9444 = vpop.permute.xlu0 %9443
        %9445 = vrot.lane.b32.xlu0 %v1217, 16
        %v9446 = vpop.permute.xlu0 %9445
        %v9448 = vsel %vm1231, %v9444, 0
        %v9451 = vsel %vm1231, %v9446, 0
        %9453 = vmatprep.subr.bf16.mxu0 0
        %9454 = vmatpush1.bf16.xpose.msra.mxu0 %v9451
        %9455 = vmatprep.subr.bf16.mxu0 0
        %9456 = vmatpush1.bf16.xpose.msra.mxu0 0
        %9457 = vmatprep.subr.bf16.mxu0 0
        %9458 = vmatpush1.bf16.xpose.msra.mxu0 0
        %9459 = vmatprep.subr.bf16.mxu0 0
        %9460 = vmatpush1.bf16.xpose.msra.mxu0 0
        %9461 = vmatprep.subr.bf16.mxu0 0
        %9462 = vmatpush1.bf16.xpose.msra.mxu0 0
        %9463 = vmatprep.subr.bf16.mxu0 0
        %9464 = vmatpush1.bf16.xpose.msra.mxu0 0
        %9465 = vmatprep.subr.bf16.mxu0 0
        %9466 = vmatpush1.bf16.xpose.msra.mxu0 0
        %9467 = vmatprep.subr.bf16.mxu0 0
        %9468 = vmatpush1.bf16.xpose.msra.mxu0 0
        %9469 = vmatprep.subr.bf16.mxu0 0
        %9470 = vmatpush1.bf16.xpose.msra.mxu0 0
        %9471 = vmatprep.subr.bf16.mxu0 0
        %9472 = vmatpush1.bf16.xpose.msra.mxu0 0
        %9473 = vmatprep.subr.bf16.mxu0 0
        %9474 = vmatpush1.bf16.xpose.msra.mxu0 0
        %9475 = vmatprep.subr.bf16.mxu0 0
        %9476 = vmatpush1.bf16.xpose.msra.mxu0 0
        %9477 = vmatprep.subr.bf16.mxu0 0
        %9478 = vmatpush1.bf16.xpose.msra.mxu0 0
        %9479 = vmatprep.subr.bf16.mxu0 0
        %9480 = vmatpush1.bf16.xpose.msra.mxu0 0
        %9481 = vmatprep.subr.bf16.mxu0 0
        %9482 = vmatpush1.bf16.xpose.msra.mxu0 0
        %9483 = vmatprep.subr.bf16.mxu0 0
        %9484 = vmatpush1.bf16.xpose.msra.mxu0 0
        %9485 = vmatprep.mubr.bf16.mxu0 0
        %9486 = vmatmul.mubr.bf16.gmra.mrb[0].mxu0 %v9448
        %v9487 = vpop.f32.mrb[0].mxu0
        %v9488 = vadd.f32 0.0, %v9487
        %v9489 = vpop.f32.mrb[0].mxu0
        %v9490 = vpop.f32.mrb[0].mxu0
        %v9491 = vadd.f32 0.0, %v9490
        %v9492 = vpop.f32.mrb[0].mxu0
        %9493 = vdwg.mxu0
        %9494 = vrot.lane.b32.xlu0 %v1210, 16
        %v9495 = vpop.permute.xlu0 %9494
        %9496 = vrot.lane.b32.xlu0 %v1218, 16
        %v9497 = vpop.permute.xlu0 %9496
        %v9499 = vsel %vm1231, %v9495, 0
        %v9502 = vsel %vm1231, %v9497, 0
        %9504 = vmatprep.subr.bf16.mxu0 0
        %9505 = vmatpush1.bf16.xpose.msra.mxu0 %v9502
        %9506 = vmatprep.subr.bf16.mxu0 0
        %9507 = vmatpush1.bf16.xpose.msra.mxu0 0
        %9508 = vmatprep.subr.bf16.mxu0 0
        %9509 = vmatpush1.bf16.xpose.msra.mxu0 0
        %9510 = vmatprep.subr.bf16.mxu0 0
        %9511 = vmatpush1.bf16.xpose.msra.mxu0 0
        %9512 = vmatprep.subr.bf16.mxu0 0
        %9513 = vmatpush1.bf16.xpose.msra.mxu0 0
        %9514 = vmatprep.subr.bf16.mxu0 0
        %9515 = vmatpush1.bf16.xpose.msra.mxu0 0
        %9516 = vmatprep.subr.bf16.mxu0 0
        %9517 = vmatpush1.bf16.xpose.msra.mxu0 0
        %9518 = vmatprep.subr.bf16.mxu0 0
        %9519 = vmatpush1.bf16.xpose.msra.mxu0 0
        %9520 = vmatprep.subr.bf16.mxu0 0
        %9521 = vmatpush1.bf16.xpose.msra.mxu0 0
        %9522 = vmatprep.subr.bf16.mxu0 0
        %9523 = vmatpush1.bf16.xpose.msra.mxu0 0
        %9524 = vmatprep.subr.bf16.mxu0 0
        %9525 = vmatpush1.bf16.xpose.msra.mxu0 0
        %9526 = vmatprep.subr.bf16.mxu0 0
        %9527 = vmatpush1.bf16.xpose.msra.mxu0 0
        %9528 = vmatprep.subr.bf16.mxu0 0
        %9529 = vmatpush1.bf16.xpose.msra.mxu0 0
        %9530 = vmatprep.subr.bf16.mxu0 0
        %9531 = vmatpush1.bf16.xpose.msra.mxu0 0
        %9532 = vmatprep.subr.bf16.mxu0 0
        %9533 = vmatpush1.bf16.xpose.msra.mxu0 0
        %9534 = vmatprep.subr.bf16.mxu0 0
        %9535 = vmatpush1.bf16.xpose.msra.mxu0 0
        %9536 = vmatprep.mubr.bf16.mxu0 0
        %9537 = vmatmul.mubr.bf16.gmra.mrb[0].mxu0 %v9499
        %v9538 = vpop.f32.mrb[0].mxu0
        %v9539 = vadd.f32 0.0, %v9538
        %v9540 = vpop.f32.mrb[0].mxu0
        %v9541 = vpop.f32.mrb[0].mxu0
        %v9542 = vadd.f32 0.0, %v9541
        %v9543 = vpop.f32.mrb[0].mxu0
        %9544 = vdwg.mxu0
        %9545 = vrot.lane.b32.xlu0 %v1211, 16
        %v9546 = vpop.permute.xlu0 %9545
        %9547 = vrot.lane.b32.xlu0 %v1219, 16
        %v9548 = vpop.permute.xlu0 %9547
        %v9550 = vsel %vm1231, %v9546, 0
        %v9553 = vsel %vm1231, %v9548, 0
        %9555 = vmatprep.subr.bf16.mxu0 0
        %9556 = vmatpush1.bf16.xpose.msra.mxu0 %v9553
        %9557 = vmatprep.subr.bf16.mxu0 0
        %9558 = vmatpush1.bf16.xpose.msra.mxu0 0
        %9559 = vmatprep.subr.bf16.mxu0 0
        %9560 = vmatpush1.bf16.xpose.msra.mxu0 0
        %9561 = vmatprep.subr.bf16.mxu0 0
        %9562 = vmatpush1.bf16.xpose.msra.mxu0 0
        %9563 = vmatprep.subr.bf16.mxu0 0
        %9564 = vmatpush1.bf16.xpose.msra.mxu0 0
        %9565 = vmatprep.subr.bf16.mxu0 0
        %9566 = vmatpush1.bf16.xpose.msra.mxu0 0
        %9567 = vmatprep.subr.bf16.mxu0 0
        %9568 = vmatpush1.bf16.xpose.msra.mxu0 0
        %9569 = vmatprep.subr.bf16.mxu0 0
        %9570 = vmatpush1.bf16.xpose.msra.mxu0 0
        %9571 = vmatprep.subr.bf16.mxu0 0
        %9572 = vmatpush1.bf16.xpose.msra.mxu0 0
        %9573 = vmatprep.subr.bf16.mxu0 0
        %9574 = vmatpush1.bf16.xpose.msra.mxu0 0
        %9575 = vmatprep.subr.bf16.mxu0 0
        %9576 = vmatpush1.bf16.xpose.msra.mxu0 0
        %9577 = vmatprep.subr.bf16.mxu0 0
        %9578 = vmatpush1.bf16.xpose.msra.mxu0 0
        %9579 = vmatprep.subr.bf16.mxu0 0
        %9580 = vmatpush1.bf16.xpose.msra.mxu0 0
        %9581 = vmatprep.subr.bf16.mxu0 0
        %9582 = vmatpush1.bf16.xpose.msra.mxu0 0
        %9583 = vmatprep.subr.bf16.mxu0 0
        %9584 = vmatpush1.bf16.xpose.msra.mxu0 0
        %9585 = vmatprep.subr.bf16.mxu0 0
        %9586 = vmatpush1.bf16.xpose.msra.mxu0 0
        %9587 = vmatprep.mubr.bf16.mxu0 0
        %9588 = vmatmul.mubr.bf16.gmra.mrb[0].mxu0 %v9550
        %v9589 = vpop.f32.mrb[0].mxu0
        %v9590 = vadd.f32 0.0, %v9589
        %v9591 = vpop.f32.mrb[0].mxu0
        %v9592 = vpop.f32.mrb[0].mxu0
        %v9593 = vadd.f32 0.0, %v9592
        %v9594 = vpop.f32.mrb[0].mxu0
        %9595 = vdwg.mxu0
        %9596 = vrot.lane.b32.xlu0 %v1212, 16
        %v9597 = vpop.permute.xlu0 %9596
        %9598 = vrot.lane.b32.xlu0 %v1220, 16
        %v9599 = vpop.permute.xlu0 %9598
        %v9601 = vsel %vm1231, %v9597, 0
        %v9604 = vsel %vm1231, %v9599, 0
        %9606 = vmatprep.subr.bf16.mxu0 0
        %9607 = vmatpush1.bf16.xpose.msra.mxu0 %v9604
        %9608 = vmatprep.subr.bf16.mxu0 0
        %9609 = vmatpush1.bf16.xpose.msra.mxu0 0
        %9610 = vmatprep.subr.bf16.mxu0 0
        %9611 = vmatpush1.bf16.xpose.msra.mxu0 0
        %9612 = vmatprep.subr.bf16.mxu0 0
        %9613 = vmatpush1.bf16.xpose.msra.mxu0 0
        %9614 = vmatprep.subr.bf16.mxu0 0
        %9615 = vmatpush1.bf16.xpose.msra.mxu0 0
        %9616 = vmatprep.subr.bf16.mxu0 0
        %9617 = vmatpush1.bf16.xpose.msra.mxu0 0
        %9618 = vmatprep.subr.bf16.mxu0 0
        %9619 = vmatpush1.bf16.xpose.msra.mxu0 0
        %9620 = vmatprep.subr.bf16.mxu0 0
        %9621 = vmatpush1.bf16.xpose.msra.mxu0 0
        %9622 = vmatprep.subr.bf16.mxu0 0
        %9623 = vmatpush1.bf16.xpose.msra.mxu0 0
        %9624 = vmatprep.subr.bf16.mxu0 0
        %9625 = vmatpush1.bf16.xpose.msra.mxu0 0
        %9626 = vmatprep.subr.bf16.mxu0 0
        %9627 = vmatpush1.bf16.xpose.msra.mxu0 0
        %9628 = vmatprep.subr.bf16.mxu0 0
        %9629 = vmatpush1.bf16.xpose.msra.mxu0 0
        %9630 = vmatprep.subr.bf16.mxu0 0
        %9631 = vmatpush1.bf16.xpose.msra.mxu0 0
        %9632 = vmatprep.subr.bf16.mxu0 0
        %9633 = vmatpush1.bf16.xpose.msra.mxu0 0
        %9634 = vmatprep.subr.bf16.mxu0 0
        %9635 = vmatpush1.bf16.xpose.msra.mxu0 0
        %9636 = vmatprep.subr.bf16.mxu0 0
        %9637 = vmatpush1.bf16.xpose.msra.mxu0 0
        %9638 = vmatprep.mubr.bf16.mxu0 0
        %9639 = vmatmul.mubr.bf16.gmra.mrb[0].mxu0 %v9601
        %v9640 = vpop.f32.mrb[0].mxu0
        %v9641 = vadd.f32 0.0, %v9640
        %v9642 = vpop.f32.mrb[0].mxu0
        %v9643 = vpop.f32.mrb[0].mxu0
        %v9644 = vadd.f32 0.0, %v9643
        %v9645 = vpop.f32.mrb[0].mxu0
        %9646 = vdwg.mxu0
        %v9647 = vmul.f32 %v9284, 0.25
        %v9648 = vmul.f32 %v9287, 0.25
        %v9649 = vmul.f32 %v9335, 0.25
        %v9650 = vmul.f32 %v9338, 0.25
        %v9651 = vmul.f32 %v9386, 0.25
        %v9652 = vmul.f32 %v9389, 0.25
        %v9653 = vmul.f32 %v9437, 0.25
        %v9654 = vmul.f32 %v9440, 0.25
        %v9655 = vmul.f32 %v9488, 0.25
        %v9656 = vmul.f32 %v9491, 0.25
        %v9657 = vmul.f32 %v9539, 0.25
        %v9658 = vmul.f32 %v9542, 0.25
        %v9659 = vmul.f32 %v9590, 0.25
        %v9660 = vmul.f32 %v9593, 0.25
        %v9661 = vmul.f32 %v9641, 0.25
        %v9662 = vmul.f32 %v9644, 0.25
        %v9663 = vadd.f32 %v9647, %v1229
        %v9664 = vadd.f32 %v9648, %v1230
        %v9665 = vadd.f32 %v9649, %v1229
        %v9666 = vadd.f32 %v9650, %v1230
        %v9667 = vadd.f32 %v9651, %v1229
        %v9668 = vadd.f32 %v9652, %v1230
        %v9669 = vadd.f32 %v9653, %v1229
        %v9670 = vadd.f32 %v9654, %v1230
        %v9671 = vadd.f32 %v9655, %v1229
        %v9672 = vadd.f32 %v9656, %v1230
        %v9673 = vadd.f32 %v9657, %v1229
        %v9674 = vadd.f32 %v9658, %v1230
        %v9675 = vadd.f32 %v9659, %v1229
        %v9676 = vadd.f32 %v9660, %v1230
        %v9677 = vadd.f32 %v9661, %v1229
        %v9678 = vadd.f32 %v9662, %v1230
        %v9679 = vsel %vm1231, %v9663, -inf
        %9680 = vmax.xlane.f32.xlu0 %v9679
        %v9681 = vpop.xlane.xlu0 %9680
        %v9682 = vsel %vm1231, %v9664, -inf
        %9683 = vmax.xlane.f32.xlu0 %v9682
        %v9684 = vpop.xlane.xlu0 %9683
        %v9685 = vsel %vm1231, %v9665, -inf
        %9686 = vmax.xlane.f32.xlu0 %v9685
        %v9687 = vpop.xlane.xlu0 %9686
        %v9688 = vsel %vm1231, %v9666, -inf
        %9689 = vmax.xlane.f32.xlu0 %v9688
        %v9690 = vpop.xlane.xlu0 %9689
        %v9691 = vsel %vm1231, %v9667, -inf
        %9692 = vmax.xlane.f32.xlu0 %v9691
        %v9693 = vpop.xlane.xlu0 %9692
        %v9694 = vsel %vm1231, %v9668, -inf
        %9695 = vmax.xlane.f32.xlu0 %v9694
        %v9696 = vpop.xlane.xlu0 %9695
        %v9697 = vsel %vm1231, %v9669, -inf
        %9698 = vmax.xlane.f32.xlu0 %v9697
        %v9699 = vpop.xlane.xlu0 %9698
        %v9700 = vsel %vm1231, %v9670, -inf
        %9701 = vmax.xlane.f32.xlu0 %v9700
        %v9702 = vpop.xlane.xlu0 %9701
        %v9703 = vsel %vm1231, %v9671, -inf
        %9704 = vmax.xlane.f32.xlu0 %v9703
        %v9705 = vpop.xlane.xlu0 %9704
        %v9706 = vsel %vm1231, %v9672, -inf
        %9707 = vmax.xlane.f32.xlu0 %v9706
        %v9708 = vpop.xlane.xlu0 %9707
        %v9709 = vsel %vm1231, %v9673, -inf
        %9710 = vmax.xlane.f32.xlu0 %v9709
        %v9711 = vpop.xlane.xlu0 %9710
        %v9712 = vsel %vm1231, %v9674, -inf
        %9713 = vmax.xlane.f32.xlu0 %v9712
        %v9714 = vpop.xlane.xlu0 %9713
        %v9715 = vsel %vm1231, %v9675, -inf
        %9716 = vmax.xlane.f32.xlu0 %v9715
        %v9717 = vpop.xlane.xlu0 %9716
        %v9718 = vsel %vm1231, %v9676, -inf
        %9719 = vmax.xlane.f32.xlu0 %v9718
        %v9720 = vpop.xlane.xlu0 %9719
        %v9721 = vsel %vm1231, %v9677, -inf
        %9722 = vmax.xlane.f32.xlu0 %v9721
        %v9723 = vpop.xlane.xlu0 %9722
        %v9724 = vsel %vm1231, %v9678, -inf
        %9725 = vmax.xlane.f32.xlu0 %v9724
        %v9726 = vpop.xlane.xlu0 %9725
        %v9727 = vsub.f32 %v9663, %v9681
        %v9728 = vsub.f32 %v9664, %v9684
        %v9729 = vsub.f32 %v9665, %v9687
        %v9730 = vsub.f32 %v9666, %v9690
        %v9731 = vsub.f32 %v9667, %v9693
        %v9732 = vsub.f32 %v9668, %v9696
        %v9733 = vsub.f32 %v9669, %v9699
        %v9734 = vsub.f32 %v9670, %v9702
        %v9735 = vsub.f32 %v9671, %v9705
        %v9736 = vsub.f32 %v9672, %v9708
        %v9737 = vsub.f32 %v9673, %v9711
        %v9738 = vsub.f32 %v9674, %v9714
        %v9739 = vsub.f32 %v9675, %v9717
        %v9740 = vsub.f32 %v9676, %v9720
        %v9741 = vsub.f32 %v9677, %v9723
        %v9742 = vsub.f32 %v9678, %v9726
        %v9743 = vmul.f32 %v9727, 1.442695
        %v9744 = vpow.pop %v9743
        %v9745 = vmul.f32 %v9728, 1.442695
        %v9746 = vpow.pop %v9745
        %v9747 = vmul.f32 %v9729, 1.442695
        %v9748 = vpow.pop %v9747
        %v9749 = vmul.f32 %v9730, 1.442695
        %v9750 = vpow.pop %v9749
        %v9751 = vmul.f32 %v9731, 1.442695
        %v9752 = vpow.pop %v9751
        %v9753 = vmul.f32 %v9732, 1.442695
        %v9754 = vpow.pop %v9753
        %v9755 = vmul.f32 %v9733, 1.442695
        %v9756 = vpow.pop %v9755
        %v9757 = vmul.f32 %v9734, 1.442695
        %v9758 = vpow.pop %v9757
        %v9759 = vmul.f32 %v9735, 1.442695
        %v9760 = vpow.pop %v9759
        %v9761 = vmul.f32 %v9736, 1.442695
        %v9762 = vpow.pop %v9761
        %v9763 = vmul.f32 %v9737, 1.442695
        %v9764 = vpow.pop %v9763
        %v9765 = vmul.f32 %v9738, 1.442695
        %v9766 = vpow.pop %v9765
        %v9767 = vmul.f32 %v9739, 1.442695
        %v9768 = vpow.pop %v9767
        %v9769 = vmul.f32 %v9740, 1.442695
        %v9770 = vpow.pop %v9769
        %v9771 = vmul.f32 %v9741, 1.442695
        %v9772 = vpow.pop %v9771
        %v9773 = vmul.f32 %v9742, 1.442695
        %v9774 = vpow.pop %v9773
        %v9775 = vsel %vm1231, %v9744, 0.0
        %9776 = vadd.xlane.f32.xlu0 %v9775
        %v9777 = vpop.xlane.xlu0 %9776
        %v9778 = vsel %vm1231, %v9746, 0.0
        %9779 = vadd.xlane.f32.xlu0 %v9778
        %v9780 = vpop.xlane.xlu0 %9779
        %v9781 = vsel %vm1231, %v9748, 0.0
        %9782 = vadd.xlane.f32.xlu0 %v9781
        %v9783 = vpop.xlane.xlu0 %9782
        %v9784 = vsel %vm1231, %v9750, 0.0
        %9785 = vadd.xlane.f32.xlu0 %v9784
        %v9786 = vpop.xlane.xlu0 %9785
        %v9787 = vsel %vm1231, %v9752, 0.0
        %9788 = vadd.xlane.f32.xlu0 %v9787
        %v9789 = vpop.xlane.xlu0 %9788
        %v9790 = vsel %vm1231, %v9754, 0.0
        %9791 = vadd.xlane.f32.xlu0 %v9790
        %v9792 = vpop.xlane.xlu0 %9791
        %v9793 = vsel %vm1231, %v9756, 0.0
        %9794 = vadd.xlane.f32.xlu0 %v9793
        %v9795 = vpop.xlane.xlu0 %9794
        %v9796 = vsel %vm1231, %v9758, 0.0
        %9797 = vadd.xlane.f32.xlu0 %v9796
        %v9798 = vpop.xlane.xlu0 %9797
        %v9799 = vsel %vm1231, %v9760, 0.0
        %9800 = vadd.xlane.f32.xlu0 %v9799
        %v9801 = vpop.xlane.xlu0 %9800
        %v9802 = vsel %vm1231, %v9762, 0.0
        %9803 = vadd.xlane.f32.xlu0 %v9802
        %v9804 = vpop.xlane.xlu0 %9803
        %v9805 = vsel %vm1231, %v9764, 0.0
        %9806 = vadd.xlane.f32.xlu0 %v9805
        %v9807 = vpop.xlane.xlu0 %9806
        %v9808 = vsel %vm1231, %v9766, 0.0
        %9809 = vadd.xlane.f32.xlu0 %v9808
        %v9810 = vpop.xlane.xlu0 %9809
        %v9811 = vsel %vm1231, %v9768, 0.0
        %9812 = vadd.xlane.f32.xlu0 %v9811
        %v9813 = vpop.xlane.xlu0 %9812
        %v9814 = vsel %vm1231, %v9770, 0.0
        %9815 = vadd.xlane.f32.xlu0 %v9814
        %v9816 = vpop.xlane.xlu0 %9815
        %v9817 = vsel %vm1231, %v9772, 0.0
        %9818 = vadd.xlane.f32.xlu0 %v9817
        %v9819 = vpop.xlane.xlu0 %9818
        %v9820 = vsel %vm1231, %v9774, 0.0
        %9821 = vadd.xlane.f32.xlu0 %v9820
        %v9822 = vpop.xlane.xlu0 %9821
        %v9823 = vrcp.pop %v9777
        %v9824 = vrcp.pop %v9780
        %v9825 = vrcp.pop %v9783
        %v9826 = vrcp.pop %v9786
        %v9827 = vrcp.pop %v9789
        %v9828 = vrcp.pop %v9792
        %v9829 = vrcp.pop %v9795
        %v9830 = vrcp.pop %v9798
        %v9831 = vrcp.pop %v9801
        %v9832 = vrcp.pop %v9804
        %v9833 = vrcp.pop %v9807
        %v9834 = vrcp.pop %v9810
        %v9835 = vrcp.pop %v9813
        %v9836 = vrcp.pop %v9816
        %v9837 = vrcp.pop %v9819
        %v9838 = vrcp.pop %v9822
        %v9839 = vmul.f32 %v9744, %v9823
        %v9840 = vmul.f32 %v9746, %v9824
        %v9841 = vmul.f32 %v9748, %v9825
        %v9842 = vmul.f32 %v9750, %v9826
        %v9843 = vmul.f32 %v9752, %v9827
        %v9844 = vmul.f32 %v9754, %v9828
        %v9845 = vmul.f32 %v9756, %v9829
        %v9846 = vmul.f32 %v9758, %v9830
        %v9847 = vmul.f32 %v9760, %v9831
        %v9848 = vmul.f32 %v9762, %v9832
        %v9849 = vmul.f32 %v9764, %v9833
        %v9850 = vmul.f32 %v9766, %v9834
        %v9851 = vmul.f32 %v9768, %v9835
        %v9852 = vmul.f32 %v9770, %v9836
        %v9853 = vmul.f32 %v9772, %v9837
        %v9854 = vmul.f32 %v9774, %v9838
        %v9855 = vpack.c.bf16 %v9840, %v9839
        %v9856 = vpack.c.bf16 %v9842, %v9841
        %v9857 = vpack.c.bf16 %v9844, %v9843
        %v9858 = vpack.c.bf16 %v9846, %v9845
        %v9859 = vpack.c.bf16 %v9848, %v9847
        %v9860 = vpack.c.bf16 %v9850, %v9849
        %v9861 = vpack.c.bf16 %v9852, %v9851
        %v9862 = vpack.c.bf16 %v9854, %v9853
        %9863 = vrot.lane.b32.xlu0 %v1221, 16
        %v9864 = vpop.permute.xlu0 %9863
        %v9867 = vsel %vm1231, %v9855, 0
        %9869 = vmatprep.subr.bf16.mxu0 0
        %9870 = vmatpush1.bf16.msra.mxu0 %v9864
        %9871 = vmatprep.subr.bf16.mxu0 0
        %9872 = vmatpush1.bf16.msra.mxu0 0
        %9873 = vmatprep.subr.bf16.mxu0 0
        %9874 = vmatpush1.bf16.msra.mxu0 0
        %9875 = vmatprep.subr.bf16.mxu0 0
        %9876 = vmatpush1.bf16.msra.mxu0 0
        %9877 = vmatprep.subr.bf16.mxu0 0
        %9878 = vmatpush1.bf16.msra.mxu0 0
        %9879 = vmatprep.subr.bf16.mxu0 0
        %9880 = vmatpush1.bf16.msra.mxu0 0
        %9881 = vmatprep.subr.bf16.mxu0 0
        %9882 = vmatpush1.bf16.msra.mxu0 0
        %9883 = vmatprep.subr.bf16.mxu0 0
        %9884 = vmatpush1.bf16.msra.mxu0 0
        %9885 = vmatprep.subr.bf16.mxu0 0
        %9886 = vmatpush1.bf16.msra.mxu0 0
        %9887 = vmatprep.subr.bf16.mxu0 0
        %9888 = vmatpush1.bf16.msra.mxu0 0
        %9889 = vmatprep.subr.bf16.mxu0 0
        %9890 = vmatpush1.bf16.msra.mxu0 0
        %9891 = vmatprep.subr.bf16.mxu0 0
        %9892 = vmatpush1.bf16.msra.mxu0 0
        %9893 = vmatprep.subr.bf16.mxu0 0
        %9894 = vmatpush1.bf16.msra.mxu0 0
        %9895 = vmatprep.subr.bf16.mxu0 0
        %9896 = vmatpush1.bf16.msra.mxu0 0
        %9897 = vmatprep.subr.bf16.mxu0 0
        %9898 = vmatpush1.bf16.msra.mxu0 0
        %9899 = vmatprep.subr.bf16.mxu0 0
        %9900 = vmatpush1.bf16.msra.mxu0 0
        %9901 = vmatprep.mubr.bf16.mxu0 0
        %9902 = vmatmul.mubr.bf16.gmra.mrb[0].mxu0 %v9867
        %v9903 = vpop.f32.mrb[0].mxu0
        %v9904 = vadd.f32 0.0, %v9903
        %v9905 = vpop.f32.mrb[0].mxu0
        %v9906 = vpop.f32.mrb[0].mxu0
        %v9907 = vadd.f32 0.0, %v9906
        %v9908 = vpop.f32.mrb[0].mxu0
        %9909 = vdwg.mxu0
        %9910 = vrot.lane.b32.xlu0 %v1222, 16
        %v9911 = vpop.permute.xlu0 %9910
        %v9914 = vsel %vm1231, %v9856, 0
        %9916 = vmatprep.subr.bf16.mxu0 0
        %9917 = vmatpush1.bf16.msra.mxu0 %v9911
        %9918 = vmatprep.subr.bf16.mxu0 0
        %9919 = vmatpush1.bf16.msra.mxu0 0
        %9920 = vmatprep.subr.bf16.mxu0 0
        %9921 = vmatpush1.bf16.msra.mxu0 0
        %9922 = vmatprep.subr.bf16.mxu0 0
        %9923 = vmatpush1.bf16.msra.mxu0 0
        %9924 = vmatprep.subr.bf16.mxu0 0
        %9925 = vmatpush1.bf16.msra.mxu0 0
        %9926 = vmatprep.subr.bf16.mxu0 0
        %9927 = vmatpush1.bf16.msra.mxu0 0
        %9928 = vmatprep.subr.bf16.mxu0 0
        %9929 = vmatpush1.bf16.msra.mxu0 0
        %9930 = vmatprep.subr.bf16.mxu0 0
        %9931 = vmatpush1.bf16.msra.mxu0 0
        %9932 = vmatprep.subr.bf16.mxu0 0
        %9933 = vmatpush1.bf16.msra.mxu0 0
        %9934 = vmatprep.subr.bf16.mxu0 0
        %9935 = vmatpush1.bf16.msra.mxu0 0
        %9936 = vmatprep.subr.bf16.mxu0 0
        %9937 = vmatpush1.bf16.msra.mxu0 0
        %9938 = vmatprep.subr.bf16.mxu0 0
        %9939 = vmatpush1.bf16.msra.mxu0 0
        %9940 = vmatprep.subr.bf16.mxu0 0
        %9941 = vmatpush1.bf16.msra.mxu0 0
        %9942 = vmatprep.subr.bf16.mxu0 0
        %9943 = vmatpush1.bf16.msra.mxu0 0
        %9944 = vmatprep.subr.bf16.mxu0 0
        %9945 = vmatpush1.bf16.msra.mxu0 0
        %9946 = vmatprep.subr.bf16.mxu0 0
        %9947 = vmatpush1.bf16.msra.mxu0 0
        %9948 = vmatprep.mubr.bf16.mxu0 0
        %9949 = vmatmul.mubr.bf16.gmra.mrb[0].mxu0 %v9914
        %v9950 = vpop.f32.mrb[0].mxu0
        %v9951 = vadd.f32 0.0, %v9950
        %v9952 = vpop.f32.mrb[0].mxu0
        %v9953 = vpop.f32.mrb[0].mxu0
        %v9954 = vadd.f32 0.0, %v9953
        %v9955 = vpop.f32.mrb[0].mxu0
        %9956 = vdwg.mxu0
        %9957 = vrot.lane.b32.xlu0 %v1223, 16
        %v9958 = vpop.permute.xlu0 %9957
        %v9961 = vsel %vm1231, %v9857, 0
        %9963 = vmatprep.subr.bf16.mxu0 0
        %9964 = vmatpush1.bf16.msra.mxu0 %v9958
        %9965 = vmatprep.subr.bf16.mxu0 0
        %9966 = vmatpush1.bf16.msra.mxu0 0
        %9967 = vmatprep.subr.bf16.mxu0 0
        %9968 = vmatpush1.bf16.msra.mxu0 0
        %9969 = vmatprep.subr.bf16.mxu0 0
        %9970 = vmatpush1.bf16.msra.mxu0 0
        %9971 = vmatprep.subr.bf16.mxu0 0
        %9972 = vmatpush1.bf16.msra.mxu0 0
        %9973 = vmatprep.subr.bf16.mxu0 0
        %9974 = vmatpush1.bf16.msra.mxu0 0
        %9975 = vmatprep.subr.bf16.mxu0 0
        %9976 = vmatpush1.bf16.msra.mxu0 0
        %9977 = vmatprep.subr.bf16.mxu0 0
        %9978 = vmatpush1.bf16.msra.mxu0 0
        %9979 = vmatprep.subr.bf16.mxu0 0
        %9980 = vmatpush1.bf16.msra.mxu0 0
        %9981 = vmatprep.subr.bf16.mxu0 0
        %9982 = vmatpush1.bf16.msra.mxu0 0
        %9983 = vmatprep.subr.bf16.mxu0 0
        %9984 = vmatpush1.bf16.msra.mxu0 0
        %9985 = vmatprep.subr.bf16.mxu0 0
        %9986 = vmatpush1.bf16.msra.mxu0 0
        %9987 = vmatprep.subr.bf16.mxu0 0
        %9988 = vmatpush1.bf16.msra.mxu0 0
        %9989 = vmatprep.subr.bf16.mxu0 0
        %9990 = vmatpush1.bf16.msra.mxu0 0
        %9991 = vmatprep.subr.bf16.mxu0 0
        %9992 = vmatpush1.bf16.msra.mxu0 0
        %9993 = vmatprep.subr.bf16.mxu0 0
        %9994 = vmatpush1.bf16.msra.mxu0 0
        %9995 = vmatprep.mubr.bf16.mxu0 0
        %9996 = vmatmul.mubr.bf16.gmra.mrb[0].mxu0 %v9961
        %v9997 = vpop.f32.mrb[0].mxu0
        %v9998 = vadd.f32 0.0, %v9997
        %v9999 = vpop.f32.mrb[0].mxu0
        %v10000 = vpop.f32.mrb[0].mxu0
        %v10001 = vadd.f32 0.0, %v10000
        %v10002 = vpop.f32.mrb[0].mxu0
        %10003 = vdwg.mxu0
        %10004 = vrot.lane.b32.xlu0 %v1224, 16
        %v10005 = vpop.permute.xlu0 %10004
        %v10008 = vsel %vm1231, %v9858, 0
        %10010 = vmatprep.subr.bf16.mxu0 0
        %10011 = vmatpush1.bf16.msra.mxu0 %v10005
        %10012 = vmatprep.subr.bf16.mxu0 0
        %10013 = vmatpush1.bf16.msra.mxu0 0
        %10014 = vmatprep.subr.bf16.mxu0 0
        %10015 = vmatpush1.bf16.msra.mxu0 0
        %10016 = vmatprep.subr.bf16.mxu0 0
        %10017 = vmatpush1.bf16.msra.mxu0 0
        %10018 = vmatprep.subr.bf16.mxu0 0
        %10019 = vmatpush1.bf16.msra.mxu0 0
        %10020 = vmatprep.subr.bf16.mxu0 0
        %10021 = vmatpush1.bf16.msra.mxu0 0
        %10022 = vmatprep.subr.bf16.mxu0 0
        %10023 = vmatpush1.bf16.msra.mxu0 0
        %10024 = vmatprep.subr.bf16.mxu0 0
        %10025 = vmatpush1.bf16.msra.mxu0 0
        %10026 = vmatprep.subr.bf16.mxu0 0
        %10027 = vmatpush1.bf16.msra.mxu0 0
        %10028 = vmatprep.subr.bf16.mxu0 0
        %10029 = vmatpush1.bf16.msra.mxu0 0
        %10030 = vmatprep.subr.bf16.mxu0 0
        %10031 = vmatpush1.bf16.msra.mxu0 0
        %10032 = vmatprep.subr.bf16.mxu0 0
        %10033 = vmatpush1.bf16.msra.mxu0 0
        %10034 = vmatprep.subr.bf16.mxu0 0
        %10035 = vmatpush1.bf16.msra.mxu0 0
        %10036 = vmatprep.subr.bf16.mxu0 0
        %10037 = vmatpush1.bf16.msra.mxu0 0
        %10038 = vmatprep.subr.bf16.mxu0 0
        %10039 = vmatpush1.bf16.msra.mxu0 0
        %10040 = vmatprep.subr.bf16.mxu0 0
        %10041 = vmatpush1.bf16.msra.mxu0 0
        %10042 = vmatprep.mubr.bf16.mxu0 0
        %10043 = vmatmul.mubr.bf16.gmra.mrb[0].mxu0 %v10008
        %v10044 = vpop.f32.mrb[0].mxu0
        %v10045 = vadd.f32 0.0, %v10044
        %v10046 = vpop.f32.mrb[0].mxu0
        %v10047 = vpop.f32.mrb[0].mxu0
        %v10048 = vadd.f32 0.0, %v10047
        %v10049 = vpop.f32.mrb[0].mxu0
        %10050 = vdwg.mxu0
        %10051 = vrot.lane.b32.xlu0 %v1225, 16
        %v10052 = vpop.permute.xlu0 %10051
        %v10055 = vsel %vm1231, %v9859, 0
        %10057 = vmatprep.subr.bf16.mxu0 0
        %10058 = vmatpush1.bf16.msra.mxu0 %v10052
        %10059 = vmatprep.subr.bf16.mxu0 0
        %10060 = vmatpush1.bf16.msra.mxu0 0
        %10061 = vmatprep.subr.bf16.mxu0 0
        %10062 = vmatpush1.bf16.msra.mxu0 0
        %10063 = vmatprep.subr.bf16.mxu0 0
        %10064 = vmatpush1.bf16.msra.mxu0 0
        %10065 = vmatprep.subr.bf16.mxu0 0
        %10066 = vmatpush1.bf16.msra.mxu0 0
        %10067 = vmatprep.subr.bf16.mxu0 0
        %10068 = vmatpush1.bf16.msra.mxu0 0
        %10069 = vmatprep.subr.bf16.mxu0 0
        %10070 = vmatpush1.bf16.msra.mxu0 0
        %10071 = vmatprep.subr.bf16.mxu0 0
        %10072 = vmatpush1.bf16.msra.mxu0 0
        %10073 = vmatprep.subr.bf16.mxu0 0
        %10074 = vmatpush1.bf16.msra.mxu0 0
        %10075 = vmatprep.subr.bf16.mxu0 0
        %10076 = vmatpush1.bf16.msra.mxu0 0
        %10077 = vmatprep.subr.bf16.mxu0 0
        %10078 = vmatpush1.bf16.msra.mxu0 0
        %10079 = vmatprep.subr.bf16.mxu0 0
        %10080 = vmatpush1.bf16.msra.mxu0 0
        %10081 = vmatprep.subr.bf16.mxu0 0
        %10082 = vmatpush1.bf16.msra.mxu0 0
        %10083 = vmatprep.subr.bf16.mxu0 0
        %10084 = vmatpush1.bf16.msra.mxu0 0
        %10085 = vmatprep.subr.bf16.mxu0 0
        %10086 = vmatpush1.bf16.msra.mxu0 0
        %10087 = vmatprep.subr.bf16.mxu0 0
        %10088 = vmatpush1.bf16.msra.mxu0 0
        %10089 = vmatprep.mubr.bf16.mxu0 0
        %10090 = vmatmul.mubr.bf16.gmra.mrb[0].mxu0 %v10055
        %v10091 = vpop.f32.mrb[0].mxu0
        %v10092 = vadd.f32 0.0, %v10091
        %v10093 = vpop.f32.mrb[0].mxu0
        %v10094 = vpop.f32.mrb[0].mxu0
        %v10095 = vadd.f32 0.0, %v10094
        %v10096 = vpop.f32.mrb[0].mxu0
        %10097 = vdwg.mxu0
        %10098 = vrot.lane.b32.xlu0 %v1226, 16
        %v10099 = vpop.permute.xlu0 %10098
        %v10102 = vsel %vm1231, %v9860, 0
        %10104 = vmatprep.subr.bf16.mxu0 0
        %10105 = vmatpush1.bf16.msra.mxu0 %v10099
        %10106 = vmatprep.subr.bf16.mxu0 0
        %10107 = vmatpush1.bf16.msra.mxu0 0
        %10108 = vmatprep.subr.bf16.mxu0 0
        %10109 = vmatpush1.bf16.msra.mxu0 0
        %10110 = vmatprep.subr.bf16.mxu0 0
        %10111 = vmatpush1.bf16.msra.mxu0 0
        %10112 = vmatprep.subr.bf16.mxu0 0
        %10113 = vmatpush1.bf16.msra.mxu0 0
        %10114 = vmatprep.subr.bf16.mxu0 0
        %10115 = vmatpush1.bf16.msra.mxu0 0
        %10116 = vmatprep.subr.bf16.mxu0 0
        %10117 = vmatpush1.bf16.msra.mxu0 0
        %10118 = vmatprep.subr.bf16.mxu0 0
        %10119 = vmatpush1.bf16.msra.mxu0 0
        %10120 = vmatprep.subr.bf16.mxu0 0
        %10121 = vmatpush1.bf16.msra.mxu0 0
        %10122 = vmatprep.subr.bf16.mxu0 0
        %10123 = vmatpush1.bf16.msra.mxu0 0
        %10124 = vmatprep.subr.bf16.mxu0 0
        %10125 = vmatpush1.bf16.msra.mxu0 0
        %10126 = vmatprep.subr.bf16.mxu0 0
        %10127 = vmatpush1.bf16.msra.mxu0 0
        %10128 = vmatprep.subr.bf16.mxu0 0
        %10129 = vmatpush1.bf16.msra.mxu0 0
        %10130 = vmatprep.subr.bf16.mxu0 0
        %10131 = vmatpush1.bf16.msra.mxu0 0
        %10132 = vmatprep.subr.bf16.mxu0 0
        %10133 = vmatpush1.bf16.msra.mxu0 0
        %10134 = vmatprep.subr.bf16.mxu0 0
        %10135 = vmatpush1.bf16.msra.mxu0 0
        %10136 = vmatprep.mubr.bf16.mxu0 0
        %10137 = vmatmul.mubr.bf16.gmra.mrb[0].mxu0 %v10102
        %v10138 = vpop.f32.mrb[0].mxu0
        %v10139 = vadd.f32 0.0, %v10138
        %v10140 = vpop.f32.mrb[0].mxu0
        %v10141 = vpop.f32.mrb[0].mxu0
        %v10142 = vadd.f32 0.0, %v10141
        %v10143 = vpop.f32.mrb[0].mxu0
        %10144 = vdwg.mxu0
        %10145 = vrot.lane.b32.xlu0 %v1227, 16
        %v10146 = vpop.permute.xlu0 %10145
        %v10149 = vsel %vm1231, %v9861, 0
        %10151 = vmatprep.subr.bf16.mxu0 0
        %10152 = vmatpush1.bf16.msra.mxu0 %v10146
        %10153 = vmatprep.subr.bf16.mxu0 0
        %10154 = vmatpush1.bf16.msra.mxu0 0
        %10155 = vmatprep.subr.bf16.mxu0 0
        %10156 = vmatpush1.bf16.msra.mxu0 0
        %10157 = vmatprep.subr.bf16.mxu0 0
        %10158 = vmatpush1.bf16.msra.mxu0 0
        %10159 = vmatprep.subr.bf16.mxu0 0
        %10160 = vmatpush1.bf16.msra.mxu0 0
        %10161 = vmatprep.subr.bf16.mxu0 0
        %10162 = vmatpush1.bf16.msra.mxu0 0
        %10163 = vmatprep.subr.bf16.mxu0 0
        %10164 = vmatpush1.bf16.msra.mxu0 0
        %10165 = vmatprep.subr.bf16.mxu0 0
        %10166 = vmatpush1.bf16.msra.mxu0 0
        %10167 = vmatprep.subr.bf16.mxu0 0
        %10168 = vmatpush1.bf16.msra.mxu0 0
        %10169 = vmatprep.subr.bf16.mxu0 0
        %10170 = vmatpush1.bf16.msra.mxu0 0
        %10171 = vmatprep.subr.bf16.mxu0 0
        %10172 = vmatpush1.bf16.msra.mxu0 0
        %10173 = vmatprep.subr.bf16.mxu0 0
        %10174 = vmatpush1.bf16.msra.mxu0 0
        %10175 = vmatprep.subr.bf16.mxu0 0
        %10176 = vmatpush1.bf16.msra.mxu0 0
        %10177 = vmatprep.subr.bf16.mxu0 0
        %10178 = vmatpush1.bf16.msra.mxu0 0
        %10179 = vmatprep.subr.bf16.mxu0 0
        %10180 = vmatpush1.bf16.msra.mxu0 0
        %10181 = vmatprep.subr.bf16.mxu0 0
        %10182 = vmatpush1.bf16.msra.mxu0 0
        %10183 = vmatprep.mubr.bf16.mxu0 0
        %10184 = vmatmul.mubr.bf16.gmra.mrb[0].mxu0 %v10149
        %v10185 = vpop.f32.mrb[0].mxu0
        %v10186 = vadd.f32 0.0, %v10185
        %v10187 = vpop.f32.mrb[0].mxu0
        %v10188 = vpop.f32.mrb[0].mxu0
        %v10189 = vadd.f32 0.0, %v10188
        %v10190 = vpop.f32.mrb[0].mxu0
        %10191 = vdwg.mxu0
        %10192 = vrot.lane.b32.xlu0 %v1228, 16
        %v10193 = vpop.permute.xlu0 %10192
        %v10196 = vsel %vm1231, %v9862, 0
        %10198 = vmatprep.subr.bf16.mxu0 0
        %10199 = vmatpush1.bf16.msra.mxu0 %v10193
        %10200 = vmatprep.subr.bf16.mxu0 0
        %10201 = vmatpush1.bf16.msra.mxu0 0
        %10202 = vmatprep.subr.bf16.mxu0 0
        %10203 = vmatpush1.bf16.msra.mxu0 0
        %10204 = vmatprep.subr.bf16.mxu0 0
        %10205 = vmatpush1.bf16.msra.mxu0 0
        %10206 = vmatprep.subr.bf16.mxu0 0
        %10207 = vmatpush1.bf16.msra.mxu0 0
        %10208 = vmatprep.subr.bf16.mxu0 0
        %10209 = vmatpush1.bf16.msra.mxu0 0
        %10210 = vmatprep.subr.bf16.mxu0 0
        %10211 = vmatpush1.bf16.msra.mxu0 0
        %10212 = vmatprep.subr.bf16.mxu0 0
        %10213 = vmatpush1.bf16.msra.mxu0 0
        %10214 = vmatprep.subr.bf16.mxu0 0
        %10215 = vmatpush1.bf16.msra.mxu0 0
        %10216 = vmatprep.subr.bf16.mxu0 0
        %10217 = vmatpush1.bf16.msra.mxu0 0
        %10218 = vmatprep.subr.bf16.mxu0 0
        %10219 = vmatpush1.bf16.msra.mxu0 0
        %10220 = vmatprep.subr.bf16.mxu0 0
        %10221 = vmatpush1.bf16.msra.mxu0 0
        %10222 = vmatprep.subr.bf16.mxu0 0
        %10223 = vmatpush1.bf16.msra.mxu0 0
        %10224 = vmatprep.subr.bf16.mxu0 0
        %10225 = vmatpush1.bf16.msra.mxu0 0
        %10226 = vmatprep.subr.bf16.mxu0 0
        %10227 = vmatpush1.bf16.msra.mxu0 0
        %10228 = vmatprep.subr.bf16.mxu0 0
        %10229 = vmatpush1.bf16.msra.mxu0 0
        %10230 = vmatprep.mubr.bf16.mxu0 0
        %10231 = vmatmul.mubr.bf16.gmra.mrb[0].mxu0 %v10196
        %v10232 = vpop.f32.mrb[0].mxu0
        %v10233 = vadd.f32 0.0, %v10232
        %v10234 = vpop.f32.mrb[0].mxu0
        %v10235 = vpop.f32.mrb[0].mxu0
        %v10236 = vadd.f32 0.0, %v10235
        %v10237 = vpop.f32.mrb[0].mxu0
        %10238 = vdwg.mxu0
        %v10239 = vpack.c.bf16 %v9907, %v9904
        %v10240 = vpack.c.bf16 %v9954, %v9951
        %v10241 = vpack.c.bf16 %v10001, %v9998
        %v10242 = vpack.c.bf16 %v10048, %v10045
        %v10243 = vpack.c.bf16 %v10095, %v10092
        %v10244 = vpack.c.bf16 %v10142, %v10139
        %v10245 = vpack.c.bf16 %v10189, %v10186
        %v10246 = vpack.c.bf16 %v10236, %v10233
        %v10247 = vld [vmem:[#allocation17 + $0x38] sm:$0xf]
        %v10248 = vld [vmem:[#allocation17 + $0x3c] sm:$0xf]
        %v10251 = vunpack.c.l.b16 %v10247
        %v10252 = vunpack.c.l.b16 %v10248
        %v10253 = vpack.c.b16 %v10252, %v10251
        %v10256 = vsel %vm1231, %v10239, 0
        %v10259 = vsel %vm1231, %v10240, 0
        %v10262 = vsel %vm1231, %v10241, 0
        %v10265 = vsel %vm1231, %v10242, 0
        %v10268 = vsel %vm1231, %v10243, 0
        %v10271 = vsel %vm1231, %v10244, 0
        %v10274 = vsel %vm1231, %v10245, 0
        %v10277 = vsel %vm1231, %v10246, 0
        %10279 = vmatprep.subr.bf16.mxu0 0
        %10280 = vmatpush1.bf16.msra.mxu0 %v10253
        %10281 = vmatprep.subr.bf16.mxu0 0
        %10282 = vmatpush1.bf16.msra.mxu0 0
        %10283 = vmatprep.subr.bf16.mxu0 0
        %10284 = vmatpush1.bf16.msra.mxu0 0
        %10285 = vmatprep.subr.bf16.mxu0 0
        %10286 = vmatpush1.bf16.msra.mxu0 0
        %10287 = vmatprep.subr.bf16.mxu0 0
        %10288 = vmatpush1.bf16.msra.mxu0 0
        %10289 = vmatprep.subr.bf16.mxu0 0
        %10290 = vmatpush1.bf16.msra.mxu0 0
        %10291 = vmatprep.subr.bf16.mxu0 0
        %10292 = vmatpush1.bf16.msra.mxu0 0
        %10293 = vmatprep.subr.bf16.mxu0 0
        %10294 = vmatpush1.bf16.msra.mxu0 0
        %10295 = vmatprep.subr.bf16.mxu0 0
        %10296 = vmatpush1.bf16.msra.mxu0 0
        %10297 = vmatprep.subr.bf16.mxu0 0
        %10298 = vmatpush1.bf16.msra.mxu0 0
        %10299 = vmatprep.subr.bf16.mxu0 0
        %10300 = vmatpush1.bf16.msra.mxu0 0
        %10301 = vmatprep.subr.bf16.mxu0 0
        %10302 = vmatpush1.bf16.msra.mxu0 0
        %10303 = vmatprep.subr.bf16.mxu0 0
        %10304 = vmatpush1.bf16.msra.mxu0 0
        %10305 = vmatprep.subr.bf16.mxu0 0
        %10306 = vmatpush1.bf16.msra.mxu0 0
        %10307 = vmatprep.subr.bf16.mxu0 0
        %10308 = vmatpush1.bf16.msra.mxu0 0
        %10309 = vmatprep.subr.bf16.mxu0 0
        %10310 = vmatpush1.bf16.msra.mxu0 0
        %10311 = vmatprep.mubr.bf16.mxu0 0
        %10312 = vmatmul.mubr.bf16.gmra.mrb[0].mxu0 %v10256
        %v10313 = vpop.f32.mrb[0].mxu0
        %v10314 = vadd.f32 0.0, %v10313
        %v10315 = vpop.f32.mrb[0].mxu0
        %v10316 = vpop.f32.mrb[0].mxu0
        %v10317 = vadd.f32 0.0, %v10316
        %v10318 = vpop.f32.mrb[0].mxu0
        %10319 = vmatprep.mubr.bf16.mxu0 0
        %10320 = vmatmul.mubr.bf16.gmra.mrb[0].mxu0 %v10259
        %v10321 = vpop.f32.mrb[0].mxu0
        %v10322 = vadd.f32 0.0, %v10321
        %v10323 = vpop.f32.mrb[0].mxu0
        %v10324 = vpop.f32.mrb[0].mxu0
        %v10325 = vadd.f32 0.0, %v10324
        %v10326 = vpop.f32.mrb[0].mxu0
        %10327 = vmatprep.mubr.bf16.mxu0 0
        %10328 = vmatmul.mubr.bf16.gmra.mrb[0].mxu0 %v10262
        %v10329 = vpop.f32.mrb[0].mxu0
        %v10330 = vadd.f32 0.0, %v10329
        %v10331 = vpop.f32.mrb[0].mxu0
        %v10332 = vpop.f32.mrb[0].mxu0
        %v10333 = vadd.f32 0.0, %v10332
        %v10334 = vpop.f32.mrb[0].mxu0
        %10335 = vmatprep.mubr.bf16.mxu0 0
        %10336 = vmatmul.mubr.bf16.gmra.mrb[0].mxu0 %v10265
        %v10337 = vpop.f32.mrb[0].mxu0
        %v10338 = vadd.f32 0.0, %v10337
        %v10339 = vpop.f32.mrb[0].mxu0
        %v10340 = vpop.f32.mrb[0].mxu0
        %v10341 = vadd.f32 0.0, %v10340
        %v10342 = vpop.f32.mrb[0].mxu0
        %10343 = vmatprep.mubr.bf16.mxu0 0
        %10344 = vmatmul.mubr.bf16.gmra.mrb[0].mxu0 %v10268
        %v10345 = vpop.f32.mrb[0].mxu0
        %v10346 = vadd.f32 0.0, %v10345
        %v10347 = vpop.f32.mrb[0].mxu0
        %v10348 = vpop.f32.mrb[0].mxu0
        %v10349 = vadd.f32 0.0, %v10348
        %v10350 = vpop.f32.mrb[0].mxu0
        %10351 = vmatprep.mubr.bf16.mxu0 0
        %10352 = vmatmul.mubr.bf16.gmra.mrb[0].mxu0 %v10271
        %v10353 = vpop.f32.mrb[0].mxu0
        %v10354 = vadd.f32 0.0, %v10353
        %v10355 = vpop.f32.mrb[0].mxu0
        %v10356 = vpop.f32.mrb[0].mxu0
        %v10357 = vadd.f32 0.0, %v10356
        %v10358 = vpop.f32.mrb[0].mxu0
        %10359 = vmatprep.mubr.bf16.mxu0 0
        %10360 = vmatmul.mubr.bf16.gmra.mrb[0].mxu0 %v10274
        %v10361 = vpop.f32.mrb[0].mxu0
        %v10362 = vadd.f32 0.0, %v10361
        %v10363 = vpop.f32.mrb[0].mxu0
        %v10364 = vpop.f32.mrb[0].mxu0
        %v10365 = vadd.f32 0.0, %v10364
        %v10366 = vpop.f32.mrb[0].mxu0
        %10367 = vmatprep.mubr.bf16.mxu0 0
        %10368 = vmatmul.mubr.bf16.gmra.mrb[0].mxu0 %v10277
        %v10369 = vpop.f32.mrb[0].mxu0
        %v10370 = vadd.f32 0.0, %v10369
        %v10371 = vpop.f32.mrb[0].mxu0
        %v10372 = vpop.f32.mrb[0].mxu0
        %v10373 = vadd.f32 0.0, %v10372
        %v10374 = vpop.f32.mrb[0].mxu0
        %10375 = vdwg.mxu0
        %v10376 = vadd.f32 %v9223, %v10314
        %v10377 = vadd.f32 %v9224, %v10317
        %v10378 = vadd.f32 %v9225, %v10322
        %v10379 = vadd.f32 %v9226, %v10325
        %v10380 = vadd.f32 %v9227, %v10330
        %v10381 = vadd.f32 %v9228, %v10333
        %v10382 = vadd.f32 %v9229, %v10338
        %v10383 = vadd.f32 %v9230, %v10341
        %v10384 = vadd.f32 %v9231, %v10346
        %v10385 = vadd.f32 %v9232, %v10349
        %v10386 = vadd.f32 %v9233, %v10354
        %v10387 = vadd.f32 %v9234, %v10357
        %v10388 = vadd.f32 %v9235, %v10362
        %v10389 = vadd.f32 %v9236, %v10365
        %v10390 = vadd.f32 %v9237, %v10370
        %v10391 = vadd.f32 %v9238, %v10373
        %v10392 = vld [vmem:[#allocation19] sm:$0x1]
        %v10394 = vlaneseq
        %v10395 = vshrl.u32 %v10394, 7
        %v10396 = vsub.s32 0, %v10395
        %v10397 = vrot.slane %v10392, %v10396
        %v10399 = vadd.f32 %v10376, %v10397
        %v10400 = vadd.f32 %v10377, %v10397
        %v10401 = vadd.f32 %v10378, %v10397
        %v10402 = vadd.f32 %v10379, %v10397
        %v10403 = vadd.f32 %v10380, %v10397
        %v10404 = vadd.f32 %v10381, %v10397
        %v10405 = vadd.f32 %v10382, %v10397
        %v10406 = vadd.f32 %v10383, %v10397
        %v10407 = vadd.f32 %v10384, %v10397
        %v10408 = vadd.f32 %v10385, %v10397
        %v10409 = vadd.f32 %v10386, %v10397
        %v10410 = vadd.f32 %v10387, %v10397
        %v10411 = vadd.f32 %v10388, %v10397
        %v10412 = vadd.f32 %v10389, %v10397
        %v10413 = vadd.f32 %v10390, %v10397
        %v10414 = vadd.f32 %v10391, %v10397
        %10415 = vst [vmem:[%s568] sm:$0xff] %v10399
        %10416 = vst [vmem:[%s568 + $0x8] sm:$0xff] %v10400
        %10417 = vst [vmem:[%s568 + $0x10] sm:$0xff] %v10401
        %10418 = vst [vmem:[%s568 + $0x18] sm:$0xff] %v10402
        %10419 = vst [vmem:[%s568 + $0x20] sm:$0xff] %v10403
        %10420 = vst [vmem:[%s568 + $0x28] sm:$0xff] %v10404
        %10421 = vst [vmem:[%s568 + $0x30] sm:$0xff] %v10405
        %10422 = vst [vmem:[%s568 + $0x38] sm:$0xff] %v10406
        %10423 = vst [vmem:[%s568 + $0x40] sm:$0xff] %v10407
        %10424 = vst [vmem:[%s568 + $0x48] sm:$0xff] %v10408
        %10425 = vst [vmem:[%s568 + $0x50] sm:$0xff] %v10409
        %10426 = vst [vmem:[%s568 + $0x58] sm:$0xff] %v10410
        %10427 = vst [vmem:[%s568 + $0x60] sm:$0xff] %v10411
        %10428 = vst [vmem:[%s568 + $0x68] sm:$0xff] %v10412
        %10429 = vst [vmem:[%s568 + $0x70] sm:$0xff] %v10413
        %10430 = vst [vmem:[%s568 + $0x78] sm:$0xff] %v10414
        %s10431 = sand.u32 %s284, 1
        %s10432 = scalar_lea.sflag [#allocation4], %s10431
        %s10433 = sand.u32 %s284, 1
        %s10434 = smul.addr %s10433, 128
        %s10435 = scalar_lea.vmem [#allocation20], %s10434
        // Predicated region
        $region109: #{tpu_custom_call.1} parent=63 // pred_check
          %p10436 = pneg %p294
        $region110: #{tpu_custom_call.1} parent=63 // pred_check_branch
          %10438 = sbr.rel (%p10436) target = $region112
        $region111: #{tpu_custom_call.1} parent=63 // pred_region
          %s10439 = smul.u32 8, %s35
          %s10441 = ssub.s32 2048, 2048
          %10442 = vsyncadd %s10432, %s10441
          %s10443 = smul.addr %s10439, 2
          %s10444 = smul.addr %s10443, 128
          %s10445 = scalar_lea.hbm %s11, %s10444
          %s10446 = sshll.u32 %s10435, 4
          %s10447 = int_to_ptr.vmem [resolvable:$true] %s10446
          %10452 = dma.vmem_to_hbm [thread:$0]  %s10447, 2048, %s10445, %s10432, 128, 128, 8
        $region112: #{tpu_custom_call.1} parent=63 // pred_fallthru
          _
      $region64: #{tpu_custom_call.1} parent=5 // pred_fallthru
        _
      %p10453 = scmp.le.s32.totalorder 2, %s30
      // Predicated region
      $region113: #{tpu_custom_call.1} parent=5 // pred_check
        %p10454 = pneg %p10453
      $region114: #{tpu_custom_call.1} parent=5 // pred_check_branch
        %10456 = sbr.rel (%p10454) target = $region116
      $region115: #{tpu_custom_call.1} parent=5 // pred_region
        %s10457 = ssub.s32 %s30, 2
        // Predicated region
        $region117: #{tpu_custom_call.1} parent=115 // pred_check
          %p10458 = pneg %p300
        $region118: #{tpu_custom_call.1} parent=115 // pred_check_branch
          %10460 = sbr.rel (%p10458) target = $region120
        $region119: #{tpu_custom_call.1} parent=115 // pred_region
          %s10461 = sand.u32 %s285, 1
          %s10462 = scalar_lea.sflag [#allocation4], %s10461
          %s10463 = sand.u32 %s285, 1
          %s10464 = smul.addr %s10463, 128
          %s10465 = scalar_lea.vmem [#allocation20], %s10464
          %10466 = dma.done %s10462, 2048
        $region120: #{tpu_custom_call.1} parent=115 // pred_fallthru
          _
      $region116: #{tpu_custom_call.1} parent=5 // pred_fallthru
        _
    $region6: #{tpu_custom_call.1} parent=1 // loop_footer
      %s34 = sadd.s32 1, %s30
    $region7: #{tpu_custom_call.1} parent=1 // loop_footer_branch
      %29 = sbr.rel target = $region3
    $region8: #{tpu_custom_call.1} parent=1 // loop_exit
      _
    %10467 = vsyncpa [#allocation3], 1
    %s10468 = scalar_lea.sflag [#allocation3], 1
    %10469 = vsyncpa %s10468, 1
    %10470 = vsyncpa [#allocation6], 1
    %s10471 = scalar_lea.sflag [#allocation6], 1
    %10472 = vsyncpa %s10471, 1
    %10473 = vsyncpa [#allocation9], 1
    %10474 = vsyncpa [#allocation12], 1
    %10475 = vsyncpa [#allocation15], 1
    %10476 = vsyncpa [#allocation18], 1
    %10477 = vsyncpa [#allocation4], 1
    %s10478 = scalar_lea.sflag [#allocation4], 1
    %10479 = vsyncpa %s10478, 1

</llo_original>
